<compile_context>
chip_gen: v7x
topology: tpu7x:2x2x1
jax: 0.10.0
libtpu: 0.0.40
codegen_flags: <defaults>
</compile_context>

<pallas_src>
import jax
import jax.numpy as jnp
from jax import lax
from jax.experimental import pallas as pl
from jax.experimental.pallas import tpu as pltpu

K = 3        # deform conv kernel size (module default)
PAD = 1
DIL = 1
STRIDE = 1   # offsets conv is stride-1, so deform stride must be 1 for spatial match


# ----------------------------------------------------------------------------- kernel body
def _deform_sample_kernel(coords_ref, wcol_ref, xmat_ref, wtile_ref, bdef_ref, out_ref):
    KK = K * K
    TILE_Q = coords_ref.shape[0]            # output pixels handled by this grid step
    H = xmat_ref.shape[0]
    WC_PAD = xmat_ref.shape[1]
    C_PAD = out_ref.shape[-1]

    xm = xmat_ref[...]                       # (H, WC_PAD) bf16 row-gather source (zero-padded lanes)
    coords = coords_ref[...]                 # (TILE_Q, 2*KK) f32: [9 x sy | 9 x sx], absolute coords

    # hoisted once (JAX does not CSE broadcast_in_dim / iota inside the tap loop)
    h_iota = lax.broadcasted_iota(jnp.int32, (TILE_Q, H), 1).astype(jnp.float32)
    wcol = jnp.broadcast_to(wcol_ref[...], (TILE_Q, WC_PAD))   # image column of each (w, c) lane

    acc = jnp.zeros((TILE_Q, C_PAD), jnp.float32)
    # Static unroll over the 9 taps; per-tap result accumulates into `acc` (no VMEM scratch).
    # For very large WC_PAD this loop should become a fori_loop / 3-tap groups (vreg pressure).
    for k in range(KK):
        syk = coords[:, k:k + 1]                                    # (TILE_Q, 1)
        sxk = coords[:, KK + k:KK + k + 1]
        # hat(d) = max(0, 1-|d|): folds bilinear weights AND out-of-image zero padding exactly
        ry = jnp.maximum(1.0 - jnp.abs(h_iota - syk), 0.0)          # (TILE_Q, H)
        rx = jnp.maximum(1.0 - jnp.abs(wcol - sxk), 0.0)            # (TILE_Q, WC_PAD)
        tk = jnp.dot(ry.astype(jnp.bfloat16), xm,
                     preferred_element_type=jnp.float32)            # row gather on the MXU
        acc = acc + jnp.dot((rx * tk).astype(jnp.bfloat16),
                            wtile_ref[k * WC_PAD:(k + 1) * WC_PAD, :],
                            preferred_element_type=jnp.float32)     # column gather + weights
    out_ref[...] = (acc + bdef_ref[...]).astype(out_ref.dtype)      # lane-dense bf16 store


# ------------------------------------------------------------------- VMEM-aware tile picking
def _round_up(x, m):
    return ((x + m - 1) // m) * m


def _vmem_bytes(shape, dtype):
    """VMEM footprint of one buffer, including (sublane, 128) lane-tiling padding."""
    item = jnp.dtype(dtype).itemsize
    sub = 8 * (4 // item)                    # 8 sublanes for f32, 16 for bf16
    if len(shape) == 1:
        shape = (1, shape[0])
    lead = 1
    for d in shape[:-2]:
        lead *= d
    return lead * _round_up(shape[-2], sub) * _round_up(shape[-1], 128) * item


def _tile_footprint_bytes(tile_h, H, W, KK, WC_pad, C_pad):
    q = tile_h * W
    fp = 2 * _vmem_bytes((q, 2 * KK), jnp.float32)         # coords   (double buffered)
    fp += 2 * _vmem_bytes((H, WC_pad), jnp.bfloat16)       # image    (double buffered, b-varying)
    fp += _vmem_bytes((KK * WC_pad, C_pad), jnp.bfloat16)  # wtile    (single buffered)
    fp += _vmem_bytes((1, WC_pad), jnp.float32)            # wcol     (single buffered)
    fp += _vmem_bytes((1, C_pad), jnp.float32)             # bias     (single buffered)
    fp += 2 * _vmem_bytes((q, C_pad), jnp.bfloat16)        # output   (double buffered)
    # live compute values inside the body (acc + per-tap ry / rx / tk / product)
    fp += _vmem_bytes((q, C_pad), jnp.float32)
    fp += _vmem_bytes((q, H), jnp.float32)
    fp += 3 * _vmem_bytes((q, WC_pad), jnp.float32)
    return fp


def _vmem_capacity_bytes():
    try:
        info = pltpu.get_tpu_info()
        for attr in ("vmem_capacity_bytes", "vmem_bytes", "vmem_size_bytes"):
            v = getattr(info, attr, None)
            if isinstance(v, int) and v > 0:
                return v
    except Exception:
        pass
    return 64 * 1024 * 1024                  # conservative fallback (v7x per-core VMEM)


def _pick_tile_h(H, W, footprint, budget):
    """Largest row-tile dividing H that is sublane-friendly and fits the VMEM budget."""
    cands = [th for th in range(1, H + 1)
             if H % th == 0 and ((th * W) % 8 == 0 or th == H)]
    fitting = [th for th in cands if footprint(th) <= budget]
    return max(fitting) if fitting else min(cands)


# ---------------------------------------------------------------------------------- wrapper
def deformable_conv_block(x, woff, boff, wdef, bdef, *, tile_h=None):
    """x: (B, C_in, H, W); woff: (2*K*K, C_in, 3, 3); boff: (2*K*K,);
       wdef: (C_out, C_in, K, K); bdef: (C_out,).  Returns (B, C_out, H, W) float32."""
    B, C_in, H, W = x.shape
    C_out = wdef.shape[0]
    KK = K * K
    HW = H * W
    WC = W * C_in
    WC_pad = _round_up(WC, 128)              # lane-aligned per-tap gather width
    C_pad = _round_up(C_out, 128)            # lane-dense output stores

    x = x.astype(jnp.float32)
    x_nhwc = jnp.transpose(x, (0, 2, 3, 1))                                  # (B, H, W, C_in)

    # ---- offset-predicting 3x3 conv (tiny; left to XLA per review) and absolute sampling
    #      coordinates per output pixel & tap, laid out [9 x sy | 9 x sx] -------------------
    off = lax.conv_general_dilated(
        x, woff.astype(jnp.float32), (1, 1), [(1, 1), (1, 1)],
        dimension_numbers=('NCHW', 'OIHW', 'NCHW'))
    off = off + boff.astype(jnp.float32)[None, :, None, None]                # (B, 18, H, W)
    ky = (jnp.arange(KK) // K).astype(jnp.float32)[None, :, None, None]
    kx = (jnp.arange(KK) % K).astype(jnp.float32)[None, :, None, None]
    py = jnp.arange(H, dtype=jnp.float32)[None, None, :, None]
    px = jnp.arange(W, dtype=jnp.float32)[None, None, None, :]
    sy = py - PAD + ky * DIL + off[:, 0::2]                                  # (B, 9, H, W)
    sx = px - PAD + kx * DIL + off[:, 1::2]
    coords = jnp.transpose(jnp.concatenate([sy, sx], axis=1),
                           (0, 2, 3, 1)).reshape(B, HW, 2 * KK)              # (B, HW, 18) f32

    # ---- row-gather source (channels last, lanes zero-padded to a 128 multiple), bf16 -----
    x_mat = jnp.pad(x_nhwc.reshape(B, H, WC),
                    ((0, 0), (0, 0), (0, WC_pad - WC))).astype(jnp.bfloat16)
    # image column of every (w, c) lane; padded lanes get -2 so hat() is exactly 0 there
    wcol = jnp.pad(jnp.repeat(jnp.arange(W, dtype=jnp.float32), C_in),
                   (0, WC_pad - WC), constant_values=-2.0).reshape(1, WC_pad)

    # ---- deform-conv weights tiled over W so the column gather + channel contraction fold
    #      into one lane-dense (TILE_Q, WC_pad) @ (WC_pad, C_pad) matmul per tap ------------
    w_kco = jnp.transpose(wdef, (2, 3, 1, 0)).reshape(KK, C_in, C_out).astype(jnp.float32)
    wtile = jnp.zeros((KK, WC_pad, C_out), jnp.float32)
    wtile = wtile.at[:, :WC, :].set(
        jnp.broadcast_to(w_kco[:, None], (KK, W, C_in, C_out)).reshape(KK, WC, C_out))
    wtile = jnp.pad(wtile.reshape(KK * WC_pad, C_out),
                    ((0, 0), (0, C_pad - C_out))).astype(jnp.bfloat16)
    bdef_mat = jnp.pad(bdef.astype(jnp.float32).reshape(1, C_out),
                       ((0, 0), (0, C_pad - C_out)))

    # ---- VMEM-budget aware tiling and explicit vmem limit ---------------------------------
    vmem_cap = _vmem_capacity_bytes()
    footprint = lambda th: _tile_footprint_bytes(th, H, W, KK, WC_pad, C_pad)
    if tile_h is None:
        tile_h = _pick_tile_h(H, W, footprint, budget=vmem_cap // 2)
    assert H % tile_h == 0 and ((tile_h * W) % 8 == 0 or tile_h == H), (tile_h, H, W)
    TILE_Q = tile_h * W
    vmem_limit = int(min(int(vmem_cap * 0.9),
                         max(2 * footprint(tile_h) + (4 << 20), 32 << 20)))

    cost = pl.CostEstimate(
        flops=int(2 * B * HW * KK * WC_pad * (H + C_pad)),
        transcendentals=0,
        bytes_accessed=int(x_mat.size * 2 + coords.size * 4 + wtile.size * 2
                           + wcol.size * 4 + bdef_mat.size * 4 + B * HW * C_pad * 2))

    # B > 1: split megacore on batch so the per-image row-gather source is not replicated
    dims = ("parallel", "parallel") if B == 1 else ("parallel", "arbitrary")

    def _call(single_buffer_resident):
        def const_spec(shape):
            if single_buffer_resident:
                return pl.BlockSpec(shape, lambda b, t: (0, 0),
                                    pipeline_mode=pl.Buffered(1))
            return pl.BlockSpec(shape, lambda b, t: (0, 0))

        return pl.pallas_call(
            _deform_sample_kernel,
            out_shape=jax.ShapeDtypeStruct((B, HW, C_pad), jnp.bfloat16),
            grid_spec=pltpu.PrefetchScalarGridSpec(
                num_scalar_prefetch=0,
                grid=(B, H // tile_h),
                in_specs=[
                    pl.BlockSpec((None, TILE_Q, 2 * KK), lambda b, t: (b, t, 0)),
                    const_spec((1, WC_pad)),
                    pl.BlockSpec((None, H, WC_pad), lambda b, t: (b, 0, 0)),
                    const_spec((KK * WC_pad, C_pad)),
                    const_spec((1, C_pad)),
                ],
                out_specs=pl.BlockSpec((None, TILE_Q, C_pad), lambda b, t: (b, t, 0)),
            ),
            compiler_params=pltpu.CompilerParams(
                dimension_semantics=dims, vmem_limit_bytes=vmem_limit),
            cost_estimate=cost if single_buffer_resident else None,
        )(coords, wcol, x_mat, wtile, bdef_mat)

    try:
        out = _call(True)
    except Exception:
        # graceful fallback if this Pallas build rejects pipeline_mode / Buffered(1)
        out = _call(False)

    out = out.reshape(B, H, W, C_pad)[..., :C_out].astype(jnp.float32)
    return jnp.transpose(out, (0, 3, 1, 2))


# -------------------------------------------------------------------------------- reference
def _reference(x, woff, boff, wdef, bdef):
    """Pure-JAX reference with torchvision DeformConv2d (v1) semantics, all in f32."""
    B, C_in, H, W = x.shape
    C_out = wdef.shape[0]
    off = lax.conv_general_dilated(
        x, woff, (1, 1), [(1, 1), (1, 1)],
        dimension_numbers=('NCHW', 'OIHW', 'NCHW')) + boff[None, :, None, None]
    py, px = jnp.meshgrid(jnp.arange(H), jnp.arange(W), indexing='ij')
    out = jnp.zeros((B, C_out, H, W), jnp.float32)
    bidx = jnp.arange(B)[:, None, None, None]
    cidx = jnp.arange(C_in)[None, :, None, None]
    for k in range(K * K):
        ky, kx = k // K, k % K
        sy = py - PAD + ky * DIL + off[:, 2 * k]
        sx = px - PAD + kx * DIL + off[:, 2 * k + 1]
        y0 = jnp.floor(sy)
        x0 = jnp.floor(sx)
        fy = sy - y0
        fx = sx - x0
        val = jnp.zeros((B, C_in, H, W), jnp.float32)
        for dy, dx, wgt in ((0, 0, (1 - fy) * (1 - fx)), (0, 1, (1 - fy) * fx),
                            (1, 0, fy * (1 - fx)), (1, 1, fy * fx)):
            yc = y0 + dy
            xc = x0 + dx
            valid = (yc >= 0) & (yc <= H - 1) & (xc >= 0) & (xc <= W - 1)
            yi = jnp.clip(yc.astype(jnp.int32), 0, H - 1)[:, None]
            xi = jnp.clip(xc.astype(jnp.int32), 0, W - 1)[:, None]
            g = x[bidx, cidx, yi, xi]
            val = val + jnp.where(valid, wgt, 0.0)[:, None] * g
        out = out + jnp.einsum('oc,bchw->bohw', wdef[:, :, ky, kx], val)
    return out + bdef[None, :, None, None]


if __name__ == "__main__":
    def run_case(B, C_in, C_out, H, W, tile_h):
        key = jax.random.PRNGKey(0)
        k1, k2, k3, k4, k5 = jax.random.split(key, 5)
        x = jax.random.normal(k1, (B, C_in, H, W), jnp.float32)
        woff = 0.1 * jax.random.normal(k2, (2 * K * K, C_in, 3, 3), jnp.float32)
        boff = 0.05 * jax.random.normal(k3, (2 * K * K,), jnp.float32)
        wdef = 0.2 * jax.random.normal(k4, (C_out, C_in, K, K), jnp.float32)
        bdef = 0.1 * jax.random.normal(k5, (C_out,), jnp.float32)

        out = jax.block_until_ready(
            deformable_conv_block(x, woff, boff, wdef, bdef, tile_h=tile_h))
        ref = jax.block_until_ready(_reference(x, woff, boff, wdef, bdef))

        assert out.shape == (B, C_out, H, W), out.shape
        err = float(jnp.max(jnp.abs(out - ref)))
        scale = float(jnp.max(jnp.abs(ref)))
        # bf16 gather/weight matmuls + bf16 store (f32 accumulation) -> atol + rtol check
        assert err <= 1e-2 + 2e-2 * scale, (err, scale)

    run_case(2, 4, 8, 16, 16, tile_h=8)    # multi row-tile path: grid = (2 batches, 2 tiles)
    run_case(2, 4, 8, 8, 8, tile_h=None)   # VMEM-aware auto tile: single row-tile per image

    print("KERNEL_OK")
</pallas_src>

<mosaic_0001>
module attributes {stable_mosaic.version = 11 : i64} {
  func.func @_deform_sample_kernel(%arg0: i32, %arg1: i32, %arg2: memref<1x128x18xf32, #tpu.memory_space<vmem>>, %arg3: memref<1x128xf32, #tpu.memory_space<vmem>>, %arg4: memref<1x16x128xbf16, #tpu.memory_space<vmem>>, %arg5: memref<1152x128xbf16, #tpu.memory_space<vmem>>, %arg6: memref<1x128xf32, #tpu.memory_space<vmem>>, %arg7: memref<1x128x128xbf16, #tpu.memory_space<vmem>>) attributes {dimension_semantics = [#tpu.dimension_semantics<parallel>, #tpu.dimension_semantics<arbitrary>], iteration_bounds = array<i64: 2, 2>, scalar_prefetch = 0 : i64, scratch_operands = 0 : i64, tpu.core_type = #tpu.core_type<tc>, window_params = [{transform_indices = @transform_0, window_bounds = array<i64: 1, 128, 18>}, {pipeline_mode = #tpu.pipeline_mode<synchronous>, transform_indices = @transform_1, window_bounds = array<i64: 1, 128>}, {transform_indices = @transform_2, window_bounds = array<i64: 1, 16, 128>}, {pipeline_mode = #tpu.pipeline_mode<synchronous>, transform_indices = @transform_3, window_bounds = array<i64: 1152, 128>}, {pipeline_mode = #tpu.pipeline_mode<synchronous>, transform_indices = @transform_4, window_bounds = array<i64: 1, 128>}, {transform_indices = @transform_5, window_bounds = array<i64: 1, 128, 128>}]} {
    %c0 = arith.constant 0 : index
    %c0_0 = arith.constant 0 : index
    %c0_1 = arith.constant 0 : index
    %0 = vector.load %arg4[%c0, %c0_0, %c0_1] : memref<1x16x128xbf16, #tpu.memory_space<vmem>>, vector<1x16x128xbf16>
    %1 = vector.shape_cast %0 : vector<1x16x128xbf16> to vector<16x128xbf16>
    %c0_2 = arith.constant 0 : index
    %c0_3 = arith.constant 0 : index
    %c0_4 = arith.constant 0 : index
    %2 = vector.load %arg2[%c0_2, %c0_3, %c0_4] : memref<1x128x18xf32, #tpu.memory_space<vmem>>, vector<1x128x18xf32>
    %3 = vector.shape_cast %2 : vector<1x128x18xf32> to vector<128x18xf32>
    %4 = tpu.iota {dimensions = array<i32: 1>} : vector<128x16xi32>
    %5 = arith.sitofp %4 : vector<128x16xi32> to vector<128x16xf32>
    %c0_5 = arith.constant 0 : index
    %c0_6 = arith.constant 0 : index
    %6 = vector.load %arg3[%c0_5, %c0_6] : memref<1x128xf32, #tpu.memory_space<vmem>>, vector<1x128xf32>
    %7 = vector.shape_cast %6 : vector<1x128xf32> to vector<1x128xf32>
    %8 = vector.broadcast %7 : vector<1x128xf32> to vector<128x128xf32>
    %cst = arith.constant 0.000000e+00 : f32
    %9 = vector.broadcast %cst : f32 to vector<128x128xf32>
    %10 = vector.extract_strided_slice %3 {offsets = [0, 0], sizes = [128, 1], strides = [1, 1]} : vector<128x18xf32> to vector<128x1xf32>
    %11 = vector.extract_strided_slice %3 {offsets = [0, 9], sizes = [128, 1], strides = [1, 1]} : vector<128x18xf32> to vector<128x1xf32>
    %12 = vector.broadcast %10 : vector<128x1xf32> to vector<128x16xf32>
    %13 = arith.subf %5, %12 : vector<128x16xf32>
    %14 = math.absf %13 : vector<128x16xf32>
    %cst_7 = arith.constant 1.000000e+00 : f32
    %15 = vector.broadcast %cst_7 : f32 to vector<128x16xf32>
    %16 = arith.subf %15, %14 : vector<128x16xf32>
    %cst_8 = arith.constant 0.000000e+00 : f32
    %17 = vector.broadcast %cst_8 : f32 to vector<128x16xf32>
    %18 = arith.maximumf %16, %17 : vector<128x16xf32>
    %19 = vector.broadcast %11 : vector<128x1xf32> to vector<128x128xf32>
    %20 = arith.subf %8, %19 : vector<128x128xf32>
    %21 = math.absf %20 : vector<128x128xf32>
    %cst_9 = arith.constant 1.000000e+00 : f32
    %22 = vector.broadcast %cst_9 : f32 to vector<128x128xf32>
    %23 = arith.subf %22, %21 : vector<128x128xf32>
    %cst_10 = arith.constant 0.000000e+00 : f32
    %24 = vector.broadcast %cst_10 : f32 to vector<128x128xf32>
    %25 = arith.maximumf %23, %24 : vector<128x128xf32>
    %26 = arith.truncf %18 : vector<128x16xf32> to vector<128x16xbf16>
    %cst_11 = arith.constant dense<0.000000e+00> : vector<128x128xf32>
    %27 = tpu.matmul %26, %1, %cst_11 {dimension_numbers = #tpu.dot_dimension_numbers<[1], [0], [0], [1], [0, 0, 1, 1], [], []>} : vector<128x16xbf16>, vector<16x128xbf16>, vector<128x128xf32> -> vector<128x128xf32>
    %28 = arith.mulf %25, %27 : vector<128x128xf32>
    %29 = arith.truncf %28 : vector<128x128xf32> to vector<128x128xbf16>
    %c0_12 = arith.constant 0 : index
    %c0_13 = arith.constant 0 : index
    %30 = vector.load %arg5[%c0_12, %c0_13] : memref<1152x128xbf16, #tpu.memory_space<vmem>>, vector<128x128xbf16>
    %cst_14 = arith.constant dense<0.000000e+00> : vector<128x128xf32>
    %31 = tpu.matmul %29, %30, %cst_14 {dimension_numbers = #tpu.dot_dimension_numbers<[1], [0], [0], [1], [0, 0, 1, 1], [], []>} : vector<128x128xbf16>, vector<128x128xbf16>, vector<128x128xf32> -> vector<128x128xf32>
    %32 = arith.addf %9, %31 : vector<128x128xf32>
    %33 = vector.extract_strided_slice %3 {offsets = [0, 1], sizes = [128, 1], strides = [1, 1]} : vector<128x18xf32> to vector<128x1xf32>
    %34 = vector.extract_strided_slice %3 {offsets = [0, 10], sizes = [128, 1], strides = [1, 1]} : vector<128x18xf32> to vector<128x1xf32>
    %35 = vector.broadcast %33 : vector<128x1xf32> to vector<128x16xf32>
    %36 = arith.subf %5, %35 : vector<128x16xf32>
    %37 = math.absf %36 : vector<128x16xf32>
    %cst_15 = arith.constant 1.000000e+00 : f32
    %38 = vector.broadcast %cst_15 : f32 to vector<128x16xf32>
    %39 = arith.subf %38, %37 : vector<128x16xf32>
    %cst_16 = arith.constant 0.000000e+00 : f32
    %40 = vector.broadcast %cst_16 : f32 to vector<128x16xf32>
    %41 = arith.maximumf %39, %40 : vector<128x16xf32>
    %42 = vector.broadcast %34 : vector<128x1xf32> to vector<128x128xf32>
    %43 = arith.subf %8, %42 : vector<128x128xf32>
    %44 = math.absf %43 : vector<128x128xf32>
    %cst_17 = arith.constant 1.000000e+00 : f32
    %45 = vector.broadcast %cst_17 : f32 to vector<128x128xf32>
    %46 = arith.subf %45, %44 : vector<128x128xf32>
    %cst_18 = arith.constant 0.000000e+00 : f32
    %47 = vector.broadcast %cst_18 : f32 to vector<128x128xf32>
    %48 = arith.maximumf %46, %47 : vector<128x128xf32>
    %49 = arith.truncf %41 : vector<128x16xf32> to vector<128x16xbf16>
    %cst_19 = arith.constant dense<0.000000e+00> : vector<128x128xf32>
    %50 = tpu.matmul %49, %1, %cst_19 {dimension_numbers = #tpu.dot_dimension_numbers<[1], [0], [0], [1], [0, 0, 1, 1], [], []>} : vector<128x16xbf16>, vector<16x128xbf16>, vector<128x128xf32> -> vector<128x128xf32>
    %51 = arith.mulf %48, %50 : vector<128x128xf32>
    %52 = arith.truncf %51 : vector<128x128xf32> to vector<128x128xbf16>
    %c128 = arith.constant 128 : index
    %c0_20 = arith.constant 0 : index
    %53 = vector.load %arg5[%c128, %c0_20] : memref<1152x128xbf16, #tpu.memory_space<vmem>>, vector<128x128xbf16>
    %cst_21 = arith.constant dense<0.000000e+00> : vector<128x128xf32>
    %54 = tpu.matmul %52, %53, %cst_21 {dimension_numbers = #tpu.dot_dimension_numbers<[1], [0], [0], [1], [0, 0, 1, 1], [], []>} : vector<128x128xbf16>, vector<128x128xbf16>, vector<128x128xf32> -> vector<128x128xf32>
    %55 = arith.addf %32, %54 : vector<128x128xf32>
    %56 = vector.extract_strided_slice %3 {offsets = [0, 2], sizes = [128, 1], strides = [1, 1]} : vector<128x18xf32> to vector<128x1xf32>
    %57 = vector.extract_strided_slice %3 {offsets = [0, 11], sizes = [128, 1], strides = [1, 1]} : vector<128x18xf32> to vector<128x1xf32>
    %58 = vector.broadcast %56 : vector<128x1xf32> to vector<128x16xf32>
    %59 = arith.subf %5, %58 : vector<128x16xf32>
    %60 = math.absf %59 : vector<128x16xf32>
    %cst_22 = arith.constant 1.000000e+00 : f32
    %61 = vector.broadcast %cst_22 : f32 to vector<128x16xf32>
    %62 = arith.subf %61, %60 : vector<128x16xf32>
    %cst_23 = arith.constant 0.000000e+00 : f32
    %63 = vector.broadcast %cst_23 : f32 to vector<128x16xf32>
    %64 = arith.maximumf %62, %63 : vector<128x16xf32>
    %65 = vector.broadcast %57 : vector<128x1xf32> to vector<128x128xf32>
    %66 = arith.subf %8, %65 : vector<128x128xf32>
    %67 = math.absf %66 : vector<128x128xf32>
    %cst_24 = arith.constant 1.000000e+00 : f32
    %68 = vector.broadcast %cst_24 : f32 to vector<128x128xf32>
    %69 = arith.subf %68, %67 : vector<128x128xf32>
    %cst_25 = arith.constant 0.000000e+00 : f32
    %70 = vector.broadcast %cst_25 : f32 to vector<128x128xf32>
    %71 = arith.maximumf %69, %70 : vector<128x128xf32>
    %72 = arith.truncf %64 : vector<128x16xf32> to vector<128x16xbf16>
    %cst_26 = arith.constant dense<0.000000e+00> : vector<128x128xf32>
    %73 = tpu.matmul %72, %1, %cst_26 {dimension_numbers = #tpu.dot_dimension_numbers<[1], [0], [0], [1], [0, 0, 1, 1], [], []>} : vector<128x16xbf16>, vector<16x128xbf16>, vector<128x128xf32> -> vector<128x128xf32>
    %74 = arith.mulf %71, %73 : vector<128x128xf32>
    %75 = arith.truncf %74 : vector<128x128xf32> to vector<128x128xbf16>
    %c256 = arith.constant 256 : index
    %c0_27 = arith.constant 0 : index
    %76 = vector.load %arg5[%c256, %c0_27] : memref<1152x128xbf16, #tpu.memory_space<vmem>>, vector<128x128xbf16>
    %cst_28 = arith.constant dense<0.000000e+00> : vector<128x128xf32>
    %77 = tpu.matmul %75, %76, %cst_28 {dimension_numbers = #tpu.dot_dimension_numbers<[1], [0], [0], [1], [0, 0, 1, 1], [], []>} : vector<128x128xbf16>, vector<128x128xbf16>, vector<128x128xf32> -> vector<128x128xf32>
    %78 = arith.addf %55, %77 : vector<128x128xf32>
    %79 = vector.extract_strided_slice %3 {offsets = [0, 3], sizes = [128, 1], strides = [1, 1]} : vector<128x18xf32> to vector<128x1xf32>
    %80 = vector.extract_strided_slice %3 {offsets = [0, 12], sizes = [128, 1], strides = [1, 1]} : vector<128x18xf32> to vector<128x1xf32>
    %81 = vector.broadcast %79 : vector<128x1xf32> to vector<128x16xf32>
    %82 = arith.subf %5, %81 : vector<128x16xf32>
    %83 = math.absf %82 : vector<128x16xf32>
    %cst_29 = arith.constant 1.000000e+00 : f32
    %84 = vector.broadcast %cst_29 : f32 to vector<128x16xf32>
    %85 = arith.subf %84, %83 : vector<128x16xf32>
    %cst_30 = arith.constant 0.000000e+00 : f32
    %86 = vector.broadcast %cst_30 : f32 to vector<128x16xf32>
    %87 = arith.maximumf %85, %86 : vector<128x16xf32>
    %88 = vector.broadcast %80 : vector<128x1xf32> to vector<128x128xf32>
    %89 = arith.subf %8, %88 : vector<128x128xf32>
    %90 = math.absf %89 : vector<128x128xf32>
    %cst_31 = arith.constant 1.000000e+00 : f32
    %91 = vector.broadcast %cst_31 : f32 to vector<128x128xf32>
    %92 = arith.subf %91, %90 : vector<128x128xf32>
    %cst_32 = arith.constant 0.000000e+00 : f32
    %93 = vector.broadcast %cst_32 : f32 to vector<128x128xf32>
    %94 = arith.maximumf %92, %93 : vector<128x128xf32>
    %95 = arith.truncf %87 : vector<128x16xf32> to vector<128x16xbf16>
    %cst_33 = arith.constant dense<0.000000e+00> : vector<128x128xf32>
    %96 = tpu.matmul %95, %1, %cst_33 {dimension_numbers = #tpu.dot_dimension_numbers<[1], [0], [0], [1], [0, 0, 1, 1], [], []>} : vector<128x16xbf16>, vector<16x128xbf16>, vector<128x128xf32> -> vector<128x128xf32>
    %97 = arith.mulf %94, %96 : vector<128x128xf32>
    %98 = arith.truncf %97 : vector<128x128xf32> to vector<128x128xbf16>
    %c384 = arith.constant 384 : index
    %c0_34 = arith.constant 0 : index
    %99 = vector.load %arg5[%c384, %c0_34] : memref<1152x128xbf16, #tpu.memory_space<vmem>>, vector<128x128xbf16>
    %cst_35 = arith.constant dense<0.000000e+00> : vector<128x128xf32>
    %100 = tpu.matmul %98, %99, %cst_35 {dimension_numbers = #tpu.dot_dimension_numbers<[1], [0], [0], [1], [0, 0, 1, 1], [], []>} : vector<128x128xbf16>, vector<128x128xbf16>, vector<128x128xf32> -> vector<128x128xf32>
    %101 = arith.addf %78, %100 : vector<128x128xf32>
    %102 = vector.extract_strided_slice %3 {offsets = [0, 4], sizes = [128, 1], strides = [1, 1]} : vector<128x18xf32> to vector<128x1xf32>
    %103 = vector.extract_strided_slice %3 {offsets = [0, 13], sizes = [128, 1], strides = [1, 1]} : vector<128x18xf32> to vector<128x1xf32>
    %104 = vector.broadcast %102 : vector<128x1xf32> to vector<128x16xf32>
    %105 = arith.subf %5, %104 : vector<128x16xf32>
    %106 = math.absf %105 : vector<128x16xf32>
    %cst_36 = arith.constant 1.000000e+00 : f32
    %107 = vector.broadcast %cst_36 : f32 to vector<128x16xf32>
    %108 = arith.subf %107, %106 : vector<128x16xf32>
    %cst_37 = arith.constant 0.000000e+00 : f32
    %109 = vector.broadcast %cst_37 : f32 to vector<128x16xf32>
    %110 = arith.maximumf %108, %109 : vector<128x16xf32>
    %111 = vector.broadcast %103 : vector<128x1xf32> to vector<128x128xf32>
    %112 = arith.subf %8, %111 : vector<128x128xf32>
    %113 = math.absf %112 : vector<128x128xf32>
    %cst_38 = arith.constant 1.000000e+00 : f32
    %114 = vector.broadcast %cst_38 : f32 to vector<128x128xf32>
    %115 = arith.subf %114, %113 : vector<128x128xf32>
    %cst_39 = arith.constant 0.000000e+00 : f32
    %116 = vector.broadcast %cst_39 : f32 to vector<128x128xf32>
    %117 = arith.maximumf %115, %116 : vector<128x128xf32>
    %118 = arith.truncf %110 : vector<128x16xf32> to vector<128x16xbf16>
    %cst_40 = arith.constant dense<0.000000e+00> : vector<128x128xf32>
    %119 = tpu.matmul %118, %1, %cst_40 {dimension_numbers = #tpu.dot_dimension_numbers<[1], [0], [0], [1], [0, 0, 1, 1], [], []>} : vector<128x16xbf16>, vector<16x128xbf16>, vector<128x128xf32> -> vector<128x128xf32>
    %120 = arith.mulf %117, %119 : vector<128x128xf32>
    %121 = arith.truncf %120 : vector<128x128xf32> to vector<128x128xbf16>
    %c512 = arith.constant 512 : index
    %c0_41 = arith.constant 0 : index
    %122 = vector.load %arg5[%c512, %c0_41] : memref<1152x128xbf16, #tpu.memory_space<vmem>>, vector<128x128xbf16>
    %cst_42 = arith.constant dense<0.000000e+00> : vector<128x128xf32>
    %123 = tpu.matmul %121, %122, %cst_42 {dimension_numbers = #tpu.dot_dimension_numbers<[1], [0], [0], [1], [0, 0, 1, 1], [], []>} : vector<128x128xbf16>, vector<128x128xbf16>, vector<128x128xf32> -> vector<128x128xf32>
    %124 = arith.addf %101, %123 : vector<128x128xf32>
    %125 = vector.extract_strided_slice %3 {offsets = [0, 5], sizes = [128, 1], strides = [1, 1]} : vector<128x18xf32> to vector<128x1xf32>
    %126 = vector.extract_strided_slice %3 {offsets = [0, 14], sizes = [128, 1], strides = [1, 1]} : vector<128x18xf32> to vector<128x1xf32>
    %127 = vector.broadcast %125 : vector<128x1xf32> to vector<128x16xf32>
    %128 = arith.subf %5, %127 : vector<128x16xf32>
    %129 = math.absf %128 : vector<128x16xf32>
    %cst_43 = arith.constant 1.000000e+00 : f32
    %130 = vector.broadcast %cst_43 : f32 to vector<128x16xf32>
    %131 = arith.subf %130, %129 : vector<128x16xf32>
    %cst_44 = arith.constant 0.000000e+00 : f32
    %132 = vector.broadcast %cst_44 : f32 to vector<128x16xf32>
    %133 = arith.maximumf %131, %132 : vector<128x16xf32>
    %134 = vector.broadcast %126 : vector<128x1xf32> to vector<128x128xf32>
    %135 = arith.subf %8, %134 : vector<128x128xf32>
    %136 = math.absf %135 : vector<128x128xf32>
    %cst_45 = arith.constant 1.000000e+00 : f32
    %137 = vector.broadcast %cst_45 : f32 to vector<128x128xf32>
    %138 = arith.subf %137, %136 : vector<128x128xf32>
    %cst_46 = arith.constant 0.000000e+00 : f32
    %139 = vector.broadcast %cst_46 : f32 to vector<128x128xf32>
    %140 = arith.maximumf %138, %139 : vector<128x128xf32>
    %141 = arith.truncf %133 : vector<128x16xf32> to vector<128x16xbf16>
    %cst_47 = arith.constant dense<0.000000e+00> : vector<128x128xf32>
    %142 = tpu.matmul %141, %1, %cst_47 {dimension_numbers = #tpu.dot_dimension_numbers<[1], [0], [0], [1], [0, 0, 1, 1], [], []>} : vector<128x16xbf16>, vector<16x128xbf16>, vector<128x128xf32> -> vector<128x128xf32>
    %143 = arith.mulf %140, %142 : vector<128x128xf32>
    %144 = arith.truncf %143 : vector<128x128xf32> to vector<128x128xbf16>
    %c640 = arith.constant 640 : index
    %c0_48 = arith.constant 0 : index
    %145 = vector.load %arg5[%c640, %c0_48] : memref<1152x128xbf16, #tpu.memory_space<vmem>>, vector<128x128xbf16>
    %cst_49 = arith.constant dense<0.000000e+00> : vector<128x128xf32>
    %146 = tpu.matmul %144, %145, %cst_49 {dimension_numbers = #tpu.dot_dimension_numbers<[1], [0], [0], [1], [0, 0, 1, 1], [], []>} : vector<128x128xbf16>, vector<128x128xbf16>, vector<128x128xf32> -> vector<128x128xf32>
    %147 = arith.addf %124, %146 : vector<128x128xf32>
    %148 = vector.extract_strided_slice %3 {offsets = [0, 6], sizes = [128, 1], strides = [1, 1]} : vector<128x18xf32> to vector<128x1xf32>
    %149 = vector.extract_strided_slice %3 {offsets = [0, 15], sizes = [128, 1], strides = [1, 1]} : vector<128x18xf32> to vector<128x1xf32>
    %150 = vector.broadcast %148 : vector<128x1xf32> to vector<128x16xf32>
    %151 = arith.subf %5, %150 : vector<128x16xf32>
    %152 = math.absf %151 : vector<128x16xf32>
    %cst_50 = arith.constant 1.000000e+00 : f32
    %153 = vector.broadcast %cst_50 : f32 to vector<128x16xf32>
    %154 = arith.subf %153, %152 : vector<128x16xf32>
    %cst_51 = arith.constant 0.000000e+00 : f32
    %155 = vector.broadcast %cst_51 : f32 to vector<128x16xf32>
    %156 = arith.maximumf %154, %155 : vector<128x16xf32>
    %157 = vector.broadcast %149 : vector<128x1xf32> to vector<128x128xf32>
    %158 = arith.subf %8, %157 : vector<128x128xf32>
    %159 = math.absf %158 : vector<128x128xf32>
    %cst_52 = arith.constant 1.000000e+00 : f32
    %160 = vector.broadcast %cst_52 : f32 to vector<128x128xf32>
    %161 = arith.subf %160, %159 : vector<128x128xf32>
    %cst_53 = arith.constant 0.000000e+00 : f32
    %162 = vector.broadcast %cst_53 : f32 to vector<128x128xf32>
    %163 = arith.maximumf %161, %162 : vector<128x128xf32>
    %164 = arith.truncf %156 : vector<128x16xf32> to vector<128x16xbf16>
    %cst_54 = arith.constant dense<0.000000e+00> : vector<128x128xf32>
    %165 = tpu.matmul %164, %1, %cst_54 {dimension_numbers = #tpu.dot_dimension_numbers<[1], [0], [0], [1], [0, 0, 1, 1], [], []>} : vector<128x16xbf16>, vector<16x128xbf16>, vector<128x128xf32> -> vector<128x128xf32>
    %166 = arith.mulf %163, %165 : vector<128x128xf32>
    %167 = arith.truncf %166 : vector<128x128xf32> to vector<128x128xbf16>
    %c768 = arith.constant 768 : index
    %c0_55 = arith.constant 0 : index
    %168 = vector.load %arg5[%c768, %c0_55] : memref<1152x128xbf16, #tpu.memory_space<vmem>>, vector<128x128xbf16>
    %cst_56 = arith.constant dense<0.000000e+00> : vector<128x128xf32>
    %169 = tpu.matmul %167, %168, %cst_56 {dimension_numbers = #tpu.dot_dimension_numbers<[1], [0], [0], [1], [0, 0, 1, 1], [], []>} : vector<128x128xbf16>, vector<128x128xbf16>, vector<128x128xf32> -> vector<128x128xf32>
    %170 = arith.addf %147, %169 : vector<128x128xf32>
    %171 = vector.extract_strided_slice %3 {offsets = [0, 7], sizes = [128, 1], strides = [1, 1]} : vector<128x18xf32> to vector<128x1xf32>
    %172 = vector.extract_strided_slice %3 {offsets = [0, 16], sizes = [128, 1], strides = [1, 1]} : vector<128x18xf32> to vector<128x1xf32>
    %173 = vector.broadcast %171 : vector<128x1xf32> to vector<128x16xf32>
    %174 = arith.subf %5, %173 : vector<128x16xf32>
    %175 = math.absf %174 : vector<128x16xf32>
    %cst_57 = arith.constant 1.000000e+00 : f32
    %176 = vector.broadcast %cst_57 : f32 to vector<128x16xf32>
    %177 = arith.subf %176, %175 : vector<128x16xf32>
    %cst_58 = arith.constant 0.000000e+00 : f32
    %178 = vector.broadcast %cst_58 : f32 to vector<128x16xf32>
    %179 = arith.maximumf %177, %178 : vector<128x16xf32>
    %180 = vector.broadcast %172 : vector<128x1xf32> to vector<128x128xf32>
    %181 = arith.subf %8, %180 : vector<128x128xf32>
    %182 = math.absf %181 : vector<128x128xf32>
    %cst_59 = arith.constant 1.000000e+00 : f32
    %183 = vector.broadcast %cst_59 : f32 to vector<128x128xf32>
    %184 = arith.subf %183, %182 : vector<128x128xf32>
    %cst_60 = arith.constant 0.000000e+00 : f32
    %185 = vector.broadcast %cst_60 : f32 to vector<128x128xf32>
    %186 = arith.maximumf %184, %185 : vector<128x128xf32>
    %187 = arith.truncf %179 : vector<128x16xf32> to vector<128x16xbf16>
    %cst_61 = arith.constant dense<0.000000e+00> : vector<128x128xf32>
    %188 = tpu.matmul %187, %1, %cst_61 {dimension_numbers = #tpu.dot_dimension_numbers<[1], [0], [0], [1], [0, 0, 1, 1], [], []>} : vector<128x16xbf16>, vector<16x128xbf16>, vector<128x128xf32> -> vector<128x128xf32>
    %189 = arith.mulf %186, %188 : vector<128x128xf32>
    %190 = arith.truncf %189 : vector<128x128xf32> to vector<128x128xbf16>
    %c896 = arith.constant 896 : index
    %c0_62 = arith.constant 0 : index
    %191 = vector.load %arg5[%c896, %c0_62] : memref<1152x128xbf16, #tpu.memory_space<vmem>>, vector<128x128xbf16>
    %cst_63 = arith.constant dense<0.000000e+00> : vector<128x128xf32>
    %192 = tpu.matmul %190, %191, %cst_63 {dimension_numbers = #tpu.dot_dimension_numbers<[1], [0], [0], [1], [0, 0, 1, 1], [], []>} : vector<128x128xbf16>, vector<128x128xbf16>, vector<128x128xf32> -> vector<128x128xf32>
    %193 = arith.addf %170, %192 : vector<128x128xf32>
    %194 = vector.extract_strided_slice %3 {offsets = [0, 8], sizes = [128, 1], strides = [1, 1]} : vector<128x18xf32> to vector<128x1xf32>
    %195 = vector.extract_strided_slice %3 {offsets = [0, 17], sizes = [128, 1], strides = [1, 1]} : vector<128x18xf32> to vector<128x1xf32>
    %196 = vector.broadcast %194 : vector<128x1xf32> to vector<128x16xf32>
    %197 = arith.subf %5, %196 : vector<128x16xf32>
    %198 = math.absf %197 : vector<128x16xf32>
    %cst_64 = arith.constant 1.000000e+00 : f32
    %199 = vector.broadcast %cst_64 : f32 to vector<128x16xf32>
    %200 = arith.subf %199, %198 : vector<128x16xf32>
    %cst_65 = arith.constant 0.000000e+00 : f32
    %201 = vector.broadcast %cst_65 : f32 to vector<128x16xf32>
    %202 = arith.maximumf %200, %201 : vector<128x16xf32>
    %203 = vector.broadcast %195 : vector<128x1xf32> to vector<128x128xf32>
    %204 = arith.subf %8, %203 : vector<128x128xf32>
    %205 = math.absf %204 : vector<128x128xf32>
    %cst_66 = arith.constant 1.000000e+00 : f32
    %206 = vector.broadcast %cst_66 : f32 to vector<128x128xf32>
    %207 = arith.subf %206, %205 : vector<128x128xf32>
    %cst_67 = arith.constant 0.000000e+00 : f32
    %208 = vector.broadcast %cst_67 : f32 to vector<128x128xf32>
    %209 = arith.maximumf %207, %208 : vector<128x128xf32>
    %210 = arith.truncf %202 : vector<128x16xf32> to vector<128x16xbf16>
    %cst_68 = arith.constant dense<0.000000e+00> : vector<128x128xf32>
    %211 = tpu.matmul %210, %1, %cst_68 {dimension_numbers = #tpu.dot_dimension_numbers<[1], [0], [0], [1], [0, 0, 1, 1], [], []>} : vector<128x16xbf16>, vector<16x128xbf16>, vector<128x128xf32> -> vector<128x128xf32>
    %212 = arith.mulf %209, %211 : vector<128x128xf32>
    %213 = arith.truncf %212 : vector<128x128xf32> to vector<128x128xbf16>
    %c1024 = arith.constant 1024 : index
    %c0_69 = arith.constant 0 : index
    %214 = vector.load %arg5[%c1024, %c0_69] : memref<1152x128xbf16, #tpu.memory_space<vmem>>, vector<128x128xbf16>
    %cst_70 = arith.constant dense<0.000000e+00> : vector<128x128xf32>
    %215 = tpu.matmul %213, %214, %cst_70 {dimension_numbers = #tpu.dot_dimension_numbers<[1], [0], [0], [1], [0, 0, 1, 1], [], []>} : vector<128x128xbf16>, vector<128x128xbf16>, vector<128x128xf32> -> vector<128x128xf32>
    %216 = arith.addf %193, %215 : vector<128x128xf32>
    %c0_71 = arith.constant 0 : index
    %c0_72 = arith.constant 0 : index
    %217 = vector.load %arg6[%c0_71, %c0_72] : memref<1x128xf32, #tpu.memory_space<vmem>>, vector<1x128xf32>
    %218 = vector.broadcast %217 : vector<1x128xf32> to vector<128x128xf32>
    %219 = arith.addf %216, %218 : vector<128x128xf32>
    %220 = arith.truncf %219 : vector<128x128xf32> to vector<128x128xbf16>
    %c0_73 = arith.constant 0 : index
    %c0_74 = arith.constant 0 : index
    %c0_75 = arith.constant 0 : index
    %221 = vector.load %arg7[%c0_73, %c0_74, %c0_75] : memref<1x128x128xbf16, #tpu.memory_space<vmem>>, vector<1x128x128xbf16>
    %222 = vector.shape_cast %221 : vector<1x128x128xbf16> to vector<128x128xbf16>
    %223 = vector.shape_cast %220 : vector<128x128xbf16> to vector<1x128x128xbf16>
    tpu.vector_store %arg7[%c0_73, %c0_74, %c0_75], %223 {strides = array<i32>} : memref<1x128x128xbf16, #tpu.memory_space<vmem>>, vector<1x128x128xbf16>,
    return
  }
  func.func @transform_0(%arg0: i32, %arg1: i32) -> (i32, i32, i32) {
    %c0_i32 = arith.constant 0 : i32
    %c0_i32_0 = arith.constant 0 : i32
    return %arg0, %arg1, %c0_i32 : i32, i32, i32
  }
  func.func @transform_1(%arg0: i32, %arg1: i32) -> (i32, i32) {
    %c0_i32 = arith.constant 0 : i32
    %c0_i32_0 = arith.constant 0 : i32
    %c0_i32_1 = arith.constant 0 : i32
    return %c0_i32, %c0_i32_0 : i32, i32
  }
  func.func @transform_2(%arg0: i32, %arg1: i32) -> (i32, i32, i32) {
    %c0_i32 = arith.constant 0 : i32
    %c0_i32_0 = arith.constant 0 : i32
    %c0_i32_1 = arith.constant 0 : i32
    return %arg0, %c0_i32, %c0_i32_0 : i32, i32, i32
  }
  func.func @transform_3(%arg0: i32, %arg1: i32) -> (i32, i32) {
    %c0_i32 = arith.constant 0 : i32
    %c0_i32_0 = arith.constant 0 : i32
    %c0_i32_1 = arith.constant 0 : i32
    return %c0_i32, %c0_i32_0 : i32, i32
  }
  func.func @transform_4(%arg0: i32, %arg1: i32) -> (i32, i32) {
    %c0_i32 = arith.constant 0 : i32
    %c0_i32_0 = arith.constant 0 : i32
    %c0_i32_1 = arith.constant 0 : i32
    return %c0_i32, %c0_i32_0 : i32, i32
  }
  func.func @transform_5(%arg0: i32, %arg1: i32) -> (i32, i32, i32) {
    %c0_i32 = arith.constant 0 : i32
    %c0_i32_0 = arith.constant 0 : i32
    return %arg0, %arg1, %c0_i32 : i32, i32, i32
  }
}

module attributes {stable_mosaic.version = 11 : i64} {
  func.func @_deform_sample_kernel(%arg0: i32, %arg1: i32, %arg2: memref<1x128x18xf32, #tpu.memory_space<vmem>>, %arg3: memref<1x128xf32, #tpu.memory_space<vmem>>, %arg4: memref<1x16x128xbf16, #tpu.memory_space<vmem>>, %arg5: memref<1152x128xbf16, #tpu.memory_space<vmem>>, %arg6: memref<1x128xf32, #tpu.memory_space<vmem>>, %arg7: memref<1x128x128xbf16, #tpu.memory_space<vmem>>) attributes {dimension_semantics = [#tpu.dimension_semantics<parallel>, #tpu.dimension_semantics<arbitrary>], iteration_bounds = array<i64: 2, 2>, scalar_prefetch = 0 : i64, scratch_operands = 0 : i64, tpu.core_type = #tpu.core_type<tc>, window_params = [{transform_indices = @transform_0, window_bounds = array<i64: 1, 128, 18>}, {pipeline_mode = #tpu.pipeline_mode<synchronous>, transform_indices = @transform_1, window_bounds = array<i64: 1, 128>}, {transform_indices = @transform_2, window_bounds = array<i64: 1, 16, 128>}, {pipeline_mode = #tpu.pipeline_mode<synchronous>, transform_indices = @transform_3, window_bounds = array<i64: 1152, 128>}, {pipeline_mode = #tpu.pipeline_mode<synchronous>, transform_indices = @transform_4, window_bounds = array<i64: 1, 128>}, {transform_indices = @transform_5, window_bounds = array<i64: 1, 128, 128>}]} {
    %c0 = arith.constant 0 : index
    %c0_0 = arith.constant 0 : index
    %c0_1 = arith.constant 0 : index
    %0 = vector.load %arg4[%c0, %c0_0, %c0_1] : memref<1x16x128xbf16, #tpu.memory_space<vmem>>, vector<1x16x128xbf16>
    %1 = vector.shape_cast %0 : vector<1x16x128xbf16> to vector<16x128xbf16>
    %c0_2 = arith.constant 0 : index
    %c0_3 = arith.constant 0 : index
    %c0_4 = arith.constant 0 : index
    %2 = vector.load %arg2[%c0_2, %c0_3, %c0_4] : memref<1x128x18xf32, #tpu.memory_space<vmem>>, vector<1x128x18xf32>
    %3 = vector.shape_cast %2 : vector<1x128x18xf32> to vector<128x18xf32>
    %4 = tpu.iota {dimensions = array<i32: 1>} : vector<128x16xi32>
    %5 = arith.sitofp %4 : vector<128x16xi32> to vector<128x16xf32>
    %c0_5 = arith.constant 0 : index
    %c0_6 = arith.constant 0 : index
    %6 = vector.load %arg3[%c0_5, %c0_6] : memref<1x128xf32, #tpu.memory_space<vmem>>, vector<1x128xf32>
    %7 = vector.shape_cast %6 : vector<1x128xf32> to vector<1x128xf32>
    %8 = vector.broadcast %7 : vector<1x128xf32> to vector<128x128xf32>
    %cst = arith.constant 0.000000e+00 : f32
    %9 = vector.broadcast %cst : f32 to vector<128x128xf32>
    %10 = vector.extract_strided_slice %3 {offsets = [0, 0], sizes = [128, 1], strides = [1, 1]} : vector<128x18xf32> to vector<128x1xf32>
    %11 = vector.extract_strided_slice %3 {offsets = [0, 9], sizes = [128, 1], strides = [1, 1]} : vector<128x18xf32> to vector<128x1xf32>
    %12 = vector.broadcast %10 : vector<128x1xf32> to vector<128x16xf32>
    %13 = arith.subf %5, %12 : vector<128x16xf32>
    %14 = math.absf %13 : vector<128x16xf32>
    %cst_7 = arith.constant 1.000000e+00 : f32
    %15 = vector.broadcast %cst_7 : f32 to vector<128x16xf32>
    %16 = arith.subf %15, %14 : vector<128x16xf32>
    %cst_8 = arith.constant 0.000000e+00 : f32
    %17 = vector.broadcast %cst_8 : f32 to vector<128x16xf32>
    %18 = arith.maximumf %16, %17 : vector<128x16xf32>
    %19 = vector.broadcast %11 : vector<128x1xf32> to vector<128x128xf32>
    %20 = arith.subf %8, %19 : vector<128x128xf32>
    %21 = math.absf %20 : vector<128x128xf32>
    %cst_9 = arith.constant 1.000000e+00 : f32
    %22 = vector.broadcast %cst_9 : f32 to vector<128x128xf32>
    %23 = arith.subf %22, %21 : vector<128x128xf32>
    %cst_10 = arith.constant 0.000000e+00 : f32
    %24 = vector.broadcast %cst_10 : f32 to vector<128x128xf32>
    %25 = arith.maximumf %23, %24 : vector<128x128xf32>
    %26 = arith.truncf %18 : vector<128x16xf32> to vector<128x16xbf16>
    %cst_11 = arith.constant dense<0.000000e+00> : vector<128x128xf32>
    %27 = tpu.matmul %26, %1, %cst_11 {dimension_numbers = #tpu.dot_dimension_numbers<[1], [0], [0], [1], [0, 0, 1, 1], [], []>} : vector<128x16xbf16>, vector<16x128xbf16>, vector<128x128xf32> -> vector<128x128xf32>
    %28 = arith.mulf %25, %27 : vector<128x128xf32>
    %29 = arith.truncf %28 : vector<128x128xf32> to vector<128x128xbf16>
    %c0_12 = arith.constant 0 : index
    %c0_13 = arith.constant 0 : index
    %30 = vector.load %arg5[%c0_12, %c0_13] : memref<1152x128xbf16, #tpu.memory_space<vmem>>, vector<128x128xbf16>
    %cst_14 = arith.constant dense<0.000000e+00> : vector<128x128xf32>
    %31 = tpu.matmul %29, %30, %cst_14 {dimension_numbers = #tpu.dot_dimension_numbers<[1], [0], [0], [1], [0, 0, 1, 1], [], []>} : vector<128x128xbf16>, vector<128x128xbf16>, vector<128x128xf32> -> vector<128x128xf32>
    %32 = arith.addf %9, %31 : vector<128x128xf32>
    %33 = vector.extract_strided_slice %3 {offsets = [0, 1], sizes = [128, 1], strides = [1, 1]} : vector<128x18xf32> to vector<128x1xf32>
    %34 = vector.extract_strided_slice %3 {offsets = [0, 10], sizes = [128, 1], strides = [1, 1]} : vector<128x18xf32> to vector<128x1xf32>
    %35 = vector.broadcast %33 : vector<128x1xf32> to vector<128x16xf32>
    %36 = arith.subf %5, %35 : vector<128x16xf32>
    %37 = math.absf %36 : vector<128x16xf32>
    %cst_15 = arith.constant 1.000000e+00 : f32
    %38 = vector.broadcast %cst_15 : f32 to vector<128x16xf32>
    %39 = arith.subf %38, %37 : vector<128x16xf32>
    %cst_16 = arith.constant 0.000000e+00 : f32
    %40 = vector.broadcast %cst_16 : f32 to vector<128x16xf32>
    %41 = arith.maximumf %39, %40 : vector<128x16xf32>
    %42 = vector.broadcast %34 : vector<128x1xf32> to vector<128x128xf32>
    %43 = arith.subf %8, %42 : vector<128x128xf32>
    %44 = math.absf %43 : vector<128x128xf32>
    %cst_17 = arith.constant 1.000000e+00 : f32
    %45 = vector.broadcast %cst_17 : f32 to vector<128x128xf32>
    %46 = arith.subf %45, %44 : vector<128x128xf32>
    %cst_18 = arith.constant 0.000000e+00 : f32
    %47 = vector.broadcast %cst_18 : f32 to vector<128x128xf32>
    %48 = arith.maximumf %46, %47 : vector<128x128xf32>
    %49 = arith.truncf %41 : vector<128x16xf32> to vector<128x16xbf16>
    %cst_19 = arith.constant dense<0.000000e+00> : vector<128x128xf32>
    %50 = tpu.matmul %49, %1, %cst_19 {dimension_numbers = #tpu.dot_dimension_numbers<[1], [0], [0], [1], [0, 0, 1, 1], [], []>} : vector<128x16xbf16>, vector<16x128xbf16>, vector<128x128xf32> -> vector<128x128xf32>
    %51 = arith.mulf %48, %50 : vector<128x128xf32>
    %52 = arith.truncf %51 : vector<128x128xf32> to vector<128x128xbf16>
    %c128 = arith.constant 128 : index
    %c0_20 = arith.constant 0 : index
    %53 = vector.load %arg5[%c128, %c0_20] : memref<1152x128xbf16, #tpu.memory_space<vmem>>, vector<128x128xbf16>
    %cst_21 = arith.constant dense<0.000000e+00> : vector<128x128xf32>
    %54 = tpu.matmul %52, %53, %cst_21 {dimension_numbers = #tpu.dot_dimension_numbers<[1], [0], [0], [1], [0, 0, 1, 1], [], []>} : vector<128x128xbf16>, vector<128x128xbf16>, vector<128x128xf32> -> vector<128x128xf32>
    %55 = arith.addf %32, %54 : vector<128x128xf32>
    %56 = vector.extract_strided_slice %3 {offsets = [0, 2], sizes = [128, 1], strides = [1, 1]} : vector<128x18xf32> to vector<128x1xf32>
    %57 = vector.extract_strided_slice %3 {offsets = [0, 11], sizes = [128, 1], strides = [1, 1]} : vector<128x18xf32> to vector<128x1xf32>
    %58 = vector.broadcast %56 : vector<128x1xf32> to vector<128x16xf32>
    %59 = arith.subf %5, %58 : vector<128x16xf32>
    %60 = math.absf %59 : vector<128x16xf32>
    %cst_22 = arith.constant 1.000000e+00 : f32
    %61 = vector.broadcast %cst_22 : f32 to vector<128x16xf32>
    %62 = arith.subf %61, %60 : vector<128x16xf32>
    %cst_23 = arith.constant 0.000000e+00 : f32
    %63 = vector.broadcast %cst_23 : f32 to vector<128x16xf32>
    %64 = arith.maximumf %62, %63 : vector<128x16xf32>
    %65 = vector.broadcast %57 : vector<128x1xf32> to vector<128x128xf32>
    %66 = arith.subf %8, %65 : vector<128x128xf32>
    %67 = math.absf %66 : vector<128x128xf32>
    %cst_24 = arith.constant 1.000000e+00 : f32
    %68 = vector.broadcast %cst_24 : f32 to vector<128x128xf32>
    %69 = arith.subf %68, %67 : vector<128x128xf32>
    %cst_25 = arith.constant 0.000000e+00 : f32
    %70 = vector.broadcast %cst_25 : f32 to vector<128x128xf32>
    %71 = arith.maximumf %69, %70 : vector<128x128xf32>
    %72 = arith.truncf %64 : vector<128x16xf32> to vector<128x16xbf16>
    %cst_26 = arith.constant dense<0.000000e+00> : vector<128x128xf32>
    %73 = tpu.matmul %72, %1, %cst_26 {dimension_numbers = #tpu.dot_dimension_numbers<[1], [0], [0], [1], [0, 0, 1, 1], [], []>} : vector<128x16xbf16>, vector<16x128xbf16>, vector<128x128xf32> -> vector<128x128xf32>
    %74 = arith.mulf %71, %73 : vector<128x128xf32>
    %75 = arith.truncf %74 : vector<128x128xf32> to vector<128x128xbf16>
    %c256 = arith.constant 256 : index
    %c0_27 = arith.constant 0 : index
    %76 = vector.load %arg5[%c256, %c0_27] : memref<1152x128xbf16, #tpu.memory_space<vmem>>, vector<128x128xbf16>
    %cst_28 = arith.constant dense<0.000000e+00> : vector<128x128xf32>
    %77 = tpu.matmul %75, %76, %cst_28 {dimension_numbers = #tpu.dot_dimension_numbers<[1], [0], [0], [1], [0, 0, 1, 1], [], []>} : vector<128x128xbf16>, vector<128x128xbf16>, vector<128x128xf32> -> vector<128x128xf32>
    %78 = arith.addf %55, %77 : vector<128x128xf32>
    %79 = vector.extract_strided_slice %3 {offsets = [0, 3], sizes = [128, 1], strides = [1, 1]} : vector<128x18xf32> to vector<128x1xf32>
    %80 = vector.extract_strided_slice %3 {offsets = [0, 12], sizes = [128, 1], strides = [1, 1]} : vector<128x18xf32> to vector<128x1xf32>
    %81 = vector.broadcast %79 : vector<128x1xf32> to vector<128x16xf32>
    %82 = arith.subf %5, %81 : vector<128x16xf32>
    %83 = math.absf %82 : vector<128x16xf32>
    %cst_29 = arith.constant 1.000000e+00 : f32
    %84 = vector.broadcast %cst_29 : f32 to vector<128x16xf32>
    %85 = arith.subf %84, %83 : vector<128x16xf32>
    %cst_30 = arith.constant 0.000000e+00 : f32
    %86 = vector.broadcast %cst_30 : f32 to vector<128x16xf32>
    %87 = arith.maximumf %85, %86 : vector<128x16xf32>
    %88 = vector.broadcast %80 : vector<128x1xf32> to vector<128x128xf32>
    %89 = arith.subf %8, %88 : vector<128x128xf32>
    %90 = math.absf %89 : vector<128x128xf32>
    %cst_31 = arith.constant 1.000000e+00 : f32
    %91 = vector.broadcast %cst_31 : f32 to vector<128x128xf32>
    %92 = arith.subf %91, %90 : vector<128x128xf32>
    %cst_32 = arith.constant 0.000000e+00 : f32
    %93 = vector.broadcast %cst_32 : f32 to vector<128x128xf32>
    %94 = arith.maximumf %92, %93 : vector<128x128xf32>
    %95 = arith.truncf %87 : vector<128x16xf32> to vector<128x16xbf16>
    %cst_33 = arith.constant dense<0.000000e+00> : vector<128x128xf32>
    %96 = tpu.matmul %95, %1, %cst_33 {dimension_numbers = #tpu.dot_dimension_numbers<[1], [0], [0], [1], [0, 0, 1, 1], [], []>} : vector<128x16xbf16>, vector<16x128xbf16>, vector<128x128xf32> -> vector<128x128xf32>
    %97 = arith.mulf %94, %96 : vector<128x128xf32>
    %98 = arith.truncf %97 : vector<128x128xf32> to vector<128x128xbf16>
    %c384 = arith.constant 384 : index
    %c0_34 = arith.constant 0 : index
    %99 = vector.load %arg5[%c384, %c0_34] : memref<1152x128xbf16, #tpu.memory_space<vmem>>, vector<128x128xbf16>
    %cst_35 = arith.constant dense<0.000000e+00> : vector<128x128xf32>
    %100 = tpu.matmul %98, %99, %cst_35 {dimension_numbers = #tpu.dot_dimension_numbers<[1], [0], [0], [1], [0, 0, 1, 1], [], []>} : vector<128x128xbf16>, vector<128x128xbf16>, vector<128x128xf32> -> vector<128x128xf32>
    %101 = arith.addf %78, %100 : vector<128x128xf32>
    %102 = vector.extract_strided_slice %3 {offsets = [0, 4], sizes = [128, 1], strides = [1, 1]} : vector<128x18xf32> to vector<128x1xf32>
    %103 = vector.extract_strided_slice %3 {offsets = [0, 13], sizes = [128, 1], strides = [1, 1]} : vector<128x18xf32> to vector<128x1xf32>
    %104 = vector.broadcast %102 : vector<128x1xf32> to vector<128x16xf32>
    %105 = arith.subf %5, %104 : vector<128x16xf32>
    %106 = math.absf %105 : vector<128x16xf32>
    %cst_36 = arith.constant 1.000000e+00 : f32
    %107 = vector.broadcast %cst_36 : f32 to vector<128x16xf32>
    %108 = arith.subf %107, %106 : vector<128x16xf32>
    %cst_37 = arith.constant 0.000000e+00 : f32
    %109 = vector.broadcast %cst_37 : f32 to vector<128x16xf32>
    %110 = arith.maximumf %108, %109 : vector<128x16xf32>
    %111 = vector.broadcast %103 : vector<128x1xf32> to vector<128x128xf32>
    %112 = arith.subf %8, %111 : vector<128x128xf32>
    %113 = math.absf %112 : vector<128x128xf32>
    %cst_38 = arith.constant 1.000000e+00 : f32
    %114 = vector.broadcast %cst_38 : f32 to vector<128x128xf32>
    %115 = arith.subf %114, %113 : vector<128x128xf32>
    %cst_39 = arith.constant 0.000000e+00 : f32
    %116 = vector.broadcast %cst_39 : f32 to vector<128x128xf32>
    %117 = arith.maximumf %115, %116 : vector<128x128xf32>
    %118 = arith.truncf %110 : vector<128x16xf32> to vector<128x16xbf16>
    %cst_40 = arith.constant dense<0.000000e+00> : vector<128x128xf32>
    %119 = tpu.matmul %118, %1, %cst_40 {dimension_numbers = #tpu.dot_dimension_numbers<[1], [0], [0], [1], [0, 0, 1, 1], [], []>} : vector<128x16xbf16>, vector<16x128xbf16>, vector<128x128xf32> -> vector<128x128xf32>
    %120 = arith.mulf %117, %119 : vector<128x128xf32>
    %121 = arith.truncf %120 : vector<128x128xf32> to vector<128x128xbf16>
    %c512 = arith.constant 512 : index
    %c0_41 = arith.constant 0 : index
    %122 = vector.load %arg5[%c512, %c0_41] : memref<1152x128xbf16, #tpu.memory_space<vmem>>, vector<128x128xbf16>
    %cst_42 = arith.constant dense<0.000000e+00> : vector<128x128xf32>
    %123 = tpu.matmul %121, %122, %cst_42 {dimension_numbers = #tpu.dot_dimension_numbers<[1], [0], [0], [1], [0, 0, 1, 1], [], []>} : vector<128x128xbf16>, vector<128x128xbf16>, vector<128x128xf32> -> vector<128x128xf32>
    %124 = arith.addf %101, %123 : vector<128x128xf32>
    %125 = vector.extract_strided_slice %3 {offsets = [0, 5], sizes = [128, 1], strides = [1, 1]} : vector<128x18xf32> to vector<128x1xf32>
    %126 = vector.extract_strided_slice %3 {offsets = [0, 14], sizes = [128, 1], strides = [1, 1]} : vector<128x18xf32> to vector<128x1xf32>
    %127 = vector.broadcast %125 : vector<128x1xf32> to vector<128x16xf32>
    %128 = arith.subf %5, %127 : vector<128x16xf32>
    %129 = math.absf %128 : vector<128x16xf32>
    %cst_43 = arith.constant 1.000000e+00 : f32
    %130 = vector.broadcast %cst_43 : f32 to vector<128x16xf32>
    %131 = arith.subf %130, %129 : vector<128x16xf32>
    %cst_44 = arith.constant 0.000000e+00 : f32
    %132 = vector.broadcast %cst_44 : f32 to vector<128x16xf32>
    %133 = arith.maximumf %131, %132 : vector<128x16xf32>
    %134 = vector.broadcast %126 : vector<128x1xf32> to vector<128x128xf32>
    %135 = arith.subf %8, %134 : vector<128x128xf32>
    %136 = math.absf %135 : vector<128x128xf32>
    %cst_45 = arith.constant 1.000000e+00 : f32
    %137 = vector.broadcast %cst_45 : f32 to vector<128x128xf32>
    %138 = arith.subf %137, %136 : vector<128x128xf32>
    %cst_46 = arith.constant 0.000000e+00 : f32
    %139 = vector.broadcast %cst_46 : f32 to vector<128x128xf32>
    %140 = arith.maximumf %138, %139 : vector<128x128xf32>
    %141 = arith.truncf %133 : vector<128x16xf32> to vector<128x16xbf16>
    %cst_47 = arith.constant dense<0.000000e+00> : vector<128x128xf32>
    %142 = tpu.matmul %141, %1, %cst_47 {dimension_numbers = #tpu.dot_dimension_numbers<[1], [0], [0], [1], [0, 0, 1, 1], [], []>} : vector<128x16xbf16>, vector<16x128xbf16>, vector<128x128xf32> -> vector<128x128xf32>
    %143 = arith.mulf %140, %142 : vector<128x128xf32>
    %144 = arith.truncf %143 : vector<128x128xf32> to vector<128x128xbf16>
    %c640 = arith.constant 640 : index
    %c0_48 = arith.constant 0 : index
    %145 = vector.load %arg5[%c640, %c0_48] : memref<1152x128xbf16, #tpu.memory_space<vmem>>, vector<128x128xbf16>
    %cst_49 = arith.constant dense<0.000000e+00> : vector<128x128xf32>
    %146 = tpu.matmul %144, %145, %cst_49 {dimension_numbers = #tpu.dot_dimension_numbers<[1], [0], [0], [1], [0, 0, 1, 1], [], []>} : vector<128x128xbf16>, vector<128x128xbf16>, vector<128x128xf32> -> vector<128x128xf32>
    %147 = arith.addf %124, %146 : vector<128x128xf32>
    %148 = vector.extract_strided_slice %3 {offsets = [0, 6], sizes = [128, 1], strides = [1, 1]} : vector<128x18xf32> to vector<128x1xf32>
    %149 = vector.extract_strided_slice %3 {offsets = [0, 15], sizes = [128, 1], strides = [1, 1]} : vector<128x18xf32> to vector<128x1xf32>
    %150 = vector.broadcast %148 : vector<128x1xf32> to vector<128x16xf32>
    %151 = arith.subf %5, %150 : vector<128x16xf32>
    %152 = math.absf %151 : vector<128x16xf32>
    %cst_50 = arith.constant 1.000000e+00 : f32
    %153 = vector.broadcast %cst_50 : f32 to vector<128x16xf32>
    %154 = arith.subf %153, %152 : vector<128x16xf32>
    %cst_51 = arith.constant 0.000000e+00 : f32
    %155 = vector.broadcast %cst_51 : f32 to vector<128x16xf32>
    %156 = arith.maximumf %154, %155 : vector<128x16xf32>
    %157 = vector.broadcast %149 : vector<128x1xf32> to vector<128x128xf32>
    %158 = arith.subf %8, %157 : vector<128x128xf32>
    %159 = math.absf %158 : vector<128x128xf32>
    %cst_52 = arith.constant 1.000000e+00 : f32
    %160 = vector.broadcast %cst_52 : f32 to vector<128x128xf32>
    %161 = arith.subf %160, %159 : vector<128x128xf32>
    %cst_53 = arith.constant 0.000000e+00 : f32
    %162 = vector.broadcast %cst_53 : f32 to vector<128x128xf32>
    %163 = arith.maximumf %161, %162 : vector<128x128xf32>
    %164 = arith.truncf %156 : vector<128x16xf32> to vector<128x16xbf16>
    %cst_54 = arith.constant dense<0.000000e+00> : vector<128x128xf32>
    %165 = tpu.matmul %164, %1, %cst_54 {dimension_numbers = #tpu.dot_dimension_numbers<[1], [0], [0], [1], [0, 0, 1, 1], [], []>} : vector<128x16xbf16>, vector<16x128xbf16>, vector<128x128xf32> -> vector<128x128xf32>
    %166 = arith.mulf %163, %165 : vector<128x128xf32>
    %167 = arith.truncf %166 : vector<128x128xf32> to vector<128x128xbf16>
    %c768 = arith.constant 768 : index
    %c0_55 = arith.constant 0 : index
    %168 = vector.load %arg5[%c768, %c0_55] : memref<1152x128xbf16, #tpu.memory_space<vmem>>, vector<128x128xbf16>
    %cst_56 = arith.constant dense<0.000000e+00> : vector<128x128xf32>
    %169 = tpu.matmul %167, %168, %cst_56 {dimension_numbers = #tpu.dot_dimension_numbers<[1], [0], [0], [1], [0, 0, 1, 1], [], []>} : vector<128x128xbf16>, vector<128x128xbf16>, vector<128x128xf32> -> vector<128x128xf32>
    %170 = arith.addf %147, %169 : vector<128x128xf32>
    %171 = vector.extract_strided_slice %3 {offsets = [0, 7], sizes = [128, 1], strides = [1, 1]} : vector<128x18xf32> to vector<128x1xf32>
    %172 = vector.extract_strided_slice %3 {offsets = [0, 16], sizes = [128, 1], strides = [1, 1]} : vector<128x18xf32> to vector<128x1xf32>
    %173 = vector.broadcast %171 : vector<128x1xf32> to vector<128x16xf32>
    %174 = arith.subf %5, %173 : vector<128x16xf32>
    %175 = math.absf %174 : vector<128x16xf32>
    %cst_57 = arith.constant 1.000000e+00 : f32
    %176 = vector.broadcast %cst_57 : f32 to vector<128x16xf32>
    %177 = arith.subf %176, %175 : vector<128x16xf32>
    %cst_58 = arith.constant 0.000000e+00 : f32
    %178 = vector.broadcast %cst_58 : f32 to vector<128x16xf32>
    %179 = arith.maximumf %177, %178 : vector<128x16xf32>
    %180 = vector.broadcast %172 : vector<128x1xf32> to vector<128x128xf32>
    %181 = arith.subf %8, %180 : vector<128x128xf32>
    %182 = math.absf %181 : vector<128x128xf32>
    %cst_59 = arith.constant 1.000000e+00 : f32
    %183 = vector.broadcast %cst_59 : f32 to vector<128x128xf32>
    %184 = arith.subf %183, %182 : vector<128x128xf32>
    %cst_60 = arith.constant 0.000000e+00 : f32
    %185 = vector.broadcast %cst_60 : f32 to vector<128x128xf32>
    %186 = arith.maximumf %184, %185 : vector<128x128xf32>
    %187 = arith.truncf %179 : vector<128x16xf32> to vector<128x16xbf16>
    %cst_61 = arith.constant dense<0.000000e+00> : vector<128x128xf32>
    %188 = tpu.matmul %187, %1, %cst_61 {dimension_numbers = #tpu.dot_dimension_numbers<[1], [0], [0], [1], [0, 0, 1, 1], [], []>} : vector<128x16xbf16>, vector<16x128xbf16>, vector<128x128xf32> -> vector<128x128xf32>
    %189 = arith.mulf %186, %188 : vector<128x128xf32>
    %190 = arith.truncf %189 : vector<128x128xf32> to vector<128x128xbf16>
    %c896 = arith.constant 896 : index
    %c0_62 = arith.constant 0 : index
    %191 = vector.load %arg5[%c896, %c0_62] : memref<1152x128xbf16, #tpu.memory_space<vmem>>, vector<128x128xbf16>
    %cst_63 = arith.constant dense<0.000000e+00> : vector<128x128xf32>
    %192 = tpu.matmul %190, %191, %cst_63 {dimension_numbers = #tpu.dot_dimension_numbers<[1], [0], [0], [1], [0, 0, 1, 1], [], []>} : vector<128x128xbf16>, vector<128x128xbf16>, vector<128x128xf32> -> vector<128x128xf32>
    %193 = arith.addf %170, %192 : vector<128x128xf32>
    %194 = vector.extract_strided_slice %3 {offsets = [0, 8], sizes = [128, 1], strides = [1, 1]} : vector<128x18xf32> to vector<128x1xf32>
    %195 = vector.extract_strided_slice %3 {offsets = [0, 17], sizes = [128, 1], strides = [1, 1]} : vector<128x18xf32> to vector<128x1xf32>
    %196 = vector.broadcast %194 : vector<128x1xf32> to vector<128x16xf32>
    %197 = arith.subf %5, %196 : vector<128x16xf32>
    %198 = math.absf %197 : vector<128x16xf32>
    %cst_64 = arith.constant 1.000000e+00 : f32
    %199 = vector.broadcast %cst_64 : f32 to vector<128x16xf32>
    %200 = arith.subf %199, %198 : vector<128x16xf32>
    %cst_65 = arith.constant 0.000000e+00 : f32
    %201 = vector.broadcast %cst_65 : f32 to vector<128x16xf32>
    %202 = arith.maximumf %200, %201 : vector<128x16xf32>
    %203 = vector.broadcast %195 : vector<128x1xf32> to vector<128x128xf32>
    %204 = arith.subf %8, %203 : vector<128x128xf32>
    %205 = math.absf %204 : vector<128x128xf32>
    %cst_66 = arith.constant 1.000000e+00 : f32
    %206 = vector.broadcast %cst_66 : f32 to vector<128x128xf32>
    %207 = arith.subf %206, %205 : vector<128x128xf32>
    %cst_67 = arith.constant 0.000000e+00 : f32
    %208 = vector.broadcast %cst_67 : f32 to vector<128x128xf32>
    %209 = arith.maximumf %207, %208 : vector<128x128xf32>
    %210 = arith.truncf %202 : vector<128x16xf32> to vector<128x16xbf16>
    %cst_68 = arith.constant dense<0.000000e+00> : vector<128x128xf32>
    %211 = tpu.matmul %210, %1, %cst_68 {dimension_numbers = #tpu.dot_dimension_numbers<[1], [0], [0], [1], [0, 0, 1, 1], [], []>} : vector<128x16xbf16>, vector<16x128xbf16>, vector<128x128xf32> -> vector<128x128xf32>
    %212 = arith.mulf %209, %211 : vector<128x128xf32>
    %213 = arith.truncf %212 : vector<128x128xf32> to vector<128x128xbf16>
    %c1024 = arith.constant 1024 : index
    %c0_69 = arith.constant 0 : index
    %214 = vector.load %arg5[%c1024, %c0_69] : memref<1152x128xbf16, #tpu.memory_space<vmem>>, vector<128x128xbf16>
    %cst_70 = arith.constant dense<0.000000e+00> : vector<128x128xf32>
    %215 = tpu.matmul %213, %214, %cst_70 {dimension_numbers = #tpu.dot_dimension_numbers<[1], [0], [0], [1], [0, 0, 1, 1], [], []>} : vector<128x128xbf16>, vector<128x128xbf16>, vector<128x128xf32> -> vector<128x128xf32>
    %216 = arith.addf %193, %215 : vector<128x128xf32>
    %c0_71 = arith.constant 0 : index
    %c0_72 = arith.constant 0 : index
    %217 = vector.load %arg6[%c0_71, %c0_72] : memref<1x128xf32, #tpu.memory_space<vmem>>, vector<1x128xf32>
    %218 = vector.broadcast %217 : vector<1x128xf32> to vector<128x128xf32>
    %219 = arith.addf %216, %218 : vector<128x128xf32>
    %220 = arith.truncf %219 : vector<128x128xf32> to vector<128x128xbf16>
    %c0_73 = arith.constant 0 : index
    %c0_74 = arith.constant 0 : index
    %c0_75 = arith.constant 0 : index
    %221 = vector.load %arg7[%c0_73, %c0_74, %c0_75] : memref<1x128x128xbf16, #tpu.memory_space<vmem>>, vector<1x128x128xbf16>
    %222 = vector.shape_cast %221 : vector<1x128x128xbf16> to vector<128x128xbf16>
    %223 = vector.shape_cast %220 : vector<128x128xbf16> to vector<1x128x128xbf16>
    tpu.vector_store %arg7[%c0_73, %c0_74, %c0_75], %223 {strides = array<i32>} : memref<1x128x128xbf16, #tpu.memory_space<vmem>>, vector<1x128x128xbf16>,
    return
  }
  func.func @transform_0(%arg0: i32, %arg1: i32) -> (i32, i32, i32) {
    %c0_i32 = arith.constant 0 : i32
    %c0_i32_0 = arith.constant 0 : i32
    return %arg0, %arg1, %c0_i32 : i32, i32, i32
  }
  func.func @transform_1(%arg0: i32, %arg1: i32) -> (i32, i32) {
    %c0_i32 = arith.constant 0 : i32
    %c0_i32_0 = arith.constant 0 : i32
    %c0_i32_1 = arith.constant 0 : i32
    return %c0_i32, %c0_i32_0 : i32, i32
  }
  func.func @transform_2(%arg0: i32, %arg1: i32) -> (i32, i32, i32) {
    %c0_i32 = arith.constant 0 : i32
    %c0_i32_0 = arith.constant 0 : i32
    %c0_i32_1 = arith.constant 0 : i32
    return %arg0, %c0_i32, %c0_i32_0 : i32, i32, i32
  }
  func.func @transform_3(%arg0: i32, %arg1: i32) -> (i32, i32) {
    %c0_i32 = arith.constant 0 : i32
    %c0_i32_0 = arith.constant 0 : i32
    %c0_i32_1 = arith.constant 0 : i32
    return %c0_i32, %c0_i32_0 : i32, i32
  }
  func.func @transform_4(%arg0: i32, %arg1: i32) -> (i32, i32) {
    %c0_i32 = arith.constant 0 : i32
    %c0_i32_0 = arith.constant 0 : i32
    %c0_i32_1 = arith.constant 0 : i32
    return %c0_i32, %c0_i32_0 : i32, i32
  }
  func.func @transform_5(%arg0: i32, %arg1: i32) -> (i32, i32, i32) {
    %c0_i32 = arith.constant 0 : i32
    %c0_i32_0 = arith.constant 0 : i32
    return %arg0, %arg1, %c0_i32 : i32, i32, i32
  }
}

</mosaic_0001>

<llo_original>
// kernel: tpu_custom_call.1
$region0: #{tpu_custom_call.1}
  #allocation0 [shape = 'u32[]', space=smem, size = 0x4, offset = 0x4, fixed_abs, tag = 'smem constant byte address 0x4 - core index']
  #allocation1 [shape = 'u32[144,128]{1,0:T(1,128)}', space=vmem, size = 0x12000, scoped, tag = 'internal scratch']
  %s0 = inlined_call_operand.vmem [shape: f32[2,256,18], index: 0, kind: input, shape index: {}]
  %s1 = inlined_call_operand.vmem [shape: f32[1,128], index: 1, kind: input, shape index: {}]
  %s2 = inlined_call_operand.vmem [shape: bf16[2,16,128], index: 2, kind: input, shape index: {}]
  %s3 = inlined_call_operand.vmem [shape: bf16[1152,128], index: 3, kind: input, shape index: {}]
  %s4 = inlined_call_operand.vmem [shape: f32[1,128], index: 4, kind: input, shape index: {}]
  %s5 = inlined_call_operand.hbm [shape: bf16[2,256,128], index: 5, kind: output, shape index: {}]
  %s6 = sld [smem:[#allocation0]]
  $region53: #{tpu_custom_call.1} parent=0
    _
  %s8 = ssub.s32 1, %s6
  %s9 = scalar_select 0, %s8, %s6
  $region1: #{tpu_custom_call.1} parent=0
    #allocation2 [shape = 'u8[65536]{0}', space=vmem, size = 0x10000, scoped, tag = 'output window, operand 0']
    #allocation3 [shape = 's32[2]{0}', space=sflag, size = 0x8, scoped, tag = 'scoped memory for tpu_custom_call.1']
    %10 = vsyncpa [#allocation3], 0
    %s11 = scalar_lea.sflag [#allocation3], 1
    %12 = vsyncpa %s11, 0
    loop: start=0, step=1, limit=6
    $region2: #{tpu_custom_call.1} parent=1 // loop_pre_header
      _
    $region3: #{tpu_custom_call.1} parent=1 // loop_header
      %s14 = sphi 0, %s18
      %p15 = scmp.ge.s32.totalorder %s14, 6
      %s21 = sphi 0, %s33
      %s22 = sphi 0, %s29
      %s23 = sphi 0, %s21
      %s24 = sphi 0, %s22
      %s25 = sphi 0, %s23
      %s26 = sphi 0, %s24
      %s38 = sphi 0, %s40
      %s41 = sphi 0, %s38
      %s42 = sphi 0, %s41
      %s58 = sphi 0, %s42
      %s62 = sphi 0, %s62
      %s64 = sphi 0, %s62
      %s65 = sphi 0, %s64
      %s79 = sphi 0, %s65
      %s85 = sphi 0, %s87
      %s88 = sphi 0, %s85
      %s89 = sphi 0, %s88
      %s105 = sphi 0, %s89
      %s109 = sphi 0, %s109
      %s111 = sphi 0, %s109
      %s112 = sphi 0, %s111
      %s126 = sphi 0, %s112
      %s130 = sphi 0, %s130
      %s132 = sphi 0, %s130
      %s133 = sphi 0, %s132
      %s147 = sphi 0, %s133
      %s155 = sphi 0, %s157
      %s158 = sphi 0, %s155
      %s159 = sphi 0, %s158
      %s175 = sphi 0, %s159
    $region4: #{tpu_custom_call.1} parent=1 // loop_header_branch
      %17 = sbr.rel (%p15) target = $region8
    $region5: #{tpu_custom_call.1} parent=1 // loop_body
      %s19 = ssub.s32 %s14, 1
      %s20 = ssub.s32 %s14, 2
      %s27 = sadd.s32 1, %s22
      %p28 = scmp.ge.s32.totalorder %s27, 2
      %s29 = scalar_select %p28, 0, %s27
      %s30 = sadd.s32 1, %s21
      %s31 = scalar_select %p28, %s30, %s21
      %p32 = scmp.ge.s32.totalorder %s31, 2
      %s33 = scalar_select %p32, 0, %s31
      %s34 = ssub.s32 %s21, %s33
      %s35 = ssub.s32 %s22, %s29
      %s36 = sor.u32 %s34, %s35
      %p37 = scmp.eq.s32.totalorder %s36, 0
      %s39 = sadd.s32 %s38, 1
      %s40 = scalar_select %p37, %s38, %s39
      %p43 = pneg %p37
      %p44 = scmp.eq.s32.totalorder %s14, 3
      %p45 = por %p43, %p44
      %p46 = scmp.ne.s32.totalorder %s38, %s41
      %p47 = scmp.eq.s32.totalorder %s14, 0
      %p48 = por %p46, %p47
      %p49 = scmp.ne.s32.totalorder %s38, %s41
      %p50 = scmp.eq.s32.totalorder %s19, 3
      %p51 = por %p49, %p50
      %p52 = scmp.ne.s32.totalorder %s41, %s42
      %p53 = scmp.eq.s32.totalorder %s19, 0
      %p54 = por %p52, %p53
      %p55 = scmp.ne.s32.totalorder %s41, %s42
      %p56 = scmp.eq.s32.totalorder %s20, 3
      %p57 = por %p55, %p56
      %p59 = scmp.ne.s32.totalorder %s42, %s58
      %p60 = scmp.eq.s32.totalorder %s20, 0
      %p61 = por %p59, %p60
      %s63 = sadd.s32 %s62, 1
      %p66 = scmp.eq.s32.totalorder %s14, 3
      %p67 = scmp.ne.s32.totalorder %s62, %s64
      %p68 = scmp.eq.s32.totalorder %s14, 0
      %p69 = por %p67, %p68
      %p70 = scmp.ne.s32.totalorder %s62, %s64
      %p71 = scmp.eq.s32.totalorder %s19, 3
      %p72 = por %p70, %p71
      %p73 = scmp.ne.s32.totalorder %s64, %s65
      %p74 = scmp.eq.s32.totalorder %s19, 0
      %p75 = por %p73, %p74
      %p76 = scmp.ne.s32.totalorder %s64, %s65
      %p77 = scmp.eq.s32.totalorder %s20, 3
      %p78 = por %p76, %p77
      %p80 = scmp.ne.s32.totalorder %s65, %s79
      %p81 = scmp.eq.s32.totalorder %s20, 0
      %p82 = por %p80, %p81
      %s83 = ssub.s32 %s21, %s33
      %p84 = scmp.eq.s32.totalorder %s83, 0
      %s86 = sadd.s32 %s85, 1
      %s87 = scalar_select %p84, %s85, %s86
      %p90 = pneg %p84
      %p91 = scmp.eq.s32.totalorder %s14, 3
      %p92 = por %p90, %p91
      %p93 = scmp.ne.s32.totalorder %s85, %s88
      %p94 = scmp.eq.s32.totalorder %s14, 0
      %p95 = por %p93, %p94
      %p96 = scmp.ne.s32.totalorder %s85, %s88
      %p97 = scmp.eq.s32.totalorder %s19, 3
      %p98 = por %p96, %p97
      %p99 = scmp.ne.s32.totalorder %s88, %s89
      %p100 = scmp.eq.s32.totalorder %s19, 0
      %p101 = por %p99, %p100
      %p102 = scmp.ne.s32.totalorder %s88, %s89
      %p103 = scmp.eq.s32.totalorder %s20, 3
      %p104 = por %p102, %p103
      %p106 = scmp.ne.s32.totalorder %s89, %s105
      %p107 = scmp.eq.s32.totalorder %s20, 0
      %p108 = por %p106, %p107
      %s110 = sadd.s32 %s109, 1
      %p113 = scmp.eq.s32.totalorder %s14, 3
      %p114 = scmp.ne.s32.totalorder %s109, %s111
      %p115 = scmp.eq.s32.totalorder %s14, 0
      %p116 = por %p114, %p115
      %p117 = scmp.ne.s32.totalorder %s109, %s111
      %p118 = scmp.eq.s32.totalorder %s19, 3
      %p119 = por %p117, %p118
      %p120 = scmp.ne.s32.totalorder %s111, %s112
      %p121 = scmp.eq.s32.totalorder %s19, 0
      %p122 = por %p120, %p121
      %p123 = scmp.ne.s32.totalorder %s111, %s112
      %p124 = scmp.eq.s32.totalorder %s20, 3
      %p125 = por %p123, %p124
      %p127 = scmp.ne.s32.totalorder %s112, %s126
      %p128 = scmp.eq.s32.totalorder %s20, 0
      %p129 = por %p127, %p128
      %s131 = sadd.s32 %s130, 1
      %p134 = scmp.eq.s32.totalorder %s14, 3
      %p135 = scmp.ne.s32.totalorder %s130, %s132
      %p136 = scmp.eq.s32.totalorder %s14, 0
      %p137 = por %p135, %p136
      %p138 = scmp.ne.s32.totalorder %s130, %s132
      %p139 = scmp.eq.s32.totalorder %s19, 3
      %p140 = por %p138, %p139
      %p141 = scmp.ne.s32.totalorder %s132, %s133
      %p142 = scmp.eq.s32.totalorder %s19, 0
      %p143 = por %p141, %p142
      %p144 = scmp.ne.s32.totalorder %s132, %s133
      %p145 = scmp.eq.s32.totalorder %s20, 3
      %p146 = por %p144, %p145
      %p148 = scmp.ne.s32.totalorder %s133, %s147
      %p149 = scmp.eq.s32.totalorder %s20, 0
      %p150 = por %p148, %p149
      %s151 = ssub.s32 %s21, %s33
      %s152 = ssub.s32 %s22, %s29
      %s153 = sor.u32 %s151, %s152
      %p154 = scmp.eq.s32.totalorder %s153, 0
      %s156 = sadd.s32 %s155, 1
      %s157 = scalar_select %p154, %s155, %s156
      %p160 = pneg %p154
      %p161 = scmp.eq.s32.totalorder %s14, 3
      %p162 = por %p160, %p161
      %p163 = scmp.ne.s32.totalorder %s155, %s158
      %p164 = scmp.eq.s32.totalorder %s14, 0
      %p165 = por %p163, %p164
      %p166 = scmp.ne.s32.totalorder %s155, %s158
      %p167 = scmp.eq.s32.totalorder %s19, 3
      %p168 = por %p166, %p167
      %p169 = scmp.ne.s32.totalorder %s158, %s159
      %p170 = scmp.eq.s32.totalorder %s19, 0
      %p171 = por %p169, %p170
      %p172 = scmp.ne.s32.totalorder %s158, %s159
      %p173 = scmp.eq.s32.totalorder %s20, 3
      %p174 = por %p172, %p173
      %p176 = scmp.ne.s32.totalorder %s159, %s175
      %p177 = scmp.eq.s32.totalorder %s20, 0
      %p178 = por %p176, %p177
      %p179 = scmp.le.s32.totalorder 1, %s14
      %p180 = scmp.lt.s32.totalorder %s14, 5
      %p181 = pnand %p179, %p180
      %p182 = pneg %p181
      // Predicated region
      $region9: #{tpu_custom_call.1} parent=5 // pred_check
        _
      $region10: #{tpu_custom_call.1} parent=5 // pred_check_branch
        %184 = sbr.rel (%p181) target = $region12
      $region11: #{tpu_custom_call.1} parent=5 // pred_region
        %s185 = ssub.s32 %s14, 1
        // Predicated region
        $region13: #{tpu_custom_call.1} parent=11 // pred_check
          %p186 = pneg %p75
        $region14: #{tpu_custom_call.1} parent=11 // pred_check_branch
          %188 = sbr.rel (%p186) target = $region16
        $region15: #{tpu_custom_call.1} parent=11 // pred_region
          _
        $region16: #{tpu_custom_call.1} parent=11 // pred_fallthru
          _
        // Predicated region
        $region17: #{tpu_custom_call.1} parent=11 // pred_check
          %p189 = pneg %p122
        $region18: #{tpu_custom_call.1} parent=11 // pred_check_branch
          %191 = sbr.rel (%p189) target = $region20
        $region19: #{tpu_custom_call.1} parent=11 // pred_region
          _
        $region20: #{tpu_custom_call.1} parent=11 // pred_fallthru
          _
        // Predicated region
        $region21: #{tpu_custom_call.1} parent=11 // pred_check
          %p192 = pneg %p143
        $region22: #{tpu_custom_call.1} parent=11 // pred_check_branch
          %194 = sbr.rel (%p192) target = $region24
        $region23: #{tpu_custom_call.1} parent=11 // pred_region
          _
        $region24: #{tpu_custom_call.1} parent=11 // pred_fallthru
          _
      $region12: #{tpu_custom_call.1} parent=5 // pred_fallthru
        _
      %p195 = scmp.lt.s32.totalorder %s14, 4
      // Predicated region
      $region25: #{tpu_custom_call.1} parent=5 // pred_check
        %p196 = pneg %p195
      $region26: #{tpu_custom_call.1} parent=5 // pred_check_branch
        %198 = sbr.rel (%p196) target = $region28
      $region27: #{tpu_custom_call.1} parent=5 // pred_region
        // Predicated region
        $region29: #{tpu_custom_call.1} parent=27 // pred_check
          %p199 = pneg %p48
        $region30: #{tpu_custom_call.1} parent=27 // pred_check_branch
          %201 = sbr.rel (%p199) target = $region32
        $region31: #{tpu_custom_call.1} parent=27 // pred_region
          %s202 = smul.u32 16, %s22
          %p203 = scmp.lt.s32.totalorder %s21, 1
          %s204 = scalar_select %p203, %s21, 1
          %p205 = scmp.lt.s32.totalorder %s202, 31
          %s206 = scalar_select %p205, %s202, 31
          %s207 = smul.addr %s204, 32
          %s208 = sadd.s32 %s206, %s207
          %s209 = smul.addr %s208, 8
          %s210 = scalar_lea.vmem %s0, %s209
          %s211 = smul.u32 16, %s22
        $region32: #{tpu_custom_call.1} parent=27 // pred_fallthru
          _
        // Predicated region
        $region33: #{tpu_custom_call.1} parent=27 // pred_check
          %p212 = pneg %p95
        $region34: #{tpu_custom_call.1} parent=27 // pred_check_branch
          %214 = sbr.rel (%p212) target = $region36
        $region35: #{tpu_custom_call.1} parent=27 // pred_region
          %p215 = scmp.lt.s32.totalorder %s21, 1
          %s216 = scalar_select %p215, %s21, 1
          %s217 = smul.addr %s216, 2
          %s218 = smul.addr %s217, 4
          %s219 = scalar_lea.vmem %s2, %s218
        $region36: #{tpu_custom_call.1} parent=27 // pred_fallthru
          _
      $region28: #{tpu_custom_call.1} parent=5 // pred_fallthru
        _
      %p220 = scmp.le.s32.totalorder 1, %s14
      %p221 = scmp.lt.s32.totalorder %s14, 5
      %p222 = pnand %p220, %p221
      %p223 = pneg %p222
      // Predicated region
      $region37: #{tpu_custom_call.1} parent=5 // pred_check
        _
      $region38: #{tpu_custom_call.1} parent=5 // pred_check_branch
        %225 = sbr.rel (%p222) target = $region40
      $region39: #{tpu_custom_call.1} parent=5 // pred_region
        %s226 = ssub.s32 %s14, 1
        %s227 = smul.u32 16, %s24
        %p228 = scmp.lt.s32.totalorder %s23, 1
        %s229 = scalar_select %p228, %s23, 1
        %p230 = scmp.lt.s32.totalorder %s227, 31
        %s231 = scalar_select %p230, %s227, 31
        %s232 = smul.addr %s229, 32
        %s233 = sadd.s32 %s231, %s232
        %s234 = smul.addr %s233, 8
        %s235 = scalar_lea.vmem %s0, %s234
        %p236 = pneg %p54
        %p237 = pneg %p51
        %p238 = pneg %p75
        %p239 = pneg %p72
        %p240 = scmp.lt.s32.totalorder %s23, 1
        %s241 = scalar_select %p240, %s23, 1
        %s242 = smul.addr %s241, 2
        %s243 = smul.addr %s242, 4
        %s244 = scalar_lea.vmem %s2, %s243
        %p245 = pneg %p101
        %p246 = pneg %p98
        %p247 = pneg %p122
        %p248 = pneg %p119
        %p249 = pneg %p143
        %p250 = pneg %p140
        %p251 = pneg %p171
        %p252 = pneg %p168
        %s253 = sand.u32 %s158, 1
        %s254 = scalar_lea.sflag [#allocation3], %s253
        %s255 = sand.u32 %s158, 1
        %s256 = smul.addr %s255, 64
        %s257 = scalar_lea.vmem [#allocation2], %s256
        %s258 = smul.u32 16, %s24
        %p259 = scmp.lt.s32.totalorder %s23, 1
        %s260 = scalar_select %p259, %s23, 1
        %p261 = scmp.lt.s32.totalorder %s258, 31
        %s262 = scalar_select %p261, %s258, 31
        %s263 = smul.addr %s260, 32
        %s264 = sadd.s32 %s262, %s263
        %s265 = smul.addr %s264, 8
        %s266 = scalar_lea.vmem %s0, %s265
        %s267 = smul.u32 16, %s24
        %p268 = scmp.lt.s32.totalorder %s23, 1
        %s269 = scalar_select %p268, %s23, 1
        %s270 = smul.addr %s269, 2
        %s271 = smul.addr %s270, 4
        %s272 = scalar_lea.vmem %s2, %s271
        %s273 = smul.u32 16, %s24
        %v275 = vld [vmem:[%s272] sm:$0xf]
        %v276 = vld [vmem:[%s272 + $0x4] sm:$0xf]
        %v277 = vld [vmem:[%s266] sm:$0xff]
        %v278 = vld [vmem:[%s266 + $0x8] sm:$0xff]
        %v279 = vld [vmem:[%s266 + $0x10] sm:$0xff]
        %v280 = vld [vmem:[%s266 + $0x18] sm:$0xff]
        %v281 = vld [vmem:[%s266 + $0x20] sm:$0xff]
        %v282 = vld [vmem:[%s266 + $0x28] sm:$0xff]
        %v283 = vld [vmem:[%s266 + $0x30] sm:$0xff]
        %v284 = vld [vmem:[%s266 + $0x38] sm:$0xff]
        %v285 = vld [vmem:[%s266 + $0x40] sm:$0xff]
        %v286 = vld [vmem:[%s266 + $0x48] sm:$0xff]
        %v287 = vld [vmem:[%s266 + $0x50] sm:$0xff]
        %v288 = vld [vmem:[%s266 + $0x58] sm:$0xff]
        %v289 = vld [vmem:[%s266 + $0x60] sm:$0xff]
        %v290 = vld [vmem:[%s266 + $0x68] sm:$0xff]
        %v291 = vld [vmem:[%s266 + $0x70] sm:$0xff]
        %v292 = vld [vmem:[%s266 + $0x78] sm:$0xff]
        %v293 = vlaneseq
        %v294 = vand.u32 %v293, 127
        %v295 = vcvt.s32.f32 %v294
        %v296 = vld [vmem:[%s1] sm:$0x1]
        %v298 = vlaneseq
        %v299 = vshrl.u32 %v298, 7
        %v300 = vsub.s32 0, %v299
        %v301 = vrot.slane %v296, %v300
        %304 = vset.pattern.permute.xlu0 0
        %305 = vperm.xlu0 %304, %v277
        %v306 = vpop.permute.xlu0 %305
        %309 = vset.pattern.permute.xlu0 0
        %310 = vperm.xlu0 %309, %v278
        %v311 = vpop.permute.xlu0 %310
        %314 = vset.pattern.permute.xlu0 0
        %315 = vperm.xlu0 %314, %v279
        %v316 = vpop.permute.xlu0 %315
        %319 = vset.pattern.permute.xlu0 0
        %320 = vperm.xlu0 %319, %v280
        %v321 = vpop.permute.xlu0 %320
        %324 = vset.pattern.permute.xlu0 0
        %325 = vperm.xlu0 %324, %v281
        %v326 = vpop.permute.xlu0 %325
        %329 = vset.pattern.permute.xlu0 0
        %330 = vperm.xlu0 %329, %v282
        %v331 = vpop.permute.xlu0 %330
        %334 = vset.pattern.permute.xlu0 0
        %335 = vperm.xlu0 %334, %v283
        %v336 = vpop.permute.xlu0 %335
        %339 = vset.pattern.permute.xlu0 0
        %340 = vperm.xlu0 %339, %v284
        %v341 = vpop.permute.xlu0 %340
        %344 = vset.pattern.permute.xlu0 0
        %345 = vperm.xlu0 %344, %v285
        %v346 = vpop.permute.xlu0 %345
        %349 = vset.pattern.permute.xlu0 0
        %350 = vperm.xlu0 %349, %v286
        %v351 = vpop.permute.xlu0 %350
        %354 = vset.pattern.permute.xlu0 0
        %355 = vperm.xlu0 %354, %v287
        %v356 = vpop.permute.xlu0 %355
        %359 = vset.pattern.permute.xlu0 0
        %360 = vperm.xlu0 %359, %v288
        %v361 = vpop.permute.xlu0 %360
        %364 = vset.pattern.permute.xlu0 0
        %365 = vperm.xlu0 %364, %v289
        %v366 = vpop.permute.xlu0 %365
        %369 = vset.pattern.permute.xlu0 0
        %370 = vperm.xlu0 %369, %v290
        %v371 = vpop.permute.xlu0 %370
        %374 = vset.pattern.permute.xlu0 0
        %375 = vperm.xlu0 %374, %v291
        %v376 = vpop.permute.xlu0 %375
        %379 = vset.pattern.permute.xlu0 0
        %380 = vperm.xlu0 %379, %v292
        %v381 = vpop.permute.xlu0 %380
        %v383 = vsub.f32 %v295, %v306
        %v384 = vsub.f32 %v295, %v311
        %v385 = vsub.f32 %v295, %v316
        %v386 = vsub.f32 %v295, %v321
        %v387 = vsub.f32 %v295, %v326
        %v388 = vsub.f32 %v295, %v331
        %v389 = vsub.f32 %v295, %v336
        %v390 = vsub.f32 %v295, %v341
        %v391 = vsub.f32 %v295, %v346
        %v392 = vsub.f32 %v295, %v351
        %v393 = vsub.f32 %v295, %v356
        %v394 = vsub.f32 %v295, %v361
        %v395 = vsub.f32 %v295, %v366
        %v396 = vsub.f32 %v295, %v371
        %v397 = vsub.f32 %v295, %v376
        %v398 = vsub.f32 %v295, %v381
        %v399 = vand.u32 2147483647, %v383
        %v400 = vand.u32 2147483647, %v384
        %v401 = vand.u32 2147483647, %v385
        %v402 = vand.u32 2147483647, %v386
        %v403 = vand.u32 2147483647, %v387
        %v404 = vand.u32 2147483647, %v388
        %v405 = vand.u32 2147483647, %v389
        %v406 = vand.u32 2147483647, %v390
        %v407 = vand.u32 2147483647, %v391
        %v408 = vand.u32 2147483647, %v392
        %v409 = vand.u32 2147483647, %v393
        %v410 = vand.u32 2147483647, %v394
        %v411 = vand.u32 2147483647, %v395
        %v412 = vand.u32 2147483647, %v396
        %v413 = vand.u32 2147483647, %v397
        %v414 = vand.u32 2147483647, %v398
        %v415 = vsub.f32 1.0, %v399
        %v416 = vsub.f32 1.0, %v400
        %v417 = vsub.f32 1.0, %v401
        %v418 = vsub.f32 1.0, %v402
        %v419 = vsub.f32 1.0, %v403
        %v420 = vsub.f32 1.0, %v404
        %v421 = vsub.f32 1.0, %v405
        %v422 = vsub.f32 1.0, %v406
        %v423 = vsub.f32 1.0, %v407
        %v424 = vsub.f32 1.0, %v408
        %v425 = vsub.f32 1.0, %v409
        %v426 = vsub.f32 1.0, %v410
        %v427 = vsub.f32 1.0, %v411
        %v428 = vsub.f32 1.0, %v412
        %v429 = vsub.f32 1.0, %v413
        %v430 = vsub.f32 1.0, %v414
        %v431 = vmax.f32 %v415, 0.0
        %v432 = vmax.f32 %v416, 0.0
        %v433 = vmax.f32 %v417, 0.0
        %v434 = vmax.f32 %v418, 0.0
        %v435 = vmax.f32 %v419, 0.0
        %v436 = vmax.f32 %v420, 0.0
        %v437 = vmax.f32 %v421, 0.0
        %v438 = vmax.f32 %v422, 0.0
        %v439 = vmax.f32 %v423, 0.0
        %v440 = vmax.f32 %v424, 0.0
        %v441 = vmax.f32 %v425, 0.0
        %v442 = vmax.f32 %v426, 0.0
        %v443 = vmax.f32 %v427, 0.0
        %v444 = vmax.f32 %v428, 0.0
        %v445 = vmax.f32 %v429, 0.0
        %v446 = vmax.f32 %v430, 0.0
        %447 = vset.pattern.permute.xlu0 9
        %448 = vperm.xlu0 %447, %v277
        %v449 = vpop.permute.xlu0 %448
        %451 = vset.pattern.permute.xlu0 9
        %452 = vperm.xlu0 %451, %v278
        %v453 = vpop.permute.xlu0 %452
        %455 = vset.pattern.permute.xlu0 9
        %456 = vperm.xlu0 %455, %v279
        %v457 = vpop.permute.xlu0 %456
        %459 = vset.pattern.permute.xlu0 9
        %460 = vperm.xlu0 %459, %v280
        %v461 = vpop.permute.xlu0 %460
        %463 = vset.pattern.permute.xlu0 9
        %464 = vperm.xlu0 %463, %v281
        %v465 = vpop.permute.xlu0 %464
        %467 = vset.pattern.permute.xlu0 9
        %468 = vperm.xlu0 %467, %v282
        %v469 = vpop.permute.xlu0 %468
        %471 = vset.pattern.permute.xlu0 9
        %472 = vperm.xlu0 %471, %v283
        %v473 = vpop.permute.xlu0 %472
        %475 = vset.pattern.permute.xlu0 9
        %476 = vperm.xlu0 %475, %v284
        %v477 = vpop.permute.xlu0 %476
        %479 = vset.pattern.permute.xlu0 9
        %480 = vperm.xlu0 %479, %v285
        %v481 = vpop.permute.xlu0 %480
        %483 = vset.pattern.permute.xlu0 9
        %484 = vperm.xlu0 %483, %v286
        %v485 = vpop.permute.xlu0 %484
        %487 = vset.pattern.permute.xlu0 9
        %488 = vperm.xlu0 %487, %v287
        %v489 = vpop.permute.xlu0 %488
        %491 = vset.pattern.permute.xlu0 9
        %492 = vperm.xlu0 %491, %v288
        %v493 = vpop.permute.xlu0 %492
        %495 = vset.pattern.permute.xlu0 9
        %496 = vperm.xlu0 %495, %v289
        %v497 = vpop.permute.xlu0 %496
        %499 = vset.pattern.permute.xlu0 9
        %500 = vperm.xlu0 %499, %v290
        %v501 = vpop.permute.xlu0 %500
        %503 = vset.pattern.permute.xlu0 9
        %504 = vperm.xlu0 %503, %v291
        %v505 = vpop.permute.xlu0 %504
        %507 = vset.pattern.permute.xlu0 9
        %508 = vperm.xlu0 %507, %v292
        %v509 = vpop.permute.xlu0 %508
        %v511 = vsub.f32 %v301, %v449
        %v512 = vsub.f32 %v301, %v453
        %v513 = vsub.f32 %v301, %v457
        %v514 = vsub.f32 %v301, %v461
        %v515 = vsub.f32 %v301, %v465
        %v516 = vsub.f32 %v301, %v469
        %v517 = vsub.f32 %v301, %v473
        %v518 = vsub.f32 %v301, %v477
        %v519 = vsub.f32 %v301, %v481
        %v520 = vsub.f32 %v301, %v485
        %v521 = vsub.f32 %v301, %v489
        %v522 = vsub.f32 %v301, %v493
        %v523 = vsub.f32 %v301, %v497
        %v524 = vsub.f32 %v301, %v501
        %v525 = vsub.f32 %v301, %v505
        %v526 = vsub.f32 %v301, %v509
        %v527 = vand.u32 2147483647, %v511
        %v528 = vand.u32 2147483647, %v512
        %v529 = vand.u32 2147483647, %v513
        %v530 = vand.u32 2147483647, %v514
        %v531 = vand.u32 2147483647, %v515
        %v532 = vand.u32 2147483647, %v516
        %v533 = vand.u32 2147483647, %v517
        %v534 = vand.u32 2147483647, %v518
        %v535 = vand.u32 2147483647, %v519
        %v536 = vand.u32 2147483647, %v520
        %v537 = vand.u32 2147483647, %v521
        %v538 = vand.u32 2147483647, %v522
        %v539 = vand.u32 2147483647, %v523
        %v540 = vand.u32 2147483647, %v524
        %v541 = vand.u32 2147483647, %v525
        %v542 = vand.u32 2147483647, %v526
        %v543 = vsub.f32 1.0, %v527
        %v544 = vsub.f32 1.0, %v528
        %v545 = vsub.f32 1.0, %v529
        %v546 = vsub.f32 1.0, %v530
        %v547 = vsub.f32 1.0, %v531
        %v548 = vsub.f32 1.0, %v532
        %v549 = vsub.f32 1.0, %v533
        %v550 = vsub.f32 1.0, %v534
        %v551 = vsub.f32 1.0, %v535
        %v552 = vsub.f32 1.0, %v536
        %v553 = vsub.f32 1.0, %v537
        %v554 = vsub.f32 1.0, %v538
        %v555 = vsub.f32 1.0, %v539
        %v556 = vsub.f32 1.0, %v540
        %v557 = vsub.f32 1.0, %v541
        %v558 = vsub.f32 1.0, %v542
        %v559 = vmax.f32 %v543, 0.0
        %v560 = vmax.f32 %v544, 0.0
        %v561 = vmax.f32 %v545, 0.0
        %v562 = vmax.f32 %v546, 0.0
        %v563 = vmax.f32 %v547, 0.0
        %v564 = vmax.f32 %v548, 0.0
        %v565 = vmax.f32 %v549, 0.0
        %v566 = vmax.f32 %v550, 0.0
        %v567 = vmax.f32 %v551, 0.0
        %v568 = vmax.f32 %v552, 0.0
        %v569 = vmax.f32 %v553, 0.0
        %v570 = vmax.f32 %v554, 0.0
        %v571 = vmax.f32 %v555, 0.0
        %v572 = vmax.f32 %v556, 0.0
        %v573 = vmax.f32 %v557, 0.0
        %v574 = vmax.f32 %v558, 0.0
        %v575 = vpack.c.bf16 %v432, %v431
        %v576 = vpack.c.bf16 %v434, %v433
        %v577 = vpack.c.bf16 %v436, %v435
        %v578 = vpack.c.bf16 %v438, %v437
        %v579 = vpack.c.bf16 %v440, %v439
        %v580 = vpack.c.bf16 %v442, %v441
        %v581 = vpack.c.bf16 %v444, %v443
        %v582 = vpack.c.bf16 %v446, %v445
        %v585 = vunpack.c.l.b16 %v275
        %v586 = vunpack.c.l.b16 %v276
        %v587 = vpack.c.b16 %v586, %v585
        %vm589 = vcmask 130048
        %v591 = vsel %vm589, %v575, 0
        %v594 = vsel %vm589, %v576, 0
        %v597 = vsel %vm589, %v577, 0
        %v600 = vsel %vm589, %v578, 0
        %v603 = vsel %vm589, %v579, 0
        %v606 = vsel %vm589, %v580, 0
        %v609 = vsel %vm589, %v581, 0
        %v612 = vsel %vm589, %v582, 0
        %614 = vmatprep.subr.bf16.mxu0 0
        %615 = vmatpush1.bf16.msra.mxu0 %v587
        %616 = vmatprep.subr.bf16.mxu0 0
        %617 = vmatpush1.bf16.msra.mxu0 0
        %618 = vmatprep.subr.bf16.mxu0 0
        %619 = vmatpush1.bf16.msra.mxu0 0
        %620 = vmatprep.subr.bf16.mxu0 0
        %621 = vmatpush1.bf16.msra.mxu0 0
        %622 = vmatprep.subr.bf16.mxu0 0
        %623 = vmatpush1.bf16.msra.mxu0 0
        %624 = vmatprep.subr.bf16.mxu0 0
        %625 = vmatpush1.bf16.msra.mxu0 0
        %626 = vmatprep.subr.bf16.mxu0 0
        %627 = vmatpush1.bf16.msra.mxu0 0
        %628 = vmatprep.subr.bf16.mxu0 0
        %629 = vmatpush1.bf16.msra.mxu0 0
        %630 = vmatprep.subr.bf16.mxu0 0
        %631 = vmatpush1.bf16.msra.mxu0 0
        %632 = vmatprep.subr.bf16.mxu0 0
        %633 = vmatpush1.bf16.msra.mxu0 0
        %634 = vmatprep.subr.bf16.mxu0 0
        %635 = vmatpush1.bf16.msra.mxu0 0
        %636 = vmatprep.subr.bf16.mxu0 0
        %637 = vmatpush1.bf16.msra.mxu0 0
        %638 = vmatprep.subr.bf16.mxu0 0
        %639 = vmatpush1.bf16.msra.mxu0 0
        %640 = vmatprep.subr.bf16.mxu0 0
        %641 = vmatpush1.bf16.msra.mxu0 0
        %642 = vmatprep.subr.bf16.mxu0 0
        %643 = vmatpush1.bf16.msra.mxu0 0
        %644 = vmatprep.subr.bf16.mxu0 0
        %645 = vmatpush1.bf16.msra.mxu0 0
        %646 = vmatprep.mubr.bf16.mxu0 0
        %647 = vmatmul.mubr.bf16.gmra.mrb[0].mxu0 %v591
        %v648 = vpop.f32.mrb[0].mxu0
        %v649 = vadd.f32 0.0, %v648
        %v650 = vpop.f32.mrb[0].mxu0
        %v651 = vpop.f32.mrb[0].mxu0
        %v652 = vadd.f32 0.0, %v651
        %v653 = vpop.f32.mrb[0].mxu0
        %654 = vmatprep.mubr.bf16.mxu0 0
        %655 = vmatmul.mubr.bf16.gmra.mrb[0].mxu0 %v594
        %v656 = vpop.f32.mrb[0].mxu0
        %v657 = vadd.f32 0.0, %v656
        %v658 = vpop.f32.mrb[0].mxu0
        %v659 = vpop.f32.mrb[0].mxu0
        %v660 = vadd.f32 0.0, %v659
        %v661 = vpop.f32.mrb[0].mxu0
        %662 = vmatprep.mubr.bf16.mxu0 0
        %663 = vmatmul.mubr.bf16.gmra.mrb[0].mxu0 %v597
        %v664 = vpop.f32.mrb[0].mxu0
        %v665 = vadd.f32 0.0, %v664
        %v666 = vpop.f32.mrb[0].mxu0
        %v667 = vpop.f32.mrb[0].mxu0
        %v668 = vadd.f32 0.0, %v667
        %v669 = vpop.f32.mrb[0].mxu0
        %670 = vmatprep.mubr.bf16.mxu0 0
        %671 = vmatmul.mubr.bf16.gmra.mrb[0].mxu0 %v600
        %v672 = vpop.f32.mrb[0].mxu0
        %v673 = vadd.f32 0.0, %v672
        %v674 = vpop.f32.mrb[0].mxu0
        %v675 = vpop.f32.mrb[0].mxu0
        %v676 = vadd.f32 0.0, %v675
        %v677 = vpop.f32.mrb[0].mxu0
        %678 = vmatprep.mubr.bf16.mxu0 0
        %679 = vmatmul.mubr.bf16.gmra.mrb[0].mxu0 %v603
        %v680 = vpop.f32.mrb[0].mxu0
        %v681 = vadd.f32 0.0, %v680
        %v682 = vpop.f32.mrb[0].mxu0
        %v683 = vpop.f32.mrb[0].mxu0
        %v684 = vadd.f32 0.0, %v683
        %v685 = vpop.f32.mrb[0].mxu0
        %686 = vmatprep.mubr.bf16.mxu0 0
        %687 = vmatmul.mubr.bf16.gmra.mrb[0].mxu0 %v606
        %v688 = vpop.f32.mrb[0].mxu0
        %v689 = vadd.f32 0.0, %v688
        %v690 = vpop.f32.mrb[0].mxu0
        %v691 = vpop.f32.mrb[0].mxu0
        %v692 = vadd.f32 0.0, %v691
        %v693 = vpop.f32.mrb[0].mxu0
        %694 = vmatprep.mubr.bf16.mxu0 0
        %695 = vmatmul.mubr.bf16.gmra.mrb[0].mxu0 %v609
        %v696 = vpop.f32.mrb[0].mxu0
        %v697 = vadd.f32 0.0, %v696
        %v698 = vpop.f32.mrb[0].mxu0
        %v699 = vpop.f32.mrb[0].mxu0
        %v700 = vadd.f32 0.0, %v699
        %v701 = vpop.f32.mrb[0].mxu0
        %702 = vmatprep.mubr.bf16.mxu0 0
        %703 = vmatmul.mubr.bf16.gmra.mrb[0].mxu0 %v612
        %v704 = vpop.f32.mrb[0].mxu0
        %v705 = vadd.f32 0.0, %v704
        %v706 = vpop.f32.mrb[0].mxu0
        %v707 = vpop.f32.mrb[0].mxu0
        %v708 = vadd.f32 0.0, %v707
        %v709 = vpop.f32.mrb[0].mxu0
        %710 = vdwg.mxu0
        %v711 = vmul.f32 %v559, %v649
        %v712 = vmul.f32 %v560, %v652
        %v713 = vmul.f32 %v561, %v657
        %v714 = vmul.f32 %v562, %v660
        %v715 = vmul.f32 %v563, %v665
        %v716 = vmul.f32 %v564, %v668
        %v717 = vmul.f32 %v565, %v673
        %v718 = vmul.f32 %v566, %v676
        %v719 = vmul.f32 %v567, %v681
        %v720 = vmul.f32 %v568, %v684
        %v721 = vmul.f32 %v569, %v689
        %v722 = vmul.f32 %v570, %v692
        %v723 = vmul.f32 %v571, %v697
        %v724 = vmul.f32 %v572, %v700
        %v725 = vmul.f32 %v573, %v705
        %v726 = vmul.f32 %v574, %v708
        %v727 = vpack.c.bf16 %v712, %v711
        %v728 = vpack.c.bf16 %v714, %v713
        %v729 = vpack.c.bf16 %v716, %v715
        %v730 = vpack.c.bf16 %v718, %v717
        %v731 = vpack.c.bf16 %v720, %v719
        %v732 = vpack.c.bf16 %v722, %v721
        %v733 = vpack.c.bf16 %v724, %v723
        %v734 = vpack.c.bf16 %v726, %v725
        %v735 = vld [vmem:[%s3] sm:$0xf]
        %v736 = vld [vmem:[%s3 + $0x4] sm:$0xf]
        %v737 = vld [vmem:[%s3 + $0x8] sm:$0xf]
        %v738 = vld [vmem:[%s3 + $0xc] sm:$0xf]
        %v739 = vld [vmem:[%s3 + $0x10] sm:$0xf]
        %v740 = vld [vmem:[%s3 + $0x14] sm:$0xf]
        %v741 = vld [vmem:[%s3 + $0x18] sm:$0xf]
        %v742 = vld [vmem:[%s3 + $0x1c] sm:$0xf]
        %v743 = vld [vmem:[%s3 + $0x20] sm:$0xf]
        %v744 = vld [vmem:[%s3 + $0x24] sm:$0xf]
        %v745 = vld [vmem:[%s3 + $0x28] sm:$0xf]
        %v746 = vld [vmem:[%s3 + $0x2c] sm:$0xf]
        %v747 = vld [vmem:[%s3 + $0x30] sm:$0xf]
        %v748 = vld [vmem:[%s3 + $0x34] sm:$0xf]
        %v749 = vld [vmem:[%s3 + $0x38] sm:$0xf]
        %v750 = vld [vmem:[%s3 + $0x3c] sm:$0xf]
        %751 = vset.pattern.permute.xlu0 1
        %752 = vperm.xlu0 %751, %v277
        %v753 = vpop.permute.xlu0 %752
        %755 = vset.pattern.permute.xlu0 1
        %756 = vperm.xlu0 %755, %v278
        %v757 = vpop.permute.xlu0 %756
        %759 = vset.pattern.permute.xlu0 1
        %760 = vperm.xlu0 %759, %v279
        %v761 = vpop.permute.xlu0 %760
        %763 = vset.pattern.permute.xlu0 1
        %764 = vperm.xlu0 %763, %v280
        %v765 = vpop.permute.xlu0 %764
        %767 = vset.pattern.permute.xlu0 1
        %768 = vperm.xlu0 %767, %v281
        %v769 = vpop.permute.xlu0 %768
        %771 = vset.pattern.permute.xlu0 1
        %772 = vperm.xlu0 %771, %v282
        %v773 = vpop.permute.xlu0 %772
        %775 = vset.pattern.permute.xlu0 1
        %776 = vperm.xlu0 %775, %v283
        %v777 = vpop.permute.xlu0 %776
        %779 = vset.pattern.permute.xlu0 1
        %780 = vperm.xlu0 %779, %v284
        %v781 = vpop.permute.xlu0 %780
        %783 = vset.pattern.permute.xlu0 1
        %784 = vperm.xlu0 %783, %v285
        %v785 = vpop.permute.xlu0 %784
        %787 = vset.pattern.permute.xlu0 1
        %788 = vperm.xlu0 %787, %v286
        %v789 = vpop.permute.xlu0 %788
        %791 = vset.pattern.permute.xlu0 1
        %792 = vperm.xlu0 %791, %v287
        %v793 = vpop.permute.xlu0 %792
        %795 = vset.pattern.permute.xlu0 1
        %796 = vperm.xlu0 %795, %v288
        %v797 = vpop.permute.xlu0 %796
        %799 = vset.pattern.permute.xlu0 1
        %800 = vperm.xlu0 %799, %v289
        %v801 = vpop.permute.xlu0 %800
        %803 = vset.pattern.permute.xlu0 1
        %804 = vperm.xlu0 %803, %v290
        %v805 = vpop.permute.xlu0 %804
        %807 = vset.pattern.permute.xlu0 1
        %808 = vperm.xlu0 %807, %v291
        %v809 = vpop.permute.xlu0 %808
        %811 = vset.pattern.permute.xlu0 1
        %812 = vperm.xlu0 %811, %v292
        %v813 = vpop.permute.xlu0 %812
        %v815 = vsub.f32 %v295, %v753
        %v816 = vsub.f32 %v295, %v757
        %v817 = vsub.f32 %v295, %v761
        %v818 = vsub.f32 %v295, %v765
        %v819 = vsub.f32 %v295, %v769
        %v820 = vsub.f32 %v295, %v773
        %v821 = vsub.f32 %v295, %v777
        %v822 = vsub.f32 %v295, %v781
        %v823 = vsub.f32 %v295, %v785
        %v824 = vsub.f32 %v295, %v789
        %v825 = vsub.f32 %v295, %v793
        %v826 = vsub.f32 %v295, %v797
        %v827 = vsub.f32 %v295, %v801
        %v828 = vsub.f32 %v295, %v805
        %v829 = vsub.f32 %v295, %v809
        %v830 = vsub.f32 %v295, %v813
        %v831 = vand.u32 2147483647, %v815
        %v832 = vand.u32 2147483647, %v816
        %v833 = vand.u32 2147483647, %v817
        %v834 = vand.u32 2147483647, %v818
        %v835 = vand.u32 2147483647, %v819
        %v836 = vand.u32 2147483647, %v820
        %v837 = vand.u32 2147483647, %v821
        %v838 = vand.u32 2147483647, %v822
        %v839 = vand.u32 2147483647, %v823
        %v840 = vand.u32 2147483647, %v824
        %v841 = vand.u32 2147483647, %v825
        %v842 = vand.u32 2147483647, %v826
        %v843 = vand.u32 2147483647, %v827
        %v844 = vand.u32 2147483647, %v828
        %v845 = vand.u32 2147483647, %v829
        %v846 = vand.u32 2147483647, %v830
        %v847 = vsub.f32 1.0, %v831
        %v848 = vsub.f32 1.0, %v832
        %v849 = vsub.f32 1.0, %v833
        %v850 = vsub.f32 1.0, %v834
        %v851 = vsub.f32 1.0, %v835
        %v852 = vsub.f32 1.0, %v836
        %v853 = vsub.f32 1.0, %v837
        %v854 = vsub.f32 1.0, %v838
        %v855 = vsub.f32 1.0, %v839
        %v856 = vsub.f32 1.0, %v840
        %v857 = vsub.f32 1.0, %v841
        %v858 = vsub.f32 1.0, %v842
        %v859 = vsub.f32 1.0, %v843
        %v860 = vsub.f32 1.0, %v844
        %v861 = vsub.f32 1.0, %v845
        %v862 = vsub.f32 1.0, %v846
        %v863 = vmax.f32 %v847, 0.0
        %v864 = vmax.f32 %v848, 0.0
        %v865 = vmax.f32 %v849, 0.0
        %v866 = vmax.f32 %v850, 0.0
        %v867 = vmax.f32 %v851, 0.0
        %v868 = vmax.f32 %v852, 0.0
        %v869 = vmax.f32 %v853, 0.0
        %v870 = vmax.f32 %v854, 0.0
        %v871 = vmax.f32 %v855, 0.0
        %v872 = vmax.f32 %v856, 0.0
        %v873 = vmax.f32 %v857, 0.0
        %v874 = vmax.f32 %v858, 0.0
        %v875 = vmax.f32 %v859, 0.0
        %v876 = vmax.f32 %v860, 0.0
        %v877 = vmax.f32 %v861, 0.0
        %v878 = vmax.f32 %v862, 0.0
        %879 = vset.pattern.permute.xlu0 10
        %880 = vperm.xlu0 %879, %v277
        %v881 = vpop.permute.xlu0 %880
        %883 = vset.pattern.permute.xlu0 10
        %884 = vperm.xlu0 %883, %v278
        %v885 = vpop.permute.xlu0 %884
        %887 = vset.pattern.permute.xlu0 10
        %888 = vperm.xlu0 %887, %v279
        %v889 = vpop.permute.xlu0 %888
        %891 = vset.pattern.permute.xlu0 10
        %892 = vperm.xlu0 %891, %v280
        %v893 = vpop.permute.xlu0 %892
        %895 = vset.pattern.permute.xlu0 10
        %896 = vperm.xlu0 %895, %v281
        %v897 = vpop.permute.xlu0 %896
        %899 = vset.pattern.permute.xlu0 10
        %900 = vperm.xlu0 %899, %v282
        %v901 = vpop.permute.xlu0 %900
        %903 = vset.pattern.permute.xlu0 10
        %904 = vperm.xlu0 %903, %v283
        %v905 = vpop.permute.xlu0 %904
        %907 = vset.pattern.permute.xlu0 10
        %908 = vperm.xlu0 %907, %v284
        %v909 = vpop.permute.xlu0 %908
        %911 = vset.pattern.permute.xlu0 10
        %912 = vperm.xlu0 %911, %v285
        %v913 = vpop.permute.xlu0 %912
        %915 = vset.pattern.permute.xlu0 10
        %916 = vperm.xlu0 %915, %v286
        %v917 = vpop.permute.xlu0 %916
        %919 = vset.pattern.permute.xlu0 10
        %920 = vperm.xlu0 %919, %v287
        %v921 = vpop.permute.xlu0 %920
        %923 = vset.pattern.permute.xlu0 10
        %924 = vperm.xlu0 %923, %v288
        %v925 = vpop.permute.xlu0 %924
        %927 = vset.pattern.permute.xlu0 10
        %928 = vperm.xlu0 %927, %v289
        %v929 = vpop.permute.xlu0 %928
        %931 = vset.pattern.permute.xlu0 10
        %932 = vperm.xlu0 %931, %v290
        %v933 = vpop.permute.xlu0 %932
        %935 = vset.pattern.permute.xlu0 10
        %936 = vperm.xlu0 %935, %v291
        %v937 = vpop.permute.xlu0 %936
        %939 = vset.pattern.permute.xlu0 10
        %940 = vperm.xlu0 %939, %v292
        %v941 = vpop.permute.xlu0 %940
        %v943 = vsub.f32 %v301, %v881
        %v944 = vsub.f32 %v301, %v885
        %v945 = vsub.f32 %v301, %v889
        %v946 = vsub.f32 %v301, %v893
        %v947 = vsub.f32 %v301, %v897
        %v948 = vsub.f32 %v301, %v901
        %v949 = vsub.f32 %v301, %v905
        %v950 = vsub.f32 %v301, %v909
        %v951 = vsub.f32 %v301, %v913
        %v952 = vsub.f32 %v301, %v917
        %v953 = vsub.f32 %v301, %v921
        %v954 = vsub.f32 %v301, %v925
        %v955 = vsub.f32 %v301, %v929
        %v956 = vsub.f32 %v301, %v933
        %v957 = vsub.f32 %v301, %v937
        %v958 = vsub.f32 %v301, %v941
        %v959 = vand.u32 2147483647, %v943
        %v960 = vand.u32 2147483647, %v944
        %v961 = vand.u32 2147483647, %v945
        %v962 = vand.u32 2147483647, %v946
        %v963 = vand.u32 2147483647, %v947
        %v964 = vand.u32 2147483647, %v948
        %v965 = vand.u32 2147483647, %v949
        %v966 = vand.u32 2147483647, %v950
        %v967 = vand.u32 2147483647, %v951
        %v968 = vand.u32 2147483647, %v952
        %v969 = vand.u32 2147483647, %v953
        %v970 = vand.u32 2147483647, %v954
        %v971 = vand.u32 2147483647, %v955
        %v972 = vand.u32 2147483647, %v956
        %v973 = vand.u32 2147483647, %v957
        %v974 = vand.u32 2147483647, %v958
        %v975 = vsub.f32 1.0, %v959
        %v976 = vsub.f32 1.0, %v960
        %v977 = vsub.f32 1.0, %v961
        %v978 = vsub.f32 1.0, %v962
        %v979 = vsub.f32 1.0, %v963
        %v980 = vsub.f32 1.0, %v964
        %v981 = vsub.f32 1.0, %v965
        %v982 = vsub.f32 1.0, %v966
        %v983 = vsub.f32 1.0, %v967
        %v984 = vsub.f32 1.0, %v968
        %v985 = vsub.f32 1.0, %v969
        %v986 = vsub.f32 1.0, %v970
        %v987 = vsub.f32 1.0, %v971
        %v988 = vsub.f32 1.0, %v972
        %v989 = vsub.f32 1.0, %v973
        %v990 = vsub.f32 1.0, %v974
        %v991 = vmax.f32 %v975, 0.0
        %v992 = vmax.f32 %v976, 0.0
        %v993 = vmax.f32 %v977, 0.0
        %v994 = vmax.f32 %v978, 0.0
        %v995 = vmax.f32 %v979, 0.0
        %v996 = vmax.f32 %v980, 0.0
        %v997 = vmax.f32 %v981, 0.0
        %v998 = vmax.f32 %v982, 0.0
        %v999 = vmax.f32 %v983, 0.0
        %v1000 = vmax.f32 %v984, 0.0
        %v1001 = vmax.f32 %v985, 0.0
        %v1002 = vmax.f32 %v986, 0.0
        %v1003 = vmax.f32 %v987, 0.0
        %v1004 = vmax.f32 %v988, 0.0
        %v1005 = vmax.f32 %v989, 0.0
        %v1006 = vmax.f32 %v990, 0.0
        %v1007 = vpack.c.bf16 %v864, %v863
        %v1008 = vpack.c.bf16 %v866, %v865
        %v1009 = vpack.c.bf16 %v868, %v867
        %v1010 = vpack.c.bf16 %v870, %v869
        %v1011 = vpack.c.bf16 %v872, %v871
        %v1012 = vpack.c.bf16 %v874, %v873
        %v1013 = vpack.c.bf16 %v876, %v875
        %v1014 = vpack.c.bf16 %v878, %v877
        %v1016 = vsel %vm589, %v1007, 0
        %v1019 = vsel %vm589, %v1008, 0
        %v1022 = vsel %vm589, %v1009, 0
        %v1025 = vsel %vm589, %v1010, 0
        %v1028 = vsel %vm589, %v1011, 0
        %v1031 = vsel %vm589, %v1012, 0
        %v1034 = vsel %vm589, %v1013, 0
        %v1037 = vsel %vm589, %v1014, 0
        %1039 = vmatprep.subr.bf16.mxu0 0
        %1040 = vmatpush1.bf16.msra.mxu0 %v587
        %1041 = vmatprep.subr.bf16.mxu0 0
        %1042 = vmatpush1.bf16.msra.mxu0 0
        %1043 = vmatprep.subr.bf16.mxu0 0
        %1044 = vmatpush1.bf16.msra.mxu0 0
        %1045 = vmatprep.subr.bf16.mxu0 0
        %1046 = vmatpush1.bf16.msra.mxu0 0
        %1047 = vmatprep.subr.bf16.mxu0 0
        %1048 = vmatpush1.bf16.msra.mxu0 0
        %1049 = vmatprep.subr.bf16.mxu0 0
        %1050 = vmatpush1.bf16.msra.mxu0 0
        %1051 = vmatprep.subr.bf16.mxu0 0
        %1052 = vmatpush1.bf16.msra.mxu0 0
        %1053 = vmatprep.subr.bf16.mxu0 0
        %1054 = vmatpush1.bf16.msra.mxu0 0
        %1055 = vmatprep.subr.bf16.mxu0 0
        %1056 = vmatpush1.bf16.msra.mxu0 0
        %1057 = vmatprep.subr.bf16.mxu0 0
        %1058 = vmatpush1.bf16.msra.mxu0 0
        %1059 = vmatprep.subr.bf16.mxu0 0
        %1060 = vmatpush1.bf16.msra.mxu0 0
        %1061 = vmatprep.subr.bf16.mxu0 0
        %1062 = vmatpush1.bf16.msra.mxu0 0
        %1063 = vmatprep.subr.bf16.mxu0 0
        %1064 = vmatpush1.bf16.msra.mxu0 0
        %1065 = vmatprep.subr.bf16.mxu0 0
        %1066 = vmatpush1.bf16.msra.mxu0 0
        %1067 = vmatprep.subr.bf16.mxu0 0
        %1068 = vmatpush1.bf16.msra.mxu0 0
        %1069 = vmatprep.subr.bf16.mxu0 0
        %1070 = vmatpush1.bf16.msra.mxu0 0
        %1071 = vmatprep.mubr.bf16.mxu0 0
        %1072 = vmatmul.mubr.bf16.gmra.mrb[0].mxu0 %v1016
        %v1073 = vpop.f32.mrb[0].mxu0
        %v1074 = vadd.f32 0.0, %v1073
        %v1075 = vpop.f32.mrb[0].mxu0
        %v1076 = vpop.f32.mrb[0].mxu0
        %v1077 = vadd.f32 0.0, %v1076
        %v1078 = vpop.f32.mrb[0].mxu0
        %1079 = vmatprep.mubr.bf16.mxu0 0
        %1080 = vmatmul.mubr.bf16.gmra.mrb[0].mxu0 %v1019
        %v1081 = vpop.f32.mrb[0].mxu0
        %v1082 = vadd.f32 0.0, %v1081
        %v1083 = vpop.f32.mrb[0].mxu0
        %v1084 = vpop.f32.mrb[0].mxu0
        %v1085 = vadd.f32 0.0, %v1084
        %v1086 = vpop.f32.mrb[0].mxu0
        %1087 = vmatprep.mubr.bf16.mxu0 0
        %1088 = vmatmul.mubr.bf16.gmra.mrb[0].mxu0 %v1022
        %v1089 = vpop.f32.mrb[0].mxu0
        %v1090 = vadd.f32 0.0, %v1089
        %v1091 = vpop.f32.mrb[0].mxu0
        %v1092 = vpop.f32.mrb[0].mxu0
        %v1093 = vadd.f32 0.0, %v1092
        %v1094 = vpop.f32.mrb[0].mxu0
        %1095 = vmatprep.mubr.bf16.mxu0 0
        %1096 = vmatmul.mubr.bf16.gmra.mrb[0].mxu0 %v1025
        %v1097 = vpop.f32.mrb[0].mxu0
        %v1098 = vadd.f32 0.0, %v1097
        %v1099 = vpop.f32.mrb[0].mxu0
        %v1100 = vpop.f32.mrb[0].mxu0
        %v1101 = vadd.f32 0.0, %v1100
        %v1102 = vpop.f32.mrb[0].mxu0
        %1103 = vmatprep.mubr.bf16.mxu0 0
        %1104 = vmatmul.mubr.bf16.gmra.mrb[0].mxu0 %v1028
        %v1105 = vpop.f32.mrb[0].mxu0
        %v1106 = vadd.f32 0.0, %v1105
        %v1107 = vpop.f32.mrb[0].mxu0
        %v1108 = vpop.f32.mrb[0].mxu0
        %v1109 = vadd.f32 0.0, %v1108
        %v1110 = vpop.f32.mrb[0].mxu0
        %1111 = vmatprep.mubr.bf16.mxu0 0
        %1112 = vmatmul.mubr.bf16.gmra.mrb[0].mxu0 %v1031
        %v1113 = vpop.f32.mrb[0].mxu0
        %v1114 = vadd.f32 0.0, %v1113
        %v1115 = vpop.f32.mrb[0].mxu0
        %v1116 = vpop.f32.mrb[0].mxu0
        %v1117 = vadd.f32 0.0, %v1116
        %v1118 = vpop.f32.mrb[0].mxu0
        %1119 = vmatprep.mubr.bf16.mxu0 0
        %1120 = vmatmul.mubr.bf16.gmra.mrb[0].mxu0 %v1034
        %v1121 = vpop.f32.mrb[0].mxu0
        %v1122 = vadd.f32 0.0, %v1121
        %v1123 = vpop.f32.mrb[0].mxu0
        %v1124 = vpop.f32.mrb[0].mxu0
        %v1125 = vadd.f32 0.0, %v1124
        %v1126 = vpop.f32.mrb[0].mxu0
        %1127 = vmatprep.mubr.bf16.mxu0 0
        %1128 = vmatmul.mubr.bf16.gmra.mrb[0].mxu0 %v1037
        %v1129 = vpop.f32.mrb[0].mxu0
        %v1130 = vadd.f32 0.0, %v1129
        %v1131 = vpop.f32.mrb[0].mxu0
        %v1132 = vpop.f32.mrb[0].mxu0
        %v1133 = vadd.f32 0.0, %v1132
        %v1134 = vpop.f32.mrb[0].mxu0
        %1135 = vdwg.mxu0
        %v1136 = vmul.f32 %v991, %v1074
        %v1137 = vmul.f32 %v992, %v1077
        %v1138 = vmul.f32 %v993, %v1082
        %v1139 = vmul.f32 %v994, %v1085
        %v1140 = vmul.f32 %v995, %v1090
        %v1141 = vmul.f32 %v996, %v1093
        %v1142 = vmul.f32 %v997, %v1098
        %v1143 = vmul.f32 %v998, %v1101
        %v1144 = vmul.f32 %v999, %v1106
        %v1145 = vmul.f32 %v1000, %v1109
        %v1146 = vmul.f32 %v1001, %v1114
        %v1147 = vmul.f32 %v1002, %v1117
        %v1148 = vmul.f32 %v1003, %v1122
        %v1149 = vmul.f32 %v1004, %v1125
        %v1150 = vmul.f32 %v1005, %v1130
        %v1151 = vmul.f32 %v1006, %v1133
        %v1152 = vpack.c.bf16 %v1137, %v1136
        %v1153 = vpack.c.bf16 %v1139, %v1138
        %v1154 = vpack.c.bf16 %v1141, %v1140
        %v1155 = vpack.c.bf16 %v1143, %v1142
        %v1156 = vpack.c.bf16 %v1145, %v1144
        %v1157 = vpack.c.bf16 %v1147, %v1146
        %v1158 = vpack.c.bf16 %v1149, %v1148
        %v1159 = vpack.c.bf16 %v1151, %v1150
        %v1160 = vld [vmem:[%s3 + $0x40] sm:$0xf]
        %v1161 = vld [vmem:[%s3 + $0x44] sm:$0xf]
        %v1162 = vld [vmem:[%s3 + $0x48] sm:$0xf]
        %v1163 = vld [vmem:[%s3 + $0x4c] sm:$0xf]
        %v1164 = vld [vmem:[%s3 + $0x50] sm:$0xf]
        %v1165 = vld [vmem:[%s3 + $0x54] sm:$0xf]
        %v1166 = vld [vmem:[%s3 + $0x58] sm:$0xf]
        %v1167 = vld [vmem:[%s3 + $0x5c] sm:$0xf]
        %v1168 = vld [vmem:[%s3 + $0x60] sm:$0xf]
        %v1169 = vld [vmem:[%s3 + $0x64] sm:$0xf]
        %v1170 = vld [vmem:[%s3 + $0x68] sm:$0xf]
        %v1171 = vld [vmem:[%s3 + $0x6c] sm:$0xf]
        %v1172 = vld [vmem:[%s3 + $0x70] sm:$0xf]
        %v1173 = vld [vmem:[%s3 + $0x74] sm:$0xf]
        %v1174 = vld [vmem:[%s3 + $0x78] sm:$0xf]
        %v1175 = vld [vmem:[%s3 + $0x7c] sm:$0xf]
        %v1192 = vunpack.c.l.b16 %v1160
        %v1193 = vunpack.c.l.b16 %v1161
        %v1194 = vunpack.c.l.b16 %v1162
        %v1195 = vunpack.c.l.b16 %v1163
        %v1196 = vunpack.c.l.b16 %v1164
        %v1197 = vunpack.c.l.b16 %v1165
        %v1198 = vunpack.c.l.b16 %v1166
        %v1199 = vunpack.c.l.b16 %v1167
        %v1200 = vunpack.c.l.b16 %v1168
        %v1201 = vunpack.c.l.b16 %v1169
        %v1202 = vunpack.c.l.b16 %v1170
        %v1203 = vunpack.c.l.b16 %v1171
        %v1204 = vunpack.c.l.b16 %v1172
        %v1205 = vunpack.c.l.b16 %v1173
        %v1206 = vunpack.c.l.b16 %v1174
        %v1207 = vunpack.c.l.b16 %v1175
        %v1208 = vpack.c.b16 %v1193, %v1192
        %v1209 = vpack.c.b16 %v1195, %v1194
        %v1210 = vpack.c.b16 %v1197, %v1196
        %v1211 = vpack.c.b16 %v1199, %v1198
        %v1212 = vpack.c.b16 %v1201, %v1200
        %v1213 = vpack.c.b16 %v1203, %v1202
        %v1214 = vpack.c.b16 %v1205, %v1204
        %v1215 = vpack.c.b16 %v1207, %v1206
        %1224 = vmatprep.subr.bf16.mxu0 0
        %1225 = vmatpush1.bf16.msra.mxu0 %v1208
        %1226 = vmatprep.subr.bf16.mxu0 0
        %1227 = vmatpush1.bf16.msra.mxu0 %v1209
        %1228 = vmatprep.subr.bf16.mxu0 0
        %1229 = vmatpush1.bf16.msra.mxu0 %v1210
        %1230 = vmatprep.subr.bf16.mxu0 0
        %1231 = vmatpush1.bf16.msra.mxu0 %v1211
        %1232 = vmatprep.subr.bf16.mxu0 0
        %1233 = vmatpush1.bf16.msra.mxu0 %v1212
        %1234 = vmatprep.subr.bf16.mxu0 0
        %1235 = vmatpush1.bf16.msra.mxu0 %v1213
        %1236 = vmatprep.subr.bf16.mxu0 0
        %1237 = vmatpush1.bf16.msra.mxu0 %v1214
        %1238 = vmatprep.subr.bf16.mxu0 0
        %1239 = vmatpush1.bf16.msra.mxu0 %v1215
        %1240 = vmatprep.subr.bf16.mxu0 0
        %1241 = vmatpush1.bf16.msra.mxu0 0
        %1242 = vmatprep.subr.bf16.mxu0 0
        %1243 = vmatpush1.bf16.msra.mxu0 0
        %1244 = vmatprep.subr.bf16.mxu0 0
        %1245 = vmatpush1.bf16.msra.mxu0 0
        %1246 = vmatprep.subr.bf16.mxu0 0
        %1247 = vmatpush1.bf16.msra.mxu0 0
        %1248 = vmatprep.subr.bf16.mxu0 0
        %1249 = vmatpush1.bf16.msra.mxu0 0
        %1250 = vmatprep.subr.bf16.mxu0 0
        %1251 = vmatpush1.bf16.msra.mxu0 0
        %1252 = vmatprep.subr.bf16.mxu0 0
        %1253 = vmatpush1.bf16.msra.mxu0 0
        %1254 = vmatprep.subr.bf16.mxu0 0
        %1255 = vmatpush1.bf16.msra.mxu0 0
        %1256 = vmatprep.mubr.bf16.mxu0 0
        %1257 = vmatmul.mubr.bf16.gmra.mrb[0].mxu0 %v1152
        %v1258 = vpop.f32.mrb[0].mxu0
        %v1259 = vadd.f32 0.0, %v1258
        %v1260 = vpop.f32.mrb[0].mxu0
        %v1261 = vpop.f32.mrb[0].mxu0
        %v1262 = vadd.f32 0.0, %v1261
        %v1263 = vpop.f32.mrb[0].mxu0
        %1264 = vmatprep.mubr.bf16.mxu0 0
        %1265 = vmatmul.mubr.bf16.gmra.mrb[0].mxu0 %v1153
        %v1266 = vpop.f32.mrb[0].mxu0
        %v1267 = vadd.f32 0.0, %v1266
        %v1268 = vpop.f32.mrb[0].mxu0
        %v1269 = vpop.f32.mrb[0].mxu0
        %v1270 = vadd.f32 0.0, %v1269
        %v1271 = vpop.f32.mrb[0].mxu0
        %1272 = vmatprep.mubr.bf16.mxu0 0
        %1273 = vmatmul.mubr.bf16.gmra.mrb[0].mxu0 %v1154
        %v1274 = vpop.f32.mrb[0].mxu0
        %v1275 = vadd.f32 0.0, %v1274
        %v1276 = vpop.f32.mrb[0].mxu0
        %v1277 = vpop.f32.mrb[0].mxu0
        %v1278 = vadd.f32 0.0, %v1277
        %v1279 = vpop.f32.mrb[0].mxu0
        %1280 = vmatprep.mubr.bf16.mxu0 0
        %1281 = vmatmul.mubr.bf16.gmra.mrb[0].mxu0 %v1155
        %v1282 = vpop.f32.mrb[0].mxu0
        %v1283 = vadd.f32 0.0, %v1282
        %v1284 = vpop.f32.mrb[0].mxu0
        %v1285 = vpop.f32.mrb[0].mxu0
        %v1286 = vadd.f32 0.0, %v1285
        %v1287 = vpop.f32.mrb[0].mxu0
        %1288 = vmatprep.mubr.bf16.mxu0 0
        %1289 = vmatmul.mubr.bf16.gmra.mrb[0].mxu0 %v1156
        %v1290 = vpop.f32.mrb[0].mxu0
        %v1291 = vadd.f32 0.0, %v1290
        %v1292 = vpop.f32.mrb[0].mxu0
        %v1293 = vpop.f32.mrb[0].mxu0
        %v1294 = vadd.f32 0.0, %v1293
        %v1295 = vpop.f32.mrb[0].mxu0
        %1296 = vmatprep.mubr.bf16.mxu0 0
        %1297 = vmatmul.mubr.bf16.gmra.mrb[0].mxu0 %v1157
        %v1298 = vpop.f32.mrb[0].mxu0
        %v1299 = vadd.f32 0.0, %v1298
        %v1300 = vpop.f32.mrb[0].mxu0
        %v1301 = vpop.f32.mrb[0].mxu0
        %v1302 = vadd.f32 0.0, %v1301
        %v1303 = vpop.f32.mrb[0].mxu0
        %1304 = vmatprep.mubr.bf16.mxu0 0
        %1305 = vmatmul.mubr.bf16.gmra.mrb[0].mxu0 %v1158
        %v1306 = vpop.f32.mrb[0].mxu0
        %v1307 = vadd.f32 0.0, %v1306
        %v1308 = vpop.f32.mrb[0].mxu0
        %v1309 = vpop.f32.mrb[0].mxu0
        %v1310 = vadd.f32 0.0, %v1309
        %v1311 = vpop.f32.mrb[0].mxu0
        %1312 = vmatprep.mubr.bf16.mxu0 0
        %1313 = vmatmul.mubr.bf16.gmra.mrb[0].mxu0 %v1159
        %v1314 = vpop.f32.mrb[0].mxu0
        %v1315 = vadd.f32 0.0, %v1314
        %v1316 = vpop.f32.mrb[0].mxu0
        %v1317 = vpop.f32.mrb[0].mxu0
        %v1318 = vadd.f32 0.0, %v1317
        %v1319 = vpop.f32.mrb[0].mxu0
        %1320 = vdwg.mxu0
        %v1337 = vunpack.c.l.b16 %v735
        %v1338 = vunpack.c.l.b16 %v736
        %v1339 = vunpack.c.l.b16 %v737
        %v1340 = vunpack.c.l.b16 %v738
        %v1341 = vunpack.c.l.b16 %v739
        %v1342 = vunpack.c.l.b16 %v740
        %v1343 = vunpack.c.l.b16 %v741
        %v1344 = vunpack.c.l.b16 %v742
        %v1345 = vunpack.c.l.b16 %v743
        %v1346 = vunpack.c.l.b16 %v744
        %v1347 = vunpack.c.l.b16 %v745
        %v1348 = vunpack.c.l.b16 %v746
        %v1349 = vunpack.c.l.b16 %v747
        %v1350 = vunpack.c.l.b16 %v748
        %v1351 = vunpack.c.l.b16 %v749
        %v1352 = vunpack.c.l.b16 %v750
        %v1353 = vpack.c.b16 %v1338, %v1337
        %v1354 = vpack.c.b16 %v1340, %v1339
        %v1355 = vpack.c.b16 %v1342, %v1341
        %v1356 = vpack.c.b16 %v1344, %v1343
        %v1357 = vpack.c.b16 %v1346, %v1345
        %v1358 = vpack.c.b16 %v1348, %v1347
        %v1359 = vpack.c.b16 %v1350, %v1349
        %v1360 = vpack.c.b16 %v1352, %v1351
        %1369 = vmatprep.subr.bf16.mxu0 0
        %1370 = vmatpush1.bf16.msra.mxu0 %v1353
        %1371 = vmatprep.subr.bf16.mxu0 0
        %1372 = vmatpush1.bf16.msra.mxu0 %v1354
        %1373 = vmatprep.subr.bf16.mxu0 0
        %1374 = vmatpush1.bf16.msra.mxu0 %v1355
        %1375 = vmatprep.subr.bf16.mxu0 0
        %1376 = vmatpush1.bf16.msra.mxu0 %v1356
        %1377 = vmatprep.subr.bf16.mxu0 0
        %1378 = vmatpush1.bf16.msra.mxu0 %v1357
        %1379 = vmatprep.subr.bf16.mxu0 0
        %1380 = vmatpush1.bf16.msra.mxu0 %v1358
        %1381 = vmatprep.subr.bf16.mxu0 0
        %1382 = vmatpush1.bf16.msra.mxu0 %v1359
        %1383 = vmatprep.subr.bf16.mxu0 0
        %1384 = vmatpush1.bf16.msra.mxu0 %v1360
        %1385 = vmatprep.subr.bf16.mxu0 0
        %1386 = vmatpush1.bf16.msra.mxu0 0
        %1387 = vmatprep.subr.bf16.mxu0 0
        %1388 = vmatpush1.bf16.msra.mxu0 0
        %1389 = vmatprep.subr.bf16.mxu0 0
        %1390 = vmatpush1.bf16.msra.mxu0 0
        %1391 = vmatprep.subr.bf16.mxu0 0
        %1392 = vmatpush1.bf16.msra.mxu0 0
        %1393 = vmatprep.subr.bf16.mxu0 0
        %1394 = vmatpush1.bf16.msra.mxu0 0
        %1395 = vmatprep.subr.bf16.mxu0 0
        %1396 = vmatpush1.bf16.msra.mxu0 0
        %1397 = vmatprep.subr.bf16.mxu0 0
        %1398 = vmatpush1.bf16.msra.mxu0 0
        %1399 = vmatprep.subr.bf16.mxu0 0
        %1400 = vmatpush1.bf16.msra.mxu0 0
        %1401 = vmatprep.mubr.bf16.mxu0 0
        %1402 = vmatmul.mubr.bf16.gmra.mrb[0].mxu0 %v727
        %v1403 = vpop.f32.mrb[0].mxu0
        %v1404 = vadd.f32 %v1259, %v1403
        %v1405 = vpop.f32.mrb[0].mxu0
        %v1406 = vpop.f32.mrb[0].mxu0
        %v1407 = vadd.f32 %v1262, %v1406
        %v1408 = vpop.f32.mrb[0].mxu0
        %1409 = vmatprep.mubr.bf16.mxu0 0
        %1410 = vmatmul.mubr.bf16.gmra.mrb[0].mxu0 %v728
        %v1411 = vpop.f32.mrb[0].mxu0
        %v1412 = vadd.f32 %v1267, %v1411
        %v1413 = vpop.f32.mrb[0].mxu0
        %v1414 = vpop.f32.mrb[0].mxu0
        %v1415 = vadd.f32 %v1270, %v1414
        %v1416 = vpop.f32.mrb[0].mxu0
        %1417 = vmatprep.mubr.bf16.mxu0 0
        %1418 = vmatmul.mubr.bf16.gmra.mrb[0].mxu0 %v729
        %v1419 = vpop.f32.mrb[0].mxu0
        %v1420 = vadd.f32 %v1275, %v1419
        %v1421 = vpop.f32.mrb[0].mxu0
        %v1422 = vpop.f32.mrb[0].mxu0
        %v1423 = vadd.f32 %v1278, %v1422
        %v1424 = vpop.f32.mrb[0].mxu0
        %1425 = vmatprep.mubr.bf16.mxu0 0
        %1426 = vmatmul.mubr.bf16.gmra.mrb[0].mxu0 %v730
        %v1427 = vpop.f32.mrb[0].mxu0
        %v1428 = vadd.f32 %v1283, %v1427
        %v1429 = vpop.f32.mrb[0].mxu0
        %v1430 = vpop.f32.mrb[0].mxu0
        %v1431 = vadd.f32 %v1286, %v1430
        %v1432 = vpop.f32.mrb[0].mxu0
        %1433 = vmatprep.mubr.bf16.mxu0 0
        %1434 = vmatmul.mubr.bf16.gmra.mrb[0].mxu0 %v731
        %v1435 = vpop.f32.mrb[0].mxu0
        %v1436 = vadd.f32 %v1291, %v1435
        %v1437 = vpop.f32.mrb[0].mxu0
        %v1438 = vpop.f32.mrb[0].mxu0
        %v1439 = vadd.f32 %v1294, %v1438
        %v1440 = vpop.f32.mrb[0].mxu0
        %1441 = vmatprep.mubr.bf16.mxu0 0
        %1442 = vmatmul.mubr.bf16.gmra.mrb[0].mxu0 %v732
        %v1443 = vpop.f32.mrb[0].mxu0
        %v1444 = vadd.f32 %v1299, %v1443
        %v1445 = vpop.f32.mrb[0].mxu0
        %v1446 = vpop.f32.mrb[0].mxu0
        %v1447 = vadd.f32 %v1302, %v1446
        %v1448 = vpop.f32.mrb[0].mxu0
        %1449 = vmatprep.mubr.bf16.mxu0 0
        %1450 = vmatmul.mubr.bf16.gmra.mrb[0].mxu0 %v733
        %v1451 = vpop.f32.mrb[0].mxu0
        %v1452 = vadd.f32 %v1307, %v1451
        %v1453 = vpop.f32.mrb[0].mxu0
        %v1454 = vpop.f32.mrb[0].mxu0
        %v1455 = vadd.f32 %v1310, %v1454
        %v1456 = vpop.f32.mrb[0].mxu0
        %1457 = vmatprep.mubr.bf16.mxu0 0
        %1458 = vmatmul.mubr.bf16.gmra.mrb[0].mxu0 %v734
        %v1459 = vpop.f32.mrb[0].mxu0
        %v1460 = vadd.f32 %v1315, %v1459
        %v1461 = vpop.f32.mrb[0].mxu0
        %v1462 = vpop.f32.mrb[0].mxu0
        %v1463 = vadd.f32 %v1318, %v1462
        %v1464 = vpop.f32.mrb[0].mxu0
        %1465 = vdwg.mxu0
        %1466 = vset.pattern.permute.xlu0 2
        %1467 = vperm.xlu0 %1466, %v277
        %v1468 = vpop.permute.xlu0 %1467
        %1470 = vset.pattern.permute.xlu0 2
        %1471 = vperm.xlu0 %1470, %v278
        %v1472 = vpop.permute.xlu0 %1471
        %1474 = vset.pattern.permute.xlu0 2
        %1475 = vperm.xlu0 %1474, %v279
        %v1476 = vpop.permute.xlu0 %1475
        %1478 = vset.pattern.permute.xlu0 2
        %1479 = vperm.xlu0 %1478, %v280
        %v1480 = vpop.permute.xlu0 %1479
        %1482 = vset.pattern.permute.xlu0 2
        %1483 = vperm.xlu0 %1482, %v281
        %v1484 = vpop.permute.xlu0 %1483
        %1486 = vset.pattern.permute.xlu0 2
        %1487 = vperm.xlu0 %1486, %v282
        %v1488 = vpop.permute.xlu0 %1487
        %1490 = vset.pattern.permute.xlu0 2
        %1491 = vperm.xlu0 %1490, %v283
        %v1492 = vpop.permute.xlu0 %1491
        %1494 = vset.pattern.permute.xlu0 2
        %1495 = vperm.xlu0 %1494, %v284
        %v1496 = vpop.permute.xlu0 %1495
        %1498 = vset.pattern.permute.xlu0 2
        %1499 = vperm.xlu0 %1498, %v285
        %v1500 = vpop.permute.xlu0 %1499
        %1502 = vset.pattern.permute.xlu0 2
        %1503 = vperm.xlu0 %1502, %v286
        %v1504 = vpop.permute.xlu0 %1503
        %1506 = vset.pattern.permute.xlu0 2
        %1507 = vperm.xlu0 %1506, %v287
        %v1508 = vpop.permute.xlu0 %1507
        %1510 = vset.pattern.permute.xlu0 2
        %1511 = vperm.xlu0 %1510, %v288
        %v1512 = vpop.permute.xlu0 %1511
        %1514 = vset.pattern.permute.xlu0 2
        %1515 = vperm.xlu0 %1514, %v289
        %v1516 = vpop.permute.xlu0 %1515
        %1518 = vset.pattern.permute.xlu0 2
        %1519 = vperm.xlu0 %1518, %v290
        %v1520 = vpop.permute.xlu0 %1519
        %1522 = vset.pattern.permute.xlu0 2
        %1523 = vperm.xlu0 %1522, %v291
        %v1524 = vpop.permute.xlu0 %1523
        %1526 = vset.pattern.permute.xlu0 2
        %1527 = vperm.xlu0 %1526, %v292
        %v1528 = vpop.permute.xlu0 %1527
        %v1530 = vsub.f32 %v295, %v1468
        %v1531 = vsub.f32 %v295, %v1472
        %v1532 = vsub.f32 %v295, %v1476
        %v1533 = vsub.f32 %v295, %v1480
        %v1534 = vsub.f32 %v295, %v1484
        %v1535 = vsub.f32 %v295, %v1488
        %v1536 = vsub.f32 %v295, %v1492
        %v1537 = vsub.f32 %v295, %v1496
        %v1538 = vsub.f32 %v295, %v1500
        %v1539 = vsub.f32 %v295, %v1504
        %v1540 = vsub.f32 %v295, %v1508
        %v1541 = vsub.f32 %v295, %v1512
        %v1542 = vsub.f32 %v295, %v1516
        %v1543 = vsub.f32 %v295, %v1520
        %v1544 = vsub.f32 %v295, %v1524
        %v1545 = vsub.f32 %v295, %v1528
        %v1546 = vand.u32 2147483647, %v1530
        %v1547 = vand.u32 2147483647, %v1531
        %v1548 = vand.u32 2147483647, %v1532
        %v1549 = vand.u32 2147483647, %v1533
        %v1550 = vand.u32 2147483647, %v1534
        %v1551 = vand.u32 2147483647, %v1535
        %v1552 = vand.u32 2147483647, %v1536
        %v1553 = vand.u32 2147483647, %v1537
        %v1554 = vand.u32 2147483647, %v1538
        %v1555 = vand.u32 2147483647, %v1539
        %v1556 = vand.u32 2147483647, %v1540
        %v1557 = vand.u32 2147483647, %v1541
        %v1558 = vand.u32 2147483647, %v1542
        %v1559 = vand.u32 2147483647, %v1543
        %v1560 = vand.u32 2147483647, %v1544
        %v1561 = vand.u32 2147483647, %v1545
        %v1562 = vsub.f32 1.0, %v1546
        %v1563 = vsub.f32 1.0, %v1547
        %v1564 = vsub.f32 1.0, %v1548
        %v1565 = vsub.f32 1.0, %v1549
        %v1566 = vsub.f32 1.0, %v1550
        %v1567 = vsub.f32 1.0, %v1551
        %v1568 = vsub.f32 1.0, %v1552
        %v1569 = vsub.f32 1.0, %v1553
        %v1570 = vsub.f32 1.0, %v1554
        %v1571 = vsub.f32 1.0, %v1555
        %v1572 = vsub.f32 1.0, %v1556
        %v1573 = vsub.f32 1.0, %v1557
        %v1574 = vsub.f32 1.0, %v1558
        %v1575 = vsub.f32 1.0, %v1559
        %v1576 = vsub.f32 1.0, %v1560
        %v1577 = vsub.f32 1.0, %v1561
        %v1578 = vmax.f32 %v1562, 0.0
        %v1579 = vmax.f32 %v1563, 0.0
        %v1580 = vmax.f32 %v1564, 0.0
        %v1581 = vmax.f32 %v1565, 0.0
        %v1582 = vmax.f32 %v1566, 0.0
        %v1583 = vmax.f32 %v1567, 0.0
        %v1584 = vmax.f32 %v1568, 0.0
        %v1585 = vmax.f32 %v1569, 0.0
        %v1586 = vmax.f32 %v1570, 0.0
        %v1587 = vmax.f32 %v1571, 0.0
        %v1588 = vmax.f32 %v1572, 0.0
        %v1589 = vmax.f32 %v1573, 0.0
        %v1590 = vmax.f32 %v1574, 0.0
        %v1591 = vmax.f32 %v1575, 0.0
        %v1592 = vmax.f32 %v1576, 0.0
        %v1593 = vmax.f32 %v1577, 0.0
        %1594 = vset.pattern.permute.xlu0 11
        %1595 = vperm.xlu0 %1594, %v277
        %v1596 = vpop.permute.xlu0 %1595
        %1598 = vset.pattern.permute.xlu0 11
        %1599 = vperm.xlu0 %1598, %v278
        %v1600 = vpop.permute.xlu0 %1599
        %1602 = vset.pattern.permute.xlu0 11
        %1603 = vperm.xlu0 %1602, %v279
        %v1604 = vpop.permute.xlu0 %1603
        %1606 = vset.pattern.permute.xlu0 11
        %1607 = vperm.xlu0 %1606, %v280
        %v1608 = vpop.permute.xlu0 %1607
        %1610 = vset.pattern.permute.xlu0 11
        %1611 = vperm.xlu0 %1610, %v281
        %v1612 = vpop.permute.xlu0 %1611
        %1614 = vset.pattern.permute.xlu0 11
        %1615 = vperm.xlu0 %1614, %v282
        %v1616 = vpop.permute.xlu0 %1615
        %1618 = vset.pattern.permute.xlu0 11
        %1619 = vperm.xlu0 %1618, %v283
        %v1620 = vpop.permute.xlu0 %1619
        %1622 = vset.pattern.permute.xlu0 11
        %1623 = vperm.xlu0 %1622, %v284
        %v1624 = vpop.permute.xlu0 %1623
        %1626 = vset.pattern.permute.xlu0 11
        %1627 = vperm.xlu0 %1626, %v285
        %v1628 = vpop.permute.xlu0 %1627
        %1630 = vset.pattern.permute.xlu0 11
        %1631 = vperm.xlu0 %1630, %v286
        %v1632 = vpop.permute.xlu0 %1631
        %1634 = vset.pattern.permute.xlu0 11
        %1635 = vperm.xlu0 %1634, %v287
        %v1636 = vpop.permute.xlu0 %1635
        %1638 = vset.pattern.permute.xlu0 11
        %1639 = vperm.xlu0 %1638, %v288
        %v1640 = vpop.permute.xlu0 %1639
        %1642 = vset.pattern.permute.xlu0 11
        %1643 = vperm.xlu0 %1642, %v289
        %v1644 = vpop.permute.xlu0 %1643
        %1646 = vset.pattern.permute.xlu0 11
        %1647 = vperm.xlu0 %1646, %v290
        %v1648 = vpop.permute.xlu0 %1647
        %1650 = vset.pattern.permute.xlu0 11
        %1651 = vperm.xlu0 %1650, %v291
        %v1652 = vpop.permute.xlu0 %1651
        %1654 = vset.pattern.permute.xlu0 11
        %1655 = vperm.xlu0 %1654, %v292
        %v1656 = vpop.permute.xlu0 %1655
        %v1658 = vsub.f32 %v301, %v1596
        %v1659 = vsub.f32 %v301, %v1600
        %v1660 = vsub.f32 %v301, %v1604
        %v1661 = vsub.f32 %v301, %v1608
        %v1662 = vsub.f32 %v301, %v1612
        %v1663 = vsub.f32 %v301, %v1616
        %v1664 = vsub.f32 %v301, %v1620
        %v1665 = vsub.f32 %v301, %v1624
        %v1666 = vsub.f32 %v301, %v1628
        %v1667 = vsub.f32 %v301, %v1632
        %v1668 = vsub.f32 %v301, %v1636
        %v1669 = vsub.f32 %v301, %v1640
        %v1670 = vsub.f32 %v301, %v1644
        %v1671 = vsub.f32 %v301, %v1648
        %v1672 = vsub.f32 %v301, %v1652
        %v1673 = vsub.f32 %v301, %v1656
        %v1674 = vand.u32 2147483647, %v1658
        %v1675 = vand.u32 2147483647, %v1659
        %v1676 = vand.u32 2147483647, %v1660
        %v1677 = vand.u32 2147483647, %v1661
        %v1678 = vand.u32 2147483647, %v1662
        %v1679 = vand.u32 2147483647, %v1663
        %v1680 = vand.u32 2147483647, %v1664
        %v1681 = vand.u32 2147483647, %v1665
        %v1682 = vand.u32 2147483647, %v1666
        %v1683 = vand.u32 2147483647, %v1667
        %v1684 = vand.u32 2147483647, %v1668
        %v1685 = vand.u32 2147483647, %v1669
        %v1686 = vand.u32 2147483647, %v1670
        %v1687 = vand.u32 2147483647, %v1671
        %v1688 = vand.u32 2147483647, %v1672
        %v1689 = vand.u32 2147483647, %v1673
        %v1690 = vsub.f32 1.0, %v1674
        %v1691 = vsub.f32 1.0, %v1675
        %v1692 = vsub.f32 1.0, %v1676
        %v1693 = vsub.f32 1.0, %v1677
        %v1694 = vsub.f32 1.0, %v1678
        %v1695 = vsub.f32 1.0, %v1679
        %v1696 = vsub.f32 1.0, %v1680
        %v1697 = vsub.f32 1.0, %v1681
        %v1698 = vsub.f32 1.0, %v1682
        %v1699 = vsub.f32 1.0, %v1683
        %v1700 = vsub.f32 1.0, %v1684
        %v1701 = vsub.f32 1.0, %v1685
        %v1702 = vsub.f32 1.0, %v1686
        %v1703 = vsub.f32 1.0, %v1687
        %v1704 = vsub.f32 1.0, %v1688
        %v1705 = vsub.f32 1.0, %v1689
        %v1706 = vmax.f32 %v1690, 0.0
        %v1707 = vmax.f32 %v1691, 0.0
        %v1708 = vmax.f32 %v1692, 0.0
        %v1709 = vmax.f32 %v1693, 0.0
        %v1710 = vmax.f32 %v1694, 0.0
        %v1711 = vmax.f32 %v1695, 0.0
        %v1712 = vmax.f32 %v1696, 0.0
        %v1713 = vmax.f32 %v1697, 0.0
        %v1714 = vmax.f32 %v1698, 0.0
        %v1715 = vmax.f32 %v1699, 0.0
        %v1716 = vmax.f32 %v1700, 0.0
        %v1717 = vmax.f32 %v1701, 0.0
        %v1718 = vmax.f32 %v1702, 0.0
        %v1719 = vmax.f32 %v1703, 0.0
        %v1720 = vmax.f32 %v1704, 0.0
        %v1721 = vmax.f32 %v1705, 0.0
        %v1722 = vpack.c.bf16 %v1579, %v1578
        %v1723 = vpack.c.bf16 %v1581, %v1580
        %v1724 = vpack.c.bf16 %v1583, %v1582
        %v1725 = vpack.c.bf16 %v1585, %v1584
        %v1726 = vpack.c.bf16 %v1587, %v1586
        %v1727 = vpack.c.bf16 %v1589, %v1588
        %v1728 = vpack.c.bf16 %v1591, %v1590
        %v1729 = vpack.c.bf16 %v1593, %v1592
        %v1731 = vsel %vm589, %v1722, 0
        %v1734 = vsel %vm589, %v1723, 0
        %v1737 = vsel %vm589, %v1724, 0
        %v1740 = vsel %vm589, %v1725, 0
        %v1743 = vsel %vm589, %v1726, 0
        %v1746 = vsel %vm589, %v1727, 0
        %v1749 = vsel %vm589, %v1728, 0
        %v1752 = vsel %vm589, %v1729, 0
        %1754 = vmatprep.subr.bf16.mxu0 0
        %1755 = vmatpush1.bf16.msra.mxu0 %v587
        %1756 = vmatprep.subr.bf16.mxu0 0
        %1757 = vmatpush1.bf16.msra.mxu0 0
        %1758 = vmatprep.subr.bf16.mxu0 0
        %1759 = vmatpush1.bf16.msra.mxu0 0
        %1760 = vmatprep.subr.bf16.mxu0 0
        %1761 = vmatpush1.bf16.msra.mxu0 0
        %1762 = vmatprep.subr.bf16.mxu0 0
        %1763 = vmatpush1.bf16.msra.mxu0 0
        %1764 = vmatprep.subr.bf16.mxu0 0
        %1765 = vmatpush1.bf16.msra.mxu0 0
        %1766 = vmatprep.subr.bf16.mxu0 0
        %1767 = vmatpush1.bf16.msra.mxu0 0
        %1768 = vmatprep.subr.bf16.mxu0 0
        %1769 = vmatpush1.bf16.msra.mxu0 0
        %1770 = vmatprep.subr.bf16.mxu0 0
        %1771 = vmatpush1.bf16.msra.mxu0 0
        %1772 = vmatprep.subr.bf16.mxu0 0
        %1773 = vmatpush1.bf16.msra.mxu0 0
        %1774 = vmatprep.subr.bf16.mxu0 0
        %1775 = vmatpush1.bf16.msra.mxu0 0
        %1776 = vmatprep.subr.bf16.mxu0 0
        %1777 = vmatpush1.bf16.msra.mxu0 0
        %1778 = vmatprep.subr.bf16.mxu0 0
        %1779 = vmatpush1.bf16.msra.mxu0 0
        %1780 = vmatprep.subr.bf16.mxu0 0
        %1781 = vmatpush1.bf16.msra.mxu0 0
        %1782 = vmatprep.subr.bf16.mxu0 0
        %1783 = vmatpush1.bf16.msra.mxu0 0
        %1784 = vmatprep.subr.bf16.mxu0 0
        %1785 = vmatpush1.bf16.msra.mxu0 0
        %1786 = vmatprep.mubr.bf16.mxu0 0
        %1787 = vmatmul.mubr.bf16.gmra.mrb[0].mxu0 %v1731
        %v1788 = vpop.f32.mrb[0].mxu0
        %v1789 = vadd.f32 0.0, %v1788
        %v1790 = vpop.f32.mrb[0].mxu0
        %v1791 = vpop.f32.mrb[0].mxu0
        %v1792 = vadd.f32 0.0, %v1791
        %v1793 = vpop.f32.mrb[0].mxu0
        %1794 = vmatprep.mubr.bf16.mxu0 0
        %1795 = vmatmul.mubr.bf16.gmra.mrb[0].mxu0 %v1734
        %v1796 = vpop.f32.mrb[0].mxu0
        %v1797 = vadd.f32 0.0, %v1796
        %v1798 = vpop.f32.mrb[0].mxu0
        %v1799 = vpop.f32.mrb[0].mxu0
        %v1800 = vadd.f32 0.0, %v1799
        %v1801 = vpop.f32.mrb[0].mxu0
        %1802 = vmatprep.mubr.bf16.mxu0 0
        %1803 = vmatmul.mubr.bf16.gmra.mrb[0].mxu0 %v1737
        %v1804 = vpop.f32.mrb[0].mxu0
        %v1805 = vadd.f32 0.0, %v1804
        %v1806 = vpop.f32.mrb[0].mxu0
        %v1807 = vpop.f32.mrb[0].mxu0
        %v1808 = vadd.f32 0.0, %v1807
        %v1809 = vpop.f32.mrb[0].mxu0
        %1810 = vmatprep.mubr.bf16.mxu0 0
        %1811 = vmatmul.mubr.bf16.gmra.mrb[0].mxu0 %v1740
        %v1812 = vpop.f32.mrb[0].mxu0
        %v1813 = vadd.f32 0.0, %v1812
        %v1814 = vpop.f32.mrb[0].mxu0
        %v1815 = vpop.f32.mrb[0].mxu0
        %v1816 = vadd.f32 0.0, %v1815
        %v1817 = vpop.f32.mrb[0].mxu0
        %1818 = vmatprep.mubr.bf16.mxu0 0
        %1819 = vmatmul.mubr.bf16.gmra.mrb[0].mxu0 %v1743
        %v1820 = vpop.f32.mrb[0].mxu0
        %v1821 = vadd.f32 0.0, %v1820
        %v1822 = vpop.f32.mrb[0].mxu0
        %v1823 = vpop.f32.mrb[0].mxu0
        %v1824 = vadd.f32 0.0, %v1823
        %v1825 = vpop.f32.mrb[0].mxu0
        %1826 = vmatprep.mubr.bf16.mxu0 0
        %1827 = vmatmul.mubr.bf16.gmra.mrb[0].mxu0 %v1746
        %v1828 = vpop.f32.mrb[0].mxu0
        %v1829 = vadd.f32 0.0, %v1828
        %v1830 = vpop.f32.mrb[0].mxu0
        %v1831 = vpop.f32.mrb[0].mxu0
        %v1832 = vadd.f32 0.0, %v1831
        %v1833 = vpop.f32.mrb[0].mxu0
        %1834 = vmatprep.mubr.bf16.mxu0 0
        %1835 = vmatmul.mubr.bf16.gmra.mrb[0].mxu0 %v1749
        %v1836 = vpop.f32.mrb[0].mxu0
        %v1837 = vadd.f32 0.0, %v1836
        %v1838 = vpop.f32.mrb[0].mxu0
        %v1839 = vpop.f32.mrb[0].mxu0
        %v1840 = vadd.f32 0.0, %v1839
        %v1841 = vpop.f32.mrb[0].mxu0
        %1842 = vmatprep.mubr.bf16.mxu0 0
        %1843 = vmatmul.mubr.bf16.gmra.mrb[0].mxu0 %v1752
        %v1844 = vpop.f32.mrb[0].mxu0
        %v1845 = vadd.f32 0.0, %v1844
        %v1846 = vpop.f32.mrb[0].mxu0
        %v1847 = vpop.f32.mrb[0].mxu0
        %v1848 = vadd.f32 0.0, %v1847
        %v1849 = vpop.f32.mrb[0].mxu0
        %1850 = vdwg.mxu0
        %v1851 = vmul.f32 %v1706, %v1789
        %v1852 = vmul.f32 %v1707, %v1792
        %v1853 = vmul.f32 %v1708, %v1797
        %v1854 = vmul.f32 %v1709, %v1800
        %v1855 = vmul.f32 %v1710, %v1805
        %v1856 = vmul.f32 %v1711, %v1808
        %v1857 = vmul.f32 %v1712, %v1813
        %v1858 = vmul.f32 %v1713, %v1816
        %v1859 = vmul.f32 %v1714, %v1821
        %v1860 = vmul.f32 %v1715, %v1824
        %v1861 = vmul.f32 %v1716, %v1829
        %v1862 = vmul.f32 %v1717, %v1832
        %v1863 = vmul.f32 %v1718, %v1837
        %v1864 = vmul.f32 %v1719, %v1840
        %v1865 = vmul.f32 %v1720, %v1845
        %v1866 = vmul.f32 %v1721, %v1848
        %v1867 = vpack.c.bf16 %v1852, %v1851
        %v1868 = vpack.c.bf16 %v1854, %v1853
        %v1869 = vpack.c.bf16 %v1856, %v1855
        %v1870 = vpack.c.bf16 %v1858, %v1857
        %v1871 = vpack.c.bf16 %v1860, %v1859
        %v1872 = vpack.c.bf16 %v1862, %v1861
        %v1873 = vpack.c.bf16 %v1864, %v1863
        %v1874 = vpack.c.bf16 %v1866, %v1865
        %v1875 = vld [vmem:[%s3 + $0x80] sm:$0xf]
        %v1876 = vld [vmem:[%s3 + $0x84] sm:$0xf]
        %v1877 = vld [vmem:[%s3 + $0x88] sm:$0xf]
        %v1878 = vld [vmem:[%s3 + $0x8c] sm:$0xf]
        %v1879 = vld [vmem:[%s3 + $0x90] sm:$0xf]
        %v1880 = vld [vmem:[%s3 + $0x94] sm:$0xf]
        %v1881 = vld [vmem:[%s3 + $0x98] sm:$0xf]
        %v1882 = vld [vmem:[%s3 + $0x9c] sm:$0xf]
        %v1883 = vld [vmem:[%s3 + $0xa0] sm:$0xf]
        %v1884 = vld [vmem:[%s3 + $0xa4] sm:$0xf]
        %v1885 = vld [vmem:[%s3 + $0xa8] sm:$0xf]
        %v1886 = vld [vmem:[%s3 + $0xac] sm:$0xf]
        %v1887 = vld [vmem:[%s3 + $0xb0] sm:$0xf]
        %v1888 = vld [vmem:[%s3 + $0xb4] sm:$0xf]
        %v1889 = vld [vmem:[%s3 + $0xb8] sm:$0xf]
        %v1890 = vld [vmem:[%s3 + $0xbc] sm:$0xf]
        %v1907 = vunpack.c.l.b16 %v1875
        %v1908 = vunpack.c.l.b16 %v1876
        %v1909 = vunpack.c.l.b16 %v1877
        %v1910 = vunpack.c.l.b16 %v1878
        %v1911 = vunpack.c.l.b16 %v1879
        %v1912 = vunpack.c.l.b16 %v1880
        %v1913 = vunpack.c.l.b16 %v1881
        %v1914 = vunpack.c.l.b16 %v1882
        %v1915 = vunpack.c.l.b16 %v1883
        %v1916 = vunpack.c.l.b16 %v1884
        %v1917 = vunpack.c.l.b16 %v1885
        %v1918 = vunpack.c.l.b16 %v1886
        %v1919 = vunpack.c.l.b16 %v1887
        %v1920 = vunpack.c.l.b16 %v1888
        %v1921 = vunpack.c.l.b16 %v1889
        %v1922 = vunpack.c.l.b16 %v1890
        %v1923 = vpack.c.b16 %v1908, %v1907
        %v1924 = vpack.c.b16 %v1910, %v1909
        %v1925 = vpack.c.b16 %v1912, %v1911
        %v1926 = vpack.c.b16 %v1914, %v1913
        %v1927 = vpack.c.b16 %v1916, %v1915
        %v1928 = vpack.c.b16 %v1918, %v1917
        %v1929 = vpack.c.b16 %v1920, %v1919
        %v1930 = vpack.c.b16 %v1922, %v1921
        %1939 = vmatprep.subr.bf16.mxu0 0
        %1940 = vmatpush1.bf16.msra.mxu0 %v1923
        %1941 = vmatprep.subr.bf16.mxu0 0
        %1942 = vmatpush1.bf16.msra.mxu0 %v1924
        %1943 = vmatprep.subr.bf16.mxu0 0
        %1944 = vmatpush1.bf16.msra.mxu0 %v1925
        %1945 = vmatprep.subr.bf16.mxu0 0
        %1946 = vmatpush1.bf16.msra.mxu0 %v1926
        %1947 = vmatprep.subr.bf16.mxu0 0
        %1948 = vmatpush1.bf16.msra.mxu0 %v1927
        %1949 = vmatprep.subr.bf16.mxu0 0
        %1950 = vmatpush1.bf16.msra.mxu0 %v1928
        %1951 = vmatprep.subr.bf16.mxu0 0
        %1952 = vmatpush1.bf16.msra.mxu0 %v1929
        %1953 = vmatprep.subr.bf16.mxu0 0
        %1954 = vmatpush1.bf16.msra.mxu0 %v1930
        %1955 = vmatprep.subr.bf16.mxu0 0
        %1956 = vmatpush1.bf16.msra.mxu0 0
        %1957 = vmatprep.subr.bf16.mxu0 0
        %1958 = vmatpush1.bf16.msra.mxu0 0
        %1959 = vmatprep.subr.bf16.mxu0 0
        %1960 = vmatpush1.bf16.msra.mxu0 0
        %1961 = vmatprep.subr.bf16.mxu0 0
        %1962 = vmatpush1.bf16.msra.mxu0 0
        %1963 = vmatprep.subr.bf16.mxu0 0
        %1964 = vmatpush1.bf16.msra.mxu0 0
        %1965 = vmatprep.subr.bf16.mxu0 0
        %1966 = vmatpush1.bf16.msra.mxu0 0
        %1967 = vmatprep.subr.bf16.mxu0 0
        %1968 = vmatpush1.bf16.msra.mxu0 0
        %1969 = vmatprep.subr.bf16.mxu0 0
        %1970 = vmatpush1.bf16.msra.mxu0 0
        %1971 = vmatprep.mubr.bf16.mxu0 0
        %1972 = vmatmul.mubr.bf16.gmra.mrb[0].mxu0 %v1867
        %v1973 = vpop.f32.mrb[0].mxu0
        %v1974 = vadd.f32 0.0, %v1973
        %v1975 = vpop.f32.mrb[0].mxu0
        %v1976 = vpop.f32.mrb[0].mxu0
        %v1977 = vadd.f32 0.0, %v1976
        %v1978 = vpop.f32.mrb[0].mxu0
        %1979 = vmatprep.mubr.bf16.mxu0 0
        %1980 = vmatmul.mubr.bf16.gmra.mrb[0].mxu0 %v1868
        %v1981 = vpop.f32.mrb[0].mxu0
        %v1982 = vadd.f32 0.0, %v1981
        %v1983 = vpop.f32.mrb[0].mxu0
        %v1984 = vpop.f32.mrb[0].mxu0
        %v1985 = vadd.f32 0.0, %v1984
        %v1986 = vpop.f32.mrb[0].mxu0
        %1987 = vmatprep.mubr.bf16.mxu0 0
        %1988 = vmatmul.mubr.bf16.gmra.mrb[0].mxu0 %v1869
        %v1989 = vpop.f32.mrb[0].mxu0
        %v1990 = vadd.f32 0.0, %v1989
        %v1991 = vpop.f32.mrb[0].mxu0
        %v1992 = vpop.f32.mrb[0].mxu0
        %v1993 = vadd.f32 0.0, %v1992
        %v1994 = vpop.f32.mrb[0].mxu0
        %1995 = vmatprep.mubr.bf16.mxu0 0
        %1996 = vmatmul.mubr.bf16.gmra.mrb[0].mxu0 %v1870
        %v1997 = vpop.f32.mrb[0].mxu0
        %v1998 = vadd.f32 0.0, %v1997
        %v1999 = vpop.f32.mrb[0].mxu0
        %v2000 = vpop.f32.mrb[0].mxu0
        %v2001 = vadd.f32 0.0, %v2000
        %v2002 = vpop.f32.mrb[0].mxu0
        %2003 = vmatprep.mubr.bf16.mxu0 0
        %2004 = vmatmul.mubr.bf16.gmra.mrb[0].mxu0 %v1871
        %v2005 = vpop.f32.mrb[0].mxu0
        %v2006 = vadd.f32 0.0, %v2005
        %v2007 = vpop.f32.mrb[0].mxu0
        %v2008 = vpop.f32.mrb[0].mxu0
        %v2009 = vadd.f32 0.0, %v2008
        %v2010 = vpop.f32.mrb[0].mxu0
        %2011 = vmatprep.mubr.bf16.mxu0 0
        %2012 = vmatmul.mubr.bf16.gmra.mrb[0].mxu0 %v1872
        %v2013 = vpop.f32.mrb[0].mxu0
        %v2014 = vadd.f32 0.0, %v2013
        %v2015 = vpop.f32.mrb[0].mxu0
        %v2016 = vpop.f32.mrb[0].mxu0
        %v2017 = vadd.f32 0.0, %v2016
        %v2018 = vpop.f32.mrb[0].mxu0
        %2019 = vmatprep.mubr.bf16.mxu0 0
        %2020 = vmatmul.mubr.bf16.gmra.mrb[0].mxu0 %v1873
        %v2021 = vpop.f32.mrb[0].mxu0
        %v2022 = vadd.f32 0.0, %v2021
        %v2023 = vpop.f32.mrb[0].mxu0
        %v2024 = vpop.f32.mrb[0].mxu0
        %v2025 = vadd.f32 0.0, %v2024
        %v2026 = vpop.f32.mrb[0].mxu0
        %2027 = vmatprep.mubr.bf16.mxu0 0
        %2028 = vmatmul.mubr.bf16.gmra.mrb[0].mxu0 %v1874
        %v2029 = vpop.f32.mrb[0].mxu0
        %v2030 = vadd.f32 0.0, %v2029
        %v2031 = vpop.f32.mrb[0].mxu0
        %v2032 = vpop.f32.mrb[0].mxu0
        %v2033 = vadd.f32 0.0, %v2032
        %v2034 = vpop.f32.mrb[0].mxu0
        %2035 = vdwg.mxu0
        %v2036 = vadd.f32 %v1404, %v1974
        %v2037 = vadd.f32 %v1407, %v1977
        %v2038 = vadd.f32 %v1412, %v1982
        %v2039 = vadd.f32 %v1415, %v1985
        %v2040 = vadd.f32 %v1420, %v1990
        %v2041 = vadd.f32 %v1423, %v1993
        %v2042 = vadd.f32 %v1428, %v1998
        %v2043 = vadd.f32 %v1431, %v2001
        %v2044 = vadd.f32 %v1436, %v2006
        %v2045 = vadd.f32 %v1439, %v2009
        %v2046 = vadd.f32 %v1444, %v2014
        %v2047 = vadd.f32 %v1447, %v2017
        %v2048 = vadd.f32 %v1452, %v2022
        %v2049 = vadd.f32 %v1455, %v2025
        %v2050 = vadd.f32 %v1460, %v2030
        %v2051 = vadd.f32 %v1463, %v2033
        %2052 = vset.pattern.permute.xlu0 3
        %2053 = vperm.xlu0 %2052, %v277
        %v2054 = vpop.permute.xlu0 %2053
        %2056 = vset.pattern.permute.xlu0 3
        %2057 = vperm.xlu0 %2056, %v278
        %v2058 = vpop.permute.xlu0 %2057
        %2060 = vset.pattern.permute.xlu0 3
        %2061 = vperm.xlu0 %2060, %v279
        %v2062 = vpop.permute.xlu0 %2061
        %2064 = vset.pattern.permute.xlu0 3
        %2065 = vperm.xlu0 %2064, %v280
        %v2066 = vpop.permute.xlu0 %2065
        %2068 = vset.pattern.permute.xlu0 3
        %2069 = vperm.xlu0 %2068, %v281
        %v2070 = vpop.permute.xlu0 %2069
        %2072 = vset.pattern.permute.xlu0 3
        %2073 = vperm.xlu0 %2072, %v282
        %v2074 = vpop.permute.xlu0 %2073
        %2076 = vset.pattern.permute.xlu0 3
        %2077 = vperm.xlu0 %2076, %v283
        %v2078 = vpop.permute.xlu0 %2077
        %2080 = vset.pattern.permute.xlu0 3
        %2081 = vperm.xlu0 %2080, %v284
        %v2082 = vpop.permute.xlu0 %2081
        %2084 = vset.pattern.permute.xlu0 3
        %2085 = vperm.xlu0 %2084, %v285
        %v2086 = vpop.permute.xlu0 %2085
        %2088 = vset.pattern.permute.xlu0 3
        %2089 = vperm.xlu0 %2088, %v286
        %v2090 = vpop.permute.xlu0 %2089
        %2092 = vset.pattern.permute.xlu0 3
        %2093 = vperm.xlu0 %2092, %v287
        %v2094 = vpop.permute.xlu0 %2093
        %2096 = vset.pattern.permute.xlu0 3
        %2097 = vperm.xlu0 %2096, %v288
        %v2098 = vpop.permute.xlu0 %2097
        %2100 = vset.pattern.permute.xlu0 3
        %2101 = vperm.xlu0 %2100, %v289
        %v2102 = vpop.permute.xlu0 %2101
        %2104 = vset.pattern.permute.xlu0 3
        %2105 = vperm.xlu0 %2104, %v290
        %v2106 = vpop.permute.xlu0 %2105
        %2108 = vset.pattern.permute.xlu0 3
        %2109 = vperm.xlu0 %2108, %v291
        %v2110 = vpop.permute.xlu0 %2109
        %2112 = vset.pattern.permute.xlu0 3
        %2113 = vperm.xlu0 %2112, %v292
        %v2114 = vpop.permute.xlu0 %2113
        %v2116 = vsub.f32 %v295, %v2054
        %v2117 = vsub.f32 %v295, %v2058
        %v2118 = vsub.f32 %v295, %v2062
        %v2119 = vsub.f32 %v295, %v2066
        %v2120 = vsub.f32 %v295, %v2070
        %v2121 = vsub.f32 %v295, %v2074
        %v2122 = vsub.f32 %v295, %v2078
        %v2123 = vsub.f32 %v295, %v2082
        %v2124 = vsub.f32 %v295, %v2086
        %v2125 = vsub.f32 %v295, %v2090
        %v2126 = vsub.f32 %v295, %v2094
        %v2127 = vsub.f32 %v295, %v2098
        %v2128 = vsub.f32 %v295, %v2102
        %v2129 = vsub.f32 %v295, %v2106
        %v2130 = vsub.f32 %v295, %v2110
        %v2131 = vsub.f32 %v295, %v2114
        %v2132 = vand.u32 2147483647, %v2116
        %v2133 = vand.u32 2147483647, %v2117
        %v2134 = vand.u32 2147483647, %v2118
        %v2135 = vand.u32 2147483647, %v2119
        %v2136 = vand.u32 2147483647, %v2120
        %v2137 = vand.u32 2147483647, %v2121
        %v2138 = vand.u32 2147483647, %v2122
        %v2139 = vand.u32 2147483647, %v2123
        %v2140 = vand.u32 2147483647, %v2124
        %v2141 = vand.u32 2147483647, %v2125
        %v2142 = vand.u32 2147483647, %v2126
        %v2143 = vand.u32 2147483647, %v2127
        %v2144 = vand.u32 2147483647, %v2128
        %v2145 = vand.u32 2147483647, %v2129
        %v2146 = vand.u32 2147483647, %v2130
        %v2147 = vand.u32 2147483647, %v2131
        %v2148 = vsub.f32 1.0, %v2132
        %v2149 = vsub.f32 1.0, %v2133
        %v2150 = vsub.f32 1.0, %v2134
        %v2151 = vsub.f32 1.0, %v2135
        %v2152 = vsub.f32 1.0, %v2136
        %v2153 = vsub.f32 1.0, %v2137
        %v2154 = vsub.f32 1.0, %v2138
        %v2155 = vsub.f32 1.0, %v2139
        %v2156 = vsub.f32 1.0, %v2140
        %v2157 = vsub.f32 1.0, %v2141
        %v2158 = vsub.f32 1.0, %v2142
        %v2159 = vsub.f32 1.0, %v2143
        %v2160 = vsub.f32 1.0, %v2144
        %v2161 = vsub.f32 1.0, %v2145
        %v2162 = vsub.f32 1.0, %v2146
        %v2163 = vsub.f32 1.0, %v2147
        %v2164 = vmax.f32 %v2148, 0.0
        %v2165 = vmax.f32 %v2149, 0.0
        %v2166 = vmax.f32 %v2150, 0.0
        %v2167 = vmax.f32 %v2151, 0.0
        %v2168 = vmax.f32 %v2152, 0.0
        %v2169 = vmax.f32 %v2153, 0.0
        %v2170 = vmax.f32 %v2154, 0.0
        %v2171 = vmax.f32 %v2155, 0.0
        %v2172 = vmax.f32 %v2156, 0.0
        %v2173 = vmax.f32 %v2157, 0.0
        %v2174 = vmax.f32 %v2158, 0.0
        %v2175 = vmax.f32 %v2159, 0.0
        %v2176 = vmax.f32 %v2160, 0.0
        %v2177 = vmax.f32 %v2161, 0.0
        %v2178 = vmax.f32 %v2162, 0.0
        %v2179 = vmax.f32 %v2163, 0.0
        %2180 = vset.pattern.permute.xlu0 12
        %2181 = vperm.xlu0 %2180, %v277
        %v2182 = vpop.permute.xlu0 %2181
        %2184 = vset.pattern.permute.xlu0 12
        %2185 = vperm.xlu0 %2184, %v278
        %v2186 = vpop.permute.xlu0 %2185
        %2188 = vset.pattern.permute.xlu0 12
        %2189 = vperm.xlu0 %2188, %v279
        %v2190 = vpop.permute.xlu0 %2189
        %2192 = vset.pattern.permute.xlu0 12
        %2193 = vperm.xlu0 %2192, %v280
        %v2194 = vpop.permute.xlu0 %2193
        %2196 = vset.pattern.permute.xlu0 12
        %2197 = vperm.xlu0 %2196, %v281
        %v2198 = vpop.permute.xlu0 %2197
        %2200 = vset.pattern.permute.xlu0 12
        %2201 = vperm.xlu0 %2200, %v282
        %v2202 = vpop.permute.xlu0 %2201
        %2204 = vset.pattern.permute.xlu0 12
        %2205 = vperm.xlu0 %2204, %v283
        %v2206 = vpop.permute.xlu0 %2205
        %2208 = vset.pattern.permute.xlu0 12
        %2209 = vperm.xlu0 %2208, %v284
        %v2210 = vpop.permute.xlu0 %2209
        %2212 = vset.pattern.permute.xlu0 12
        %2213 = vperm.xlu0 %2212, %v285
        %v2214 = vpop.permute.xlu0 %2213
        %2216 = vset.pattern.permute.xlu0 12
        %2217 = vperm.xlu0 %2216, %v286
        %v2218 = vpop.permute.xlu0 %2217
        %2220 = vset.pattern.permute.xlu0 12
        %2221 = vperm.xlu0 %2220, %v287
        %v2222 = vpop.permute.xlu0 %2221
        %2224 = vset.pattern.permute.xlu0 12
        %2225 = vperm.xlu0 %2224, %v288
        %v2226 = vpop.permute.xlu0 %2225
        %2228 = vset.pattern.permute.xlu0 12
        %2229 = vperm.xlu0 %2228, %v289
        %v2230 = vpop.permute.xlu0 %2229
        %2232 = vset.pattern.permute.xlu0 12
        %2233 = vperm.xlu0 %2232, %v290
        %v2234 = vpop.permute.xlu0 %2233
        %2236 = vset.pattern.permute.xlu0 12
        %2237 = vperm.xlu0 %2236, %v291
        %v2238 = vpop.permute.xlu0 %2237
        %2240 = vset.pattern.permute.xlu0 12
        %2241 = vperm.xlu0 %2240, %v292
        %v2242 = vpop.permute.xlu0 %2241
        %v2244 = vsub.f32 %v301, %v2182
        %v2245 = vsub.f32 %v301, %v2186
        %v2246 = vsub.f32 %v301, %v2190
        %v2247 = vsub.f32 %v301, %v2194
        %v2248 = vsub.f32 %v301, %v2198
        %v2249 = vsub.f32 %v301, %v2202
        %v2250 = vsub.f32 %v301, %v2206
        %v2251 = vsub.f32 %v301, %v2210
        %v2252 = vsub.f32 %v301, %v2214
        %v2253 = vsub.f32 %v301, %v2218
        %v2254 = vsub.f32 %v301, %v2222
        %v2255 = vsub.f32 %v301, %v2226
        %v2256 = vsub.f32 %v301, %v2230
        %v2257 = vsub.f32 %v301, %v2234
        %v2258 = vsub.f32 %v301, %v2238
        %v2259 = vsub.f32 %v301, %v2242
        %v2260 = vand.u32 2147483647, %v2244
        %v2261 = vand.u32 2147483647, %v2245
        %v2262 = vand.u32 2147483647, %v2246
        %v2263 = vand.u32 2147483647, %v2247
        %v2264 = vand.u32 2147483647, %v2248
        %v2265 = vand.u32 2147483647, %v2249
        %v2266 = vand.u32 2147483647, %v2250
        %v2267 = vand.u32 2147483647, %v2251
        %v2268 = vand.u32 2147483647, %v2252
        %v2269 = vand.u32 2147483647, %v2253
        %v2270 = vand.u32 2147483647, %v2254
        %v2271 = vand.u32 2147483647, %v2255
        %v2272 = vand.u32 2147483647, %v2256
        %v2273 = vand.u32 2147483647, %v2257
        %v2274 = vand.u32 2147483647, %v2258
        %v2275 = vand.u32 2147483647, %v2259
        %v2276 = vsub.f32 1.0, %v2260
        %v2277 = vsub.f32 1.0, %v2261
        %v2278 = vsub.f32 1.0, %v2262
        %v2279 = vsub.f32 1.0, %v2263
        %v2280 = vsub.f32 1.0, %v2264
        %v2281 = vsub.f32 1.0, %v2265
        %v2282 = vsub.f32 1.0, %v2266
        %v2283 = vsub.f32 1.0, %v2267
        %v2284 = vsub.f32 1.0, %v2268
        %v2285 = vsub.f32 1.0, %v2269
        %v2286 = vsub.f32 1.0, %v2270
        %v2287 = vsub.f32 1.0, %v2271
        %v2288 = vsub.f32 1.0, %v2272
        %v2289 = vsub.f32 1.0, %v2273
        %v2290 = vsub.f32 1.0, %v2274
        %v2291 = vsub.f32 1.0, %v2275
        %v2292 = vmax.f32 %v2276, 0.0
        %v2293 = vmax.f32 %v2277, 0.0
        %v2294 = vmax.f32 %v2278, 0.0
        %v2295 = vmax.f32 %v2279, 0.0
        %v2296 = vmax.f32 %v2280, 0.0
        %v2297 = vmax.f32 %v2281, 0.0
        %v2298 = vmax.f32 %v2282, 0.0
        %v2299 = vmax.f32 %v2283, 0.0
        %v2300 = vmax.f32 %v2284, 0.0
        %v2301 = vmax.f32 %v2285, 0.0
        %v2302 = vmax.f32 %v2286, 0.0
        %v2303 = vmax.f32 %v2287, 0.0
        %v2304 = vmax.f32 %v2288, 0.0
        %v2305 = vmax.f32 %v2289, 0.0
        %v2306 = vmax.f32 %v2290, 0.0
        %v2307 = vmax.f32 %v2291, 0.0
        %v2308 = vpack.c.bf16 %v2165, %v2164
        %v2309 = vpack.c.bf16 %v2167, %v2166
        %v2310 = vpack.c.bf16 %v2169, %v2168
        %v2311 = vpack.c.bf16 %v2171, %v2170
        %v2312 = vpack.c.bf16 %v2173, %v2172
        %v2313 = vpack.c.bf16 %v2175, %v2174
        %v2314 = vpack.c.bf16 %v2177, %v2176
        %v2315 = vpack.c.bf16 %v2179, %v2178
        %v2317 = vsel %vm589, %v2308, 0
        %v2320 = vsel %vm589, %v2309, 0
        %v2323 = vsel %vm589, %v2310, 0
        %v2326 = vsel %vm589, %v2311, 0
        %v2329 = vsel %vm589, %v2312, 0
        %v2332 = vsel %vm589, %v2313, 0
        %v2335 = vsel %vm589, %v2314, 0
        %v2338 = vsel %vm589, %v2315, 0
        %2340 = vmatprep.subr.bf16.mxu0 0
        %2341 = vmatpush1.bf16.msra.mxu0 %v587
        %2342 = vmatprep.subr.bf16.mxu0 0
        %2343 = vmatpush1.bf16.msra.mxu0 0
        %2344 = vmatprep.subr.bf16.mxu0 0
        %2345 = vmatpush1.bf16.msra.mxu0 0
        %2346 = vmatprep.subr.bf16.mxu0 0
        %2347 = vmatpush1.bf16.msra.mxu0 0
        %2348 = vmatprep.subr.bf16.mxu0 0
        %2349 = vmatpush1.bf16.msra.mxu0 0
        %2350 = vmatprep.subr.bf16.mxu0 0
        %2351 = vmatpush1.bf16.msra.mxu0 0
        %2352 = vmatprep.subr.bf16.mxu0 0
        %2353 = vmatpush1.bf16.msra.mxu0 0
        %2354 = vmatprep.subr.bf16.mxu0 0
        %2355 = vmatpush1.bf16.msra.mxu0 0
        %2356 = vmatprep.subr.bf16.mxu0 0
        %2357 = vmatpush1.bf16.msra.mxu0 0
        %2358 = vmatprep.subr.bf16.mxu0 0
        %2359 = vmatpush1.bf16.msra.mxu0 0
        %2360 = vmatprep.subr.bf16.mxu0 0
        %2361 = vmatpush1.bf16.msra.mxu0 0
        %2362 = vmatprep.subr.bf16.mxu0 0
        %2363 = vmatpush1.bf16.msra.mxu0 0
        %2364 = vmatprep.subr.bf16.mxu0 0
        %2365 = vmatpush1.bf16.msra.mxu0 0
        %2366 = vmatprep.subr.bf16.mxu0 0
        %2367 = vmatpush1.bf16.msra.mxu0 0
        %2368 = vmatprep.subr.bf16.mxu0 0
        %2369 = vmatpush1.bf16.msra.mxu0 0
        %2370 = vmatprep.subr.bf16.mxu0 0
        %2371 = vmatpush1.bf16.msra.mxu0 0
        %2372 = vmatprep.mubr.bf16.mxu0 0
        %2373 = vmatmul.mubr.bf16.gmra.mrb[0].mxu0 %v2317
        %v2374 = vpop.f32.mrb[0].mxu0
        %v2375 = vadd.f32 0.0, %v2374
        %v2376 = vpop.f32.mrb[0].mxu0
        %v2377 = vpop.f32.mrb[0].mxu0
        %v2378 = vadd.f32 0.0, %v2377
        %v2379 = vpop.f32.mrb[0].mxu0
        %2380 = vmatprep.mubr.bf16.mxu0 0
        %2381 = vmatmul.mubr.bf16.gmra.mrb[0].mxu0 %v2320
        %v2382 = vpop.f32.mrb[0].mxu0
        %v2383 = vadd.f32 0.0, %v2382
        %v2384 = vpop.f32.mrb[0].mxu0
        %v2385 = vpop.f32.mrb[0].mxu0
        %v2386 = vadd.f32 0.0, %v2385
        %v2387 = vpop.f32.mrb[0].mxu0
        %2388 = vmatprep.mubr.bf16.mxu0 0
        %2389 = vmatmul.mubr.bf16.gmra.mrb[0].mxu0 %v2323
        %v2390 = vpop.f32.mrb[0].mxu0
        %v2391 = vadd.f32 0.0, %v2390
        %v2392 = vpop.f32.mrb[0].mxu0
        %v2393 = vpop.f32.mrb[0].mxu0
        %v2394 = vadd.f32 0.0, %v2393
        %v2395 = vpop.f32.mrb[0].mxu0
        %2396 = vmatprep.mubr.bf16.mxu0 0
        %2397 = vmatmul.mubr.bf16.gmra.mrb[0].mxu0 %v2326
        %v2398 = vpop.f32.mrb[0].mxu0
        %v2399 = vadd.f32 0.0, %v2398
        %v2400 = vpop.f32.mrb[0].mxu0
        %v2401 = vpop.f32.mrb[0].mxu0
        %v2402 = vadd.f32 0.0, %v2401
        %v2403 = vpop.f32.mrb[0].mxu0
        %2404 = vmatprep.mubr.bf16.mxu0 0
        %2405 = vmatmul.mubr.bf16.gmra.mrb[0].mxu0 %v2329
        %v2406 = vpop.f32.mrb[0].mxu0
        %v2407 = vadd.f32 0.0, %v2406
        %v2408 = vpop.f32.mrb[0].mxu0
        %v2409 = vpop.f32.mrb[0].mxu0
        %v2410 = vadd.f32 0.0, %v2409
        %v2411 = vpop.f32.mrb[0].mxu0
        %2412 = vmatprep.mubr.bf16.mxu0 0
        %2413 = vmatmul.mubr.bf16.gmra.mrb[0].mxu0 %v2332
        %v2414 = vpop.f32.mrb[0].mxu0
        %v2415 = vadd.f32 0.0, %v2414
        %v2416 = vpop.f32.mrb[0].mxu0
        %v2417 = vpop.f32.mrb[0].mxu0
        %v2418 = vadd.f32 0.0, %v2417
        %v2419 = vpop.f32.mrb[0].mxu0
        %2420 = vmatprep.mubr.bf16.mxu0 0
        %2421 = vmatmul.mubr.bf16.gmra.mrb[0].mxu0 %v2335
        %v2422 = vpop.f32.mrb[0].mxu0
        %v2423 = vadd.f32 0.0, %v2422
        %v2424 = vpop.f32.mrb[0].mxu0
        %v2425 = vpop.f32.mrb[0].mxu0
        %v2426 = vadd.f32 0.0, %v2425
        %v2427 = vpop.f32.mrb[0].mxu0
        %2428 = vmatprep.mubr.bf16.mxu0 0
        %2429 = vmatmul.mubr.bf16.gmra.mrb[0].mxu0 %v2338
        %v2430 = vpop.f32.mrb[0].mxu0
        %v2431 = vadd.f32 0.0, %v2430
        %v2432 = vpop.f32.mrb[0].mxu0
        %v2433 = vpop.f32.mrb[0].mxu0
        %v2434 = vadd.f32 0.0, %v2433
        %v2435 = vpop.f32.mrb[0].mxu0
        %2436 = vdwg.mxu0
        %v2437 = vmul.f32 %v2292, %v2375
        %v2438 = vmul.f32 %v2293, %v2378
        %v2439 = vmul.f32 %v2294, %v2383
        %v2440 = vmul.f32 %v2295, %v2386
        %v2441 = vmul.f32 %v2296, %v2391
        %v2442 = vmul.f32 %v2297, %v2394
        %v2443 = vmul.f32 %v2298, %v2399
        %v2444 = vmul.f32 %v2299, %v2402
        %v2445 = vmul.f32 %v2300, %v2407
        %v2446 = vmul.f32 %v2301, %v2410
        %v2447 = vmul.f32 %v2302, %v2415
        %v2448 = vmul.f32 %v2303, %v2418
        %v2449 = vmul.f32 %v2304, %v2423
        %v2450 = vmul.f32 %v2305, %v2426
        %v2451 = vmul.f32 %v2306, %v2431
        %v2452 = vmul.f32 %v2307, %v2434
        %v2453 = vpack.c.bf16 %v2438, %v2437
        %v2454 = vpack.c.bf16 %v2440, %v2439
        %v2455 = vpack.c.bf16 %v2442, %v2441
        %v2456 = vpack.c.bf16 %v2444, %v2443
        %v2457 = vpack.c.bf16 %v2446, %v2445
        %v2458 = vpack.c.bf16 %v2448, %v2447
        %v2459 = vpack.c.bf16 %v2450, %v2449
        %v2460 = vpack.c.bf16 %v2452, %v2451
        %v2461 = vld [vmem:[%s3 + $0xc0] sm:$0xf]
        %v2462 = vld [vmem:[%s3 + $0xc4] sm:$0xf]
        %v2463 = vld [vmem:[%s3 + $0xc8] sm:$0xf]
        %v2464 = vld [vmem:[%s3 + $0xcc] sm:$0xf]
        %v2465 = vld [vmem:[%s3 + $0xd0] sm:$0xf]
        %v2466 = vld [vmem:[%s3 + $0xd4] sm:$0xf]
        %v2467 = vld [vmem:[%s3 + $0xd8] sm:$0xf]
        %v2468 = vld [vmem:[%s3 + $0xdc] sm:$0xf]
        %v2469 = vld [vmem:[%s3 + $0xe0] sm:$0xf]
        %v2470 = vld [vmem:[%s3 + $0xe4] sm:$0xf]
        %v2471 = vld [vmem:[%s3 + $0xe8] sm:$0xf]
        %v2472 = vld [vmem:[%s3 + $0xec] sm:$0xf]
        %v2473 = vld [vmem:[%s3 + $0xf0] sm:$0xf]
        %v2474 = vld [vmem:[%s3 + $0xf4] sm:$0xf]
        %v2475 = vld [vmem:[%s3 + $0xf8] sm:$0xf]
        %v2476 = vld [vmem:[%s3 + $0xfc] sm:$0xf]
        %v2493 = vunpack.c.l.b16 %v2461
        %v2494 = vunpack.c.l.b16 %v2462
        %v2495 = vunpack.c.l.b16 %v2463
        %v2496 = vunpack.c.l.b16 %v2464
        %v2497 = vunpack.c.l.b16 %v2465
        %v2498 = vunpack.c.l.b16 %v2466
        %v2499 = vunpack.c.l.b16 %v2467
        %v2500 = vunpack.c.l.b16 %v2468
        %v2501 = vunpack.c.l.b16 %v2469
        %v2502 = vunpack.c.l.b16 %v2470
        %v2503 = vunpack.c.l.b16 %v2471
        %v2504 = vunpack.c.l.b16 %v2472
        %v2505 = vunpack.c.l.b16 %v2473
        %v2506 = vunpack.c.l.b16 %v2474
        %v2507 = vunpack.c.l.b16 %v2475
        %v2508 = vunpack.c.l.b16 %v2476
        %v2509 = vpack.c.b16 %v2494, %v2493
        %v2510 = vpack.c.b16 %v2496, %v2495
        %v2511 = vpack.c.b16 %v2498, %v2497
        %v2512 = vpack.c.b16 %v2500, %v2499
        %v2513 = vpack.c.b16 %v2502, %v2501
        %v2514 = vpack.c.b16 %v2504, %v2503
        %v2515 = vpack.c.b16 %v2506, %v2505
        %v2516 = vpack.c.b16 %v2508, %v2507
        %2525 = vmatprep.subr.bf16.mxu0 0
        %2526 = vmatpush1.bf16.msra.mxu0 %v2509
        %2527 = vmatprep.subr.bf16.mxu0 0
        %2528 = vmatpush1.bf16.msra.mxu0 %v2510
        %2529 = vmatprep.subr.bf16.mxu0 0
        %2530 = vmatpush1.bf16.msra.mxu0 %v2511
        %2531 = vmatprep.subr.bf16.mxu0 0
        %2532 = vmatpush1.bf16.msra.mxu0 %v2512
        %2533 = vmatprep.subr.bf16.mxu0 0
        %2534 = vmatpush1.bf16.msra.mxu0 %v2513
        %2535 = vmatprep.subr.bf16.mxu0 0
        %2536 = vmatpush1.bf16.msra.mxu0 %v2514
        %2537 = vmatprep.subr.bf16.mxu0 0
        %2538 = vmatpush1.bf16.msra.mxu0 %v2515
        %2539 = vmatprep.subr.bf16.mxu0 0
        %2540 = vmatpush1.bf16.msra.mxu0 %v2516
        %2541 = vmatprep.subr.bf16.mxu0 0
        %2542 = vmatpush1.bf16.msra.mxu0 0
        %2543 = vmatprep.subr.bf16.mxu0 0
        %2544 = vmatpush1.bf16.msra.mxu0 0
        %2545 = vmatprep.subr.bf16.mxu0 0
        %2546 = vmatpush1.bf16.msra.mxu0 0
        %2547 = vmatprep.subr.bf16.mxu0 0
        %2548 = vmatpush1.bf16.msra.mxu0 0
        %2549 = vmatprep.subr.bf16.mxu0 0
        %2550 = vmatpush1.bf16.msra.mxu0 0
        %2551 = vmatprep.subr.bf16.mxu0 0
        %2552 = vmatpush1.bf16.msra.mxu0 0
        %2553 = vmatprep.subr.bf16.mxu0 0
        %2554 = vmatpush1.bf16.msra.mxu0 0
        %2555 = vmatprep.subr.bf16.mxu0 0
        %2556 = vmatpush1.bf16.msra.mxu0 0
        %2557 = vmatprep.mubr.bf16.mxu0 0
        %2558 = vmatmul.mubr.bf16.gmra.mrb[0].mxu0 %v2453
        %v2559 = vpop.f32.mrb[0].mxu0
        %v2560 = vadd.f32 0.0, %v2559
        %v2561 = vpop.f32.mrb[0].mxu0
        %v2562 = vpop.f32.mrb[0].mxu0
        %v2563 = vadd.f32 0.0, %v2562
        %v2564 = vpop.f32.mrb[0].mxu0
        %2565 = vmatprep.mubr.bf16.mxu0 0
        %2566 = vmatmul.mubr.bf16.gmra.mrb[0].mxu0 %v2454
        %v2567 = vpop.f32.mrb[0].mxu0
        %v2568 = vadd.f32 0.0, %v2567
        %v2569 = vpop.f32.mrb[0].mxu0
        %v2570 = vpop.f32.mrb[0].mxu0
        %v2571 = vadd.f32 0.0, %v2570
        %v2572 = vpop.f32.mrb[0].mxu0
        %2573 = vmatprep.mubr.bf16.mxu0 0
        %2574 = vmatmul.mubr.bf16.gmra.mrb[0].mxu0 %v2455
        %v2575 = vpop.f32.mrb[0].mxu0
        %v2576 = vadd.f32 0.0, %v2575
        %v2577 = vpop.f32.mrb[0].mxu0
        %v2578 = vpop.f32.mrb[0].mxu0
        %v2579 = vadd.f32 0.0, %v2578
        %v2580 = vpop.f32.mrb[0].mxu0
        %2581 = vmatprep.mubr.bf16.mxu0 0
        %2582 = vmatmul.mubr.bf16.gmra.mrb[0].mxu0 %v2456
        %v2583 = vpop.f32.mrb[0].mxu0
        %v2584 = vadd.f32 0.0, %v2583
        %v2585 = vpop.f32.mrb[0].mxu0
        %v2586 = vpop.f32.mrb[0].mxu0
        %v2587 = vadd.f32 0.0, %v2586
        %v2588 = vpop.f32.mrb[0].mxu0
        %2589 = vmatprep.mubr.bf16.mxu0 0
        %2590 = vmatmul.mubr.bf16.gmra.mrb[0].mxu0 %v2457
        %v2591 = vpop.f32.mrb[0].mxu0
        %v2592 = vadd.f32 0.0, %v2591
        %v2593 = vpop.f32.mrb[0].mxu0
        %v2594 = vpop.f32.mrb[0].mxu0
        %v2595 = vadd.f32 0.0, %v2594
        %v2596 = vpop.f32.mrb[0].mxu0
        %2597 = vmatprep.mubr.bf16.mxu0 0
        %2598 = vmatmul.mubr.bf16.gmra.mrb[0].mxu0 %v2458
        %v2599 = vpop.f32.mrb[0].mxu0
        %v2600 = vadd.f32 0.0, %v2599
        %v2601 = vpop.f32.mrb[0].mxu0
        %v2602 = vpop.f32.mrb[0].mxu0
        %v2603 = vadd.f32 0.0, %v2602
        %v2604 = vpop.f32.mrb[0].mxu0
        %2605 = vmatprep.mubr.bf16.mxu0 0
        %2606 = vmatmul.mubr.bf16.gmra.mrb[0].mxu0 %v2459
        %v2607 = vpop.f32.mrb[0].mxu0
        %v2608 = vadd.f32 0.0, %v2607
        %v2609 = vpop.f32.mrb[0].mxu0
        %v2610 = vpop.f32.mrb[0].mxu0
        %v2611 = vadd.f32 0.0, %v2610
        %v2612 = vpop.f32.mrb[0].mxu0
        %2613 = vmatprep.mubr.bf16.mxu0 0
        %2614 = vmatmul.mubr.bf16.gmra.mrb[0].mxu0 %v2460
        %v2615 = vpop.f32.mrb[0].mxu0
        %v2616 = vadd.f32 0.0, %v2615
        %v2617 = vpop.f32.mrb[0].mxu0
        %v2618 = vpop.f32.mrb[0].mxu0
        %v2619 = vadd.f32 0.0, %v2618
        %v2620 = vpop.f32.mrb[0].mxu0
        %2621 = vdwg.mxu0
        %v2622 = vadd.f32 %v2036, %v2560
        %v2623 = vadd.f32 %v2037, %v2563
        %v2624 = vadd.f32 %v2038, %v2568
        %v2625 = vadd.f32 %v2039, %v2571
        %v2626 = vadd.f32 %v2040, %v2576
        %v2627 = vadd.f32 %v2041, %v2579
        %v2628 = vadd.f32 %v2042, %v2584
        %v2629 = vadd.f32 %v2043, %v2587
        %v2630 = vadd.f32 %v2044, %v2592
        %v2631 = vadd.f32 %v2045, %v2595
        %v2632 = vadd.f32 %v2046, %v2600
        %v2633 = vadd.f32 %v2047, %v2603
        %v2634 = vadd.f32 %v2048, %v2608
        %v2635 = vadd.f32 %v2049, %v2611
        %v2636 = vadd.f32 %v2050, %v2616
        %v2637 = vadd.f32 %v2051, %v2619
        %2638 = vset.pattern.permute.xlu0 4
        %2639 = vperm.xlu0 %2638, %v277
        %v2640 = vpop.permute.xlu0 %2639
        %2642 = vset.pattern.permute.xlu0 4
        %2643 = vperm.xlu0 %2642, %v278
        %v2644 = vpop.permute.xlu0 %2643
        %2646 = vset.pattern.permute.xlu0 4
        %2647 = vperm.xlu0 %2646, %v279
        %v2648 = vpop.permute.xlu0 %2647
        %2650 = vset.pattern.permute.xlu0 4
        %2651 = vperm.xlu0 %2650, %v280
        %v2652 = vpop.permute.xlu0 %2651
        %2654 = vset.pattern.permute.xlu0 4
        %2655 = vperm.xlu0 %2654, %v281
        %v2656 = vpop.permute.xlu0 %2655
        %2658 = vset.pattern.permute.xlu0 4
        %2659 = vperm.xlu0 %2658, %v282
        %v2660 = vpop.permute.xlu0 %2659
        %2662 = vset.pattern.permute.xlu0 4
        %2663 = vperm.xlu0 %2662, %v283
        %v2664 = vpop.permute.xlu0 %2663
        %2666 = vset.pattern.permute.xlu0 4
        %2667 = vperm.xlu0 %2666, %v284
        %v2668 = vpop.permute.xlu0 %2667
        %2670 = vset.pattern.permute.xlu0 4
        %2671 = vperm.xlu0 %2670, %v285
        %v2672 = vpop.permute.xlu0 %2671
        %2674 = vset.pattern.permute.xlu0 4
        %2675 = vperm.xlu0 %2674, %v286
        %v2676 = vpop.permute.xlu0 %2675
        %2678 = vset.pattern.permute.xlu0 4
        %2679 = vperm.xlu0 %2678, %v287
        %v2680 = vpop.permute.xlu0 %2679
        %2682 = vset.pattern.permute.xlu0 4
        %2683 = vperm.xlu0 %2682, %v288
        %v2684 = vpop.permute.xlu0 %2683
        %2686 = vset.pattern.permute.xlu0 4
        %2687 = vperm.xlu0 %2686, %v289
        %v2688 = vpop.permute.xlu0 %2687
        %2690 = vset.pattern.permute.xlu0 4
        %2691 = vperm.xlu0 %2690, %v290
        %v2692 = vpop.permute.xlu0 %2691
        %2694 = vset.pattern.permute.xlu0 4
        %2695 = vperm.xlu0 %2694, %v291
        %v2696 = vpop.permute.xlu0 %2695
        %2698 = vset.pattern.permute.xlu0 4
        %2699 = vperm.xlu0 %2698, %v292
        %v2700 = vpop.permute.xlu0 %2699
        %v2702 = vsub.f32 %v295, %v2640
        %v2703 = vsub.f32 %v295, %v2644
        %v2704 = vsub.f32 %v295, %v2648
        %v2705 = vsub.f32 %v295, %v2652
        %v2706 = vsub.f32 %v295, %v2656
        %v2707 = vsub.f32 %v295, %v2660
        %v2708 = vsub.f32 %v295, %v2664
        %v2709 = vsub.f32 %v295, %v2668
        %v2710 = vsub.f32 %v295, %v2672
        %v2711 = vsub.f32 %v295, %v2676
        %v2712 = vsub.f32 %v295, %v2680
        %v2713 = vsub.f32 %v295, %v2684
        %v2714 = vsub.f32 %v295, %v2688
        %v2715 = vsub.f32 %v295, %v2692
        %v2716 = vsub.f32 %v295, %v2696
        %v2717 = vsub.f32 %v295, %v2700
        %v2718 = vand.u32 2147483647, %v2702
        %v2719 = vand.u32 2147483647, %v2703
        %v2720 = vand.u32 2147483647, %v2704
        %v2721 = vand.u32 2147483647, %v2705
        %v2722 = vand.u32 2147483647, %v2706
        %v2723 = vand.u32 2147483647, %v2707
        %v2724 = vand.u32 2147483647, %v2708
        %v2725 = vand.u32 2147483647, %v2709
        %v2726 = vand.u32 2147483647, %v2710
        %v2727 = vand.u32 2147483647, %v2711
        %v2728 = vand.u32 2147483647, %v2712
        %v2729 = vand.u32 2147483647, %v2713
        %v2730 = vand.u32 2147483647, %v2714
        %v2731 = vand.u32 2147483647, %v2715
        %v2732 = vand.u32 2147483647, %v2716
        %v2733 = vand.u32 2147483647, %v2717
        %v2734 = vsub.f32 1.0, %v2718
        %v2735 = vsub.f32 1.0, %v2719
        %v2736 = vsub.f32 1.0, %v2720
        %v2737 = vsub.f32 1.0, %v2721
        %v2738 = vsub.f32 1.0, %v2722
        %v2739 = vsub.f32 1.0, %v2723
        %v2740 = vsub.f32 1.0, %v2724
        %v2741 = vsub.f32 1.0, %v2725
        %v2742 = vsub.f32 1.0, %v2726
        %v2743 = vsub.f32 1.0, %v2727
        %v2744 = vsub.f32 1.0, %v2728
        %v2745 = vsub.f32 1.0, %v2729
        %v2746 = vsub.f32 1.0, %v2730
        %v2747 = vsub.f32 1.0, %v2731
        %v2748 = vsub.f32 1.0, %v2732
        %v2749 = vsub.f32 1.0, %v2733
        %v2750 = vmax.f32 %v2734, 0.0
        %v2751 = vmax.f32 %v2735, 0.0
        %v2752 = vmax.f32 %v2736, 0.0
        %v2753 = vmax.f32 %v2737, 0.0
        %v2754 = vmax.f32 %v2738, 0.0
        %v2755 = vmax.f32 %v2739, 0.0
        %v2756 = vmax.f32 %v2740, 0.0
        %v2757 = vmax.f32 %v2741, 0.0
        %v2758 = vmax.f32 %v2742, 0.0
        %v2759 = vmax.f32 %v2743, 0.0
        %v2760 = vmax.f32 %v2744, 0.0
        %v2761 = vmax.f32 %v2745, 0.0
        %v2762 = vmax.f32 %v2746, 0.0
        %v2763 = vmax.f32 %v2747, 0.0
        %v2764 = vmax.f32 %v2748, 0.0
        %v2765 = vmax.f32 %v2749, 0.0
        %2766 = vset.pattern.permute.xlu0 13
        %2767 = vperm.xlu0 %2766, %v277
        %v2768 = vpop.permute.xlu0 %2767
        %2770 = vset.pattern.permute.xlu0 13
        %2771 = vperm.xlu0 %2770, %v278
        %v2772 = vpop.permute.xlu0 %2771
        %2774 = vset.pattern.permute.xlu0 13
        %2775 = vperm.xlu0 %2774, %v279
        %v2776 = vpop.permute.xlu0 %2775
        %2778 = vset.pattern.permute.xlu0 13
        %2779 = vperm.xlu0 %2778, %v280
        %v2780 = vpop.permute.xlu0 %2779
        %2782 = vset.pattern.permute.xlu0 13
        %2783 = vperm.xlu0 %2782, %v281
        %v2784 = vpop.permute.xlu0 %2783
        %2786 = vset.pattern.permute.xlu0 13
        %2787 = vperm.xlu0 %2786, %v282
        %v2788 = vpop.permute.xlu0 %2787
        %2790 = vset.pattern.permute.xlu0 13
        %2791 = vperm.xlu0 %2790, %v283
        %v2792 = vpop.permute.xlu0 %2791
        %2794 = vset.pattern.permute.xlu0 13
        %2795 = vperm.xlu0 %2794, %v284
        %v2796 = vpop.permute.xlu0 %2795
        %2798 = vset.pattern.permute.xlu0 13
        %2799 = vperm.xlu0 %2798, %v285
        %v2800 = vpop.permute.xlu0 %2799
        %2802 = vset.pattern.permute.xlu0 13
        %2803 = vperm.xlu0 %2802, %v286
        %v2804 = vpop.permute.xlu0 %2803
        %2806 = vset.pattern.permute.xlu0 13
        %2807 = vperm.xlu0 %2806, %v287
        %v2808 = vpop.permute.xlu0 %2807
        %2810 = vset.pattern.permute.xlu0 13
        %2811 = vperm.xlu0 %2810, %v288
        %v2812 = vpop.permute.xlu0 %2811
        %2814 = vset.pattern.permute.xlu0 13
        %2815 = vperm.xlu0 %2814, %v289
        %v2816 = vpop.permute.xlu0 %2815
        %2818 = vset.pattern.permute.xlu0 13
        %2819 = vperm.xlu0 %2818, %v290
        %v2820 = vpop.permute.xlu0 %2819
        %2822 = vset.pattern.permute.xlu0 13
        %2823 = vperm.xlu0 %2822, %v291
        %v2824 = vpop.permute.xlu0 %2823
        %2826 = vset.pattern.permute.xlu0 13
        %2827 = vperm.xlu0 %2826, %v292
        %v2828 = vpop.permute.xlu0 %2827
        %v2830 = vsub.f32 %v301, %v2768
        %v2831 = vsub.f32 %v301, %v2772
        %v2832 = vsub.f32 %v301, %v2776
        %v2833 = vsub.f32 %v301, %v2780
        %v2834 = vsub.f32 %v301, %v2784
        %v2835 = vsub.f32 %v301, %v2788
        %v2836 = vsub.f32 %v301, %v2792
        %v2837 = vsub.f32 %v301, %v2796
        %v2838 = vsub.f32 %v301, %v2800
        %v2839 = vsub.f32 %v301, %v2804
        %v2840 = vsub.f32 %v301, %v2808
        %v2841 = vsub.f32 %v301, %v2812
        %v2842 = vsub.f32 %v301, %v2816
        %v2843 = vsub.f32 %v301, %v2820
        %v2844 = vsub.f32 %v301, %v2824
        %v2845 = vsub.f32 %v301, %v2828
        %v2846 = vand.u32 2147483647, %v2830
        %v2847 = vand.u32 2147483647, %v2831
        %v2848 = vand.u32 2147483647, %v2832
        %v2849 = vand.u32 2147483647, %v2833
        %v2850 = vand.u32 2147483647, %v2834
        %v2851 = vand.u32 2147483647, %v2835
        %v2852 = vand.u32 2147483647, %v2836
        %v2853 = vand.u32 2147483647, %v2837
        %v2854 = vand.u32 2147483647, %v2838
        %v2855 = vand.u32 2147483647, %v2839
        %v2856 = vand.u32 2147483647, %v2840
        %v2857 = vand.u32 2147483647, %v2841
        %v2858 = vand.u32 2147483647, %v2842
        %v2859 = vand.u32 2147483647, %v2843
        %v2860 = vand.u32 2147483647, %v2844
        %v2861 = vand.u32 2147483647, %v2845
        %v2862 = vsub.f32 1.0, %v2846
        %v2863 = vsub.f32 1.0, %v2847
        %v2864 = vsub.f32 1.0, %v2848
        %v2865 = vsub.f32 1.0, %v2849
        %v2866 = vsub.f32 1.0, %v2850
        %v2867 = vsub.f32 1.0, %v2851
        %v2868 = vsub.f32 1.0, %v2852
        %v2869 = vsub.f32 1.0, %v2853
        %v2870 = vsub.f32 1.0, %v2854
        %v2871 = vsub.f32 1.0, %v2855
        %v2872 = vsub.f32 1.0, %v2856
        %v2873 = vsub.f32 1.0, %v2857
        %v2874 = vsub.f32 1.0, %v2858
        %v2875 = vsub.f32 1.0, %v2859
        %v2876 = vsub.f32 1.0, %v2860
        %v2877 = vsub.f32 1.0, %v2861
        %v2878 = vmax.f32 %v2862, 0.0
        %v2879 = vmax.f32 %v2863, 0.0
        %v2880 = vmax.f32 %v2864, 0.0
        %v2881 = vmax.f32 %v2865, 0.0
        %v2882 = vmax.f32 %v2866, 0.0
        %v2883 = vmax.f32 %v2867, 0.0
        %v2884 = vmax.f32 %v2868, 0.0
        %v2885 = vmax.f32 %v2869, 0.0
        %v2886 = vmax.f32 %v2870, 0.0
        %v2887 = vmax.f32 %v2871, 0.0
        %v2888 = vmax.f32 %v2872, 0.0
        %v2889 = vmax.f32 %v2873, 0.0
        %v2890 = vmax.f32 %v2874, 0.0
        %v2891 = vmax.f32 %v2875, 0.0
        %v2892 = vmax.f32 %v2876, 0.0
        %v2893 = vmax.f32 %v2877, 0.0
        %v2894 = vpack.c.bf16 %v2751, %v2750
        %v2895 = vpack.c.bf16 %v2753, %v2752
        %v2896 = vpack.c.bf16 %v2755, %v2754
        %v2897 = vpack.c.bf16 %v2757, %v2756
        %v2898 = vpack.c.bf16 %v2759, %v2758
        %v2899 = vpack.c.bf16 %v2761, %v2760
        %v2900 = vpack.c.bf16 %v2763, %v2762
        %v2901 = vpack.c.bf16 %v2765, %v2764
        %v2903 = vsel %vm589, %v2894, 0
        %v2906 = vsel %vm589, %v2895, 0
        %v2909 = vsel %vm589, %v2896, 0
        %v2912 = vsel %vm589, %v2897, 0
        %v2915 = vsel %vm589, %v2898, 0
        %v2918 = vsel %vm589, %v2899, 0
        %v2921 = vsel %vm589, %v2900, 0
        %v2924 = vsel %vm589, %v2901, 0
        %2926 = vmatprep.subr.bf16.mxu0 0
        %2927 = vmatpush1.bf16.msra.mxu0 %v587
        %2928 = vmatprep.subr.bf16.mxu0 0
        %2929 = vmatpush1.bf16.msra.mxu0 0
        %2930 = vmatprep.subr.bf16.mxu0 0
        %2931 = vmatpush1.bf16.msra.mxu0 0
        %2932 = vmatprep.subr.bf16.mxu0 0
        %2933 = vmatpush1.bf16.msra.mxu0 0
        %2934 = vmatprep.subr.bf16.mxu0 0
        %2935 = vmatpush1.bf16.msra.mxu0 0
        %2936 = vmatprep.subr.bf16.mxu0 0
        %2937 = vmatpush1.bf16.msra.mxu0 0
        %2938 = vmatprep.subr.bf16.mxu0 0
        %2939 = vmatpush1.bf16.msra.mxu0 0
        %2940 = vmatprep.subr.bf16.mxu0 0
        %2941 = vmatpush1.bf16.msra.mxu0 0
        %2942 = vmatprep.subr.bf16.mxu0 0
        %2943 = vmatpush1.bf16.msra.mxu0 0
        %2944 = vmatprep.subr.bf16.mxu0 0
        %2945 = vmatpush1.bf16.msra.mxu0 0
        %2946 = vmatprep.subr.bf16.mxu0 0
        %2947 = vmatpush1.bf16.msra.mxu0 0
        %2948 = vmatprep.subr.bf16.mxu0 0
        %2949 = vmatpush1.bf16.msra.mxu0 0
        %2950 = vmatprep.subr.bf16.mxu0 0
        %2951 = vmatpush1.bf16.msra.mxu0 0
        %2952 = vmatprep.subr.bf16.mxu0 0
        %2953 = vmatpush1.bf16.msra.mxu0 0
        %2954 = vmatprep.subr.bf16.mxu0 0
        %2955 = vmatpush1.bf16.msra.mxu0 0
        %2956 = vmatprep.subr.bf16.mxu0 0
        %2957 = vmatpush1.bf16.msra.mxu0 0
        %2958 = vmatprep.mubr.bf16.mxu0 0
        %2959 = vmatmul.mubr.bf16.gmra.mrb[0].mxu0 %v2903
        %v2960 = vpop.f32.mrb[0].mxu0
        %v2961 = vadd.f32 0.0, %v2960
        %v2962 = vpop.f32.mrb[0].mxu0
        %v2963 = vpop.f32.mrb[0].mxu0
        %v2964 = vadd.f32 0.0, %v2963
        %v2965 = vpop.f32.mrb[0].mxu0
        %2966 = vmatprep.mubr.bf16.mxu0 0
        %2967 = vmatmul.mubr.bf16.gmra.mrb[0].mxu0 %v2906
        %v2968 = vpop.f32.mrb[0].mxu0
        %v2969 = vadd.f32 0.0, %v2968
        %v2970 = vpop.f32.mrb[0].mxu0
        %v2971 = vpop.f32.mrb[0].mxu0
        %v2972 = vadd.f32 0.0, %v2971
        %v2973 = vpop.f32.mrb[0].mxu0
        %2974 = vmatprep.mubr.bf16.mxu0 0
        %2975 = vmatmul.mubr.bf16.gmra.mrb[0].mxu0 %v2909
        %v2976 = vpop.f32.mrb[0].mxu0
        %v2977 = vadd.f32 0.0, %v2976
        %v2978 = vpop.f32.mrb[0].mxu0
        %v2979 = vpop.f32.mrb[0].mxu0
        %v2980 = vadd.f32 0.0, %v2979
        %v2981 = vpop.f32.mrb[0].mxu0
        %2982 = vmatprep.mubr.bf16.mxu0 0
        %2983 = vmatmul.mubr.bf16.gmra.mrb[0].mxu0 %v2912
        %v2984 = vpop.f32.mrb[0].mxu0
        %v2985 = vadd.f32 0.0, %v2984
        %v2986 = vpop.f32.mrb[0].mxu0
        %v2987 = vpop.f32.mrb[0].mxu0
        %v2988 = vadd.f32 0.0, %v2987
        %v2989 = vpop.f32.mrb[0].mxu0
        %2990 = vmatprep.mubr.bf16.mxu0 0
        %2991 = vmatmul.mubr.bf16.gmra.mrb[0].mxu0 %v2915
        %v2992 = vpop.f32.mrb[0].mxu0
        %v2993 = vadd.f32 0.0, %v2992
        %v2994 = vpop.f32.mrb[0].mxu0
        %v2995 = vpop.f32.mrb[0].mxu0
        %v2996 = vadd.f32 0.0, %v2995
        %v2997 = vpop.f32.mrb[0].mxu0
        %2998 = vmatprep.mubr.bf16.mxu0 0
        %2999 = vmatmul.mubr.bf16.gmra.mrb[0].mxu0 %v2918
        %v3000 = vpop.f32.mrb[0].mxu0
        %v3001 = vadd.f32 0.0, %v3000
        %v3002 = vpop.f32.mrb[0].mxu0
        %v3003 = vpop.f32.mrb[0].mxu0
        %v3004 = vadd.f32 0.0, %v3003
        %v3005 = vpop.f32.mrb[0].mxu0
        %3006 = vmatprep.mubr.bf16.mxu0 0
        %3007 = vmatmul.mubr.bf16.gmra.mrb[0].mxu0 %v2921
        %v3008 = vpop.f32.mrb[0].mxu0
        %v3009 = vadd.f32 0.0, %v3008
        %v3010 = vpop.f32.mrb[0].mxu0
        %v3011 = vpop.f32.mrb[0].mxu0
        %v3012 = vadd.f32 0.0, %v3011
        %v3013 = vpop.f32.mrb[0].mxu0
        %3014 = vmatprep.mubr.bf16.mxu0 0
        %3015 = vmatmul.mubr.bf16.gmra.mrb[0].mxu0 %v2924
        %v3016 = vpop.f32.mrb[0].mxu0
        %v3017 = vadd.f32 0.0, %v3016
        %v3018 = vpop.f32.mrb[0].mxu0
        %v3019 = vpop.f32.mrb[0].mxu0
        %v3020 = vadd.f32 0.0, %v3019
        %v3021 = vpop.f32.mrb[0].mxu0
        %3022 = vdwg.mxu0
        %v3023 = vmul.f32 %v2878, %v2961
        %v3024 = vmul.f32 %v2879, %v2964
        %v3025 = vmul.f32 %v2880, %v2969
        %v3026 = vmul.f32 %v2881, %v2972
        %v3027 = vmul.f32 %v2882, %v2977
        %v3028 = vmul.f32 %v2883, %v2980
        %v3029 = vmul.f32 %v2884, %v2985
        %v3030 = vmul.f32 %v2885, %v2988
        %v3031 = vmul.f32 %v2886, %v2993
        %v3032 = vmul.f32 %v2887, %v2996
        %v3033 = vmul.f32 %v2888, %v3001
        %v3034 = vmul.f32 %v2889, %v3004
        %v3035 = vmul.f32 %v2890, %v3009
        %v3036 = vmul.f32 %v2891, %v3012
        %v3037 = vmul.f32 %v2892, %v3017
        %v3038 = vmul.f32 %v2893, %v3020
        %v3039 = vpack.c.bf16 %v3024, %v3023
        %v3040 = vpack.c.bf16 %v3026, %v3025
        %v3041 = vpack.c.bf16 %v3028, %v3027
        %v3042 = vpack.c.bf16 %v3030, %v3029
        %v3043 = vpack.c.bf16 %v3032, %v3031
        %v3044 = vpack.c.bf16 %v3034, %v3033
        %v3045 = vpack.c.bf16 %v3036, %v3035
        %v3046 = vpack.c.bf16 %v3038, %v3037
        %v3047 = vld [vmem:[%s3 + $0x100] sm:$0xf]
        %v3048 = vld [vmem:[%s3 + $0x104] sm:$0xf]
        %v3049 = vld [vmem:[%s3 + $0x108] sm:$0xf]
        %v3050 = vld [vmem:[%s3 + $0x10c] sm:$0xf]
        %v3051 = vld [vmem:[%s3 + $0x110] sm:$0xf]
        %v3052 = vld [vmem:[%s3 + $0x114] sm:$0xf]
        %v3053 = vld [vmem:[%s3 + $0x118] sm:$0xf]
        %v3054 = vld [vmem:[%s3 + $0x11c] sm:$0xf]
        %v3055 = vld [vmem:[%s3 + $0x120] sm:$0xf]
        %v3056 = vld [vmem:[%s3 + $0x124] sm:$0xf]
        %v3057 = vld [vmem:[%s3 + $0x128] sm:$0xf]
        %v3058 = vld [vmem:[%s3 + $0x12c] sm:$0xf]
        %v3059 = vld [vmem:[%s3 + $0x130] sm:$0xf]
        %v3060 = vld [vmem:[%s3 + $0x134] sm:$0xf]
        %v3061 = vld [vmem:[%s3 + $0x138] sm:$0xf]
        %v3062 = vld [vmem:[%s3 + $0x13c] sm:$0xf]
        %v3079 = vunpack.c.l.b16 %v3047
        %v3080 = vunpack.c.l.b16 %v3048
        %v3081 = vunpack.c.l.b16 %v3049
        %v3082 = vunpack.c.l.b16 %v3050
        %v3083 = vunpack.c.l.b16 %v3051
        %v3084 = vunpack.c.l.b16 %v3052
        %v3085 = vunpack.c.l.b16 %v3053
        %v3086 = vunpack.c.l.b16 %v3054
        %v3087 = vunpack.c.l.b16 %v3055
        %v3088 = vunpack.c.l.b16 %v3056
        %v3089 = vunpack.c.l.b16 %v3057
        %v3090 = vunpack.c.l.b16 %v3058
        %v3091 = vunpack.c.l.b16 %v3059
        %v3092 = vunpack.c.l.b16 %v3060
        %v3093 = vunpack.c.l.b16 %v3061
        %v3094 = vunpack.c.l.b16 %v3062
        %v3095 = vpack.c.b16 %v3080, %v3079
        %v3096 = vpack.c.b16 %v3082, %v3081
        %v3097 = vpack.c.b16 %v3084, %v3083
        %v3098 = vpack.c.b16 %v3086, %v3085
        %v3099 = vpack.c.b16 %v3088, %v3087
        %v3100 = vpack.c.b16 %v3090, %v3089
        %v3101 = vpack.c.b16 %v3092, %v3091
        %v3102 = vpack.c.b16 %v3094, %v3093
        %3111 = vmatprep.subr.bf16.mxu0 0
        %3112 = vmatpush1.bf16.msra.mxu0 %v3095
        %3113 = vmatprep.subr.bf16.mxu0 0
        %3114 = vmatpush1.bf16.msra.mxu0 %v3096
        %3115 = vmatprep.subr.bf16.mxu0 0
        %3116 = vmatpush1.bf16.msra.mxu0 %v3097
        %3117 = vmatprep.subr.bf16.mxu0 0
        %3118 = vmatpush1.bf16.msra.mxu0 %v3098
        %3119 = vmatprep.subr.bf16.mxu0 0
        %3120 = vmatpush1.bf16.msra.mxu0 %v3099
        %3121 = vmatprep.subr.bf16.mxu0 0
        %3122 = vmatpush1.bf16.msra.mxu0 %v3100
        %3123 = vmatprep.subr.bf16.mxu0 0
        %3124 = vmatpush1.bf16.msra.mxu0 %v3101
        %3125 = vmatprep.subr.bf16.mxu0 0
        %3126 = vmatpush1.bf16.msra.mxu0 %v3102
        %3127 = vmatprep.subr.bf16.mxu0 0
        %3128 = vmatpush1.bf16.msra.mxu0 0
        %3129 = vmatprep.subr.bf16.mxu0 0
        %3130 = vmatpush1.bf16.msra.mxu0 0
        %3131 = vmatprep.subr.bf16.mxu0 0
        %3132 = vmatpush1.bf16.msra.mxu0 0
        %3133 = vmatprep.subr.bf16.mxu0 0
        %3134 = vmatpush1.bf16.msra.mxu0 0
        %3135 = vmatprep.subr.bf16.mxu0 0
        %3136 = vmatpush1.bf16.msra.mxu0 0
        %3137 = vmatprep.subr.bf16.mxu0 0
        %3138 = vmatpush1.bf16.msra.mxu0 0
        %3139 = vmatprep.subr.bf16.mxu0 0
        %3140 = vmatpush1.bf16.msra.mxu0 0
        %3141 = vmatprep.subr.bf16.mxu0 0
        %3142 = vmatpush1.bf16.msra.mxu0 0
        %3143 = vmatprep.mubr.bf16.mxu0 0
        %3144 = vmatmul.mubr.bf16.gmra.mrb[0].mxu0 %v3039
        %v3145 = vpop.f32.mrb[0].mxu0
        %v3146 = vadd.f32 0.0, %v3145
        %v3147 = vpop.f32.mrb[0].mxu0
        %v3148 = vpop.f32.mrb[0].mxu0
        %v3149 = vadd.f32 0.0, %v3148
        %v3150 = vpop.f32.mrb[0].mxu0
        %3151 = vmatprep.mubr.bf16.mxu0 0
        %3152 = vmatmul.mubr.bf16.gmra.mrb[0].mxu0 %v3040
        %v3153 = vpop.f32.mrb[0].mxu0
        %v3154 = vadd.f32 0.0, %v3153
        %v3155 = vpop.f32.mrb[0].mxu0
        %v3156 = vpop.f32.mrb[0].mxu0
        %v3157 = vadd.f32 0.0, %v3156
        %v3158 = vpop.f32.mrb[0].mxu0
        %3159 = vmatprep.mubr.bf16.mxu0 0
        %3160 = vmatmul.mubr.bf16.gmra.mrb[0].mxu0 %v3041
        %v3161 = vpop.f32.mrb[0].mxu0
        %v3162 = vadd.f32 0.0, %v3161
        %v3163 = vpop.f32.mrb[0].mxu0
        %v3164 = vpop.f32.mrb[0].mxu0
        %v3165 = vadd.f32 0.0, %v3164
        %v3166 = vpop.f32.mrb[0].mxu0
        %3167 = vmatprep.mubr.bf16.mxu0 0
        %3168 = vmatmul.mubr.bf16.gmra.mrb[0].mxu0 %v3042
        %v3169 = vpop.f32.mrb[0].mxu0
        %v3170 = vadd.f32 0.0, %v3169
        %v3171 = vpop.f32.mrb[0].mxu0
        %v3172 = vpop.f32.mrb[0].mxu0
        %v3173 = vadd.f32 0.0, %v3172
        %v3174 = vpop.f32.mrb[0].mxu0
        %3175 = vmatprep.mubr.bf16.mxu0 0
        %3176 = vmatmul.mubr.bf16.gmra.mrb[0].mxu0 %v3043
        %v3177 = vpop.f32.mrb[0].mxu0
        %v3178 = vadd.f32 0.0, %v3177
        %v3179 = vpop.f32.mrb[0].mxu0
        %v3180 = vpop.f32.mrb[0].mxu0
        %v3181 = vadd.f32 0.0, %v3180
        %v3182 = vpop.f32.mrb[0].mxu0
        %3183 = vmatprep.mubr.bf16.mxu0 0
        %3184 = vmatmul.mubr.bf16.gmra.mrb[0].mxu0 %v3044
        %v3185 = vpop.f32.mrb[0].mxu0
        %v3186 = vadd.f32 0.0, %v3185
        %v3187 = vpop.f32.mrb[0].mxu0
        %v3188 = vpop.f32.mrb[0].mxu0
        %v3189 = vadd.f32 0.0, %v3188
        %v3190 = vpop.f32.mrb[0].mxu0
        %3191 = vmatprep.mubr.bf16.mxu0 0
        %3192 = vmatmul.mubr.bf16.gmra.mrb[0].mxu0 %v3045
        %v3193 = vpop.f32.mrb[0].mxu0
        %v3194 = vadd.f32 0.0, %v3193
        %v3195 = vpop.f32.mrb[0].mxu0
        %v3196 = vpop.f32.mrb[0].mxu0
        %v3197 = vadd.f32 0.0, %v3196
        %v3198 = vpop.f32.mrb[0].mxu0
        %3199 = vmatprep.mubr.bf16.mxu0 0
        %3200 = vmatmul.mubr.bf16.gmra.mrb[0].mxu0 %v3046
        %v3201 = vpop.f32.mrb[0].mxu0
        %v3202 = vadd.f32 0.0, %v3201
        %v3203 = vpop.f32.mrb[0].mxu0
        %v3204 = vpop.f32.mrb[0].mxu0
        %v3205 = vadd.f32 0.0, %v3204
        %v3206 = vpop.f32.mrb[0].mxu0
        %3207 = vdwg.mxu0
        %v3208 = vadd.f32 %v2622, %v3146
        %v3209 = vadd.f32 %v2623, %v3149
        %v3210 = vadd.f32 %v2624, %v3154
        %v3211 = vadd.f32 %v2625, %v3157
        %v3212 = vadd.f32 %v2626, %v3162
        %v3213 = vadd.f32 %v2627, %v3165
        %v3214 = vadd.f32 %v2628, %v3170
        %v3215 = vadd.f32 %v2629, %v3173
        %v3216 = vadd.f32 %v2630, %v3178
        %v3217 = vadd.f32 %v2631, %v3181
        %v3218 = vadd.f32 %v2632, %v3186
        %v3219 = vadd.f32 %v2633, %v3189
        %v3220 = vadd.f32 %v2634, %v3194
        %v3221 = vadd.f32 %v2635, %v3197
        %v3222 = vadd.f32 %v2636, %v3202
        %v3223 = vadd.f32 %v2637, %v3205
        %3224 = vset.pattern.permute.xlu0 5
        %3225 = vperm.xlu0 %3224, %v277
        %v3226 = vpop.permute.xlu0 %3225
        %3228 = vset.pattern.permute.xlu0 5
        %3229 = vperm.xlu0 %3228, %v278
        %v3230 = vpop.permute.xlu0 %3229
        %3232 = vset.pattern.permute.xlu0 5
        %3233 = vperm.xlu0 %3232, %v279
        %v3234 = vpop.permute.xlu0 %3233
        %3236 = vset.pattern.permute.xlu0 5
        %3237 = vperm.xlu0 %3236, %v280
        %v3238 = vpop.permute.xlu0 %3237
        %3240 = vset.pattern.permute.xlu0 5
        %3241 = vperm.xlu0 %3240, %v281
        %v3242 = vpop.permute.xlu0 %3241
        %3244 = vset.pattern.permute.xlu0 5
        %3245 = vperm.xlu0 %3244, %v282
        %v3246 = vpop.permute.xlu0 %3245
        %3248 = vset.pattern.permute.xlu0 5
        %3249 = vperm.xlu0 %3248, %v283
        %v3250 = vpop.permute.xlu0 %3249
        %3252 = vset.pattern.permute.xlu0 5
        %3253 = vperm.xlu0 %3252, %v284
        %v3254 = vpop.permute.xlu0 %3253
        %3256 = vset.pattern.permute.xlu0 5
        %3257 = vperm.xlu0 %3256, %v285
        %v3258 = vpop.permute.xlu0 %3257
        %3260 = vset.pattern.permute.xlu0 5
        %3261 = vperm.xlu0 %3260, %v286
        %v3262 = vpop.permute.xlu0 %3261
        %3264 = vset.pattern.permute.xlu0 5
        %3265 = vperm.xlu0 %3264, %v287
        %v3266 = vpop.permute.xlu0 %3265
        %3268 = vset.pattern.permute.xlu0 5
        %3269 = vperm.xlu0 %3268, %v288
        %v3270 = vpop.permute.xlu0 %3269
        %3272 = vset.pattern.permute.xlu0 5
        %3273 = vperm.xlu0 %3272, %v289
        %v3274 = vpop.permute.xlu0 %3273
        %3276 = vset.pattern.permute.xlu0 5
        %3277 = vperm.xlu0 %3276, %v290
        %v3278 = vpop.permute.xlu0 %3277
        %3280 = vset.pattern.permute.xlu0 5
        %3281 = vperm.xlu0 %3280, %v291
        %v3282 = vpop.permute.xlu0 %3281
        %3284 = vset.pattern.permute.xlu0 5
        %3285 = vperm.xlu0 %3284, %v292
        %v3286 = vpop.permute.xlu0 %3285
        %v3288 = vsub.f32 %v295, %v3226
        %v3289 = vsub.f32 %v295, %v3230
        %v3290 = vsub.f32 %v295, %v3234
        %v3291 = vsub.f32 %v295, %v3238
        %v3292 = vsub.f32 %v295, %v3242
        %v3293 = vsub.f32 %v295, %v3246
        %v3294 = vsub.f32 %v295, %v3250
        %v3295 = vsub.f32 %v295, %v3254
        %v3296 = vsub.f32 %v295, %v3258
        %v3297 = vsub.f32 %v295, %v3262
        %v3298 = vsub.f32 %v295, %v3266
        %v3299 = vsub.f32 %v295, %v3270
        %v3300 = vsub.f32 %v295, %v3274
        %v3301 = vsub.f32 %v295, %v3278
        %v3302 = vsub.f32 %v295, %v3282
        %v3303 = vsub.f32 %v295, %v3286
        %v3304 = vand.u32 2147483647, %v3288
        %v3305 = vand.u32 2147483647, %v3289
        %v3306 = vand.u32 2147483647, %v3290
        %v3307 = vand.u32 2147483647, %v3291
        %v3308 = vand.u32 2147483647, %v3292
        %v3309 = vand.u32 2147483647, %v3293
        %v3310 = vand.u32 2147483647, %v3294
        %v3311 = vand.u32 2147483647, %v3295
        %v3312 = vand.u32 2147483647, %v3296
        %v3313 = vand.u32 2147483647, %v3297
        %v3314 = vand.u32 2147483647, %v3298
        %v3315 = vand.u32 2147483647, %v3299
        %v3316 = vand.u32 2147483647, %v3300
        %v3317 = vand.u32 2147483647, %v3301
        %v3318 = vand.u32 2147483647, %v3302
        %v3319 = vand.u32 2147483647, %v3303
        %v3320 = vsub.f32 1.0, %v3304
        %v3321 = vsub.f32 1.0, %v3305
        %v3322 = vsub.f32 1.0, %v3306
        %v3323 = vsub.f32 1.0, %v3307
        %v3324 = vsub.f32 1.0, %v3308
        %v3325 = vsub.f32 1.0, %v3309
        %v3326 = vsub.f32 1.0, %v3310
        %v3327 = vsub.f32 1.0, %v3311
        %v3328 = vsub.f32 1.0, %v3312
        %v3329 = vsub.f32 1.0, %v3313
        %v3330 = vsub.f32 1.0, %v3314
        %v3331 = vsub.f32 1.0, %v3315
        %v3332 = vsub.f32 1.0, %v3316
        %v3333 = vsub.f32 1.0, %v3317
        %v3334 = vsub.f32 1.0, %v3318
        %v3335 = vsub.f32 1.0, %v3319
        %v3336 = vmax.f32 %v3320, 0.0
        %v3337 = vmax.f32 %v3321, 0.0
        %v3338 = vmax.f32 %v3322, 0.0
        %v3339 = vmax.f32 %v3323, 0.0
        %v3340 = vmax.f32 %v3324, 0.0
        %v3341 = vmax.f32 %v3325, 0.0
        %v3342 = vmax.f32 %v3326, 0.0
        %v3343 = vmax.f32 %v3327, 0.0
        %v3344 = vmax.f32 %v3328, 0.0
        %v3345 = vmax.f32 %v3329, 0.0
        %v3346 = vmax.f32 %v3330, 0.0
        %v3347 = vmax.f32 %v3331, 0.0
        %v3348 = vmax.f32 %v3332, 0.0
        %v3349 = vmax.f32 %v3333, 0.0
        %v3350 = vmax.f32 %v3334, 0.0
        %v3351 = vmax.f32 %v3335, 0.0
        %3352 = vset.pattern.permute.xlu0 14
        %3353 = vperm.xlu0 %3352, %v277
        %v3354 = vpop.permute.xlu0 %3353
        %3356 = vset.pattern.permute.xlu0 14
        %3357 = vperm.xlu0 %3356, %v278
        %v3358 = vpop.permute.xlu0 %3357
        %3360 = vset.pattern.permute.xlu0 14
        %3361 = vperm.xlu0 %3360, %v279
        %v3362 = vpop.permute.xlu0 %3361
        %3364 = vset.pattern.permute.xlu0 14
        %3365 = vperm.xlu0 %3364, %v280
        %v3366 = vpop.permute.xlu0 %3365
        %3368 = vset.pattern.permute.xlu0 14
        %3369 = vperm.xlu0 %3368, %v281
        %v3370 = vpop.permute.xlu0 %3369
        %3372 = vset.pattern.permute.xlu0 14
        %3373 = vperm.xlu0 %3372, %v282
        %v3374 = vpop.permute.xlu0 %3373
        %3376 = vset.pattern.permute.xlu0 14
        %3377 = vperm.xlu0 %3376, %v283
        %v3378 = vpop.permute.xlu0 %3377
        %3380 = vset.pattern.permute.xlu0 14
        %3381 = vperm.xlu0 %3380, %v284
        %v3382 = vpop.permute.xlu0 %3381
        %3384 = vset.pattern.permute.xlu0 14
        %3385 = vperm.xlu0 %3384, %v285
        %v3386 = vpop.permute.xlu0 %3385
        %3388 = vset.pattern.permute.xlu0 14
        %3389 = vperm.xlu0 %3388, %v286
        %v3390 = vpop.permute.xlu0 %3389
        %3392 = vset.pattern.permute.xlu0 14
        %3393 = vperm.xlu0 %3392, %v287
        %v3394 = vpop.permute.xlu0 %3393
        %3396 = vset.pattern.permute.xlu0 14
        %3397 = vperm.xlu0 %3396, %v288
        %v3398 = vpop.permute.xlu0 %3397
        %3400 = vset.pattern.permute.xlu0 14
        %3401 = vperm.xlu0 %3400, %v289
        %v3402 = vpop.permute.xlu0 %3401
        %3404 = vset.pattern.permute.xlu0 14
        %3405 = vperm.xlu0 %3404, %v290
        %v3406 = vpop.permute.xlu0 %3405
        %3408 = vset.pattern.permute.xlu0 14
        %3409 = vperm.xlu0 %3408, %v291
        %v3410 = vpop.permute.xlu0 %3409
        %3412 = vset.pattern.permute.xlu0 14
        %3413 = vperm.xlu0 %3412, %v292
        %v3414 = vpop.permute.xlu0 %3413
        %v3416 = vsub.f32 %v301, %v3354
        %v3417 = vsub.f32 %v301, %v3358
        %v3418 = vsub.f32 %v301, %v3362
        %v3419 = vsub.f32 %v301, %v3366
        %v3420 = vsub.f32 %v301, %v3370
        %v3421 = vsub.f32 %v301, %v3374
        %v3422 = vsub.f32 %v301, %v3378
        %v3423 = vsub.f32 %v301, %v3382
        %v3424 = vsub.f32 %v301, %v3386
        %v3425 = vsub.f32 %v301, %v3390
        %v3426 = vsub.f32 %v301, %v3394
        %v3427 = vsub.f32 %v301, %v3398
        %v3428 = vsub.f32 %v301, %v3402
        %v3429 = vsub.f32 %v301, %v3406
        %v3430 = vsub.f32 %v301, %v3410
        %v3431 = vsub.f32 %v301, %v3414
        %v3432 = vand.u32 2147483647, %v3416
        %v3433 = vand.u32 2147483647, %v3417
        %v3434 = vand.u32 2147483647, %v3418
        %v3435 = vand.u32 2147483647, %v3419
        %v3436 = vand.u32 2147483647, %v3420
        %v3437 = vand.u32 2147483647, %v3421
        %v3438 = vand.u32 2147483647, %v3422
        %v3439 = vand.u32 2147483647, %v3423
        %v3440 = vand.u32 2147483647, %v3424
        %v3441 = vand.u32 2147483647, %v3425
        %v3442 = vand.u32 2147483647, %v3426
        %v3443 = vand.u32 2147483647, %v3427
        %v3444 = vand.u32 2147483647, %v3428
        %v3445 = vand.u32 2147483647, %v3429
        %v3446 = vand.u32 2147483647, %v3430
        %v3447 = vand.u32 2147483647, %v3431
        %v3448 = vsub.f32 1.0, %v3432
        %v3449 = vsub.f32 1.0, %v3433
        %v3450 = vsub.f32 1.0, %v3434
        %v3451 = vsub.f32 1.0, %v3435
        %v3452 = vsub.f32 1.0, %v3436
        %v3453 = vsub.f32 1.0, %v3437
        %v3454 = vsub.f32 1.0, %v3438
        %v3455 = vsub.f32 1.0, %v3439
        %v3456 = vsub.f32 1.0, %v3440
        %v3457 = vsub.f32 1.0, %v3441
        %v3458 = vsub.f32 1.0, %v3442
        %v3459 = vsub.f32 1.0, %v3443
        %v3460 = vsub.f32 1.0, %v3444
        %v3461 = vsub.f32 1.0, %v3445
        %v3462 = vsub.f32 1.0, %v3446
        %v3463 = vsub.f32 1.0, %v3447
        %v3464 = vmax.f32 %v3448, 0.0
        %v3465 = vmax.f32 %v3449, 0.0
        %v3466 = vmax.f32 %v3450, 0.0
        %v3467 = vmax.f32 %v3451, 0.0
        %v3468 = vmax.f32 %v3452, 0.0
        %v3469 = vmax.f32 %v3453, 0.0
        %v3470 = vmax.f32 %v3454, 0.0
        %v3471 = vmax.f32 %v3455, 0.0
        %v3472 = vmax.f32 %v3456, 0.0
        %v3473 = vmax.f32 %v3457, 0.0
        %v3474 = vmax.f32 %v3458, 0.0
        %v3475 = vmax.f32 %v3459, 0.0
        %v3476 = vmax.f32 %v3460, 0.0
        %v3477 = vmax.f32 %v3461, 0.0
        %v3478 = vmax.f32 %v3462, 0.0
        %v3479 = vmax.f32 %v3463, 0.0
        %v3480 = vpack.c.bf16 %v3337, %v3336
        %v3481 = vpack.c.bf16 %v3339, %v3338
        %v3482 = vpack.c.bf16 %v3341, %v3340
        %v3483 = vpack.c.bf16 %v3343, %v3342
        %v3484 = vpack.c.bf16 %v3345, %v3344
        %v3485 = vpack.c.bf16 %v3347, %v3346
        %v3486 = vpack.c.bf16 %v3349, %v3348
        %v3487 = vpack.c.bf16 %v3351, %v3350
        %v3489 = vsel %vm589, %v3480, 0
        %v3492 = vsel %vm589, %v3481, 0
        %v3495 = vsel %vm589, %v3482, 0
        %v3498 = vsel %vm589, %v3483, 0
        %v3501 = vsel %vm589, %v3484, 0
        %v3504 = vsel %vm589, %v3485, 0
        %v3507 = vsel %vm589, %v3486, 0
        %v3510 = vsel %vm589, %v3487, 0
        %3512 = vmatprep.subr.bf16.mxu0 0
        %3513 = vmatpush1.bf16.msra.mxu0 %v587
        %3514 = vmatprep.subr.bf16.mxu0 0
        %3515 = vmatpush1.bf16.msra.mxu0 0
        %3516 = vmatprep.subr.bf16.mxu0 0
        %3517 = vmatpush1.bf16.msra.mxu0 0
        %3518 = vmatprep.subr.bf16.mxu0 0
        %3519 = vmatpush1.bf16.msra.mxu0 0
        %3520 = vmatprep.subr.bf16.mxu0 0
        %3521 = vmatpush1.bf16.msra.mxu0 0
        %3522 = vmatprep.subr.bf16.mxu0 0
        %3523 = vmatpush1.bf16.msra.mxu0 0
        %3524 = vmatprep.subr.bf16.mxu0 0
        %3525 = vmatpush1.bf16.msra.mxu0 0
        %3526 = vmatprep.subr.bf16.mxu0 0
        %3527 = vmatpush1.bf16.msra.mxu0 0
        %3528 = vmatprep.subr.bf16.mxu0 0
        %3529 = vmatpush1.bf16.msra.mxu0 0
        %3530 = vmatprep.subr.bf16.mxu0 0
        %3531 = vmatpush1.bf16.msra.mxu0 0
        %3532 = vmatprep.subr.bf16.mxu0 0
        %3533 = vmatpush1.bf16.msra.mxu0 0
        %3534 = vmatprep.subr.bf16.mxu0 0
        %3535 = vmatpush1.bf16.msra.mxu0 0
        %3536 = vmatprep.subr.bf16.mxu0 0
        %3537 = vmatpush1.bf16.msra.mxu0 0
        %3538 = vmatprep.subr.bf16.mxu0 0
        %3539 = vmatpush1.bf16.msra.mxu0 0
        %3540 = vmatprep.subr.bf16.mxu0 0
        %3541 = vmatpush1.bf16.msra.mxu0 0
        %3542 = vmatprep.subr.bf16.mxu0 0
        %3543 = vmatpush1.bf16.msra.mxu0 0
        %3544 = vmatprep.mubr.bf16.mxu0 0
        %3545 = vmatmul.mubr.bf16.gmra.mrb[0].mxu0 %v3489
        %v3546 = vpop.f32.mrb[0].mxu0
        %v3547 = vadd.f32 0.0, %v3546
        %v3548 = vpop.f32.mrb[0].mxu0
        %v3549 = vpop.f32.mrb[0].mxu0
        %v3550 = vadd.f32 0.0, %v3549
        %v3551 = vpop.f32.mrb[0].mxu0
        %3552 = vmatprep.mubr.bf16.mxu0 0
        %3553 = vmatmul.mubr.bf16.gmra.mrb[0].mxu0 %v3492
        %v3554 = vpop.f32.mrb[0].mxu0
        %v3555 = vadd.f32 0.0, %v3554
        %v3556 = vpop.f32.mrb[0].mxu0
        %v3557 = vpop.f32.mrb[0].mxu0
        %v3558 = vadd.f32 0.0, %v3557
        %v3559 = vpop.f32.mrb[0].mxu0
        %3560 = vmatprep.mubr.bf16.mxu0 0
        %3561 = vmatmul.mubr.bf16.gmra.mrb[0].mxu0 %v3495
        %v3562 = vpop.f32.mrb[0].mxu0
        %v3563 = vadd.f32 0.0, %v3562
        %v3564 = vpop.f32.mrb[0].mxu0
        %v3565 = vpop.f32.mrb[0].mxu0
        %v3566 = vadd.f32 0.0, %v3565
        %v3567 = vpop.f32.mrb[0].mxu0
        %3568 = vmatprep.mubr.bf16.mxu0 0
        %3569 = vmatmul.mubr.bf16.gmra.mrb[0].mxu0 %v3498
        %v3570 = vpop.f32.mrb[0].mxu0
        %v3571 = vadd.f32 0.0, %v3570
        %v3572 = vpop.f32.mrb[0].mxu0
        %v3573 = vpop.f32.mrb[0].mxu0
        %v3574 = vadd.f32 0.0, %v3573
        %v3575 = vpop.f32.mrb[0].mxu0
        %3576 = vmatprep.mubr.bf16.mxu0 0
        %3577 = vmatmul.mubr.bf16.gmra.mrb[0].mxu0 %v3501
        %v3578 = vpop.f32.mrb[0].mxu0
        %v3579 = vadd.f32 0.0, %v3578
        %v3580 = vpop.f32.mrb[0].mxu0
        %v3581 = vpop.f32.mrb[0].mxu0
        %v3582 = vadd.f32 0.0, %v3581
        %v3583 = vpop.f32.mrb[0].mxu0
        %3584 = vmatprep.mubr.bf16.mxu0 0
        %3585 = vmatmul.mubr.bf16.gmra.mrb[0].mxu0 %v3504
        %v3586 = vpop.f32.mrb[0].mxu0
        %v3587 = vadd.f32 0.0, %v3586
        %v3588 = vpop.f32.mrb[0].mxu0
        %v3589 = vpop.f32.mrb[0].mxu0
        %v3590 = vadd.f32 0.0, %v3589
        %v3591 = vpop.f32.mrb[0].mxu0
        %3592 = vmatprep.mubr.bf16.mxu0 0
        %3593 = vmatmul.mubr.bf16.gmra.mrb[0].mxu0 %v3507
        %v3594 = vpop.f32.mrb[0].mxu0
        %v3595 = vadd.f32 0.0, %v3594
        %v3596 = vpop.f32.mrb[0].mxu0
        %v3597 = vpop.f32.mrb[0].mxu0
        %v3598 = vadd.f32 0.0, %v3597
        %v3599 = vpop.f32.mrb[0].mxu0
        %3600 = vmatprep.mubr.bf16.mxu0 0
        %3601 = vmatmul.mubr.bf16.gmra.mrb[0].mxu0 %v3510
        %v3602 = vpop.f32.mrb[0].mxu0
        %v3603 = vadd.f32 0.0, %v3602
        %v3604 = vpop.f32.mrb[0].mxu0
        %v3605 = vpop.f32.mrb[0].mxu0
        %v3606 = vadd.f32 0.0, %v3605
        %v3607 = vpop.f32.mrb[0].mxu0
        %3608 = vdwg.mxu0
        %v3609 = vmul.f32 %v3464, %v3547
        %v3610 = vmul.f32 %v3465, %v3550
        %v3611 = vmul.f32 %v3466, %v3555
        %v3612 = vmul.f32 %v3467, %v3558
        %v3613 = vmul.f32 %v3468, %v3563
        %v3614 = vmul.f32 %v3469, %v3566
        %v3615 = vmul.f32 %v3470, %v3571
        %v3616 = vmul.f32 %v3471, %v3574
        %v3617 = vmul.f32 %v3472, %v3579
        %v3618 = vmul.f32 %v3473, %v3582
        %v3619 = vmul.f32 %v3474, %v3587
        %v3620 = vmul.f32 %v3475, %v3590
        %v3621 = vmul.f32 %v3476, %v3595
        %v3622 = vmul.f32 %v3477, %v3598
        %v3623 = vmul.f32 %v3478, %v3603
        %v3624 = vmul.f32 %v3479, %v3606
        %v3625 = vpack.c.bf16 %v3610, %v3609
        %v3626 = vpack.c.bf16 %v3612, %v3611
        %v3627 = vpack.c.bf16 %v3614, %v3613
        %v3628 = vpack.c.bf16 %v3616, %v3615
        %v3629 = vpack.c.bf16 %v3618, %v3617
        %v3630 = vpack.c.bf16 %v3620, %v3619
        %v3631 = vpack.c.bf16 %v3622, %v3621
        %v3632 = vpack.c.bf16 %v3624, %v3623
        %v3633 = vld [vmem:[%s3 + $0x140] sm:$0xf]
        %v3634 = vld [vmem:[%s3 + $0x144] sm:$0xf]
        %v3635 = vld [vmem:[%s3 + $0x148] sm:$0xf]
        %v3636 = vld [vmem:[%s3 + $0x14c] sm:$0xf]
        %v3637 = vld [vmem:[%s3 + $0x150] sm:$0xf]
        %v3638 = vld [vmem:[%s3 + $0x154] sm:$0xf]
        %v3639 = vld [vmem:[%s3 + $0x158] sm:$0xf]
        %v3640 = vld [vmem:[%s3 + $0x15c] sm:$0xf]
        %v3641 = vld [vmem:[%s3 + $0x160] sm:$0xf]
        %v3642 = vld [vmem:[%s3 + $0x164] sm:$0xf]
        %v3643 = vld [vmem:[%s3 + $0x168] sm:$0xf]
        %v3644 = vld [vmem:[%s3 + $0x16c] sm:$0xf]
        %v3645 = vld [vmem:[%s3 + $0x170] sm:$0xf]
        %v3646 = vld [vmem:[%s3 + $0x174] sm:$0xf]
        %v3647 = vld [vmem:[%s3 + $0x178] sm:$0xf]
        %v3648 = vld [vmem:[%s3 + $0x17c] sm:$0xf]
        %v3665 = vunpack.c.l.b16 %v3633
        %v3666 = vunpack.c.l.b16 %v3634
        %v3667 = vunpack.c.l.b16 %v3635
        %v3668 = vunpack.c.l.b16 %v3636
        %v3669 = vunpack.c.l.b16 %v3637
        %v3670 = vunpack.c.l.b16 %v3638
        %v3671 = vunpack.c.l.b16 %v3639
        %v3672 = vunpack.c.l.b16 %v3640
        %v3673 = vunpack.c.l.b16 %v3641
        %v3674 = vunpack.c.l.b16 %v3642
        %v3675 = vunpack.c.l.b16 %v3643
        %v3676 = vunpack.c.l.b16 %v3644
        %v3677 = vunpack.c.l.b16 %v3645
        %v3678 = vunpack.c.l.b16 %v3646
        %v3679 = vunpack.c.l.b16 %v3647
        %v3680 = vunpack.c.l.b16 %v3648
        %v3681 = vpack.c.b16 %v3666, %v3665
        %v3682 = vpack.c.b16 %v3668, %v3667
        %v3683 = vpack.c.b16 %v3670, %v3669
        %v3684 = vpack.c.b16 %v3672, %v3671
        %v3685 = vpack.c.b16 %v3674, %v3673
        %v3686 = vpack.c.b16 %v3676, %v3675
        %v3687 = vpack.c.b16 %v3678, %v3677
        %v3688 = vpack.c.b16 %v3680, %v3679
        %3697 = vmatprep.subr.bf16.mxu0 0
        %3698 = vmatpush1.bf16.msra.mxu0 %v3681
        %3699 = vmatprep.subr.bf16.mxu0 0
        %3700 = vmatpush1.bf16.msra.mxu0 %v3682
        %3701 = vmatprep.subr.bf16.mxu0 0
        %3702 = vmatpush1.bf16.msra.mxu0 %v3683
        %3703 = vmatprep.subr.bf16.mxu0 0
        %3704 = vmatpush1.bf16.msra.mxu0 %v3684
        %3705 = vmatprep.subr.bf16.mxu0 0
        %3706 = vmatpush1.bf16.msra.mxu0 %v3685
        %3707 = vmatprep.subr.bf16.mxu0 0
        %3708 = vmatpush1.bf16.msra.mxu0 %v3686
        %3709 = vmatprep.subr.bf16.mxu0 0
        %3710 = vmatpush1.bf16.msra.mxu0 %v3687
        %3711 = vmatprep.subr.bf16.mxu0 0
        %3712 = vmatpush1.bf16.msra.mxu0 %v3688
        %3713 = vmatprep.subr.bf16.mxu0 0
        %3714 = vmatpush1.bf16.msra.mxu0 0
        %3715 = vmatprep.subr.bf16.mxu0 0
        %3716 = vmatpush1.bf16.msra.mxu0 0
        %3717 = vmatprep.subr.bf16.mxu0 0
        %3718 = vmatpush1.bf16.msra.mxu0 0
        %3719 = vmatprep.subr.bf16.mxu0 0
        %3720 = vmatpush1.bf16.msra.mxu0 0
        %3721 = vmatprep.subr.bf16.mxu0 0
        %3722 = vmatpush1.bf16.msra.mxu0 0
        %3723 = vmatprep.subr.bf16.mxu0 0
        %3724 = vmatpush1.bf16.msra.mxu0 0
        %3725 = vmatprep.subr.bf16.mxu0 0
        %3726 = vmatpush1.bf16.msra.mxu0 0
        %3727 = vmatprep.subr.bf16.mxu0 0
        %3728 = vmatpush1.bf16.msra.mxu0 0
        %3729 = vmatprep.mubr.bf16.mxu0 0
        %3730 = vmatmul.mubr.bf16.gmra.mrb[0].mxu0 %v3625
        %v3731 = vpop.f32.mrb[0].mxu0
        %v3732 = vadd.f32 0.0, %v3731
        %v3733 = vpop.f32.mrb[0].mxu0
        %v3734 = vpop.f32.mrb[0].mxu0
        %v3735 = vadd.f32 0.0, %v3734
        %v3736 = vpop.f32.mrb[0].mxu0
        %3737 = vmatprep.mubr.bf16.mxu0 0
        %3738 = vmatmul.mubr.bf16.gmra.mrb[0].mxu0 %v3626
        %v3739 = vpop.f32.mrb[0].mxu0
        %v3740 = vadd.f32 0.0, %v3739
        %v3741 = vpop.f32.mrb[0].mxu0
        %v3742 = vpop.f32.mrb[0].mxu0
        %v3743 = vadd.f32 0.0, %v3742
        %v3744 = vpop.f32.mrb[0].mxu0
        %3745 = vmatprep.mubr.bf16.mxu0 0
        %3746 = vmatmul.mubr.bf16.gmra.mrb[0].mxu0 %v3627
        %v3747 = vpop.f32.mrb[0].mxu0
        %v3748 = vadd.f32 0.0, %v3747
        %v3749 = vpop.f32.mrb[0].mxu0
        %v3750 = vpop.f32.mrb[0].mxu0
        %v3751 = vadd.f32 0.0, %v3750
        %v3752 = vpop.f32.mrb[0].mxu0
        %3753 = vmatprep.mubr.bf16.mxu0 0
        %3754 = vmatmul.mubr.bf16.gmra.mrb[0].mxu0 %v3628
        %v3755 = vpop.f32.mrb[0].mxu0
        %v3756 = vadd.f32 0.0, %v3755
        %v3757 = vpop.f32.mrb[0].mxu0
        %v3758 = vpop.f32.mrb[0].mxu0
        %v3759 = vadd.f32 0.0, %v3758
        %v3760 = vpop.f32.mrb[0].mxu0
        %3761 = vmatprep.mubr.bf16.mxu0 0
        %3762 = vmatmul.mubr.bf16.gmra.mrb[0].mxu0 %v3629
        %v3763 = vpop.f32.mrb[0].mxu0
        %v3764 = vadd.f32 0.0, %v3763
        %v3765 = vpop.f32.mrb[0].mxu0
        %v3766 = vpop.f32.mrb[0].mxu0
        %v3767 = vadd.f32 0.0, %v3766
        %v3768 = vpop.f32.mrb[0].mxu0
        %3769 = vmatprep.mubr.bf16.mxu0 0
        %3770 = vmatmul.mubr.bf16.gmra.mrb[0].mxu0 %v3630
        %v3771 = vpop.f32.mrb[0].mxu0
        %v3772 = vadd.f32 0.0, %v3771
        %v3773 = vpop.f32.mrb[0].mxu0
        %v3774 = vpop.f32.mrb[0].mxu0
        %v3775 = vadd.f32 0.0, %v3774
        %v3776 = vpop.f32.mrb[0].mxu0
        %3777 = vmatprep.mubr.bf16.mxu0 0
        %3778 = vmatmul.mubr.bf16.gmra.mrb[0].mxu0 %v3631
        %v3779 = vpop.f32.mrb[0].mxu0
        %v3780 = vadd.f32 0.0, %v3779
        %v3781 = vpop.f32.mrb[0].mxu0
        %v3782 = vpop.f32.mrb[0].mxu0
        %v3783 = vadd.f32 0.0, %v3782
        %v3784 = vpop.f32.mrb[0].mxu0
        %3785 = vmatprep.mubr.bf16.mxu0 0
        %3786 = vmatmul.mubr.bf16.gmra.mrb[0].mxu0 %v3632
        %v3787 = vpop.f32.mrb[0].mxu0
        %v3788 = vadd.f32 0.0, %v3787
        %v3789 = vpop.f32.mrb[0].mxu0
        %v3790 = vpop.f32.mrb[0].mxu0
        %v3791 = vadd.f32 0.0, %v3790
        %v3792 = vpop.f32.mrb[0].mxu0
        %3793 = vdwg.mxu0
        %v3794 = vadd.f32 %v3208, %v3732
        %v3795 = vadd.f32 %v3209, %v3735
        %v3796 = vadd.f32 %v3210, %v3740
        %v3797 = vadd.f32 %v3211, %v3743
        %v3798 = vadd.f32 %v3212, %v3748
        %v3799 = vadd.f32 %v3213, %v3751
        %v3800 = vadd.f32 %v3214, %v3756
        %v3801 = vadd.f32 %v3215, %v3759
        %v3802 = vadd.f32 %v3216, %v3764
        %v3803 = vadd.f32 %v3217, %v3767
        %v3804 = vadd.f32 %v3218, %v3772
        %v3805 = vadd.f32 %v3219, %v3775
        %v3806 = vadd.f32 %v3220, %v3780
        %v3807 = vadd.f32 %v3221, %v3783
        %v3808 = vadd.f32 %v3222, %v3788
        %v3809 = vadd.f32 %v3223, %v3791
        %3810 = vset.pattern.permute.xlu0 6
        %3811 = vperm.xlu0 %3810, %v277
        %v3812 = vpop.permute.xlu0 %3811
        %3814 = vset.pattern.permute.xlu0 6
        %3815 = vperm.xlu0 %3814, %v278
        %v3816 = vpop.permute.xlu0 %3815
        %3818 = vset.pattern.permute.xlu0 6
        %3819 = vperm.xlu0 %3818, %v279
        %v3820 = vpop.permute.xlu0 %3819
        %3822 = vset.pattern.permute.xlu0 6
        %3823 = vperm.xlu0 %3822, %v280
        %v3824 = vpop.permute.xlu0 %3823
        %3826 = vset.pattern.permute.xlu0 6
        %3827 = vperm.xlu0 %3826, %v281
        %v3828 = vpop.permute.xlu0 %3827
        %3830 = vset.pattern.permute.xlu0 6
        %3831 = vperm.xlu0 %3830, %v282
        %v3832 = vpop.permute.xlu0 %3831
        %3834 = vset.pattern.permute.xlu0 6
        %3835 = vperm.xlu0 %3834, %v283
        %v3836 = vpop.permute.xlu0 %3835
        %3838 = vset.pattern.permute.xlu0 6
        %3839 = vperm.xlu0 %3838, %v284
        %v3840 = vpop.permute.xlu0 %3839
        %3842 = vset.pattern.permute.xlu0 6
        %3843 = vperm.xlu0 %3842, %v285
        %v3844 = vpop.permute.xlu0 %3843
        %3846 = vset.pattern.permute.xlu0 6
        %3847 = vperm.xlu0 %3846, %v286
        %v3848 = vpop.permute.xlu0 %3847
        %3850 = vset.pattern.permute.xlu0 6
        %3851 = vperm.xlu0 %3850, %v287
        %v3852 = vpop.permute.xlu0 %3851
        %3854 = vset.pattern.permute.xlu0 6
        %3855 = vperm.xlu0 %3854, %v288
        %v3856 = vpop.permute.xlu0 %3855
        %3858 = vset.pattern.permute.xlu0 6
        %3859 = vperm.xlu0 %3858, %v289
        %v3860 = vpop.permute.xlu0 %3859
        %3862 = vset.pattern.permute.xlu0 6
        %3863 = vperm.xlu0 %3862, %v290
        %v3864 = vpop.permute.xlu0 %3863
        %3866 = vset.pattern.permute.xlu0 6
        %3867 = vperm.xlu0 %3866, %v291
        %v3868 = vpop.permute.xlu0 %3867
        %3870 = vset.pattern.permute.xlu0 6
        %3871 = vperm.xlu0 %3870, %v292
        %v3872 = vpop.permute.xlu0 %3871
        %v3874 = vsub.f32 %v295, %v3812
        %v3875 = vsub.f32 %v295, %v3816
        %v3876 = vsub.f32 %v295, %v3820
        %v3877 = vsub.f32 %v295, %v3824
        %v3878 = vsub.f32 %v295, %v3828
        %v3879 = vsub.f32 %v295, %v3832
        %v3880 = vsub.f32 %v295, %v3836
        %v3881 = vsub.f32 %v295, %v3840
        %v3882 = vsub.f32 %v295, %v3844
        %v3883 = vsub.f32 %v295, %v3848
        %v3884 = vsub.f32 %v295, %v3852
        %v3885 = vsub.f32 %v295, %v3856
        %v3886 = vsub.f32 %v295, %v3860
        %v3887 = vsub.f32 %v295, %v3864
        %v3888 = vsub.f32 %v295, %v3868
        %v3889 = vsub.f32 %v295, %v3872
        %v3890 = vand.u32 2147483647, %v3874
        %v3891 = vand.u32 2147483647, %v3875
        %v3892 = vand.u32 2147483647, %v3876
        %v3893 = vand.u32 2147483647, %v3877
        %v3894 = vand.u32 2147483647, %v3878
        %v3895 = vand.u32 2147483647, %v3879
        %v3896 = vand.u32 2147483647, %v3880
        %v3897 = vand.u32 2147483647, %v3881
        %v3898 = vand.u32 2147483647, %v3882
        %v3899 = vand.u32 2147483647, %v3883
        %v3900 = vand.u32 2147483647, %v3884
        %v3901 = vand.u32 2147483647, %v3885
        %v3902 = vand.u32 2147483647, %v3886
        %v3903 = vand.u32 2147483647, %v3887
        %v3904 = vand.u32 2147483647, %v3888
        %v3905 = vand.u32 2147483647, %v3889
        %v3906 = vsub.f32 1.0, %v3890
        %v3907 = vsub.f32 1.0, %v3891
        %v3908 = vsub.f32 1.0, %v3892
        %v3909 = vsub.f32 1.0, %v3893
        %v3910 = vsub.f32 1.0, %v3894
        %v3911 = vsub.f32 1.0, %v3895
        %v3912 = vsub.f32 1.0, %v3896
        %v3913 = vsub.f32 1.0, %v3897
        %v3914 = vsub.f32 1.0, %v3898
        %v3915 = vsub.f32 1.0, %v3899
        %v3916 = vsub.f32 1.0, %v3900
        %v3917 = vsub.f32 1.0, %v3901
        %v3918 = vsub.f32 1.0, %v3902
        %v3919 = vsub.f32 1.0, %v3903
        %v3920 = vsub.f32 1.0, %v3904
        %v3921 = vsub.f32 1.0, %v3905
        %v3922 = vmax.f32 %v3906, 0.0
        %v3923 = vmax.f32 %v3907, 0.0
        %v3924 = vmax.f32 %v3908, 0.0
        %v3925 = vmax.f32 %v3909, 0.0
        %v3926 = vmax.f32 %v3910, 0.0
        %v3927 = vmax.f32 %v3911, 0.0
        %v3928 = vmax.f32 %v3912, 0.0
        %v3929 = vmax.f32 %v3913, 0.0
        %v3930 = vmax.f32 %v3914, 0.0
        %v3931 = vmax.f32 %v3915, 0.0
        %v3932 = vmax.f32 %v3916, 0.0
        %v3933 = vmax.f32 %v3917, 0.0
        %v3934 = vmax.f32 %v3918, 0.0
        %v3935 = vmax.f32 %v3919, 0.0
        %v3936 = vmax.f32 %v3920, 0.0
        %v3937 = vmax.f32 %v3921, 0.0
        %3938 = vset.pattern.permute.xlu0 15
        %3939 = vperm.xlu0 %3938, %v277
        %v3940 = vpop.permute.xlu0 %3939
        %3942 = vset.pattern.permute.xlu0 15
        %3943 = vperm.xlu0 %3942, %v278
        %v3944 = vpop.permute.xlu0 %3943
        %3946 = vset.pattern.permute.xlu0 15
        %3947 = vperm.xlu0 %3946, %v279
        %v3948 = vpop.permute.xlu0 %3947
        %3950 = vset.pattern.permute.xlu0 15
        %3951 = vperm.xlu0 %3950, %v280
        %v3952 = vpop.permute.xlu0 %3951
        %3954 = vset.pattern.permute.xlu0 15
        %3955 = vperm.xlu0 %3954, %v281
        %v3956 = vpop.permute.xlu0 %3955
        %3958 = vset.pattern.permute.xlu0 15
        %3959 = vperm.xlu0 %3958, %v282
        %v3960 = vpop.permute.xlu0 %3959
        %3962 = vset.pattern.permute.xlu0 15
        %3963 = vperm.xlu0 %3962, %v283
        %v3964 = vpop.permute.xlu0 %3963
        %3966 = vset.pattern.permute.xlu0 15
        %3967 = vperm.xlu0 %3966, %v284
        %v3968 = vpop.permute.xlu0 %3967
        %3970 = vset.pattern.permute.xlu0 15
        %3971 = vperm.xlu0 %3970, %v285
        %v3972 = vpop.permute.xlu0 %3971
        %3974 = vset.pattern.permute.xlu0 15
        %3975 = vperm.xlu0 %3974, %v286
        %v3976 = vpop.permute.xlu0 %3975
        %3978 = vset.pattern.permute.xlu0 15
        %3979 = vperm.xlu0 %3978, %v287
        %v3980 = vpop.permute.xlu0 %3979
        %3982 = vset.pattern.permute.xlu0 15
        %3983 = vperm.xlu0 %3982, %v288
        %v3984 = vpop.permute.xlu0 %3983
        %3986 = vset.pattern.permute.xlu0 15
        %3987 = vperm.xlu0 %3986, %v289
        %v3988 = vpop.permute.xlu0 %3987
        %3990 = vset.pattern.permute.xlu0 15
        %3991 = vperm.xlu0 %3990, %v290
        %v3992 = vpop.permute.xlu0 %3991
        %3994 = vset.pattern.permute.xlu0 15
        %3995 = vperm.xlu0 %3994, %v291
        %v3996 = vpop.permute.xlu0 %3995
        %3998 = vset.pattern.permute.xlu0 15
        %3999 = vperm.xlu0 %3998, %v292
        %v4000 = vpop.permute.xlu0 %3999
        %v4002 = vsub.f32 %v301, %v3940
        %v4003 = vsub.f32 %v301, %v3944
        %v4004 = vsub.f32 %v301, %v3948
        %v4005 = vsub.f32 %v301, %v3952
        %v4006 = vsub.f32 %v301, %v3956
        %v4007 = vsub.f32 %v301, %v3960
        %v4008 = vsub.f32 %v301, %v3964
        %v4009 = vsub.f32 %v301, %v3968
        %v4010 = vsub.f32 %v301, %v3972
        %v4011 = vsub.f32 %v301, %v3976
        %v4012 = vsub.f32 %v301, %v3980
        %v4013 = vsub.f32 %v301, %v3984
        %v4014 = vsub.f32 %v301, %v3988
        %v4015 = vsub.f32 %v301, %v3992
        %v4016 = vsub.f32 %v301, %v3996
        %v4017 = vsub.f32 %v301, %v4000
        %v4018 = vand.u32 2147483647, %v4002
        %v4019 = vand.u32 2147483647, %v4003
        %v4020 = vand.u32 2147483647, %v4004
        %v4021 = vand.u32 2147483647, %v4005
        %v4022 = vand.u32 2147483647, %v4006
        %v4023 = vand.u32 2147483647, %v4007
        %v4024 = vand.u32 2147483647, %v4008
        %v4025 = vand.u32 2147483647, %v4009
        %v4026 = vand.u32 2147483647, %v4010
        %v4027 = vand.u32 2147483647, %v4011
        %v4028 = vand.u32 2147483647, %v4012
        %v4029 = vand.u32 2147483647, %v4013
        %v4030 = vand.u32 2147483647, %v4014
        %v4031 = vand.u32 2147483647, %v4015
        %v4032 = vand.u32 2147483647, %v4016
        %v4033 = vand.u32 2147483647, %v4017
        %v4034 = vsub.f32 1.0, %v4018
        %v4035 = vsub.f32 1.0, %v4019
        %v4036 = vsub.f32 1.0, %v4020
        %v4037 = vsub.f32 1.0, %v4021
        %v4038 = vsub.f32 1.0, %v4022
        %v4039 = vsub.f32 1.0, %v4023
        %v4040 = vsub.f32 1.0, %v4024
        %v4041 = vsub.f32 1.0, %v4025
        %v4042 = vsub.f32 1.0, %v4026
        %v4043 = vsub.f32 1.0, %v4027
        %v4044 = vsub.f32 1.0, %v4028
        %v4045 = vsub.f32 1.0, %v4029
        %v4046 = vsub.f32 1.0, %v4030
        %v4047 = vsub.f32 1.0, %v4031
        %v4048 = vsub.f32 1.0, %v4032
        %v4049 = vsub.f32 1.0, %v4033
        %v4050 = vmax.f32 %v4034, 0.0
        %v4051 = vmax.f32 %v4035, 0.0
        %v4052 = vmax.f32 %v4036, 0.0
        %v4053 = vmax.f32 %v4037, 0.0
        %v4054 = vmax.f32 %v4038, 0.0
        %v4055 = vmax.f32 %v4039, 0.0
        %v4056 = vmax.f32 %v4040, 0.0
        %v4057 = vmax.f32 %v4041, 0.0
        %v4058 = vmax.f32 %v4042, 0.0
        %v4059 = vmax.f32 %v4043, 0.0
        %v4060 = vmax.f32 %v4044, 0.0
        %v4061 = vmax.f32 %v4045, 0.0
        %v4062 = vmax.f32 %v4046, 0.0
        %v4063 = vmax.f32 %v4047, 0.0
        %v4064 = vmax.f32 %v4048, 0.0
        %v4065 = vmax.f32 %v4049, 0.0
        %v4066 = vpack.c.bf16 %v3923, %v3922
        %v4067 = vpack.c.bf16 %v3925, %v3924
        %v4068 = vpack.c.bf16 %v3927, %v3926
        %v4069 = vpack.c.bf16 %v3929, %v3928
        %v4070 = vpack.c.bf16 %v3931, %v3930
        %v4071 = vpack.c.bf16 %v3933, %v3932
        %v4072 = vpack.c.bf16 %v3935, %v3934
        %v4073 = vpack.c.bf16 %v3937, %v3936
        %v4075 = vsel %vm589, %v4066, 0
        %v4078 = vsel %vm589, %v4067, 0
        %v4081 = vsel %vm589, %v4068, 0
        %v4084 = vsel %vm589, %v4069, 0
        %v4087 = vsel %vm589, %v4070, 0
        %v4090 = vsel %vm589, %v4071, 0
        %v4093 = vsel %vm589, %v4072, 0
        %v4096 = vsel %vm589, %v4073, 0
        %4098 = vmatprep.subr.bf16.mxu0 0
        %4099 = vmatpush1.bf16.msra.mxu0 %v587
        %4100 = vmatprep.subr.bf16.mxu0 0
        %4101 = vmatpush1.bf16.msra.mxu0 0
        %4102 = vmatprep.subr.bf16.mxu0 0
        %4103 = vmatpush1.bf16.msra.mxu0 0
        %4104 = vmatprep.subr.bf16.mxu0 0
        %4105 = vmatpush1.bf16.msra.mxu0 0
        %4106 = vmatprep.subr.bf16.mxu0 0
        %4107 = vmatpush1.bf16.msra.mxu0 0
        %4108 = vmatprep.subr.bf16.mxu0 0
        %4109 = vmatpush1.bf16.msra.mxu0 0
        %4110 = vmatprep.subr.bf16.mxu0 0
        %4111 = vmatpush1.bf16.msra.mxu0 0
        %4112 = vmatprep.subr.bf16.mxu0 0
        %4113 = vmatpush1.bf16.msra.mxu0 0
        %4114 = vmatprep.subr.bf16.mxu0 0
        %4115 = vmatpush1.bf16.msra.mxu0 0
        %4116 = vmatprep.subr.bf16.mxu0 0
        %4117 = vmatpush1.bf16.msra.mxu0 0
        %4118 = vmatprep.subr.bf16.mxu0 0
        %4119 = vmatpush1.bf16.msra.mxu0 0
        %4120 = vmatprep.subr.bf16.mxu0 0
        %4121 = vmatpush1.bf16.msra.mxu0 0
        %4122 = vmatprep.subr.bf16.mxu0 0
        %4123 = vmatpush1.bf16.msra.mxu0 0
        %4124 = vmatprep.subr.bf16.mxu0 0
        %4125 = vmatpush1.bf16.msra.mxu0 0
        %4126 = vmatprep.subr.bf16.mxu0 0
        %4127 = vmatpush1.bf16.msra.mxu0 0
        %4128 = vmatprep.subr.bf16.mxu0 0
        %4129 = vmatpush1.bf16.msra.mxu0 0
        %4130 = vmatprep.mubr.bf16.mxu0 0
        %4131 = vmatmul.mubr.bf16.gmra.mrb[0].mxu0 %v4075
        %v4132 = vpop.f32.mrb[0].mxu0
        %v4133 = vadd.f32 0.0, %v4132
        %v4134 = vpop.f32.mrb[0].mxu0
        %v4135 = vpop.f32.mrb[0].mxu0
        %v4136 = vadd.f32 0.0, %v4135
        %v4137 = vpop.f32.mrb[0].mxu0
        %4138 = vmatprep.mubr.bf16.mxu0 0
        %4139 = vmatmul.mubr.bf16.gmra.mrb[0].mxu0 %v4078
        %v4140 = vpop.f32.mrb[0].mxu0
        %v4141 = vadd.f32 0.0, %v4140
        %v4142 = vpop.f32.mrb[0].mxu0
        %v4143 = vpop.f32.mrb[0].mxu0
        %v4144 = vadd.f32 0.0, %v4143
        %v4145 = vpop.f32.mrb[0].mxu0
        %4146 = vmatprep.mubr.bf16.mxu0 0
        %4147 = vmatmul.mubr.bf16.gmra.mrb[0].mxu0 %v4081
        %v4148 = vpop.f32.mrb[0].mxu0
        %v4149 = vadd.f32 0.0, %v4148
        %v4150 = vpop.f32.mrb[0].mxu0
        %v4151 = vpop.f32.mrb[0].mxu0
        %v4152 = vadd.f32 0.0, %v4151
        %v4153 = vpop.f32.mrb[0].mxu0
        %4154 = vmatprep.mubr.bf16.mxu0 0
        %4155 = vmatmul.mubr.bf16.gmra.mrb[0].mxu0 %v4084
        %v4156 = vpop.f32.mrb[0].mxu0
        %v4157 = vadd.f32 0.0, %v4156
        %v4158 = vpop.f32.mrb[0].mxu0
        %v4159 = vpop.f32.mrb[0].mxu0
        %v4160 = vadd.f32 0.0, %v4159
        %v4161 = vpop.f32.mrb[0].mxu0
        %4162 = vmatprep.mubr.bf16.mxu0 0
        %4163 = vmatmul.mubr.bf16.gmra.mrb[0].mxu0 %v4087
        %v4164 = vpop.f32.mrb[0].mxu0
        %v4165 = vadd.f32 0.0, %v4164
        %v4166 = vpop.f32.mrb[0].mxu0
        %v4167 = vpop.f32.mrb[0].mxu0
        %v4168 = vadd.f32 0.0, %v4167
        %v4169 = vpop.f32.mrb[0].mxu0
        %4170 = vmatprep.mubr.bf16.mxu0 0
        %4171 = vmatmul.mubr.bf16.gmra.mrb[0].mxu0 %v4090
        %v4172 = vpop.f32.mrb[0].mxu0
        %v4173 = vadd.f32 0.0, %v4172
        %v4174 = vpop.f32.mrb[0].mxu0
        %v4175 = vpop.f32.mrb[0].mxu0
        %v4176 = vadd.f32 0.0, %v4175
        %v4177 = vpop.f32.mrb[0].mxu0
        %4178 = vmatprep.mubr.bf16.mxu0 0
        %4179 = vmatmul.mubr.bf16.gmra.mrb[0].mxu0 %v4093
        %v4180 = vpop.f32.mrb[0].mxu0
        %v4181 = vadd.f32 0.0, %v4180
        %v4182 = vpop.f32.mrb[0].mxu0
        %v4183 = vpop.f32.mrb[0].mxu0
        %v4184 = vadd.f32 0.0, %v4183
        %v4185 = vpop.f32.mrb[0].mxu0
        %4186 = vmatprep.mubr.bf16.mxu0 0
        %4187 = vmatmul.mubr.bf16.gmra.mrb[0].mxu0 %v4096
        %v4188 = vpop.f32.mrb[0].mxu0
        %v4189 = vadd.f32 0.0, %v4188
        %v4190 = vpop.f32.mrb[0].mxu0
        %v4191 = vpop.f32.mrb[0].mxu0
        %v4192 = vadd.f32 0.0, %v4191
        %v4193 = vpop.f32.mrb[0].mxu0
        %4194 = vdwg.mxu0
        %v4195 = vmul.f32 %v4050, %v4133
        %v4196 = vmul.f32 %v4051, %v4136
        %v4197 = vmul.f32 %v4052, %v4141
        %v4198 = vmul.f32 %v4053, %v4144
        %v4199 = vmul.f32 %v4054, %v4149
        %v4200 = vmul.f32 %v4055, %v4152
        %v4201 = vmul.f32 %v4056, %v4157
        %v4202 = vmul.f32 %v4057, %v4160
        %v4203 = vmul.f32 %v4058, %v4165
        %v4204 = vmul.f32 %v4059, %v4168
        %v4205 = vmul.f32 %v4060, %v4173
        %v4206 = vmul.f32 %v4061, %v4176
        %v4207 = vmul.f32 %v4062, %v4181
        %v4208 = vmul.f32 %v4063, %v4184
        %v4209 = vmul.f32 %v4064, %v4189
        %v4210 = vmul.f32 %v4065, %v4192
        %v4211 = vpack.c.bf16 %v4196, %v4195
        %v4212 = vpack.c.bf16 %v4198, %v4197
        %v4213 = vpack.c.bf16 %v4200, %v4199
        %v4214 = vpack.c.bf16 %v4202, %v4201
        %v4215 = vpack.c.bf16 %v4204, %v4203
        %v4216 = vpack.c.bf16 %v4206, %v4205
        %v4217 = vpack.c.bf16 %v4208, %v4207
        %v4218 = vpack.c.bf16 %v4210, %v4209
        %v4219 = vld [vmem:[%s3 + $0x180] sm:$0xf]
        %v4220 = vld [vmem:[%s3 + $0x184] sm:$0xf]
        %v4221 = vld [vmem:[%s3 + $0x188] sm:$0xf]
        %v4222 = vld [vmem:[%s3 + $0x18c] sm:$0xf]
        %v4223 = vld [vmem:[%s3 + $0x190] sm:$0xf]
        %v4224 = vld [vmem:[%s3 + $0x194] sm:$0xf]
        %v4225 = vld [vmem:[%s3 + $0x198] sm:$0xf]
        %v4226 = vld [vmem:[%s3 + $0x19c] sm:$0xf]
        %v4227 = vld [vmem:[%s3 + $0x1a0] sm:$0xf]
        %v4228 = vld [vmem:[%s3 + $0x1a4] sm:$0xf]
        %v4229 = vld [vmem:[%s3 + $0x1a8] sm:$0xf]
        %v4230 = vld [vmem:[%s3 + $0x1ac] sm:$0xf]
        %v4231 = vld [vmem:[%s3 + $0x1b0] sm:$0xf]
        %v4232 = vld [vmem:[%s3 + $0x1b4] sm:$0xf]
        %v4233 = vld [vmem:[%s3 + $0x1b8] sm:$0xf]
        %v4234 = vld [vmem:[%s3 + $0x1bc] sm:$0xf]
        %v4251 = vunpack.c.l.b16 %v4219
        %v4252 = vunpack.c.l.b16 %v4220
        %v4253 = vunpack.c.l.b16 %v4221
        %v4254 = vunpack.c.l.b16 %v4222
        %v4255 = vunpack.c.l.b16 %v4223
        %v4256 = vunpack.c.l.b16 %v4224
        %v4257 = vunpack.c.l.b16 %v4225
        %v4258 = vunpack.c.l.b16 %v4226
        %v4259 = vunpack.c.l.b16 %v4227
        %v4260 = vunpack.c.l.b16 %v4228
        %v4261 = vunpack.c.l.b16 %v4229
        %v4262 = vunpack.c.l.b16 %v4230
        %v4263 = vunpack.c.l.b16 %v4231
        %v4264 = vunpack.c.l.b16 %v4232
        %v4265 = vunpack.c.l.b16 %v4233
        %v4266 = vunpack.c.l.b16 %v4234
        %v4267 = vpack.c.b16 %v4252, %v4251
        %v4268 = vpack.c.b16 %v4254, %v4253
        %v4269 = vpack.c.b16 %v4256, %v4255
        %v4270 = vpack.c.b16 %v4258, %v4257
        %v4271 = vpack.c.b16 %v4260, %v4259
        %v4272 = vpack.c.b16 %v4262, %v4261
        %v4273 = vpack.c.b16 %v4264, %v4263
        %v4274 = vpack.c.b16 %v4266, %v4265
        %4283 = vmatprep.subr.bf16.mxu0 0
        %4284 = vmatpush1.bf16.msra.mxu0 %v4267
        %4285 = vmatprep.subr.bf16.mxu0 0
        %4286 = vmatpush1.bf16.msra.mxu0 %v4268
        %4287 = vmatprep.subr.bf16.mxu0 0
        %4288 = vmatpush1.bf16.msra.mxu0 %v4269
        %4289 = vmatprep.subr.bf16.mxu0 0
        %4290 = vmatpush1.bf16.msra.mxu0 %v4270
        %4291 = vmatprep.subr.bf16.mxu0 0
        %4292 = vmatpush1.bf16.msra.mxu0 %v4271
        %4293 = vmatprep.subr.bf16.mxu0 0
        %4294 = vmatpush1.bf16.msra.mxu0 %v4272
        %4295 = vmatprep.subr.bf16.mxu0 0
        %4296 = vmatpush1.bf16.msra.mxu0 %v4273
        %4297 = vmatprep.subr.bf16.mxu0 0
        %4298 = vmatpush1.bf16.msra.mxu0 %v4274
        %4299 = vmatprep.subr.bf16.mxu0 0
        %4300 = vmatpush1.bf16.msra.mxu0 0
        %4301 = vmatprep.subr.bf16.mxu0 0
        %4302 = vmatpush1.bf16.msra.mxu0 0
        %4303 = vmatprep.subr.bf16.mxu0 0
        %4304 = vmatpush1.bf16.msra.mxu0 0
        %4305 = vmatprep.subr.bf16.mxu0 0
        %4306 = vmatpush1.bf16.msra.mxu0 0
        %4307 = vmatprep.subr.bf16.mxu0 0
        %4308 = vmatpush1.bf16.msra.mxu0 0
        %4309 = vmatprep.subr.bf16.mxu0 0
        %4310 = vmatpush1.bf16.msra.mxu0 0
        %4311 = vmatprep.subr.bf16.mxu0 0
        %4312 = vmatpush1.bf16.msra.mxu0 0
        %4313 = vmatprep.subr.bf16.mxu0 0
        %4314 = vmatpush1.bf16.msra.mxu0 0
        %4315 = vmatprep.mubr.bf16.mxu0 0
        %4316 = vmatmul.mubr.bf16.gmra.mrb[0].mxu0 %v4211
        %v4317 = vpop.f32.mrb[0].mxu0
        %v4318 = vadd.f32 0.0, %v4317
        %v4319 = vpop.f32.mrb[0].mxu0
        %v4320 = vpop.f32.mrb[0].mxu0
        %v4321 = vadd.f32 0.0, %v4320
        %v4322 = vpop.f32.mrb[0].mxu0
        %4323 = vmatprep.mubr.bf16.mxu0 0
        %4324 = vmatmul.mubr.bf16.gmra.mrb[0].mxu0 %v4212
        %v4325 = vpop.f32.mrb[0].mxu0
        %v4326 = vadd.f32 0.0, %v4325
        %v4327 = vpop.f32.mrb[0].mxu0
        %v4328 = vpop.f32.mrb[0].mxu0
        %v4329 = vadd.f32 0.0, %v4328
        %v4330 = vpop.f32.mrb[0].mxu0
        %4331 = vmatprep.mubr.bf16.mxu0 0
        %4332 = vmatmul.mubr.bf16.gmra.mrb[0].mxu0 %v4213
        %v4333 = vpop.f32.mrb[0].mxu0
        %v4334 = vadd.f32 0.0, %v4333
        %v4335 = vpop.f32.mrb[0].mxu0
        %v4336 = vpop.f32.mrb[0].mxu0
        %v4337 = vadd.f32 0.0, %v4336
        %v4338 = vpop.f32.mrb[0].mxu0
        %4339 = vmatprep.mubr.bf16.mxu0 0
        %4340 = vmatmul.mubr.bf16.gmra.mrb[0].mxu0 %v4214
        %v4341 = vpop.f32.mrb[0].mxu0
        %v4342 = vadd.f32 0.0, %v4341
        %v4343 = vpop.f32.mrb[0].mxu0
        %v4344 = vpop.f32.mrb[0].mxu0
        %v4345 = vadd.f32 0.0, %v4344
        %v4346 = vpop.f32.mrb[0].mxu0
        %4347 = vmatprep.mubr.bf16.mxu0 0
        %4348 = vmatmul.mubr.bf16.gmra.mrb[0].mxu0 %v4215
        %v4349 = vpop.f32.mrb[0].mxu0
        %v4350 = vadd.f32 0.0, %v4349
        %v4351 = vpop.f32.mrb[0].mxu0
        %v4352 = vpop.f32.mrb[0].mxu0
        %v4353 = vadd.f32 0.0, %v4352
        %v4354 = vpop.f32.mrb[0].mxu0
        %4355 = vmatprep.mubr.bf16.mxu0 0
        %4356 = vmatmul.mubr.bf16.gmra.mrb[0].mxu0 %v4216
        %v4357 = vpop.f32.mrb[0].mxu0
        %v4358 = vadd.f32 0.0, %v4357
        %v4359 = vpop.f32.mrb[0].mxu0
        %v4360 = vpop.f32.mrb[0].mxu0
        %v4361 = vadd.f32 0.0, %v4360
        %v4362 = vpop.f32.mrb[0].mxu0
        %4363 = vmatprep.mubr.bf16.mxu0 0
        %4364 = vmatmul.mubr.bf16.gmra.mrb[0].mxu0 %v4217
        %v4365 = vpop.f32.mrb[0].mxu0
        %v4366 = vadd.f32 0.0, %v4365
        %v4367 = vpop.f32.mrb[0].mxu0
        %v4368 = vpop.f32.mrb[0].mxu0
        %v4369 = vadd.f32 0.0, %v4368
        %v4370 = vpop.f32.mrb[0].mxu0
        %4371 = vmatprep.mubr.bf16.mxu0 0
        %4372 = vmatmul.mubr.bf16.gmra.mrb[0].mxu0 %v4218
        %v4373 = vpop.f32.mrb[0].mxu0
        %v4374 = vadd.f32 0.0, %v4373
        %v4375 = vpop.f32.mrb[0].mxu0
        %v4376 = vpop.f32.mrb[0].mxu0
        %v4377 = vadd.f32 0.0, %v4376
        %v4378 = vpop.f32.mrb[0].mxu0
        %4379 = vdwg.mxu0
        %v4380 = vadd.f32 %v3794, %v4318
        %v4381 = vadd.f32 %v3795, %v4321
        %v4382 = vadd.f32 %v3796, %v4326
        %v4383 = vadd.f32 %v3797, %v4329
        %v4384 = vadd.f32 %v3798, %v4334
        %v4385 = vadd.f32 %v3799, %v4337
        %v4386 = vadd.f32 %v3800, %v4342
        %v4387 = vadd.f32 %v3801, %v4345
        %v4388 = vadd.f32 %v3802, %v4350
        %v4389 = vadd.f32 %v3803, %v4353
        %v4390 = vadd.f32 %v3804, %v4358
        %v4391 = vadd.f32 %v3805, %v4361
        %v4392 = vadd.f32 %v3806, %v4366
        %v4393 = vadd.f32 %v3807, %v4369
        %v4394 = vadd.f32 %v3808, %v4374
        %v4395 = vadd.f32 %v3809, %v4377
        %4396 = vset.pattern.permute.xlu0 7
        %4397 = vperm.xlu0 %4396, %v277
        %v4398 = vpop.permute.xlu0 %4397
        %4400 = vset.pattern.permute.xlu0 7
        %4401 = vperm.xlu0 %4400, %v278
        %v4402 = vpop.permute.xlu0 %4401
        %4404 = vset.pattern.permute.xlu0 7
        %4405 = vperm.xlu0 %4404, %v279
        %v4406 = vpop.permute.xlu0 %4405
        %4408 = vset.pattern.permute.xlu0 7
        %4409 = vperm.xlu0 %4408, %v280
        %v4410 = vpop.permute.xlu0 %4409
        %4412 = vset.pattern.permute.xlu0 7
        %4413 = vperm.xlu0 %4412, %v281
        %v4414 = vpop.permute.xlu0 %4413
        %4416 = vset.pattern.permute.xlu0 7
        %4417 = vperm.xlu0 %4416, %v282
        %v4418 = vpop.permute.xlu0 %4417
        %4420 = vset.pattern.permute.xlu0 7
        %4421 = vperm.xlu0 %4420, %v283
        %v4422 = vpop.permute.xlu0 %4421
        %4424 = vset.pattern.permute.xlu0 7
        %4425 = vperm.xlu0 %4424, %v284
        %v4426 = vpop.permute.xlu0 %4425
        %4428 = vset.pattern.permute.xlu0 7
        %4429 = vperm.xlu0 %4428, %v285
        %v4430 = vpop.permute.xlu0 %4429
        %4432 = vset.pattern.permute.xlu0 7
        %4433 = vperm.xlu0 %4432, %v286
        %v4434 = vpop.permute.xlu0 %4433
        %4436 = vset.pattern.permute.xlu0 7
        %4437 = vperm.xlu0 %4436, %v287
        %v4438 = vpop.permute.xlu0 %4437
        %4440 = vset.pattern.permute.xlu0 7
        %4441 = vperm.xlu0 %4440, %v288
        %v4442 = vpop.permute.xlu0 %4441
        %4444 = vset.pattern.permute.xlu0 7
        %4445 = vperm.xlu0 %4444, %v289
        %v4446 = vpop.permute.xlu0 %4445
        %4448 = vset.pattern.permute.xlu0 7
        %4449 = vperm.xlu0 %4448, %v290
        %v4450 = vpop.permute.xlu0 %4449
        %4452 = vset.pattern.permute.xlu0 7
        %4453 = vperm.xlu0 %4452, %v291
        %v4454 = vpop.permute.xlu0 %4453
        %4456 = vset.pattern.permute.xlu0 7
        %4457 = vperm.xlu0 %4456, %v292
        %v4458 = vpop.permute.xlu0 %4457
        %v4460 = vsub.f32 %v295, %v4398
        %v4461 = vsub.f32 %v295, %v4402
        %v4462 = vsub.f32 %v295, %v4406
        %v4463 = vsub.f32 %v295, %v4410
        %v4464 = vsub.f32 %v295, %v4414
        %v4465 = vsub.f32 %v295, %v4418
        %v4466 = vsub.f32 %v295, %v4422
        %v4467 = vsub.f32 %v295, %v4426
        %v4468 = vsub.f32 %v295, %v4430
        %v4469 = vsub.f32 %v295, %v4434
        %v4470 = vsub.f32 %v295, %v4438
        %v4471 = vsub.f32 %v295, %v4442
        %v4472 = vsub.f32 %v295, %v4446
        %v4473 = vsub.f32 %v295, %v4450
        %v4474 = vsub.f32 %v295, %v4454
        %v4475 = vsub.f32 %v295, %v4458
        %v4476 = vand.u32 2147483647, %v4460
        %v4477 = vand.u32 2147483647, %v4461
        %v4478 = vand.u32 2147483647, %v4462
        %v4479 = vand.u32 2147483647, %v4463
        %v4480 = vand.u32 2147483647, %v4464
        %v4481 = vand.u32 2147483647, %v4465
        %v4482 = vand.u32 2147483647, %v4466
        %v4483 = vand.u32 2147483647, %v4467
        %v4484 = vand.u32 2147483647, %v4468
        %v4485 = vand.u32 2147483647, %v4469
        %v4486 = vand.u32 2147483647, %v4470
        %v4487 = vand.u32 2147483647, %v4471
        %v4488 = vand.u32 2147483647, %v4472
        %v4489 = vand.u32 2147483647, %v4473
        %v4490 = vand.u32 2147483647, %v4474
        %v4491 = vand.u32 2147483647, %v4475
        %v4492 = vsub.f32 1.0, %v4476
        %v4493 = vsub.f32 1.0, %v4477
        %v4494 = vsub.f32 1.0, %v4478
        %v4495 = vsub.f32 1.0, %v4479
        %v4496 = vsub.f32 1.0, %v4480
        %v4497 = vsub.f32 1.0, %v4481
        %v4498 = vsub.f32 1.0, %v4482
        %v4499 = vsub.f32 1.0, %v4483
        %v4500 = vsub.f32 1.0, %v4484
        %v4501 = vsub.f32 1.0, %v4485
        %v4502 = vsub.f32 1.0, %v4486
        %v4503 = vsub.f32 1.0, %v4487
        %v4504 = vsub.f32 1.0, %v4488
        %v4505 = vsub.f32 1.0, %v4489
        %v4506 = vsub.f32 1.0, %v4490
        %v4507 = vsub.f32 1.0, %v4491
        %v4508 = vmax.f32 %v4492, 0.0
        %v4509 = vmax.f32 %v4493, 0.0
        %v4510 = vmax.f32 %v4494, 0.0
        %v4511 = vmax.f32 %v4495, 0.0
        %v4512 = vmax.f32 %v4496, 0.0
        %v4513 = vmax.f32 %v4497, 0.0
        %v4514 = vmax.f32 %v4498, 0.0
        %v4515 = vmax.f32 %v4499, 0.0
        %v4516 = vmax.f32 %v4500, 0.0
        %v4517 = vmax.f32 %v4501, 0.0
        %v4518 = vmax.f32 %v4502, 0.0
        %v4519 = vmax.f32 %v4503, 0.0
        %v4520 = vmax.f32 %v4504, 0.0
        %v4521 = vmax.f32 %v4505, 0.0
        %v4522 = vmax.f32 %v4506, 0.0
        %v4523 = vmax.f32 %v4507, 0.0
        %4524 = vset.pattern.permute.xlu0 16
        %4525 = vperm.xlu0 %4524, %v277
        %v4526 = vpop.permute.xlu0 %4525
        %4528 = vset.pattern.permute.xlu0 16
        %4529 = vperm.xlu0 %4528, %v278
        %v4530 = vpop.permute.xlu0 %4529
        %4532 = vset.pattern.permute.xlu0 16
        %4533 = vperm.xlu0 %4532, %v279
        %v4534 = vpop.permute.xlu0 %4533
        %4536 = vset.pattern.permute.xlu0 16
        %4537 = vperm.xlu0 %4536, %v280
        %v4538 = vpop.permute.xlu0 %4537
        %4540 = vset.pattern.permute.xlu0 16
        %4541 = vperm.xlu0 %4540, %v281
        %v4542 = vpop.permute.xlu0 %4541
        %4544 = vset.pattern.permute.xlu0 16
        %4545 = vperm.xlu0 %4544, %v282
        %v4546 = vpop.permute.xlu0 %4545
        %4548 = vset.pattern.permute.xlu0 16
        %4549 = vperm.xlu0 %4548, %v283
        %v4550 = vpop.permute.xlu0 %4549
        %4552 = vset.pattern.permute.xlu0 16
        %4553 = vperm.xlu0 %4552, %v284
        %v4554 = vpop.permute.xlu0 %4553
        %4556 = vset.pattern.permute.xlu0 16
        %4557 = vperm.xlu0 %4556, %v285
        %v4558 = vpop.permute.xlu0 %4557
        %4560 = vset.pattern.permute.xlu0 16
        %4561 = vperm.xlu0 %4560, %v286
        %v4562 = vpop.permute.xlu0 %4561
        %4564 = vset.pattern.permute.xlu0 16
        %4565 = vperm.xlu0 %4564, %v287
        %v4566 = vpop.permute.xlu0 %4565
        %4568 = vset.pattern.permute.xlu0 16
        %4569 = vperm.xlu0 %4568, %v288
        %v4570 = vpop.permute.xlu0 %4569
        %4572 = vset.pattern.permute.xlu0 16
        %4573 = vperm.xlu0 %4572, %v289
        %v4574 = vpop.permute.xlu0 %4573
        %4576 = vset.pattern.permute.xlu0 16
        %4577 = vperm.xlu0 %4576, %v290
        %v4578 = vpop.permute.xlu0 %4577
        %4580 = vset.pattern.permute.xlu0 16
        %4581 = vperm.xlu0 %4580, %v291
        %v4582 = vpop.permute.xlu0 %4581
        %4584 = vset.pattern.permute.xlu0 16
        %4585 = vperm.xlu0 %4584, %v292
        %v4586 = vpop.permute.xlu0 %4585
        %v4588 = vsub.f32 %v301, %v4526
        %v4589 = vsub.f32 %v301, %v4530
        %v4590 = vsub.f32 %v301, %v4534
        %v4591 = vsub.f32 %v301, %v4538
        %v4592 = vsub.f32 %v301, %v4542
        %v4593 = vsub.f32 %v301, %v4546
        %v4594 = vsub.f32 %v301, %v4550
        %v4595 = vsub.f32 %v301, %v4554
        %v4596 = vsub.f32 %v301, %v4558
        %v4597 = vsub.f32 %v301, %v4562
        %v4598 = vsub.f32 %v301, %v4566
        %v4599 = vsub.f32 %v301, %v4570
        %v4600 = vsub.f32 %v301, %v4574
        %v4601 = vsub.f32 %v301, %v4578
        %v4602 = vsub.f32 %v301, %v4582
        %v4603 = vsub.f32 %v301, %v4586
        %v4604 = vand.u32 2147483647, %v4588
        %v4605 = vand.u32 2147483647, %v4589
        %v4606 = vand.u32 2147483647, %v4590
        %v4607 = vand.u32 2147483647, %v4591
        %v4608 = vand.u32 2147483647, %v4592
        %v4609 = vand.u32 2147483647, %v4593
        %v4610 = vand.u32 2147483647, %v4594
        %v4611 = vand.u32 2147483647, %v4595
        %v4612 = vand.u32 2147483647, %v4596
        %v4613 = vand.u32 2147483647, %v4597
        %v4614 = vand.u32 2147483647, %v4598
        %v4615 = vand.u32 2147483647, %v4599
        %v4616 = vand.u32 2147483647, %v4600
        %v4617 = vand.u32 2147483647, %v4601
        %v4618 = vand.u32 2147483647, %v4602
        %v4619 = vand.u32 2147483647, %v4603
        %v4620 = vsub.f32 1.0, %v4604
        %v4621 = vsub.f32 1.0, %v4605
        %v4622 = vsub.f32 1.0, %v4606
        %v4623 = vsub.f32 1.0, %v4607
        %v4624 = vsub.f32 1.0, %v4608
        %v4625 = vsub.f32 1.0, %v4609
        %v4626 = vsub.f32 1.0, %v4610
        %v4627 = vsub.f32 1.0, %v4611
        %v4628 = vsub.f32 1.0, %v4612
        %v4629 = vsub.f32 1.0, %v4613
        %v4630 = vsub.f32 1.0, %v4614
        %v4631 = vsub.f32 1.0, %v4615
        %v4632 = vsub.f32 1.0, %v4616
        %v4633 = vsub.f32 1.0, %v4617
        %v4634 = vsub.f32 1.0, %v4618
        %v4635 = vsub.f32 1.0, %v4619
        %v4636 = vmax.f32 %v4620, 0.0
        %v4637 = vmax.f32 %v4621, 0.0
        %v4638 = vmax.f32 %v4622, 0.0
        %v4639 = vmax.f32 %v4623, 0.0
        %v4640 = vmax.f32 %v4624, 0.0
        %v4641 = vmax.f32 %v4625, 0.0
        %v4642 = vmax.f32 %v4626, 0.0
        %v4643 = vmax.f32 %v4627, 0.0
        %v4644 = vmax.f32 %v4628, 0.0
        %v4645 = vmax.f32 %v4629, 0.0
        %v4646 = vmax.f32 %v4630, 0.0
        %v4647 = vmax.f32 %v4631, 0.0
        %v4648 = vmax.f32 %v4632, 0.0
        %v4649 = vmax.f32 %v4633, 0.0
        %v4650 = vmax.f32 %v4634, 0.0
        %v4651 = vmax.f32 %v4635, 0.0
        %v4652 = vpack.c.bf16 %v4509, %v4508
        %v4653 = vpack.c.bf16 %v4511, %v4510
        %v4654 = vpack.c.bf16 %v4513, %v4512
        %v4655 = vpack.c.bf16 %v4515, %v4514
        %v4656 = vpack.c.bf16 %v4517, %v4516
        %v4657 = vpack.c.bf16 %v4519, %v4518
        %v4658 = vpack.c.bf16 %v4521, %v4520
        %v4659 = vpack.c.bf16 %v4523, %v4522
        %v4661 = vsel %vm589, %v4652, 0
        %v4664 = vsel %vm589, %v4653, 0
        %v4667 = vsel %vm589, %v4654, 0
        %v4670 = vsel %vm589, %v4655, 0
        %v4673 = vsel %vm589, %v4656, 0
        %v4676 = vsel %vm589, %v4657, 0
        %v4679 = vsel %vm589, %v4658, 0
        %v4682 = vsel %vm589, %v4659, 0
        %4684 = vmatprep.subr.bf16.mxu0 0
        %4685 = vmatpush1.bf16.msra.mxu0 %v587
        %4686 = vmatprep.subr.bf16.mxu0 0
        %4687 = vmatpush1.bf16.msra.mxu0 0
        %4688 = vmatprep.subr.bf16.mxu0 0
        %4689 = vmatpush1.bf16.msra.mxu0 0
        %4690 = vmatprep.subr.bf16.mxu0 0
        %4691 = vmatpush1.bf16.msra.mxu0 0
        %4692 = vmatprep.subr.bf16.mxu0 0
        %4693 = vmatpush1.bf16.msra.mxu0 0
        %4694 = vmatprep.subr.bf16.mxu0 0
        %4695 = vmatpush1.bf16.msra.mxu0 0
        %4696 = vmatprep.subr.bf16.mxu0 0
        %4697 = vmatpush1.bf16.msra.mxu0 0
        %4698 = vmatprep.subr.bf16.mxu0 0
        %4699 = vmatpush1.bf16.msra.mxu0 0
        %4700 = vmatprep.subr.bf16.mxu0 0
        %4701 = vmatpush1.bf16.msra.mxu0 0
        %4702 = vmatprep.subr.bf16.mxu0 0
        %4703 = vmatpush1.bf16.msra.mxu0 0
        %4704 = vmatprep.subr.bf16.mxu0 0
        %4705 = vmatpush1.bf16.msra.mxu0 0
        %4706 = vmatprep.subr.bf16.mxu0 0
        %4707 = vmatpush1.bf16.msra.mxu0 0
        %4708 = vmatprep.subr.bf16.mxu0 0
        %4709 = vmatpush1.bf16.msra.mxu0 0
        %4710 = vmatprep.subr.bf16.mxu0 0
        %4711 = vmatpush1.bf16.msra.mxu0 0
        %4712 = vmatprep.subr.bf16.mxu0 0
        %4713 = vmatpush1.bf16.msra.mxu0 0
        %4714 = vmatprep.subr.bf16.mxu0 0
        %4715 = vmatpush1.bf16.msra.mxu0 0
        %4716 = vmatprep.mubr.bf16.mxu0 0
        %4717 = vmatmul.mubr.bf16.gmra.mrb[0].mxu0 %v4661
        %v4718 = vpop.f32.mrb[0].mxu0
        %v4719 = vadd.f32 0.0, %v4718
        %v4720 = vpop.f32.mrb[0].mxu0
        %v4721 = vpop.f32.mrb[0].mxu0
        %v4722 = vadd.f32 0.0, %v4721
        %v4723 = vpop.f32.mrb[0].mxu0
        %4724 = vmatprep.mubr.bf16.mxu0 0
        %4725 = vmatmul.mubr.bf16.gmra.mrb[0].mxu0 %v4664
        %v4726 = vpop.f32.mrb[0].mxu0
        %v4727 = vadd.f32 0.0, %v4726
        %v4728 = vpop.f32.mrb[0].mxu0
        %v4729 = vpop.f32.mrb[0].mxu0
        %v4730 = vadd.f32 0.0, %v4729
        %v4731 = vpop.f32.mrb[0].mxu0
        %4732 = vmatprep.mubr.bf16.mxu0 0
        %4733 = vmatmul.mubr.bf16.gmra.mrb[0].mxu0 %v4667
        %v4734 = vpop.f32.mrb[0].mxu0
        %v4735 = vadd.f32 0.0, %v4734
        %v4736 = vpop.f32.mrb[0].mxu0
        %v4737 = vpop.f32.mrb[0].mxu0
        %v4738 = vadd.f32 0.0, %v4737
        %v4739 = vpop.f32.mrb[0].mxu0
        %4740 = vmatprep.mubr.bf16.mxu0 0
        %4741 = vmatmul.mubr.bf16.gmra.mrb[0].mxu0 %v4670
        %v4742 = vpop.f32.mrb[0].mxu0
        %v4743 = vadd.f32 0.0, %v4742
        %v4744 = vpop.f32.mrb[0].mxu0
        %v4745 = vpop.f32.mrb[0].mxu0
        %v4746 = vadd.f32 0.0, %v4745
        %v4747 = vpop.f32.mrb[0].mxu0
        %4748 = vmatprep.mubr.bf16.mxu0 0
        %4749 = vmatmul.mubr.bf16.gmra.mrb[0].mxu0 %v4673
        %v4750 = vpop.f32.mrb[0].mxu0
        %v4751 = vadd.f32 0.0, %v4750
        %v4752 = vpop.f32.mrb[0].mxu0
        %v4753 = vpop.f32.mrb[0].mxu0
        %v4754 = vadd.f32 0.0, %v4753
        %v4755 = vpop.f32.mrb[0].mxu0
        %4756 = vmatprep.mubr.bf16.mxu0 0
        %4757 = vmatmul.mubr.bf16.gmra.mrb[0].mxu0 %v4676
        %v4758 = vpop.f32.mrb[0].mxu0
        %v4759 = vadd.f32 0.0, %v4758
        %v4760 = vpop.f32.mrb[0].mxu0
        %v4761 = vpop.f32.mrb[0].mxu0
        %v4762 = vadd.f32 0.0, %v4761
        %v4763 = vpop.f32.mrb[0].mxu0
        %4764 = vmatprep.mubr.bf16.mxu0 0
        %4765 = vmatmul.mubr.bf16.gmra.mrb[0].mxu0 %v4679
        %v4766 = vpop.f32.mrb[0].mxu0
        %v4767 = vadd.f32 0.0, %v4766
        %v4768 = vpop.f32.mrb[0].mxu0
        %v4769 = vpop.f32.mrb[0].mxu0
        %v4770 = vadd.f32 0.0, %v4769
        %v4771 = vpop.f32.mrb[0].mxu0
        %4772 = vmatprep.mubr.bf16.mxu0 0
        %4773 = vmatmul.mubr.bf16.gmra.mrb[0].mxu0 %v4682
        %v4774 = vpop.f32.mrb[0].mxu0
        %v4775 = vadd.f32 0.0, %v4774
        %v4776 = vpop.f32.mrb[0].mxu0
        %v4777 = vpop.f32.mrb[0].mxu0
        %v4778 = vadd.f32 0.0, %v4777
        %v4779 = vpop.f32.mrb[0].mxu0
        %4780 = vdwg.mxu0
        %v4781 = vmul.f32 %v4636, %v4719
        %v4782 = vmul.f32 %v4637, %v4722
        %v4783 = vmul.f32 %v4638, %v4727
        %v4784 = vmul.f32 %v4639, %v4730
        %v4785 = vmul.f32 %v4640, %v4735
        %v4786 = vmul.f32 %v4641, %v4738
        %v4787 = vmul.f32 %v4642, %v4743
        %v4788 = vmul.f32 %v4643, %v4746
        %v4789 = vmul.f32 %v4644, %v4751
        %v4790 = vmul.f32 %v4645, %v4754
        %v4791 = vmul.f32 %v4646, %v4759
        %v4792 = vmul.f32 %v4647, %v4762
        %v4793 = vmul.f32 %v4648, %v4767
        %v4794 = vmul.f32 %v4649, %v4770
        %v4795 = vmul.f32 %v4650, %v4775
        %v4796 = vmul.f32 %v4651, %v4778
        %v4797 = vpack.c.bf16 %v4782, %v4781
        %v4798 = vpack.c.bf16 %v4784, %v4783
        %v4799 = vpack.c.bf16 %v4786, %v4785
        %v4800 = vpack.c.bf16 %v4788, %v4787
        %v4801 = vpack.c.bf16 %v4790, %v4789
        %v4802 = vpack.c.bf16 %v4792, %v4791
        %v4803 = vpack.c.bf16 %v4794, %v4793
        %v4804 = vpack.c.bf16 %v4796, %v4795
        %v4805 = vld [vmem:[%s3 + $0x1c0] sm:$0xf]
        %v4806 = vld [vmem:[%s3 + $0x1c4] sm:$0xf]
        %v4807 = vld [vmem:[%s3 + $0x1c8] sm:$0xf]
        %v4808 = vld [vmem:[%s3 + $0x1cc] sm:$0xf]
        %v4809 = vld [vmem:[%s3 + $0x1d0] sm:$0xf]
        %v4810 = vld [vmem:[%s3 + $0x1d4] sm:$0xf]
        %v4811 = vld [vmem:[%s3 + $0x1d8] sm:$0xf]
        %v4812 = vld [vmem:[%s3 + $0x1dc] sm:$0xf]
        %v4813 = vld [vmem:[%s3 + $0x1e0] sm:$0xf]
        %v4814 = vld [vmem:[%s3 + $0x1e4] sm:$0xf]
        %v4815 = vld [vmem:[%s3 + $0x1e8] sm:$0xf]
        %v4816 = vld [vmem:[%s3 + $0x1ec] sm:$0xf]
        %v4817 = vld [vmem:[%s3 + $0x1f0] sm:$0xf]
        %v4818 = vld [vmem:[%s3 + $0x1f4] sm:$0xf]
        %v4819 = vld [vmem:[%s3 + $0x1f8] sm:$0xf]
        %v4820 = vld [vmem:[%s3 + $0x1fc] sm:$0xf]
        %v4837 = vunpack.c.l.b16 %v4805
        %v4838 = vunpack.c.l.b16 %v4806
        %v4839 = vunpack.c.l.b16 %v4807
        %v4840 = vunpack.c.l.b16 %v4808
        %v4841 = vunpack.c.l.b16 %v4809
        %v4842 = vunpack.c.l.b16 %v4810
        %v4843 = vunpack.c.l.b16 %v4811
        %v4844 = vunpack.c.l.b16 %v4812
        %v4845 = vunpack.c.l.b16 %v4813
        %v4846 = vunpack.c.l.b16 %v4814
        %v4847 = vunpack.c.l.b16 %v4815
        %v4848 = vunpack.c.l.b16 %v4816
        %v4849 = vunpack.c.l.b16 %v4817
        %v4850 = vunpack.c.l.b16 %v4818
        %v4851 = vunpack.c.l.b16 %v4819
        %v4852 = vunpack.c.l.b16 %v4820
        %v4853 = vpack.c.b16 %v4838, %v4837
        %v4854 = vpack.c.b16 %v4840, %v4839
        %v4855 = vpack.c.b16 %v4842, %v4841
        %v4856 = vpack.c.b16 %v4844, %v4843
        %v4857 = vpack.c.b16 %v4846, %v4845
        %v4858 = vpack.c.b16 %v4848, %v4847
        %v4859 = vpack.c.b16 %v4850, %v4849
        %v4860 = vpack.c.b16 %v4852, %v4851
        %4869 = vmatprep.subr.bf16.mxu0 0
        %4870 = vmatpush1.bf16.msra.mxu0 %v4853
        %4871 = vmatprep.subr.bf16.mxu0 0
        %4872 = vmatpush1.bf16.msra.mxu0 %v4854
        %4873 = vmatprep.subr.bf16.mxu0 0
        %4874 = vmatpush1.bf16.msra.mxu0 %v4855
        %4875 = vmatprep.subr.bf16.mxu0 0
        %4876 = vmatpush1.bf16.msra.mxu0 %v4856
        %4877 = vmatprep.subr.bf16.mxu0 0
        %4878 = vmatpush1.bf16.msra.mxu0 %v4857
        %4879 = vmatprep.subr.bf16.mxu0 0
        %4880 = vmatpush1.bf16.msra.mxu0 %v4858
        %4881 = vmatprep.subr.bf16.mxu0 0
        %4882 = vmatpush1.bf16.msra.mxu0 %v4859
        %4883 = vmatprep.subr.bf16.mxu0 0
        %4884 = vmatpush1.bf16.msra.mxu0 %v4860
        %4885 = vmatprep.subr.bf16.mxu0 0
        %4886 = vmatpush1.bf16.msra.mxu0 0
        %4887 = vmatprep.subr.bf16.mxu0 0
        %4888 = vmatpush1.bf16.msra.mxu0 0
        %4889 = vmatprep.subr.bf16.mxu0 0
        %4890 = vmatpush1.bf16.msra.mxu0 0
        %4891 = vmatprep.subr.bf16.mxu0 0
        %4892 = vmatpush1.bf16.msra.mxu0 0
        %4893 = vmatprep.subr.bf16.mxu0 0
        %4894 = vmatpush1.bf16.msra.mxu0 0
        %4895 = vmatprep.subr.bf16.mxu0 0
        %4896 = vmatpush1.bf16.msra.mxu0 0
        %4897 = vmatprep.subr.bf16.mxu0 0
        %4898 = vmatpush1.bf16.msra.mxu0 0
        %4899 = vmatprep.subr.bf16.mxu0 0
        %4900 = vmatpush1.bf16.msra.mxu0 0
        %4901 = vmatprep.mubr.bf16.mxu0 0
        %4902 = vmatmul.mubr.bf16.gmra.mrb[0].mxu0 %v4797
        %v4903 = vpop.f32.mrb[0].mxu0
        %v4904 = vadd.f32 0.0, %v4903
        %v4905 = vpop.f32.mrb[0].mxu0
        %v4906 = vpop.f32.mrb[0].mxu0
        %v4907 = vadd.f32 0.0, %v4906
        %v4908 = vpop.f32.mrb[0].mxu0
        %4909 = vmatprep.mubr.bf16.mxu0 0
        %4910 = vmatmul.mubr.bf16.gmra.mrb[0].mxu0 %v4798
        %v4911 = vpop.f32.mrb[0].mxu0
        %v4912 = vadd.f32 0.0, %v4911
        %v4913 = vpop.f32.mrb[0].mxu0
        %v4914 = vpop.f32.mrb[0].mxu0
        %v4915 = vadd.f32 0.0, %v4914
        %v4916 = vpop.f32.mrb[0].mxu0
        %4917 = vmatprep.mubr.bf16.mxu0 0
        %4918 = vmatmul.mubr.bf16.gmra.mrb[0].mxu0 %v4799
        %v4919 = vpop.f32.mrb[0].mxu0
        %v4920 = vadd.f32 0.0, %v4919
        %v4921 = vpop.f32.mrb[0].mxu0
        %v4922 = vpop.f32.mrb[0].mxu0
        %v4923 = vadd.f32 0.0, %v4922
        %v4924 = vpop.f32.mrb[0].mxu0
        %4925 = vmatprep.mubr.bf16.mxu0 0
        %4926 = vmatmul.mubr.bf16.gmra.mrb[0].mxu0 %v4800
        %v4927 = vpop.f32.mrb[0].mxu0
        %v4928 = vadd.f32 0.0, %v4927
        %v4929 = vpop.f32.mrb[0].mxu0
        %v4930 = vpop.f32.mrb[0].mxu0
        %v4931 = vadd.f32 0.0, %v4930
        %v4932 = vpop.f32.mrb[0].mxu0
        %4933 = vmatprep.mubr.bf16.mxu0 0
        %4934 = vmatmul.mubr.bf16.gmra.mrb[0].mxu0 %v4801
        %v4935 = vpop.f32.mrb[0].mxu0
        %v4936 = vadd.f32 0.0, %v4935
        %v4937 = vpop.f32.mrb[0].mxu0
        %v4938 = vpop.f32.mrb[0].mxu0
        %v4939 = vadd.f32 0.0, %v4938
        %v4940 = vpop.f32.mrb[0].mxu0
        %4941 = vmatprep.mubr.bf16.mxu0 0
        %4942 = vmatmul.mubr.bf16.gmra.mrb[0].mxu0 %v4802
        %v4943 = vpop.f32.mrb[0].mxu0
        %v4944 = vadd.f32 0.0, %v4943
        %v4945 = vpop.f32.mrb[0].mxu0
        %v4946 = vpop.f32.mrb[0].mxu0
        %v4947 = vadd.f32 0.0, %v4946
        %v4948 = vpop.f32.mrb[0].mxu0
        %4949 = vmatprep.mubr.bf16.mxu0 0
        %4950 = vmatmul.mubr.bf16.gmra.mrb[0].mxu0 %v4803
        %v4951 = vpop.f32.mrb[0].mxu0
        %v4952 = vadd.f32 0.0, %v4951
        %v4953 = vpop.f32.mrb[0].mxu0
        %v4954 = vpop.f32.mrb[0].mxu0
        %v4955 = vadd.f32 0.0, %v4954
        %v4956 = vpop.f32.mrb[0].mxu0
        %4957 = vmatprep.mubr.bf16.mxu0 0
        %4958 = vmatmul.mubr.bf16.gmra.mrb[0].mxu0 %v4804
        %v4959 = vpop.f32.mrb[0].mxu0
        %v4960 = vadd.f32 0.0, %v4959
        %v4961 = vpop.f32.mrb[0].mxu0
        %v4962 = vpop.f32.mrb[0].mxu0
        %v4963 = vadd.f32 0.0, %v4962
        %v4964 = vpop.f32.mrb[0].mxu0
        %4965 = vdwg.mxu0
        %v4966 = vadd.f32 %v4380, %v4904
        %v4967 = vadd.f32 %v4381, %v4907
        %v4968 = vadd.f32 %v4382, %v4912
        %v4969 = vadd.f32 %v4383, %v4915
        %v4970 = vadd.f32 %v4384, %v4920
        %v4971 = vadd.f32 %v4385, %v4923
        %v4972 = vadd.f32 %v4386, %v4928
        %v4973 = vadd.f32 %v4387, %v4931
        %v4974 = vadd.f32 %v4388, %v4936
        %v4975 = vadd.f32 %v4389, %v4939
        %v4976 = vadd.f32 %v4390, %v4944
        %v4977 = vadd.f32 %v4391, %v4947
        %v4978 = vadd.f32 %v4392, %v4952
        %v4979 = vadd.f32 %v4393, %v4955
        %v4980 = vadd.f32 %v4394, %v4960
        %v4981 = vadd.f32 %v4395, %v4963
        %4982 = vset.pattern.permute.xlu0 8
        %4983 = vperm.xlu0 %4982, %v277
        %v4984 = vpop.permute.xlu0 %4983
        %4986 = vset.pattern.permute.xlu0 8
        %4987 = vperm.xlu0 %4986, %v278
        %v4988 = vpop.permute.xlu0 %4987
        %4990 = vset.pattern.permute.xlu0 8
        %4991 = vperm.xlu0 %4990, %v279
        %v4992 = vpop.permute.xlu0 %4991
        %4994 = vset.pattern.permute.xlu0 8
        %4995 = vperm.xlu0 %4994, %v280
        %v4996 = vpop.permute.xlu0 %4995
        %4998 = vset.pattern.permute.xlu0 8
        %4999 = vperm.xlu0 %4998, %v281
        %v5000 = vpop.permute.xlu0 %4999
        %5002 = vset.pattern.permute.xlu0 8
        %5003 = vperm.xlu0 %5002, %v282
        %v5004 = vpop.permute.xlu0 %5003
        %5006 = vset.pattern.permute.xlu0 8
        %5007 = vperm.xlu0 %5006, %v283
        %v5008 = vpop.permute.xlu0 %5007
        %5010 = vset.pattern.permute.xlu0 8
        %5011 = vperm.xlu0 %5010, %v284
        %v5012 = vpop.permute.xlu0 %5011
        %5014 = vset.pattern.permute.xlu0 8
        %5015 = vperm.xlu0 %5014, %v285
        %v5016 = vpop.permute.xlu0 %5015
        %5018 = vset.pattern.permute.xlu0 8
        %5019 = vperm.xlu0 %5018, %v286
        %v5020 = vpop.permute.xlu0 %5019
        %5022 = vset.pattern.permute.xlu0 8
        %5023 = vperm.xlu0 %5022, %v287
        %v5024 = vpop.permute.xlu0 %5023
        %5026 = vset.pattern.permute.xlu0 8
        %5027 = vperm.xlu0 %5026, %v288
        %v5028 = vpop.permute.xlu0 %5027
        %5030 = vset.pattern.permute.xlu0 8
        %5031 = vperm.xlu0 %5030, %v289
        %v5032 = vpop.permute.xlu0 %5031
        %5034 = vset.pattern.permute.xlu0 8
        %5035 = vperm.xlu0 %5034, %v290
        %v5036 = vpop.permute.xlu0 %5035
        %5038 = vset.pattern.permute.xlu0 8
        %5039 = vperm.xlu0 %5038, %v291
        %v5040 = vpop.permute.xlu0 %5039
        %5042 = vset.pattern.permute.xlu0 8
        %5043 = vperm.xlu0 %5042, %v292
        %v5044 = vpop.permute.xlu0 %5043
        %v5046 = vsub.f32 %v295, %v4984
        %v5047 = vsub.f32 %v295, %v4988
        %v5048 = vsub.f32 %v295, %v4992
        %v5049 = vsub.f32 %v295, %v4996
        %v5050 = vsub.f32 %v295, %v5000
        %v5051 = vsub.f32 %v295, %v5004
        %v5052 = vsub.f32 %v295, %v5008
        %v5053 = vsub.f32 %v295, %v5012
        %v5054 = vsub.f32 %v295, %v5016
        %v5055 = vsub.f32 %v295, %v5020
        %v5056 = vsub.f32 %v295, %v5024
        %v5057 = vsub.f32 %v295, %v5028
        %v5058 = vsub.f32 %v295, %v5032
        %v5059 = vsub.f32 %v295, %v5036
        %v5060 = vsub.f32 %v295, %v5040
        %v5061 = vsub.f32 %v295, %v5044
        %v5062 = vand.u32 2147483647, %v5046
        %v5063 = vand.u32 2147483647, %v5047
        %v5064 = vand.u32 2147483647, %v5048
        %v5065 = vand.u32 2147483647, %v5049
        %v5066 = vand.u32 2147483647, %v5050
        %v5067 = vand.u32 2147483647, %v5051
        %v5068 = vand.u32 2147483647, %v5052
        %v5069 = vand.u32 2147483647, %v5053
        %v5070 = vand.u32 2147483647, %v5054
        %v5071 = vand.u32 2147483647, %v5055
        %v5072 = vand.u32 2147483647, %v5056
        %v5073 = vand.u32 2147483647, %v5057
        %v5074 = vand.u32 2147483647, %v5058
        %v5075 = vand.u32 2147483647, %v5059
        %v5076 = vand.u32 2147483647, %v5060
        %v5077 = vand.u32 2147483647, %v5061
        %v5078 = vsub.f32 1.0, %v5062
        %v5079 = vsub.f32 1.0, %v5063
        %v5080 = vsub.f32 1.0, %v5064
        %v5081 = vsub.f32 1.0, %v5065
        %v5082 = vsub.f32 1.0, %v5066
        %v5083 = vsub.f32 1.0, %v5067
        %v5084 = vsub.f32 1.0, %v5068
        %v5085 = vsub.f32 1.0, %v5069
        %v5086 = vsub.f32 1.0, %v5070
        %v5087 = vsub.f32 1.0, %v5071
        %v5088 = vsub.f32 1.0, %v5072
        %v5089 = vsub.f32 1.0, %v5073
        %v5090 = vsub.f32 1.0, %v5074
        %v5091 = vsub.f32 1.0, %v5075
        %v5092 = vsub.f32 1.0, %v5076
        %v5093 = vsub.f32 1.0, %v5077
        %v5094 = vmax.f32 %v5078, 0.0
        %v5095 = vmax.f32 %v5079, 0.0
        %v5096 = vmax.f32 %v5080, 0.0
        %v5097 = vmax.f32 %v5081, 0.0
        %v5098 = vmax.f32 %v5082, 0.0
        %v5099 = vmax.f32 %v5083, 0.0
        %v5100 = vmax.f32 %v5084, 0.0
        %v5101 = vmax.f32 %v5085, 0.0
        %v5102 = vmax.f32 %v5086, 0.0
        %v5103 = vmax.f32 %v5087, 0.0
        %v5104 = vmax.f32 %v5088, 0.0
        %v5105 = vmax.f32 %v5089, 0.0
        %v5106 = vmax.f32 %v5090, 0.0
        %v5107 = vmax.f32 %v5091, 0.0
        %v5108 = vmax.f32 %v5092, 0.0
        %v5109 = vmax.f32 %v5093, 0.0
        %5110 = vset.pattern.permute.xlu0 17
        %5111 = vperm.xlu0 %5110, %v277
        %v5112 = vpop.permute.xlu0 %5111
        %5114 = vset.pattern.permute.xlu0 17
        %5115 = vperm.xlu0 %5114, %v278
        %v5116 = vpop.permute.xlu0 %5115
        %5118 = vset.pattern.permute.xlu0 17
        %5119 = vperm.xlu0 %5118, %v279
        %v5120 = vpop.permute.xlu0 %5119
        %5122 = vset.pattern.permute.xlu0 17
        %5123 = vperm.xlu0 %5122, %v280
        %v5124 = vpop.permute.xlu0 %5123
        %5126 = vset.pattern.permute.xlu0 17
        %5127 = vperm.xlu0 %5126, %v281
        %v5128 = vpop.permute.xlu0 %5127
        %5130 = vset.pattern.permute.xlu0 17
        %5131 = vperm.xlu0 %5130, %v282
        %v5132 = vpop.permute.xlu0 %5131
        %5134 = vset.pattern.permute.xlu0 17
        %5135 = vperm.xlu0 %5134, %v283
        %v5136 = vpop.permute.xlu0 %5135
        %5138 = vset.pattern.permute.xlu0 17
        %5139 = vperm.xlu0 %5138, %v284
        %v5140 = vpop.permute.xlu0 %5139
        %5142 = vset.pattern.permute.xlu0 17
        %5143 = vperm.xlu0 %5142, %v285
        %v5144 = vpop.permute.xlu0 %5143
        %5146 = vset.pattern.permute.xlu0 17
        %5147 = vperm.xlu0 %5146, %v286
        %v5148 = vpop.permute.xlu0 %5147
        %5150 = vset.pattern.permute.xlu0 17
        %5151 = vperm.xlu0 %5150, %v287
        %v5152 = vpop.permute.xlu0 %5151
        %5154 = vset.pattern.permute.xlu0 17
        %5155 = vperm.xlu0 %5154, %v288
        %v5156 = vpop.permute.xlu0 %5155
        %5158 = vset.pattern.permute.xlu0 17
        %5159 = vperm.xlu0 %5158, %v289
        %v5160 = vpop.permute.xlu0 %5159
        %5162 = vset.pattern.permute.xlu0 17
        %5163 = vperm.xlu0 %5162, %v290
        %v5164 = vpop.permute.xlu0 %5163
        %5166 = vset.pattern.permute.xlu0 17
        %5167 = vperm.xlu0 %5166, %v291
        %v5168 = vpop.permute.xlu0 %5167
        %5170 = vset.pattern.permute.xlu0 17
        %5171 = vperm.xlu0 %5170, %v292
        %v5172 = vpop.permute.xlu0 %5171
        %v5174 = vsub.f32 %v301, %v5112
        %v5175 = vsub.f32 %v301, %v5116
        %v5176 = vsub.f32 %v301, %v5120
        %v5177 = vsub.f32 %v301, %v5124
        %v5178 = vsub.f32 %v301, %v5128
        %v5179 = vsub.f32 %v301, %v5132
        %v5180 = vsub.f32 %v301, %v5136
        %v5181 = vsub.f32 %v301, %v5140
        %v5182 = vsub.f32 %v301, %v5144
        %v5183 = vsub.f32 %v301, %v5148
        %v5184 = vsub.f32 %v301, %v5152
        %v5185 = vsub.f32 %v301, %v5156
        %v5186 = vsub.f32 %v301, %v5160
        %v5187 = vsub.f32 %v301, %v5164
        %v5188 = vsub.f32 %v301, %v5168
        %v5189 = vsub.f32 %v301, %v5172
        %v5190 = vand.u32 2147483647, %v5174
        %v5191 = vand.u32 2147483647, %v5175
        %v5192 = vand.u32 2147483647, %v5176
        %v5193 = vand.u32 2147483647, %v5177
        %v5194 = vand.u32 2147483647, %v5178
        %v5195 = vand.u32 2147483647, %v5179
        %v5196 = vand.u32 2147483647, %v5180
        %v5197 = vand.u32 2147483647, %v5181
        %v5198 = vand.u32 2147483647, %v5182
        %v5199 = vand.u32 2147483647, %v5183
        %v5200 = vand.u32 2147483647, %v5184
        %v5201 = vand.u32 2147483647, %v5185
        %v5202 = vand.u32 2147483647, %v5186
        %v5203 = vand.u32 2147483647, %v5187
        %v5204 = vand.u32 2147483647, %v5188
        %v5205 = vand.u32 2147483647, %v5189
        %v5206 = vsub.f32 1.0, %v5190
        %v5207 = vsub.f32 1.0, %v5191
        %v5208 = vsub.f32 1.0, %v5192
        %v5209 = vsub.f32 1.0, %v5193
        %v5210 = vsub.f32 1.0, %v5194
        %v5211 = vsub.f32 1.0, %v5195
        %v5212 = vsub.f32 1.0, %v5196
        %v5213 = vsub.f32 1.0, %v5197
        %v5214 = vsub.f32 1.0, %v5198
        %v5215 = vsub.f32 1.0, %v5199
        %v5216 = vsub.f32 1.0, %v5200
        %v5217 = vsub.f32 1.0, %v5201
        %v5218 = vsub.f32 1.0, %v5202
        %v5219 = vsub.f32 1.0, %v5203
        %v5220 = vsub.f32 1.0, %v5204
        %v5221 = vsub.f32 1.0, %v5205
        %v5222 = vmax.f32 %v5206, 0.0
        %v5223 = vmax.f32 %v5207, 0.0
        %v5224 = vmax.f32 %v5208, 0.0
        %v5225 = vmax.f32 %v5209, 0.0
        %v5226 = vmax.f32 %v5210, 0.0
        %v5227 = vmax.f32 %v5211, 0.0
        %v5228 = vmax.f32 %v5212, 0.0
        %v5229 = vmax.f32 %v5213, 0.0
        %v5230 = vmax.f32 %v5214, 0.0
        %v5231 = vmax.f32 %v5215, 0.0
        %v5232 = vmax.f32 %v5216, 0.0
        %v5233 = vmax.f32 %v5217, 0.0
        %v5234 = vmax.f32 %v5218, 0.0
        %v5235 = vmax.f32 %v5219, 0.0
        %v5236 = vmax.f32 %v5220, 0.0
        %v5237 = vmax.f32 %v5221, 0.0
        %v5238 = vpack.c.bf16 %v5095, %v5094
        %v5239 = vpack.c.bf16 %v5097, %v5096
        %v5240 = vpack.c.bf16 %v5099, %v5098
        %v5241 = vpack.c.bf16 %v5101, %v5100
        %v5242 = vpack.c.bf16 %v5103, %v5102
        %v5243 = vpack.c.bf16 %v5105, %v5104
        %v5244 = vpack.c.bf16 %v5107, %v5106
        %v5245 = vpack.c.bf16 %v5109, %v5108
        %v5247 = vsel %vm589, %v5238, 0
        %v5250 = vsel %vm589, %v5239, 0
        %v5253 = vsel %vm589, %v5240, 0
        %v5256 = vsel %vm589, %v5241, 0
        %v5259 = vsel %vm589, %v5242, 0
        %v5262 = vsel %vm589, %v5243, 0
        %v5265 = vsel %vm589, %v5244, 0
        %v5268 = vsel %vm589, %v5245, 0
        %5270 = vmatprep.subr.bf16.mxu0 0
        %5271 = vmatpush1.bf16.msra.mxu0 %v587
        %5272 = vmatprep.subr.bf16.mxu0 0
        %5273 = vmatpush1.bf16.msra.mxu0 0
        %5274 = vmatprep.subr.bf16.mxu0 0
        %5275 = vmatpush1.bf16.msra.mxu0 0
        %5276 = vmatprep.subr.bf16.mxu0 0
        %5277 = vmatpush1.bf16.msra.mxu0 0
        %5278 = vmatprep.subr.bf16.mxu0 0
        %5279 = vmatpush1.bf16.msra.mxu0 0
        %5280 = vmatprep.subr.bf16.mxu0 0
        %5281 = vmatpush1.bf16.msra.mxu0 0
        %5282 = vmatprep.subr.bf16.mxu0 0
        %5283 = vmatpush1.bf16.msra.mxu0 0
        %5284 = vmatprep.subr.bf16.mxu0 0
        %5285 = vmatpush1.bf16.msra.mxu0 0
        %5286 = vmatprep.subr.bf16.mxu0 0
        %5287 = vmatpush1.bf16.msra.mxu0 0
        %5288 = vmatprep.subr.bf16.mxu0 0
        %5289 = vmatpush1.bf16.msra.mxu0 0
        %5290 = vmatprep.subr.bf16.mxu0 0
        %5291 = vmatpush1.bf16.msra.mxu0 0
        %5292 = vmatprep.subr.bf16.mxu0 0
        %5293 = vmatpush1.bf16.msra.mxu0 0
        %5294 = vmatprep.subr.bf16.mxu0 0
        %5295 = vmatpush1.bf16.msra.mxu0 0
        %5296 = vmatprep.subr.bf16.mxu0 0
        %5297 = vmatpush1.bf16.msra.mxu0 0
        %5298 = vmatprep.subr.bf16.mxu0 0
        %5299 = vmatpush1.bf16.msra.mxu0 0
        %5300 = vmatprep.subr.bf16.mxu0 0
        %5301 = vmatpush1.bf16.msra.mxu0 0
        %5302 = vmatprep.mubr.bf16.mxu0 0
        %5303 = vmatmul.mubr.bf16.gmra.mrb[0].mxu0 %v5247
        %v5304 = vpop.f32.mrb[0].mxu0
        %v5305 = vadd.f32 0.0, %v5304
        %v5306 = vpop.f32.mrb[0].mxu0
        %v5307 = vpop.f32.mrb[0].mxu0
        %v5308 = vadd.f32 0.0, %v5307
        %v5309 = vpop.f32.mrb[0].mxu0
        %5310 = vmatprep.mubr.bf16.mxu0 0
        %5311 = vmatmul.mubr.bf16.gmra.mrb[0].mxu0 %v5250
        %v5312 = vpop.f32.mrb[0].mxu0
        %v5313 = vadd.f32 0.0, %v5312
        %v5314 = vpop.f32.mrb[0].mxu0
        %v5315 = vpop.f32.mrb[0].mxu0
        %v5316 = vadd.f32 0.0, %v5315
        %v5317 = vpop.f32.mrb[0].mxu0
        %5318 = vmatprep.mubr.bf16.mxu0 0
        %5319 = vmatmul.mubr.bf16.gmra.mrb[0].mxu0 %v5253
        %v5320 = vpop.f32.mrb[0].mxu0
        %v5321 = vadd.f32 0.0, %v5320
        %v5322 = vpop.f32.mrb[0].mxu0
        %v5323 = vpop.f32.mrb[0].mxu0
        %v5324 = vadd.f32 0.0, %v5323
        %v5325 = vpop.f32.mrb[0].mxu0
        %5326 = vmatprep.mubr.bf16.mxu0 0
        %5327 = vmatmul.mubr.bf16.gmra.mrb[0].mxu0 %v5256
        %v5328 = vpop.f32.mrb[0].mxu0
        %v5329 = vadd.f32 0.0, %v5328
        %v5330 = vpop.f32.mrb[0].mxu0
        %v5331 = vpop.f32.mrb[0].mxu0
        %v5332 = vadd.f32 0.0, %v5331
        %v5333 = vpop.f32.mrb[0].mxu0
        %5334 = vmatprep.mubr.bf16.mxu0 0
        %5335 = vmatmul.mubr.bf16.gmra.mrb[0].mxu0 %v5259
        %v5336 = vpop.f32.mrb[0].mxu0
        %v5337 = vadd.f32 0.0, %v5336
        %v5338 = vpop.f32.mrb[0].mxu0
        %v5339 = vpop.f32.mrb[0].mxu0
        %v5340 = vadd.f32 0.0, %v5339
        %v5341 = vpop.f32.mrb[0].mxu0
        %5342 = vmatprep.mubr.bf16.mxu0 0
        %5343 = vmatmul.mubr.bf16.gmra.mrb[0].mxu0 %v5262
        %v5344 = vpop.f32.mrb[0].mxu0
        %v5345 = vadd.f32 0.0, %v5344
        %v5346 = vpop.f32.mrb[0].mxu0
        %v5347 = vpop.f32.mrb[0].mxu0
        %v5348 = vadd.f32 0.0, %v5347
        %v5349 = vpop.f32.mrb[0].mxu0
        %5350 = vmatprep.mubr.bf16.mxu0 0
        %5351 = vmatmul.mubr.bf16.gmra.mrb[0].mxu0 %v5265
        %v5352 = vpop.f32.mrb[0].mxu0
        %v5353 = vadd.f32 0.0, %v5352
        %v5354 = vpop.f32.mrb[0].mxu0
        %v5355 = vpop.f32.mrb[0].mxu0
        %v5356 = vadd.f32 0.0, %v5355
        %v5357 = vpop.f32.mrb[0].mxu0
        %5358 = vmatprep.mubr.bf16.mxu0 0
        %5359 = vmatmul.mubr.bf16.gmra.mrb[0].mxu0 %v5268
        %v5360 = vpop.f32.mrb[0].mxu0
        %v5361 = vadd.f32 0.0, %v5360
        %v5362 = vpop.f32.mrb[0].mxu0
        %v5363 = vpop.f32.mrb[0].mxu0
        %v5364 = vadd.f32 0.0, %v5363
        %v5365 = vpop.f32.mrb[0].mxu0
        %5366 = vdwg.mxu0
        %v5367 = vmul.f32 %v5222, %v5305
        %v5368 = vmul.f32 %v5223, %v5308
        %v5369 = vmul.f32 %v5224, %v5313
        %v5370 = vmul.f32 %v5225, %v5316
        %v5371 = vmul.f32 %v5226, %v5321
        %v5372 = vmul.f32 %v5227, %v5324
        %v5373 = vmul.f32 %v5228, %v5329
        %v5374 = vmul.f32 %v5229, %v5332
        %v5375 = vmul.f32 %v5230, %v5337
        %v5376 = vmul.f32 %v5231, %v5340
        %v5377 = vmul.f32 %v5232, %v5345
        %v5378 = vmul.f32 %v5233, %v5348
        %v5379 = vmul.f32 %v5234, %v5353
        %v5380 = vmul.f32 %v5235, %v5356
        %v5381 = vmul.f32 %v5236, %v5361
        %v5382 = vmul.f32 %v5237, %v5364
        %v5383 = vpack.c.bf16 %v5368, %v5367
        %v5384 = vpack.c.bf16 %v5370, %v5369
        %v5385 = vpack.c.bf16 %v5372, %v5371
        %v5386 = vpack.c.bf16 %v5374, %v5373
        %v5387 = vpack.c.bf16 %v5376, %v5375
        %v5388 = vpack.c.bf16 %v5378, %v5377
        %v5389 = vpack.c.bf16 %v5380, %v5379
        %v5390 = vpack.c.bf16 %v5382, %v5381
        %v5391 = vld [vmem:[%s3 + $0x200] sm:$0xf]
        %v5392 = vld [vmem:[%s3 + $0x204] sm:$0xf]
        %v5393 = vld [vmem:[%s3 + $0x208] sm:$0xf]
        %v5394 = vld [vmem:[%s3 + $0x20c] sm:$0xf]
        %v5395 = vld [vmem:[%s3 + $0x210] sm:$0xf]
        %v5396 = vld [vmem:[%s3 + $0x214] sm:$0xf]
        %v5397 = vld [vmem:[%s3 + $0x218] sm:$0xf]
        %v5398 = vld [vmem:[%s3 + $0x21c] sm:$0xf]
        %v5399 = vld [vmem:[%s3 + $0x220] sm:$0xf]
        %v5400 = vld [vmem:[%s3 + $0x224] sm:$0xf]
        %v5401 = vld [vmem:[%s3 + $0x228] sm:$0xf]
        %v5402 = vld [vmem:[%s3 + $0x22c] sm:$0xf]
        %v5403 = vld [vmem:[%s3 + $0x230] sm:$0xf]
        %v5404 = vld [vmem:[%s3 + $0x234] sm:$0xf]
        %v5405 = vld [vmem:[%s3 + $0x238] sm:$0xf]
        %v5406 = vld [vmem:[%s3 + $0x23c] sm:$0xf]
        %v5423 = vunpack.c.l.b16 %v5391
        %v5424 = vunpack.c.l.b16 %v5392
        %v5425 = vunpack.c.l.b16 %v5393
        %v5426 = vunpack.c.l.b16 %v5394
        %v5427 = vunpack.c.l.b16 %v5395
        %v5428 = vunpack.c.l.b16 %v5396
        %v5429 = vunpack.c.l.b16 %v5397
        %v5430 = vunpack.c.l.b16 %v5398
        %v5431 = vunpack.c.l.b16 %v5399
        %v5432 = vunpack.c.l.b16 %v5400
        %v5433 = vunpack.c.l.b16 %v5401
        %v5434 = vunpack.c.l.b16 %v5402
        %v5435 = vunpack.c.l.b16 %v5403
        %v5436 = vunpack.c.l.b16 %v5404
        %v5437 = vunpack.c.l.b16 %v5405
        %v5438 = vunpack.c.l.b16 %v5406
        %v5439 = vpack.c.b16 %v5424, %v5423
        %v5440 = vpack.c.b16 %v5426, %v5425
        %v5441 = vpack.c.b16 %v5428, %v5427
        %v5442 = vpack.c.b16 %v5430, %v5429
        %v5443 = vpack.c.b16 %v5432, %v5431
        %v5444 = vpack.c.b16 %v5434, %v5433
        %v5445 = vpack.c.b16 %v5436, %v5435
        %v5446 = vpack.c.b16 %v5438, %v5437
        %5455 = vmatprep.subr.bf16.mxu0 0
        %5456 = vmatpush1.bf16.msra.mxu0 %v5439
        %5457 = vmatprep.subr.bf16.mxu0 0
        %5458 = vmatpush1.bf16.msra.mxu0 %v5440
        %5459 = vmatprep.subr.bf16.mxu0 0
        %5460 = vmatpush1.bf16.msra.mxu0 %v5441
        %5461 = vmatprep.subr.bf16.mxu0 0
        %5462 = vmatpush1.bf16.msra.mxu0 %v5442
        %5463 = vmatprep.subr.bf16.mxu0 0
        %5464 = vmatpush1.bf16.msra.mxu0 %v5443
        %5465 = vmatprep.subr.bf16.mxu0 0
        %5466 = vmatpush1.bf16.msra.mxu0 %v5444
        %5467 = vmatprep.subr.bf16.mxu0 0
        %5468 = vmatpush1.bf16.msra.mxu0 %v5445
        %5469 = vmatprep.subr.bf16.mxu0 0
        %5470 = vmatpush1.bf16.msra.mxu0 %v5446
        %5471 = vmatprep.subr.bf16.mxu0 0
        %5472 = vmatpush1.bf16.msra.mxu0 0
        %5473 = vmatprep.subr.bf16.mxu0 0
        %5474 = vmatpush1.bf16.msra.mxu0 0
        %5475 = vmatprep.subr.bf16.mxu0 0
        %5476 = vmatpush1.bf16.msra.mxu0 0
        %5477 = vmatprep.subr.bf16.mxu0 0
        %5478 = vmatpush1.bf16.msra.mxu0 0
        %5479 = vmatprep.subr.bf16.mxu0 0
        %5480 = vmatpush1.bf16.msra.mxu0 0
        %5481 = vmatprep.subr.bf16.mxu0 0
        %5482 = vmatpush1.bf16.msra.mxu0 0
        %5483 = vmatprep.subr.bf16.mxu0 0
        %5484 = vmatpush1.bf16.msra.mxu0 0
        %5485 = vmatprep.subr.bf16.mxu0 0
        %5486 = vmatpush1.bf16.msra.mxu0 0
        %5487 = vmatprep.mubr.bf16.mxu0 0
        %5488 = vmatmul.mubr.bf16.gmra.mrb[0].mxu0 %v5383
        %v5489 = vpop.f32.mrb[0].mxu0
        %v5490 = vadd.f32 0.0, %v5489
        %v5491 = vpop.f32.mrb[0].mxu0
        %v5492 = vpop.f32.mrb[0].mxu0
        %v5493 = vadd.f32 0.0, %v5492
        %v5494 = vpop.f32.mrb[0].mxu0
        %5495 = vmatprep.mubr.bf16.mxu0 0
        %5496 = vmatmul.mubr.bf16.gmra.mrb[0].mxu0 %v5384
        %v5497 = vpop.f32.mrb[0].mxu0
        %v5498 = vadd.f32 0.0, %v5497
        %v5499 = vpop.f32.mrb[0].mxu0
        %v5500 = vpop.f32.mrb[0].mxu0
        %v5501 = vadd.f32 0.0, %v5500
        %v5502 = vpop.f32.mrb[0].mxu0
        %5503 = vmatprep.mubr.bf16.mxu0 0
        %5504 = vmatmul.mubr.bf16.gmra.mrb[0].mxu0 %v5385
        %v5505 = vpop.f32.mrb[0].mxu0
        %v5506 = vadd.f32 0.0, %v5505
        %v5507 = vpop.f32.mrb[0].mxu0
        %v5508 = vpop.f32.mrb[0].mxu0
        %v5509 = vadd.f32 0.0, %v5508
        %v5510 = vpop.f32.mrb[0].mxu0
        %5511 = vmatprep.mubr.bf16.mxu0 0
        %5512 = vmatmul.mubr.bf16.gmra.mrb[0].mxu0 %v5386
        %v5513 = vpop.f32.mrb[0].mxu0
        %v5514 = vadd.f32 0.0, %v5513
        %v5515 = vpop.f32.mrb[0].mxu0
        %v5516 = vpop.f32.mrb[0].mxu0
        %v5517 = vadd.f32 0.0, %v5516
        %v5518 = vpop.f32.mrb[0].mxu0
        %5519 = vmatprep.mubr.bf16.mxu0 0
        %5520 = vmatmul.mubr.bf16.gmra.mrb[0].mxu0 %v5387
        %v5521 = vpop.f32.mrb[0].mxu0
        %v5522 = vadd.f32 0.0, %v5521
        %v5523 = vpop.f32.mrb[0].mxu0
        %v5524 = vpop.f32.mrb[0].mxu0
        %v5525 = vadd.f32 0.0, %v5524
        %v5526 = vpop.f32.mrb[0].mxu0
        %5527 = vmatprep.mubr.bf16.mxu0 0
        %5528 = vmatmul.mubr.bf16.gmra.mrb[0].mxu0 %v5388
        %v5529 = vpop.f32.mrb[0].mxu0
        %v5530 = vadd.f32 0.0, %v5529
        %v5531 = vpop.f32.mrb[0].mxu0
        %v5532 = vpop.f32.mrb[0].mxu0
        %v5533 = vadd.f32 0.0, %v5532
        %v5534 = vpop.f32.mrb[0].mxu0
        %5535 = vmatprep.mubr.bf16.mxu0 0
        %5536 = vmatmul.mubr.bf16.gmra.mrb[0].mxu0 %v5389
        %v5537 = vpop.f32.mrb[0].mxu0
        %v5538 = vadd.f32 0.0, %v5537
        %v5539 = vpop.f32.mrb[0].mxu0
        %v5540 = vpop.f32.mrb[0].mxu0
        %v5541 = vadd.f32 0.0, %v5540
        %v5542 = vpop.f32.mrb[0].mxu0
        %5543 = vmatprep.mubr.bf16.mxu0 0
        %5544 = vmatmul.mubr.bf16.gmra.mrb[0].mxu0 %v5390
        %v5545 = vpop.f32.mrb[0].mxu0
        %v5546 = vadd.f32 0.0, %v5545
        %v5547 = vpop.f32.mrb[0].mxu0
        %v5548 = vpop.f32.mrb[0].mxu0
        %v5549 = vadd.f32 0.0, %v5548
        %v5550 = vpop.f32.mrb[0].mxu0
        %5551 = vdwg.mxu0
        %v5552 = vadd.f32 %v4966, %v5490
        %v5553 = vadd.f32 %v4967, %v5493
        %v5554 = vadd.f32 %v4968, %v5498
        %v5555 = vadd.f32 %v4969, %v5501
        %v5556 = vadd.f32 %v4970, %v5506
        %v5557 = vadd.f32 %v4971, %v5509
        %v5558 = vadd.f32 %v4972, %v5514
        %v5559 = vadd.f32 %v4973, %v5517
        %v5560 = vadd.f32 %v4974, %v5522
        %v5561 = vadd.f32 %v4975, %v5525
        %v5562 = vadd.f32 %v4976, %v5530
        %v5563 = vadd.f32 %v4977, %v5533
        %v5564 = vadd.f32 %v4978, %v5538
        %v5565 = vadd.f32 %v4979, %v5541
        %v5566 = vadd.f32 %v4980, %v5546
        %v5567 = vadd.f32 %v4981, %v5549
        %v5568 = vld [vmem:[%s4] sm:$0x1]
        %v5570 = vlaneseq
        %v5571 = vshrl.u32 %v5570, 7
        %v5572 = vsub.s32 0, %v5571
        %v5573 = vrot.slane %v5568, %v5572
        %v5575 = vadd.f32 %v5552, %v5573
        %v5576 = vadd.f32 %v5553, %v5573
        %v5577 = vadd.f32 %v5554, %v5573
        %v5578 = vadd.f32 %v5555, %v5573
        %v5579 = vadd.f32 %v5556, %v5573
        %v5580 = vadd.f32 %v5557, %v5573
        %v5581 = vadd.f32 %v5558, %v5573
        %v5582 = vadd.f32 %v5559, %v5573
        %v5583 = vadd.f32 %v5560, %v5573
        %v5584 = vadd.f32 %v5561, %v5573
        %v5585 = vadd.f32 %v5562, %v5573
        %v5586 = vadd.f32 %v5563, %v5573
        %v5587 = vadd.f32 %v5564, %v5573
        %v5588 = vadd.f32 %v5565, %v5573
        %v5589 = vadd.f32 %v5566, %v5573
        %v5590 = vadd.f32 %v5567, %v5573
        %v5591 = vpack.c.bf16 %v5576, %v5575
        %v5592 = vpack.c.bf16 %v5578, %v5577
        %v5593 = vpack.c.bf16 %v5580, %v5579
        %v5594 = vpack.c.bf16 %v5582, %v5581
        %v5595 = vpack.c.bf16 %v5584, %v5583
        %v5596 = vpack.c.bf16 %v5586, %v5585
        %v5597 = vpack.c.bf16 %v5588, %v5587
        %v5598 = vpack.c.bf16 %v5590, %v5589
        %v5607 = vunpack.c.l.b16 %v5591
        %v5608 = vunpack.c.h.b16 %v5591
        %v5609 = vunpack.c.l.b16 %v5592
        %v5610 = vunpack.c.h.b16 %v5592
        %v5611 = vunpack.c.l.b16 %v5593
        %v5612 = vunpack.c.h.b16 %v5593
        %v5613 = vunpack.c.l.b16 %v5594
        %v5614 = vunpack.c.h.b16 %v5594
        %v5615 = vunpack.c.l.b16 %v5595
        %v5616 = vunpack.c.h.b16 %v5595
        %v5617 = vunpack.c.l.b16 %v5596
        %v5618 = vunpack.c.h.b16 %v5596
        %v5619 = vunpack.c.l.b16 %v5597
        %v5620 = vunpack.c.h.b16 %v5597
        %v5621 = vunpack.c.l.b16 %v5598
        %v5622 = vunpack.c.h.b16 %v5598
        %v5623 = vpack.c.b16 %v5607, %v5607
        %v5624 = vpack.c.b16 %v5608, %v5608
        %v5625 = vpack.c.b16 %v5609, %v5609
        %v5626 = vpack.c.b16 %v5610, %v5610
        %v5627 = vpack.c.b16 %v5611, %v5611
        %v5628 = vpack.c.b16 %v5612, %v5612
        %v5629 = vpack.c.b16 %v5613, %v5613
        %v5630 = vpack.c.b16 %v5614, %v5614
        %v5631 = vpack.c.b16 %v5615, %v5615
        %v5632 = vpack.c.b16 %v5616, %v5616
        %v5633 = vpack.c.b16 %v5617, %v5617
        %v5634 = vpack.c.b16 %v5618, %v5618
        %v5635 = vpack.c.b16 %v5619, %v5619
        %v5636 = vpack.c.b16 %v5620, %v5620
        %v5637 = vpack.c.b16 %v5621, %v5621
        %v5638 = vpack.c.b16 %v5622, %v5622
        %5655 = vst [vmem:[%s257] sm:$0xf] %v5623
        %5656 = vst [vmem:[%s257 + $0x4] sm:$0xf] %v5624
        %5657 = vst [vmem:[%s257 + $0x8] sm:$0xf] %v5625
        %5658 = vst [vmem:[%s257 + $0xc] sm:$0xf] %v5626
        %5659 = vst [vmem:[%s257 + $0x10] sm:$0xf] %v5627
        %5660 = vst [vmem:[%s257 + $0x14] sm:$0xf] %v5628
        %5661 = vst [vmem:[%s257 + $0x18] sm:$0xf] %v5629
        %5662 = vst [vmem:[%s257 + $0x1c] sm:$0xf] %v5630
        %5663 = vst [vmem:[%s257 + $0x20] sm:$0xf] %v5631
        %5664 = vst [vmem:[%s257 + $0x24] sm:$0xf] %v5632
        %5665 = vst [vmem:[%s257 + $0x28] sm:$0xf] %v5633
        %5666 = vst [vmem:[%s257 + $0x2c] sm:$0xf] %v5634
        %5667 = vst [vmem:[%s257 + $0x30] sm:$0xf] %v5635
        %5668 = vst [vmem:[%s257 + $0x34] sm:$0xf] %v5636
        %5669 = vst [vmem:[%s257 + $0x38] sm:$0xf] %v5637
        %5670 = vst [vmem:[%s257 + $0x3c] sm:$0xf] %v5638
        %s5671 = sand.u32 %s158, 1
        %s5672 = scalar_lea.sflag [#allocation3], %s5671
        %s5673 = sand.u32 %s158, 1
        %s5674 = smul.addr %s5673, 64
        %s5675 = scalar_lea.vmem [#allocation2], %s5674
        // Predicated region
        $region41: #{tpu_custom_call.1} parent=39 // pred_check
          %p5676 = pneg %p168
        $region42: #{tpu_custom_call.1} parent=39 // pred_check_branch
          %5678 = sbr.rel (%p5676) target = $region44
        $region43: #{tpu_custom_call.1} parent=39 // pred_region
          %s5679 = smul.u32 16, %s24
          %s5681 = ssub.s32 1024, 1024
          %5682 = vsyncadd %s5672, %s5681
          %s5683 = smul.addr %s23, 32
          %s5684 = sadd.s32 %s5679, %s5683
          %s5685 = smul.addr %s5684, 64
          %s5686 = scalar_lea.hbm %s5, %s5685
          %s5687 = sshll.u32 %s5675, 4
          %s5688 = int_to_ptr.vmem [resolvable:$true] %s5687
          %5693 = dma.vmem_to_hbm [thread:$0]  %s5688, 1024, %s5686, %s5672, 64, 64, 4
        $region44: #{tpu_custom_call.1} parent=39 // pred_fallthru
          _
      $region40: #{tpu_custom_call.1} parent=5 // pred_fallthru
        _
      %p5694 = scmp.le.s32.totalorder 2, %s14
      // Predicated region
      $region45: #{tpu_custom_call.1} parent=5 // pred_check
        %p5695 = pneg %p5694
      $region46: #{tpu_custom_call.1} parent=5 // pred_check_branch
        %5697 = sbr.rel (%p5695) target = $region48
      $region47: #{tpu_custom_call.1} parent=5 // pred_region
        %s5698 = ssub.s32 %s14, 2
        // Predicated region
        $region49: #{tpu_custom_call.1} parent=47 // pred_check
          %p5699 = pneg %p174
        $region50: #{tpu_custom_call.1} parent=47 // pred_check_branch
          %5701 = sbr.rel (%p5699) target = $region52
        $region51: #{tpu_custom_call.1} parent=47 // pred_region
          %s5702 = sand.u32 %s159, 1
          %s5703 = scalar_lea.sflag [#allocation3], %s5702
          %s5704 = sand.u32 %s159, 1
          %s5705 = smul.addr %s5704, 64
          %s5706 = scalar_lea.vmem [#allocation2], %s5705
          %5707 = dma.done %s5703, 1024
        $region52: #{tpu_custom_call.1} parent=47 // pred_fallthru
          _
      $region48: #{tpu_custom_call.1} parent=5 // pred_fallthru
        _
    $region6: #{tpu_custom_call.1} parent=1 // loop_footer
      %s18 = sadd.s32 1, %s14
    $region7: #{tpu_custom_call.1} parent=1 // loop_footer_branch
      %13 = sbr.rel target = $region3
    $region8: #{tpu_custom_call.1} parent=1 // loop_exit
      _
    %5708 = vsyncpa [#allocation3], 1
    %s5709 = scalar_lea.sflag [#allocation3], 1
    %5710 = vsyncpa %s5709, 1

// kernel: tpu_custom_call.1
$region0: #{tpu_custom_call.1}
  #allocation0 [shape = 'u32[]', space=smem, size = 0x4, offset = 0x4, fixed_abs, tag = 'smem constant byte address 0x4 - core index']
  #allocation1 [shape = 'u32[144,128]{1,0:T(1,128)}', space=vmem, size = 0x12000, scoped, tag = 'internal scratch']
  %s0 = inlined_call_operand.vmem [shape: f32[2,256,18], index: 0, kind: input, shape index: {}]
  %s1 = inlined_call_operand.vmem [shape: f32[1,128], index: 1, kind: input, shape index: {}]
  %s2 = inlined_call_operand.vmem [shape: bf16[2,16,128], index: 2, kind: input, shape index: {}]
  %s3 = inlined_call_operand.vmem [shape: bf16[1152,128], index: 3, kind: input, shape index: {}]
  %s4 = inlined_call_operand.vmem [shape: f32[1,128], index: 4, kind: input, shape index: {}]
  %s5 = inlined_call_operand.hbm [shape: bf16[2,256,128], index: 5, kind: output, shape index: {}]
  %s6 = sld [smem:[#allocation0]]
  $region53: #{tpu_custom_call.1} parent=0
    _
  %s8 = ssub.s32 1, %s6
  %s9 = scalar_select 0, %s8, %s6
  $region1: #{tpu_custom_call.1} parent=0
    #allocation2 [shape = 'u8[65536]{0}', space=vmem, size = 0x10000, scoped, tag = 'output window, operand 0']
    #allocation3 [shape = 's32[2]{0}', space=sflag, size = 0x8, scoped, tag = 'scoped memory for tpu_custom_call.1']
    %10 = vsyncpa [#allocation3], 0
    %s11 = scalar_lea.sflag [#allocation3], 1
    %12 = vsyncpa %s11, 0
    loop: start=0, step=1, limit=6
    $region2: #{tpu_custom_call.1} parent=1 // loop_pre_header
      _
    $region3: #{tpu_custom_call.1} parent=1 // loop_header
      %s14 = sphi 0, %s18
      %p15 = scmp.ge.s32.totalorder %s14, 6
      %s21 = sphi 0, %s33
      %s22 = sphi 0, %s29
      %s23 = sphi 0, %s21
      %s24 = sphi 0, %s22
      %s25 = sphi 0, %s23
      %s26 = sphi 0, %s24
      %s38 = sphi 0, %s40
      %s41 = sphi 0, %s38
      %s42 = sphi 0, %s41
      %s58 = sphi 0, %s42
      %s62 = sphi 0, %s62
      %s64 = sphi 0, %s62
      %s65 = sphi 0, %s64
      %s79 = sphi 0, %s65
      %s85 = sphi 0, %s87
      %s88 = sphi 0, %s85
      %s89 = sphi 0, %s88
      %s105 = sphi 0, %s89
      %s109 = sphi 0, %s109
      %s111 = sphi 0, %s109
      %s112 = sphi 0, %s111
      %s126 = sphi 0, %s112
      %s130 = sphi 0, %s130
      %s132 = sphi 0, %s130
      %s133 = sphi 0, %s132
      %s147 = sphi 0, %s133
      %s155 = sphi 0, %s157
      %s158 = sphi 0, %s155
      %s159 = sphi 0, %s158
      %s175 = sphi 0, %s159
    $region4: #{tpu_custom_call.1} parent=1 // loop_header_branch
      %17 = sbr.rel (%p15) target = $region8
    $region5: #{tpu_custom_call.1} parent=1 // loop_body
      %s19 = ssub.s32 %s14, 1
      %s20 = ssub.s32 %s14, 2
      %s27 = sadd.s32 1, %s22
      %p28 = scmp.ge.s32.totalorder %s27, 2
      %s29 = scalar_select %p28, 0, %s27
      %s30 = sadd.s32 1, %s21
      %s31 = scalar_select %p28, %s30, %s21
      %p32 = scmp.ge.s32.totalorder %s31, 2
      %s33 = scalar_select %p32, 0, %s31
      %s34 = ssub.s32 %s21, %s33
      %s35 = ssub.s32 %s22, %s29
      %s36 = sor.u32 %s34, %s35
      %p37 = scmp.eq.s32.totalorder %s36, 0
      %s39 = sadd.s32 %s38, 1
      %s40 = scalar_select %p37, %s38, %s39
      %p43 = pneg %p37
      %p44 = scmp.eq.s32.totalorder %s14, 3
      %p45 = por %p43, %p44
      %p46 = scmp.ne.s32.totalorder %s38, %s41
      %p47 = scmp.eq.s32.totalorder %s14, 0
      %p48 = por %p46, %p47
      %p49 = scmp.ne.s32.totalorder %s38, %s41
      %p50 = scmp.eq.s32.totalorder %s19, 3
      %p51 = por %p49, %p50
      %p52 = scmp.ne.s32.totalorder %s41, %s42
      %p53 = scmp.eq.s32.totalorder %s19, 0
      %p54 = por %p52, %p53
      %p55 = scmp.ne.s32.totalorder %s41, %s42
      %p56 = scmp.eq.s32.totalorder %s20, 3
      %p57 = por %p55, %p56
      %p59 = scmp.ne.s32.totalorder %s42, %s58
      %p60 = scmp.eq.s32.totalorder %s20, 0
      %p61 = por %p59, %p60
      %s63 = sadd.s32 %s62, 1
      %p66 = scmp.eq.s32.totalorder %s14, 3
      %p67 = scmp.ne.s32.totalorder %s62, %s64
      %p68 = scmp.eq.s32.totalorder %s14, 0
      %p69 = por %p67, %p68
      %p70 = scmp.ne.s32.totalorder %s62, %s64
      %p71 = scmp.eq.s32.totalorder %s19, 3
      %p72 = por %p70, %p71
      %p73 = scmp.ne.s32.totalorder %s64, %s65
      %p74 = scmp.eq.s32.totalorder %s19, 0
      %p75 = por %p73, %p74
      %p76 = scmp.ne.s32.totalorder %s64, %s65
      %p77 = scmp.eq.s32.totalorder %s20, 3
      %p78 = por %p76, %p77
      %p80 = scmp.ne.s32.totalorder %s65, %s79
      %p81 = scmp.eq.s32.totalorder %s20, 0
      %p82 = por %p80, %p81
      %s83 = ssub.s32 %s21, %s33
      %p84 = scmp.eq.s32.totalorder %s83, 0
      %s86 = sadd.s32 %s85, 1
      %s87 = scalar_select %p84, %s85, %s86
      %p90 = pneg %p84
      %p91 = scmp.eq.s32.totalorder %s14, 3
      %p92 = por %p90, %p91
      %p93 = scmp.ne.s32.totalorder %s85, %s88
      %p94 = scmp.eq.s32.totalorder %s14, 0
      %p95 = por %p93, %p94
      %p96 = scmp.ne.s32.totalorder %s85, %s88
      %p97 = scmp.eq.s32.totalorder %s19, 3
      %p98 = por %p96, %p97
      %p99 = scmp.ne.s32.totalorder %s88, %s89
      %p100 = scmp.eq.s32.totalorder %s19, 0
      %p101 = por %p99, %p100
      %p102 = scmp.ne.s32.totalorder %s88, %s89
      %p103 = scmp.eq.s32.totalorder %s20, 3
      %p104 = por %p102, %p103
      %p106 = scmp.ne.s32.totalorder %s89, %s105
      %p107 = scmp.eq.s32.totalorder %s20, 0
      %p108 = por %p106, %p107
      %s110 = sadd.s32 %s109, 1
      %p113 = scmp.eq.s32.totalorder %s14, 3
      %p114 = scmp.ne.s32.totalorder %s109, %s111
      %p115 = scmp.eq.s32.totalorder %s14, 0
      %p116 = por %p114, %p115
      %p117 = scmp.ne.s32.totalorder %s109, %s111
      %p118 = scmp.eq.s32.totalorder %s19, 3
      %p119 = por %p117, %p118
      %p120 = scmp.ne.s32.totalorder %s111, %s112
      %p121 = scmp.eq.s32.totalorder %s19, 0
      %p122 = por %p120, %p121
      %p123 = scmp.ne.s32.totalorder %s111, %s112
      %p124 = scmp.eq.s32.totalorder %s20, 3
      %p125 = por %p123, %p124
      %p127 = scmp.ne.s32.totalorder %s112, %s126
      %p128 = scmp.eq.s32.totalorder %s20, 0
      %p129 = por %p127, %p128
      %s131 = sadd.s32 %s130, 1
      %p134 = scmp.eq.s32.totalorder %s14, 3
      %p135 = scmp.ne.s32.totalorder %s130, %s132
      %p136 = scmp.eq.s32.totalorder %s14, 0
      %p137 = por %p135, %p136
      %p138 = scmp.ne.s32.totalorder %s130, %s132
      %p139 = scmp.eq.s32.totalorder %s19, 3
      %p140 = por %p138, %p139
      %p141 = scmp.ne.s32.totalorder %s132, %s133
      %p142 = scmp.eq.s32.totalorder %s19, 0
      %p143 = por %p141, %p142
      %p144 = scmp.ne.s32.totalorder %s132, %s133
      %p145 = scmp.eq.s32.totalorder %s20, 3
      %p146 = por %p144, %p145
      %p148 = scmp.ne.s32.totalorder %s133, %s147
      %p149 = scmp.eq.s32.totalorder %s20, 0
      %p150 = por %p148, %p149
      %s151 = ssub.s32 %s21, %s33
      %s152 = ssub.s32 %s22, %s29
      %s153 = sor.u32 %s151, %s152
      %p154 = scmp.eq.s32.totalorder %s153, 0
      %s156 = sadd.s32 %s155, 1
      %s157 = scalar_select %p154, %s155, %s156
      %p160 = pneg %p154
      %p161 = scmp.eq.s32.totalorder %s14, 3
      %p162 = por %p160, %p161
      %p163 = scmp.ne.s32.totalorder %s155, %s158
      %p164 = scmp.eq.s32.totalorder %s14, 0
      %p165 = por %p163, %p164
      %p166 = scmp.ne.s32.totalorder %s155, %s158
      %p167 = scmp.eq.s32.totalorder %s19, 3
      %p168 = por %p166, %p167
      %p169 = scmp.ne.s32.totalorder %s158, %s159
      %p170 = scmp.eq.s32.totalorder %s19, 0
      %p171 = por %p169, %p170
      %p172 = scmp.ne.s32.totalorder %s158, %s159
      %p173 = scmp.eq.s32.totalorder %s20, 3
      %p174 = por %p172, %p173
      %p176 = scmp.ne.s32.totalorder %s159, %s175
      %p177 = scmp.eq.s32.totalorder %s20, 0
      %p178 = por %p176, %p177
      %p179 = scmp.le.s32.totalorder 1, %s14
      %p180 = scmp.lt.s32.totalorder %s14, 5
      %p181 = pnand %p179, %p180
      %p182 = pneg %p181
      // Predicated region
      $region9: #{tpu_custom_call.1} parent=5 // pred_check
        _
      $region10: #{tpu_custom_call.1} parent=5 // pred_check_branch
        %184 = sbr.rel (%p181) target = $region12
      $region11: #{tpu_custom_call.1} parent=5 // pred_region
        %s185 = ssub.s32 %s14, 1
        // Predicated region
        $region13: #{tpu_custom_call.1} parent=11 // pred_check
          %p186 = pneg %p75
        $region14: #{tpu_custom_call.1} parent=11 // pred_check_branch
          %188 = sbr.rel (%p186) target = $region16
        $region15: #{tpu_custom_call.1} parent=11 // pred_region
          _
        $region16: #{tpu_custom_call.1} parent=11 // pred_fallthru
          _
        // Predicated region
        $region17: #{tpu_custom_call.1} parent=11 // pred_check
          %p189 = pneg %p122
        $region18: #{tpu_custom_call.1} parent=11 // pred_check_branch
          %191 = sbr.rel (%p189) target = $region20
        $region19: #{tpu_custom_call.1} parent=11 // pred_region
          _
        $region20: #{tpu_custom_call.1} parent=11 // pred_fallthru
          _
        // Predicated region
        $region21: #{tpu_custom_call.1} parent=11 // pred_check
          %p192 = pneg %p143
        $region22: #{tpu_custom_call.1} parent=11 // pred_check_branch
          %194 = sbr.rel (%p192) target = $region24
        $region23: #{tpu_custom_call.1} parent=11 // pred_region
          _
        $region24: #{tpu_custom_call.1} parent=11 // pred_fallthru
          _
      $region12: #{tpu_custom_call.1} parent=5 // pred_fallthru
        _
      %p195 = scmp.lt.s32.totalorder %s14, 4
      // Predicated region
      $region25: #{tpu_custom_call.1} parent=5 // pred_check
        %p196 = pneg %p195
      $region26: #{tpu_custom_call.1} parent=5 // pred_check_branch
        %198 = sbr.rel (%p196) target = $region28
      $region27: #{tpu_custom_call.1} parent=5 // pred_region
        // Predicated region
        $region29: #{tpu_custom_call.1} parent=27 // pred_check
          %p199 = pneg %p48
        $region30: #{tpu_custom_call.1} parent=27 // pred_check_branch
          %201 = sbr.rel (%p199) target = $region32
        $region31: #{tpu_custom_call.1} parent=27 // pred_region
          %s202 = smul.u32 16, %s22
          %p203 = scmp.lt.s32.totalorder %s21, 1
          %s204 = scalar_select %p203, %s21, 1
          %p205 = scmp.lt.s32.totalorder %s202, 31
          %s206 = scalar_select %p205, %s202, 31
          %s207 = smul.addr %s204, 32
          %s208 = sadd.s32 %s206, %s207
          %s209 = smul.addr %s208, 8
          %s210 = scalar_lea.vmem %s0, %s209
          %s211 = smul.u32 16, %s22
        $region32: #{tpu_custom_call.1} parent=27 // pred_fallthru
          _
        // Predicated region
        $region33: #{tpu_custom_call.1} parent=27 // pred_check
          %p212 = pneg %p95
        $region34: #{tpu_custom_call.1} parent=27 // pred_check_branch
          %214 = sbr.rel (%p212) target = $region36
        $region35: #{tpu_custom_call.1} parent=27 // pred_region
          %p215 = scmp.lt.s32.totalorder %s21, 1
          %s216 = scalar_select %p215, %s21, 1
          %s217 = smul.addr %s216, 2
          %s218 = smul.addr %s217, 4
          %s219 = scalar_lea.vmem %s2, %s218
        $region36: #{tpu_custom_call.1} parent=27 // pred_fallthru
          _
      $region28: #{tpu_custom_call.1} parent=5 // pred_fallthru
        _
      %p220 = scmp.le.s32.totalorder 1, %s14
      %p221 = scmp.lt.s32.totalorder %s14, 5
      %p222 = pnand %p220, %p221
      %p223 = pneg %p222
      // Predicated region
      $region37: #{tpu_custom_call.1} parent=5 // pred_check
        _
      $region38: #{tpu_custom_call.1} parent=5 // pred_check_branch
        %225 = sbr.rel (%p222) target = $region40
      $region39: #{tpu_custom_call.1} parent=5 // pred_region
        %s226 = ssub.s32 %s14, 1
        %s227 = smul.u32 16, %s24
        %p228 = scmp.lt.s32.totalorder %s23, 1
        %s229 = scalar_select %p228, %s23, 1
        %p230 = scmp.lt.s32.totalorder %s227, 31
        %s231 = scalar_select %p230, %s227, 31
        %s232 = smul.addr %s229, 32
        %s233 = sadd.s32 %s231, %s232
        %s234 = smul.addr %s233, 8
        %s235 = scalar_lea.vmem %s0, %s234
        %p236 = pneg %p54
        %p237 = pneg %p51
        %p238 = pneg %p75
        %p239 = pneg %p72
        %p240 = scmp.lt.s32.totalorder %s23, 1
        %s241 = scalar_select %p240, %s23, 1
        %s242 = smul.addr %s241, 2
        %s243 = smul.addr %s242, 4
        %s244 = scalar_lea.vmem %s2, %s243
        %p245 = pneg %p101
        %p246 = pneg %p98
        %p247 = pneg %p122
        %p248 = pneg %p119
        %p249 = pneg %p143
        %p250 = pneg %p140
        %p251 = pneg %p171
        %p252 = pneg %p168
        %s253 = sand.u32 %s158, 1
        %s254 = scalar_lea.sflag [#allocation3], %s253
        %s255 = sand.u32 %s158, 1
        %s256 = smul.addr %s255, 64
        %s257 = scalar_lea.vmem [#allocation2], %s256
        %s258 = smul.u32 16, %s24
        %p259 = scmp.lt.s32.totalorder %s23, 1
        %s260 = scalar_select %p259, %s23, 1
        %p261 = scmp.lt.s32.totalorder %s258, 31
        %s262 = scalar_select %p261, %s258, 31
        %s263 = smul.addr %s260, 32
        %s264 = sadd.s32 %s262, %s263
        %s265 = smul.addr %s264, 8
        %s266 = scalar_lea.vmem %s0, %s265
        %s267 = smul.u32 16, %s24
        %p268 = scmp.lt.s32.totalorder %s23, 1
        %s269 = scalar_select %p268, %s23, 1
        %s270 = smul.addr %s269, 2
        %s271 = smul.addr %s270, 4
        %s272 = scalar_lea.vmem %s2, %s271
        %s273 = smul.u32 16, %s24
        %v275 = vld [vmem:[%s272] sm:$0xf]
        %v276 = vld [vmem:[%s272 + $0x4] sm:$0xf]
        %v277 = vld [vmem:[%s266] sm:$0xff]
        %v278 = vld [vmem:[%s266 + $0x8] sm:$0xff]
        %v279 = vld [vmem:[%s266 + $0x10] sm:$0xff]
        %v280 = vld [vmem:[%s266 + $0x18] sm:$0xff]
        %v281 = vld [vmem:[%s266 + $0x20] sm:$0xff]
        %v282 = vld [vmem:[%s266 + $0x28] sm:$0xff]
        %v283 = vld [vmem:[%s266 + $0x30] sm:$0xff]
        %v284 = vld [vmem:[%s266 + $0x38] sm:$0xff]
        %v285 = vld [vmem:[%s266 + $0x40] sm:$0xff]
        %v286 = vld [vmem:[%s266 + $0x48] sm:$0xff]
        %v287 = vld [vmem:[%s266 + $0x50] sm:$0xff]
        %v288 = vld [vmem:[%s266 + $0x58] sm:$0xff]
        %v289 = vld [vmem:[%s266 + $0x60] sm:$0xff]
        %v290 = vld [vmem:[%s266 + $0x68] sm:$0xff]
        %v291 = vld [vmem:[%s266 + $0x70] sm:$0xff]
        %v292 = vld [vmem:[%s266 + $0x78] sm:$0xff]
        %v293 = vlaneseq
        %v294 = vand.u32 %v293, 127
        %v295 = vcvt.s32.f32 %v294
        %v296 = vld [vmem:[%s1] sm:$0x1]
        %v298 = vlaneseq
        %v299 = vshrl.u32 %v298, 7
        %v300 = vsub.s32 0, %v299
        %v301 = vrot.slane %v296, %v300
        %304 = vset.pattern.permute.xlu0 0
        %305 = vperm.xlu0 %304, %v277
        %v306 = vpop.permute.xlu0 %305
        %309 = vset.pattern.permute.xlu0 0
        %310 = vperm.xlu0 %309, %v278
        %v311 = vpop.permute.xlu0 %310
        %314 = vset.pattern.permute.xlu0 0
        %315 = vperm.xlu0 %314, %v279
        %v316 = vpop.permute.xlu0 %315
        %319 = vset.pattern.permute.xlu0 0
        %320 = vperm.xlu0 %319, %v280
        %v321 = vpop.permute.xlu0 %320
        %324 = vset.pattern.permute.xlu0 0
        %325 = vperm.xlu0 %324, %v281
        %v326 = vpop.permute.xlu0 %325
        %329 = vset.pattern.permute.xlu0 0
        %330 = vperm.xlu0 %329, %v282
        %v331 = vpop.permute.xlu0 %330
        %334 = vset.pattern.permute.xlu0 0
        %335 = vperm.xlu0 %334, %v283
        %v336 = vpop.permute.xlu0 %335
        %339 = vset.pattern.permute.xlu0 0
        %340 = vperm.xlu0 %339, %v284
        %v341 = vpop.permute.xlu0 %340
        %344 = vset.pattern.permute.xlu0 0
        %345 = vperm.xlu0 %344, %v285
        %v346 = vpop.permute.xlu0 %345
        %349 = vset.pattern.permute.xlu0 0
        %350 = vperm.xlu0 %349, %v286
        %v351 = vpop.permute.xlu0 %350
        %354 = vset.pattern.permute.xlu0 0
        %355 = vperm.xlu0 %354, %v287
        %v356 = vpop.permute.xlu0 %355
        %359 = vset.pattern.permute.xlu0 0
        %360 = vperm.xlu0 %359, %v288
        %v361 = vpop.permute.xlu0 %360
        %364 = vset.pattern.permute.xlu0 0
        %365 = vperm.xlu0 %364, %v289
        %v366 = vpop.permute.xlu0 %365
        %369 = vset.pattern.permute.xlu0 0
        %370 = vperm.xlu0 %369, %v290
        %v371 = vpop.permute.xlu0 %370
        %374 = vset.pattern.permute.xlu0 0
        %375 = vperm.xlu0 %374, %v291
        %v376 = vpop.permute.xlu0 %375
        %379 = vset.pattern.permute.xlu0 0
        %380 = vperm.xlu0 %379, %v292
        %v381 = vpop.permute.xlu0 %380
        %v383 = vsub.f32 %v295, %v306
        %v384 = vsub.f32 %v295, %v311
        %v385 = vsub.f32 %v295, %v316
        %v386 = vsub.f32 %v295, %v321
        %v387 = vsub.f32 %v295, %v326
        %v388 = vsub.f32 %v295, %v331
        %v389 = vsub.f32 %v295, %v336
        %v390 = vsub.f32 %v295, %v341
        %v391 = vsub.f32 %v295, %v346
        %v392 = vsub.f32 %v295, %v351
        %v393 = vsub.f32 %v295, %v356
        %v394 = vsub.f32 %v295, %v361
        %v395 = vsub.f32 %v295, %v366
        %v396 = vsub.f32 %v295, %v371
        %v397 = vsub.f32 %v295, %v376
        %v398 = vsub.f32 %v295, %v381
        %v399 = vand.u32 2147483647, %v383
        %v400 = vand.u32 2147483647, %v384
        %v401 = vand.u32 2147483647, %v385
        %v402 = vand.u32 2147483647, %v386
        %v403 = vand.u32 2147483647, %v387
        %v404 = vand.u32 2147483647, %v388
        %v405 = vand.u32 2147483647, %v389
        %v406 = vand.u32 2147483647, %v390
        %v407 = vand.u32 2147483647, %v391
        %v408 = vand.u32 2147483647, %v392
        %v409 = vand.u32 2147483647, %v393
        %v410 = vand.u32 2147483647, %v394
        %v411 = vand.u32 2147483647, %v395
        %v412 = vand.u32 2147483647, %v396
        %v413 = vand.u32 2147483647, %v397
        %v414 = vand.u32 2147483647, %v398
        %v415 = vsub.f32 1.0, %v399
        %v416 = vsub.f32 1.0, %v400
        %v417 = vsub.f32 1.0, %v401
        %v418 = vsub.f32 1.0, %v402
        %v419 = vsub.f32 1.0, %v403
        %v420 = vsub.f32 1.0, %v404
        %v421 = vsub.f32 1.0, %v405
        %v422 = vsub.f32 1.0, %v406
        %v423 = vsub.f32 1.0, %v407
        %v424 = vsub.f32 1.0, %v408
        %v425 = vsub.f32 1.0, %v409
        %v426 = vsub.f32 1.0, %v410
        %v427 = vsub.f32 1.0, %v411
        %v428 = vsub.f32 1.0, %v412
        %v429 = vsub.f32 1.0, %v413
        %v430 = vsub.f32 1.0, %v414
        %v431 = vmax.f32 %v415, 0.0
        %v432 = vmax.f32 %v416, 0.0
        %v433 = vmax.f32 %v417, 0.0
        %v434 = vmax.f32 %v418, 0.0
        %v435 = vmax.f32 %v419, 0.0
        %v436 = vmax.f32 %v420, 0.0
        %v437 = vmax.f32 %v421, 0.0
        %v438 = vmax.f32 %v422, 0.0
        %v439 = vmax.f32 %v423, 0.0
        %v440 = vmax.f32 %v424, 0.0
        %v441 = vmax.f32 %v425, 0.0
        %v442 = vmax.f32 %v426, 0.0
        %v443 = vmax.f32 %v427, 0.0
        %v444 = vmax.f32 %v428, 0.0
        %v445 = vmax.f32 %v429, 0.0
        %v446 = vmax.f32 %v430, 0.0
        %447 = vset.pattern.permute.xlu0 9
        %448 = vperm.xlu0 %447, %v277
        %v449 = vpop.permute.xlu0 %448
        %451 = vset.pattern.permute.xlu0 9
        %452 = vperm.xlu0 %451, %v278
        %v453 = vpop.permute.xlu0 %452
        %455 = vset.pattern.permute.xlu0 9
        %456 = vperm.xlu0 %455, %v279
        %v457 = vpop.permute.xlu0 %456
        %459 = vset.pattern.permute.xlu0 9
        %460 = vperm.xlu0 %459, %v280
        %v461 = vpop.permute.xlu0 %460
        %463 = vset.pattern.permute.xlu0 9
        %464 = vperm.xlu0 %463, %v281
        %v465 = vpop.permute.xlu0 %464
        %467 = vset.pattern.permute.xlu0 9
        %468 = vperm.xlu0 %467, %v282
        %v469 = vpop.permute.xlu0 %468
        %471 = vset.pattern.permute.xlu0 9
        %472 = vperm.xlu0 %471, %v283
        %v473 = vpop.permute.xlu0 %472
        %475 = vset.pattern.permute.xlu0 9
        %476 = vperm.xlu0 %475, %v284
        %v477 = vpop.permute.xlu0 %476
        %479 = vset.pattern.permute.xlu0 9
        %480 = vperm.xlu0 %479, %v285
        %v481 = vpop.permute.xlu0 %480
        %483 = vset.pattern.permute.xlu0 9
        %484 = vperm.xlu0 %483, %v286
        %v485 = vpop.permute.xlu0 %484
        %487 = vset.pattern.permute.xlu0 9
        %488 = vperm.xlu0 %487, %v287
        %v489 = vpop.permute.xlu0 %488
        %491 = vset.pattern.permute.xlu0 9
        %492 = vperm.xlu0 %491, %v288
        %v493 = vpop.permute.xlu0 %492
        %495 = vset.pattern.permute.xlu0 9
        %496 = vperm.xlu0 %495, %v289
        %v497 = vpop.permute.xlu0 %496
        %499 = vset.pattern.permute.xlu0 9
        %500 = vperm.xlu0 %499, %v290
        %v501 = vpop.permute.xlu0 %500
        %503 = vset.pattern.permute.xlu0 9
        %504 = vperm.xlu0 %503, %v291
        %v505 = vpop.permute.xlu0 %504
        %507 = vset.pattern.permute.xlu0 9
        %508 = vperm.xlu0 %507, %v292
        %v509 = vpop.permute.xlu0 %508
        %v511 = vsub.f32 %v301, %v449
        %v512 = vsub.f32 %v301, %v453
        %v513 = vsub.f32 %v301, %v457
        %v514 = vsub.f32 %v301, %v461
        %v515 = vsub.f32 %v301, %v465
        %v516 = vsub.f32 %v301, %v469
        %v517 = vsub.f32 %v301, %v473
        %v518 = vsub.f32 %v301, %v477
        %v519 = vsub.f32 %v301, %v481
        %v520 = vsub.f32 %v301, %v485
        %v521 = vsub.f32 %v301, %v489
        %v522 = vsub.f32 %v301, %v493
        %v523 = vsub.f32 %v301, %v497
        %v524 = vsub.f32 %v301, %v501
        %v525 = vsub.f32 %v301, %v505
        %v526 = vsub.f32 %v301, %v509
        %v527 = vand.u32 2147483647, %v511
        %v528 = vand.u32 2147483647, %v512
        %v529 = vand.u32 2147483647, %v513
        %v530 = vand.u32 2147483647, %v514
        %v531 = vand.u32 2147483647, %v515
        %v532 = vand.u32 2147483647, %v516
        %v533 = vand.u32 2147483647, %v517
        %v534 = vand.u32 2147483647, %v518
        %v535 = vand.u32 2147483647, %v519
        %v536 = vand.u32 2147483647, %v520
        %v537 = vand.u32 2147483647, %v521
        %v538 = vand.u32 2147483647, %v522
        %v539 = vand.u32 2147483647, %v523
        %v540 = vand.u32 2147483647, %v524
        %v541 = vand.u32 2147483647, %v525
        %v542 = vand.u32 2147483647, %v526
        %v543 = vsub.f32 1.0, %v527
        %v544 = vsub.f32 1.0, %v528
        %v545 = vsub.f32 1.0, %v529
        %v546 = vsub.f32 1.0, %v530
        %v547 = vsub.f32 1.0, %v531
        %v548 = vsub.f32 1.0, %v532
        %v549 = vsub.f32 1.0, %v533
        %v550 = vsub.f32 1.0, %v534
        %v551 = vsub.f32 1.0, %v535
        %v552 = vsub.f32 1.0, %v536
        %v553 = vsub.f32 1.0, %v537
        %v554 = vsub.f32 1.0, %v538
        %v555 = vsub.f32 1.0, %v539
        %v556 = vsub.f32 1.0, %v540
        %v557 = vsub.f32 1.0, %v541
        %v558 = vsub.f32 1.0, %v542
        %v559 = vmax.f32 %v543, 0.0
        %v560 = vmax.f32 %v544, 0.0
        %v561 = vmax.f32 %v545, 0.0
        %v562 = vmax.f32 %v546, 0.0
        %v563 = vmax.f32 %v547, 0.0
        %v564 = vmax.f32 %v548, 0.0
        %v565 = vmax.f32 %v549, 0.0
        %v566 = vmax.f32 %v550, 0.0
        %v567 = vmax.f32 %v551, 0.0
        %v568 = vmax.f32 %v552, 0.0
        %v569 = vmax.f32 %v553, 0.0
        %v570 = vmax.f32 %v554, 0.0
        %v571 = vmax.f32 %v555, 0.0
        %v572 = vmax.f32 %v556, 0.0
        %v573 = vmax.f32 %v557, 0.0
        %v574 = vmax.f32 %v558, 0.0
        %v575 = vpack.c.bf16 %v432, %v431
        %v576 = vpack.c.bf16 %v434, %v433
        %v577 = vpack.c.bf16 %v436, %v435
        %v578 = vpack.c.bf16 %v438, %v437
        %v579 = vpack.c.bf16 %v440, %v439
        %v580 = vpack.c.bf16 %v442, %v441
        %v581 = vpack.c.bf16 %v444, %v443
        %v582 = vpack.c.bf16 %v446, %v445
        %v585 = vunpack.c.l.b16 %v275
        %v586 = vunpack.c.l.b16 %v276
        %v587 = vpack.c.b16 %v586, %v585
        %vm589 = vcmask 130048
        %v591 = vsel %vm589, %v575, 0
        %v594 = vsel %vm589, %v576, 0
        %v597 = vsel %vm589, %v577, 0
        %v600 = vsel %vm589, %v578, 0
        %v603 = vsel %vm589, %v579, 0
        %v606 = vsel %vm589, %v580, 0
        %v609 = vsel %vm589, %v581, 0
        %v612 = vsel %vm589, %v582, 0
        %614 = vmatprep.subr.bf16.mxu0 0
        %615 = vmatpush1.bf16.msra.mxu0 %v587
        %616 = vmatprep.subr.bf16.mxu0 0
        %617 = vmatpush1.bf16.msra.mxu0 0
        %618 = vmatprep.subr.bf16.mxu0 0
        %619 = vmatpush1.bf16.msra.mxu0 0
        %620 = vmatprep.subr.bf16.mxu0 0
        %621 = vmatpush1.bf16.msra.mxu0 0
        %622 = vmatprep.subr.bf16.mxu0 0
        %623 = vmatpush1.bf16.msra.mxu0 0
        %624 = vmatprep.subr.bf16.mxu0 0
        %625 = vmatpush1.bf16.msra.mxu0 0
        %626 = vmatprep.subr.bf16.mxu0 0
        %627 = vmatpush1.bf16.msra.mxu0 0
        %628 = vmatprep.subr.bf16.mxu0 0
        %629 = vmatpush1.bf16.msra.mxu0 0
        %630 = vmatprep.subr.bf16.mxu0 0
        %631 = vmatpush1.bf16.msra.mxu0 0
        %632 = vmatprep.subr.bf16.mxu0 0
        %633 = vmatpush1.bf16.msra.mxu0 0
        %634 = vmatprep.subr.bf16.mxu0 0
        %635 = vmatpush1.bf16.msra.mxu0 0
        %636 = vmatprep.subr.bf16.mxu0 0
        %637 = vmatpush1.bf16.msra.mxu0 0
        %638 = vmatprep.subr.bf16.mxu0 0
        %639 = vmatpush1.bf16.msra.mxu0 0
        %640 = vmatprep.subr.bf16.mxu0 0
        %641 = vmatpush1.bf16.msra.mxu0 0
        %642 = vmatprep.subr.bf16.mxu0 0
        %643 = vmatpush1.bf16.msra.mxu0 0
        %644 = vmatprep.subr.bf16.mxu0 0
        %645 = vmatpush1.bf16.msra.mxu0 0
        %646 = vmatprep.mubr.bf16.mxu0 0
        %647 = vmatmul.mubr.bf16.gmra.mrb[0].mxu0 %v591
        %v648 = vpop.f32.mrb[0].mxu0
        %v649 = vadd.f32 0.0, %v648
        %v650 = vpop.f32.mrb[0].mxu0
        %v651 = vpop.f32.mrb[0].mxu0
        %v652 = vadd.f32 0.0, %v651
        %v653 = vpop.f32.mrb[0].mxu0
        %654 = vmatprep.mubr.bf16.mxu0 0
        %655 = vmatmul.mubr.bf16.gmra.mrb[0].mxu0 %v594
        %v656 = vpop.f32.mrb[0].mxu0
        %v657 = vadd.f32 0.0, %v656
        %v658 = vpop.f32.mrb[0].mxu0
        %v659 = vpop.f32.mrb[0].mxu0
        %v660 = vadd.f32 0.0, %v659
        %v661 = vpop.f32.mrb[0].mxu0
        %662 = vmatprep.mubr.bf16.mxu0 0
        %663 = vmatmul.mubr.bf16.gmra.mrb[0].mxu0 %v597
        %v664 = vpop.f32.mrb[0].mxu0
        %v665 = vadd.f32 0.0, %v664
        %v666 = vpop.f32.mrb[0].mxu0
        %v667 = vpop.f32.mrb[0].mxu0
        %v668 = vadd.f32 0.0, %v667
        %v669 = vpop.f32.mrb[0].mxu0
        %670 = vmatprep.mubr.bf16.mxu0 0
        %671 = vmatmul.mubr.bf16.gmra.mrb[0].mxu0 %v600
        %v672 = vpop.f32.mrb[0].mxu0
        %v673 = vadd.f32 0.0, %v672
        %v674 = vpop.f32.mrb[0].mxu0
        %v675 = vpop.f32.mrb[0].mxu0
        %v676 = vadd.f32 0.0, %v675
        %v677 = vpop.f32.mrb[0].mxu0
        %678 = vmatprep.mubr.bf16.mxu0 0
        %679 = vmatmul.mubr.bf16.gmra.mrb[0].mxu0 %v603
        %v680 = vpop.f32.mrb[0].mxu0
        %v681 = vadd.f32 0.0, %v680
        %v682 = vpop.f32.mrb[0].mxu0
        %v683 = vpop.f32.mrb[0].mxu0
        %v684 = vadd.f32 0.0, %v683
        %v685 = vpop.f32.mrb[0].mxu0
        %686 = vmatprep.mubr.bf16.mxu0 0
        %687 = vmatmul.mubr.bf16.gmra.mrb[0].mxu0 %v606
        %v688 = vpop.f32.mrb[0].mxu0
        %v689 = vadd.f32 0.0, %v688
        %v690 = vpop.f32.mrb[0].mxu0
        %v691 = vpop.f32.mrb[0].mxu0
        %v692 = vadd.f32 0.0, %v691
        %v693 = vpop.f32.mrb[0].mxu0
        %694 = vmatprep.mubr.bf16.mxu0 0
        %695 = vmatmul.mubr.bf16.gmra.mrb[0].mxu0 %v609
        %v696 = vpop.f32.mrb[0].mxu0
        %v697 = vadd.f32 0.0, %v696
        %v698 = vpop.f32.mrb[0].mxu0
        %v699 = vpop.f32.mrb[0].mxu0
        %v700 = vadd.f32 0.0, %v699
        %v701 = vpop.f32.mrb[0].mxu0
        %702 = vmatprep.mubr.bf16.mxu0 0
        %703 = vmatmul.mubr.bf16.gmra.mrb[0].mxu0 %v612
        %v704 = vpop.f32.mrb[0].mxu0
        %v705 = vadd.f32 0.0, %v704
        %v706 = vpop.f32.mrb[0].mxu0
        %v707 = vpop.f32.mrb[0].mxu0
        %v708 = vadd.f32 0.0, %v707
        %v709 = vpop.f32.mrb[0].mxu0
        %710 = vdwg.mxu0
        %v711 = vmul.f32 %v559, %v649
        %v712 = vmul.f32 %v560, %v652
        %v713 = vmul.f32 %v561, %v657
        %v714 = vmul.f32 %v562, %v660
        %v715 = vmul.f32 %v563, %v665
        %v716 = vmul.f32 %v564, %v668
        %v717 = vmul.f32 %v565, %v673
        %v718 = vmul.f32 %v566, %v676
        %v719 = vmul.f32 %v567, %v681
        %v720 = vmul.f32 %v568, %v684
        %v721 = vmul.f32 %v569, %v689
        %v722 = vmul.f32 %v570, %v692
        %v723 = vmul.f32 %v571, %v697
        %v724 = vmul.f32 %v572, %v700
        %v725 = vmul.f32 %v573, %v705
        %v726 = vmul.f32 %v574, %v708
        %v727 = vpack.c.bf16 %v712, %v711
        %v728 = vpack.c.bf16 %v714, %v713
        %v729 = vpack.c.bf16 %v716, %v715
        %v730 = vpack.c.bf16 %v718, %v717
        %v731 = vpack.c.bf16 %v720, %v719
        %v732 = vpack.c.bf16 %v722, %v721
        %v733 = vpack.c.bf16 %v724, %v723
        %v734 = vpack.c.bf16 %v726, %v725
        %v735 = vld [vmem:[%s3] sm:$0xf]
        %v736 = vld [vmem:[%s3 + $0x4] sm:$0xf]
        %v737 = vld [vmem:[%s3 + $0x8] sm:$0xf]
        %v738 = vld [vmem:[%s3 + $0xc] sm:$0xf]
        %v739 = vld [vmem:[%s3 + $0x10] sm:$0xf]
        %v740 = vld [vmem:[%s3 + $0x14] sm:$0xf]
        %v741 = vld [vmem:[%s3 + $0x18] sm:$0xf]
        %v742 = vld [vmem:[%s3 + $0x1c] sm:$0xf]
        %v743 = vld [vmem:[%s3 + $0x20] sm:$0xf]
        %v744 = vld [vmem:[%s3 + $0x24] sm:$0xf]
        %v745 = vld [vmem:[%s3 + $0x28] sm:$0xf]
        %v746 = vld [vmem:[%s3 + $0x2c] sm:$0xf]
        %v747 = vld [vmem:[%s3 + $0x30] sm:$0xf]
        %v748 = vld [vmem:[%s3 + $0x34] sm:$0xf]
        %v749 = vld [vmem:[%s3 + $0x38] sm:$0xf]
        %v750 = vld [vmem:[%s3 + $0x3c] sm:$0xf]
        %751 = vset.pattern.permute.xlu0 1
        %752 = vperm.xlu0 %751, %v277
        %v753 = vpop.permute.xlu0 %752
        %755 = vset.pattern.permute.xlu0 1
        %756 = vperm.xlu0 %755, %v278
        %v757 = vpop.permute.xlu0 %756
        %759 = vset.pattern.permute.xlu0 1
        %760 = vperm.xlu0 %759, %v279
        %v761 = vpop.permute.xlu0 %760
        %763 = vset.pattern.permute.xlu0 1
        %764 = vperm.xlu0 %763, %v280
        %v765 = vpop.permute.xlu0 %764
        %767 = vset.pattern.permute.xlu0 1
        %768 = vperm.xlu0 %767, %v281
        %v769 = vpop.permute.xlu0 %768
        %771 = vset.pattern.permute.xlu0 1
        %772 = vperm.xlu0 %771, %v282
        %v773 = vpop.permute.xlu0 %772
        %775 = vset.pattern.permute.xlu0 1
        %776 = vperm.xlu0 %775, %v283
        %v777 = vpop.permute.xlu0 %776
        %779 = vset.pattern.permute.xlu0 1
        %780 = vperm.xlu0 %779, %v284
        %v781 = vpop.permute.xlu0 %780
        %783 = vset.pattern.permute.xlu0 1
        %784 = vperm.xlu0 %783, %v285
        %v785 = vpop.permute.xlu0 %784
        %787 = vset.pattern.permute.xlu0 1
        %788 = vperm.xlu0 %787, %v286
        %v789 = vpop.permute.xlu0 %788
        %791 = vset.pattern.permute.xlu0 1
        %792 = vperm.xlu0 %791, %v287
        %v793 = vpop.permute.xlu0 %792
        %795 = vset.pattern.permute.xlu0 1
        %796 = vperm.xlu0 %795, %v288
        %v797 = vpop.permute.xlu0 %796
        %799 = vset.pattern.permute.xlu0 1
        %800 = vperm.xlu0 %799, %v289
        %v801 = vpop.permute.xlu0 %800
        %803 = vset.pattern.permute.xlu0 1
        %804 = vperm.xlu0 %803, %v290
        %v805 = vpop.permute.xlu0 %804
        %807 = vset.pattern.permute.xlu0 1
        %808 = vperm.xlu0 %807, %v291
        %v809 = vpop.permute.xlu0 %808
        %811 = vset.pattern.permute.xlu0 1
        %812 = vperm.xlu0 %811, %v292
        %v813 = vpop.permute.xlu0 %812
        %v815 = vsub.f32 %v295, %v753
        %v816 = vsub.f32 %v295, %v757
        %v817 = vsub.f32 %v295, %v761
        %v818 = vsub.f32 %v295, %v765
        %v819 = vsub.f32 %v295, %v769
        %v820 = vsub.f32 %v295, %v773
        %v821 = vsub.f32 %v295, %v777
        %v822 = vsub.f32 %v295, %v781
        %v823 = vsub.f32 %v295, %v785
        %v824 = vsub.f32 %v295, %v789
        %v825 = vsub.f32 %v295, %v793
        %v826 = vsub.f32 %v295, %v797
        %v827 = vsub.f32 %v295, %v801
        %v828 = vsub.f32 %v295, %v805
        %v829 = vsub.f32 %v295, %v809
        %v830 = vsub.f32 %v295, %v813
        %v831 = vand.u32 2147483647, %v815
        %v832 = vand.u32 2147483647, %v816
        %v833 = vand.u32 2147483647, %v817
        %v834 = vand.u32 2147483647, %v818
        %v835 = vand.u32 2147483647, %v819
        %v836 = vand.u32 2147483647, %v820
        %v837 = vand.u32 2147483647, %v821
        %v838 = vand.u32 2147483647, %v822
        %v839 = vand.u32 2147483647, %v823
        %v840 = vand.u32 2147483647, %v824
        %v841 = vand.u32 2147483647, %v825
        %v842 = vand.u32 2147483647, %v826
        %v843 = vand.u32 2147483647, %v827
        %v844 = vand.u32 2147483647, %v828
        %v845 = vand.u32 2147483647, %v829
        %v846 = vand.u32 2147483647, %v830
        %v847 = vsub.f32 1.0, %v831
        %v848 = vsub.f32 1.0, %v832
        %v849 = vsub.f32 1.0, %v833
        %v850 = vsub.f32 1.0, %v834
        %v851 = vsub.f32 1.0, %v835
        %v852 = vsub.f32 1.0, %v836
        %v853 = vsub.f32 1.0, %v837
        %v854 = vsub.f32 1.0, %v838
        %v855 = vsub.f32 1.0, %v839
        %v856 = vsub.f32 1.0, %v840
        %v857 = vsub.f32 1.0, %v841
        %v858 = vsub.f32 1.0, %v842
        %v859 = vsub.f32 1.0, %v843
        %v860 = vsub.f32 1.0, %v844
        %v861 = vsub.f32 1.0, %v845
        %v862 = vsub.f32 1.0, %v846
        %v863 = vmax.f32 %v847, 0.0
        %v864 = vmax.f32 %v848, 0.0
        %v865 = vmax.f32 %v849, 0.0
        %v866 = vmax.f32 %v850, 0.0
        %v867 = vmax.f32 %v851, 0.0
        %v868 = vmax.f32 %v852, 0.0
        %v869 = vmax.f32 %v853, 0.0
        %v870 = vmax.f32 %v854, 0.0
        %v871 = vmax.f32 %v855, 0.0
        %v872 = vmax.f32 %v856, 0.0
        %v873 = vmax.f32 %v857, 0.0
        %v874 = vmax.f32 %v858, 0.0
        %v875 = vmax.f32 %v859, 0.0
        %v876 = vmax.f32 %v860, 0.0
        %v877 = vmax.f32 %v861, 0.0
        %v878 = vmax.f32 %v862, 0.0
        %879 = vset.pattern.permute.xlu0 10
        %880 = vperm.xlu0 %879, %v277
        %v881 = vpop.permute.xlu0 %880
        %883 = vset.pattern.permute.xlu0 10
        %884 = vperm.xlu0 %883, %v278
        %v885 = vpop.permute.xlu0 %884
        %887 = vset.pattern.permute.xlu0 10
        %888 = vperm.xlu0 %887, %v279
        %v889 = vpop.permute.xlu0 %888
        %891 = vset.pattern.permute.xlu0 10
        %892 = vperm.xlu0 %891, %v280
        %v893 = vpop.permute.xlu0 %892
        %895 = vset.pattern.permute.xlu0 10
        %896 = vperm.xlu0 %895, %v281
        %v897 = vpop.permute.xlu0 %896
        %899 = vset.pattern.permute.xlu0 10
        %900 = vperm.xlu0 %899, %v282
        %v901 = vpop.permute.xlu0 %900
        %903 = vset.pattern.permute.xlu0 10
        %904 = vperm.xlu0 %903, %v283
        %v905 = vpop.permute.xlu0 %904
        %907 = vset.pattern.permute.xlu0 10
        %908 = vperm.xlu0 %907, %v284
        %v909 = vpop.permute.xlu0 %908
        %911 = vset.pattern.permute.xlu0 10
        %912 = vperm.xlu0 %911, %v285
        %v913 = vpop.permute.xlu0 %912
        %915 = vset.pattern.permute.xlu0 10
        %916 = vperm.xlu0 %915, %v286
        %v917 = vpop.permute.xlu0 %916
        %919 = vset.pattern.permute.xlu0 10
        %920 = vperm.xlu0 %919, %v287
        %v921 = vpop.permute.xlu0 %920
        %923 = vset.pattern.permute.xlu0 10
        %924 = vperm.xlu0 %923, %v288
        %v925 = vpop.permute.xlu0 %924
        %927 = vset.pattern.permute.xlu0 10
        %928 = vperm.xlu0 %927, %v289
        %v929 = vpop.permute.xlu0 %928
        %931 = vset.pattern.permute.xlu0 10
        %932 = vperm.xlu0 %931, %v290
        %v933 = vpop.permute.xlu0 %932
        %935 = vset.pattern.permute.xlu0 10
        %936 = vperm.xlu0 %935, %v291
        %v937 = vpop.permute.xlu0 %936
        %939 = vset.pattern.permute.xlu0 10
        %940 = vperm.xlu0 %939, %v292
        %v941 = vpop.permute.xlu0 %940
        %v943 = vsub.f32 %v301, %v881
        %v944 = vsub.f32 %v301, %v885
        %v945 = vsub.f32 %v301, %v889
        %v946 = vsub.f32 %v301, %v893
        %v947 = vsub.f32 %v301, %v897
        %v948 = vsub.f32 %v301, %v901
        %v949 = vsub.f32 %v301, %v905
        %v950 = vsub.f32 %v301, %v909
        %v951 = vsub.f32 %v301, %v913
        %v952 = vsub.f32 %v301, %v917
        %v953 = vsub.f32 %v301, %v921
        %v954 = vsub.f32 %v301, %v925
        %v955 = vsub.f32 %v301, %v929
        %v956 = vsub.f32 %v301, %v933
        %v957 = vsub.f32 %v301, %v937
        %v958 = vsub.f32 %v301, %v941
        %v959 = vand.u32 2147483647, %v943
        %v960 = vand.u32 2147483647, %v944
        %v961 = vand.u32 2147483647, %v945
        %v962 = vand.u32 2147483647, %v946
        %v963 = vand.u32 2147483647, %v947
        %v964 = vand.u32 2147483647, %v948
        %v965 = vand.u32 2147483647, %v949
        %v966 = vand.u32 2147483647, %v950
        %v967 = vand.u32 2147483647, %v951
        %v968 = vand.u32 2147483647, %v952
        %v969 = vand.u32 2147483647, %v953
        %v970 = vand.u32 2147483647, %v954
        %v971 = vand.u32 2147483647, %v955
        %v972 = vand.u32 2147483647, %v956
        %v973 = vand.u32 2147483647, %v957
        %v974 = vand.u32 2147483647, %v958
        %v975 = vsub.f32 1.0, %v959
        %v976 = vsub.f32 1.0, %v960
        %v977 = vsub.f32 1.0, %v961
        %v978 = vsub.f32 1.0, %v962
        %v979 = vsub.f32 1.0, %v963
        %v980 = vsub.f32 1.0, %v964
        %v981 = vsub.f32 1.0, %v965
        %v982 = vsub.f32 1.0, %v966
        %v983 = vsub.f32 1.0, %v967
        %v984 = vsub.f32 1.0, %v968
        %v985 = vsub.f32 1.0, %v969
        %v986 = vsub.f32 1.0, %v970
        %v987 = vsub.f32 1.0, %v971
        %v988 = vsub.f32 1.0, %v972
        %v989 = vsub.f32 1.0, %v973
        %v990 = vsub.f32 1.0, %v974
        %v991 = vmax.f32 %v975, 0.0
        %v992 = vmax.f32 %v976, 0.0
        %v993 = vmax.f32 %v977, 0.0
        %v994 = vmax.f32 %v978, 0.0
        %v995 = vmax.f32 %v979, 0.0
        %v996 = vmax.f32 %v980, 0.0
        %v997 = vmax.f32 %v981, 0.0
        %v998 = vmax.f32 %v982, 0.0
        %v999 = vmax.f32 %v983, 0.0
        %v1000 = vmax.f32 %v984, 0.0
        %v1001 = vmax.f32 %v985, 0.0
        %v1002 = vmax.f32 %v986, 0.0
        %v1003 = vmax.f32 %v987, 0.0
        %v1004 = vmax.f32 %v988, 0.0
        %v1005 = vmax.f32 %v989, 0.0
        %v1006 = vmax.f32 %v990, 0.0
        %v1007 = vpack.c.bf16 %v864, %v863
        %v1008 = vpack.c.bf16 %v866, %v865
        %v1009 = vpack.c.bf16 %v868, %v867
        %v1010 = vpack.c.bf16 %v870, %v869
        %v1011 = vpack.c.bf16 %v872, %v871
        %v1012 = vpack.c.bf16 %v874, %v873
        %v1013 = vpack.c.bf16 %v876, %v875
        %v1014 = vpack.c.bf16 %v878, %v877
        %v1016 = vsel %vm589, %v1007, 0
        %v1019 = vsel %vm589, %v1008, 0
        %v1022 = vsel %vm589, %v1009, 0
        %v1025 = vsel %vm589, %v1010, 0
        %v1028 = vsel %vm589, %v1011, 0
        %v1031 = vsel %vm589, %v1012, 0
        %v1034 = vsel %vm589, %v1013, 0
        %v1037 = vsel %vm589, %v1014, 0
        %1039 = vmatprep.subr.bf16.mxu0 0
        %1040 = vmatpush1.bf16.msra.mxu0 %v587
        %1041 = vmatprep.subr.bf16.mxu0 0
        %1042 = vmatpush1.bf16.msra.mxu0 0
        %1043 = vmatprep.subr.bf16.mxu0 0
        %1044 = vmatpush1.bf16.msra.mxu0 0
        %1045 = vmatprep.subr.bf16.mxu0 0
        %1046 = vmatpush1.bf16.msra.mxu0 0
        %1047 = vmatprep.subr.bf16.mxu0 0
        %1048 = vmatpush1.bf16.msra.mxu0 0
        %1049 = vmatprep.subr.bf16.mxu0 0
        %1050 = vmatpush1.bf16.msra.mxu0 0
        %1051 = vmatprep.subr.bf16.mxu0 0
        %1052 = vmatpush1.bf16.msra.mxu0 0
        %1053 = vmatprep.subr.bf16.mxu0 0
        %1054 = vmatpush1.bf16.msra.mxu0 0
        %1055 = vmatprep.subr.bf16.mxu0 0
        %1056 = vmatpush1.bf16.msra.mxu0 0
        %1057 = vmatprep.subr.bf16.mxu0 0
        %1058 = vmatpush1.bf16.msra.mxu0 0
        %1059 = vmatprep.subr.bf16.mxu0 0
        %1060 = vmatpush1.bf16.msra.mxu0 0
        %1061 = vmatprep.subr.bf16.mxu0 0
        %1062 = vmatpush1.bf16.msra.mxu0 0
        %1063 = vmatprep.subr.bf16.mxu0 0
        %1064 = vmatpush1.bf16.msra.mxu0 0
        %1065 = vmatprep.subr.bf16.mxu0 0
        %1066 = vmatpush1.bf16.msra.mxu0 0
        %1067 = vmatprep.subr.bf16.mxu0 0
        %1068 = vmatpush1.bf16.msra.mxu0 0
        %1069 = vmatprep.subr.bf16.mxu0 0
        %1070 = vmatpush1.bf16.msra.mxu0 0
        %1071 = vmatprep.mubr.bf16.mxu0 0
        %1072 = vmatmul.mubr.bf16.gmra.mrb[0].mxu0 %v1016
        %v1073 = vpop.f32.mrb[0].mxu0
        %v1074 = vadd.f32 0.0, %v1073
        %v1075 = vpop.f32.mrb[0].mxu0
        %v1076 = vpop.f32.mrb[0].mxu0
        %v1077 = vadd.f32 0.0, %v1076
        %v1078 = vpop.f32.mrb[0].mxu0
        %1079 = vmatprep.mubr.bf16.mxu0 0
        %1080 = vmatmul.mubr.bf16.gmra.mrb[0].mxu0 %v1019
        %v1081 = vpop.f32.mrb[0].mxu0
        %v1082 = vadd.f32 0.0, %v1081
        %v1083 = vpop.f32.mrb[0].mxu0
        %v1084 = vpop.f32.mrb[0].mxu0
        %v1085 = vadd.f32 0.0, %v1084
        %v1086 = vpop.f32.mrb[0].mxu0
        %1087 = vmatprep.mubr.bf16.mxu0 0
        %1088 = vmatmul.mubr.bf16.gmra.mrb[0].mxu0 %v1022
        %v1089 = vpop.f32.mrb[0].mxu0
        %v1090 = vadd.f32 0.0, %v1089
        %v1091 = vpop.f32.mrb[0].mxu0
        %v1092 = vpop.f32.mrb[0].mxu0
        %v1093 = vadd.f32 0.0, %v1092
        %v1094 = vpop.f32.mrb[0].mxu0
        %1095 = vmatprep.mubr.bf16.mxu0 0
        %1096 = vmatmul.mubr.bf16.gmra.mrb[0].mxu0 %v1025
        %v1097 = vpop.f32.mrb[0].mxu0
        %v1098 = vadd.f32 0.0, %v1097
        %v1099 = vpop.f32.mrb[0].mxu0
        %v1100 = vpop.f32.mrb[0].mxu0
        %v1101 = vadd.f32 0.0, %v1100
        %v1102 = vpop.f32.mrb[0].mxu0
        %1103 = vmatprep.mubr.bf16.mxu0 0
        %1104 = vmatmul.mubr.bf16.gmra.mrb[0].mxu0 %v1028
        %v1105 = vpop.f32.mrb[0].mxu0
        %v1106 = vadd.f32 0.0, %v1105
        %v1107 = vpop.f32.mrb[0].mxu0
        %v1108 = vpop.f32.mrb[0].mxu0
        %v1109 = vadd.f32 0.0, %v1108
        %v1110 = vpop.f32.mrb[0].mxu0
        %1111 = vmatprep.mubr.bf16.mxu0 0
        %1112 = vmatmul.mubr.bf16.gmra.mrb[0].mxu0 %v1031
        %v1113 = vpop.f32.mrb[0].mxu0
        %v1114 = vadd.f32 0.0, %v1113
        %v1115 = vpop.f32.mrb[0].mxu0
        %v1116 = vpop.f32.mrb[0].mxu0
        %v1117 = vadd.f32 0.0, %v1116
        %v1118 = vpop.f32.mrb[0].mxu0
        %1119 = vmatprep.mubr.bf16.mxu0 0
        %1120 = vmatmul.mubr.bf16.gmra.mrb[0].mxu0 %v1034
        %v1121 = vpop.f32.mrb[0].mxu0
        %v1122 = vadd.f32 0.0, %v1121
        %v1123 = vpop.f32.mrb[0].mxu0
        %v1124 = vpop.f32.mrb[0].mxu0
        %v1125 = vadd.f32 0.0, %v1124
        %v1126 = vpop.f32.mrb[0].mxu0
        %1127 = vmatprep.mubr.bf16.mxu0 0
        %1128 = vmatmul.mubr.bf16.gmra.mrb[0].mxu0 %v1037
        %v1129 = vpop.f32.mrb[0].mxu0
        %v1130 = vadd.f32 0.0, %v1129
        %v1131 = vpop.f32.mrb[0].mxu0
        %v1132 = vpop.f32.mrb[0].mxu0
        %v1133 = vadd.f32 0.0, %v1132
        %v1134 = vpop.f32.mrb[0].mxu0
        %1135 = vdwg.mxu0
        %v1136 = vmul.f32 %v991, %v1074
        %v1137 = vmul.f32 %v992, %v1077
        %v1138 = vmul.f32 %v993, %v1082
        %v1139 = vmul.f32 %v994, %v1085
        %v1140 = vmul.f32 %v995, %v1090
        %v1141 = vmul.f32 %v996, %v1093
        %v1142 = vmul.f32 %v997, %v1098
        %v1143 = vmul.f32 %v998, %v1101
        %v1144 = vmul.f32 %v999, %v1106
        %v1145 = vmul.f32 %v1000, %v1109
        %v1146 = vmul.f32 %v1001, %v1114
        %v1147 = vmul.f32 %v1002, %v1117
        %v1148 = vmul.f32 %v1003, %v1122
        %v1149 = vmul.f32 %v1004, %v1125
        %v1150 = vmul.f32 %v1005, %v1130
        %v1151 = vmul.f32 %v1006, %v1133
        %v1152 = vpack.c.bf16 %v1137, %v1136
        %v1153 = vpack.c.bf16 %v1139, %v1138
        %v1154 = vpack.c.bf16 %v1141, %v1140
        %v1155 = vpack.c.bf16 %v1143, %v1142
        %v1156 = vpack.c.bf16 %v1145, %v1144
        %v1157 = vpack.c.bf16 %v1147, %v1146
        %v1158 = vpack.c.bf16 %v1149, %v1148
        %v1159 = vpack.c.bf16 %v1151, %v1150
        %v1160 = vld [vmem:[%s3 + $0x40] sm:$0xf]
        %v1161 = vld [vmem:[%s3 + $0x44] sm:$0xf]
        %v1162 = vld [vmem:[%s3 + $0x48] sm:$0xf]
        %v1163 = vld [vmem:[%s3 + $0x4c] sm:$0xf]
        %v1164 = vld [vmem:[%s3 + $0x50] sm:$0xf]
        %v1165 = vld [vmem:[%s3 + $0x54] sm:$0xf]
        %v1166 = vld [vmem:[%s3 + $0x58] sm:$0xf]
        %v1167 = vld [vmem:[%s3 + $0x5c] sm:$0xf]
        %v1168 = vld [vmem:[%s3 + $0x60] sm:$0xf]
        %v1169 = vld [vmem:[%s3 + $0x64] sm:$0xf]
        %v1170 = vld [vmem:[%s3 + $0x68] sm:$0xf]
        %v1171 = vld [vmem:[%s3 + $0x6c] sm:$0xf]
        %v1172 = vld [vmem:[%s3 + $0x70] sm:$0xf]
        %v1173 = vld [vmem:[%s3 + $0x74] sm:$0xf]
        %v1174 = vld [vmem:[%s3 + $0x78] sm:$0xf]
        %v1175 = vld [vmem:[%s3 + $0x7c] sm:$0xf]
        %v1192 = vunpack.c.l.b16 %v1160
        %v1193 = vunpack.c.l.b16 %v1161
        %v1194 = vunpack.c.l.b16 %v1162
        %v1195 = vunpack.c.l.b16 %v1163
        %v1196 = vunpack.c.l.b16 %v1164
        %v1197 = vunpack.c.l.b16 %v1165
        %v1198 = vunpack.c.l.b16 %v1166
        %v1199 = vunpack.c.l.b16 %v1167
        %v1200 = vunpack.c.l.b16 %v1168
        %v1201 = vunpack.c.l.b16 %v1169
        %v1202 = vunpack.c.l.b16 %v1170
        %v1203 = vunpack.c.l.b16 %v1171
        %v1204 = vunpack.c.l.b16 %v1172
        %v1205 = vunpack.c.l.b16 %v1173
        %v1206 = vunpack.c.l.b16 %v1174
        %v1207 = vunpack.c.l.b16 %v1175
        %v1208 = vpack.c.b16 %v1193, %v1192
        %v1209 = vpack.c.b16 %v1195, %v1194
        %v1210 = vpack.c.b16 %v1197, %v1196
        %v1211 = vpack.c.b16 %v1199, %v1198
        %v1212 = vpack.c.b16 %v1201, %v1200
        %v1213 = vpack.c.b16 %v1203, %v1202
        %v1214 = vpack.c.b16 %v1205, %v1204
        %v1215 = vpack.c.b16 %v1207, %v1206
        %1224 = vmatprep.subr.bf16.mxu0 0
        %1225 = vmatpush1.bf16.msra.mxu0 %v1208
        %1226 = vmatprep.subr.bf16.mxu0 0
        %1227 = vmatpush1.bf16.msra.mxu0 %v1209
        %1228 = vmatprep.subr.bf16.mxu0 0
        %1229 = vmatpush1.bf16.msra.mxu0 %v1210
        %1230 = vmatprep.subr.bf16.mxu0 0
        %1231 = vmatpush1.bf16.msra.mxu0 %v1211
        %1232 = vmatprep.subr.bf16.mxu0 0
        %1233 = vmatpush1.bf16.msra.mxu0 %v1212
        %1234 = vmatprep.subr.bf16.mxu0 0
        %1235 = vmatpush1.bf16.msra.mxu0 %v1213
        %1236 = vmatprep.subr.bf16.mxu0 0
        %1237 = vmatpush1.bf16.msra.mxu0 %v1214
        %1238 = vmatprep.subr.bf16.mxu0 0
        %1239 = vmatpush1.bf16.msra.mxu0 %v1215
        %1240 = vmatprep.subr.bf16.mxu0 0
        %1241 = vmatpush1.bf16.msra.mxu0 0
        %1242 = vmatprep.subr.bf16.mxu0 0
        %1243 = vmatpush1.bf16.msra.mxu0 0
        %1244 = vmatprep.subr.bf16.mxu0 0
        %1245 = vmatpush1.bf16.msra.mxu0 0
        %1246 = vmatprep.subr.bf16.mxu0 0
        %1247 = vmatpush1.bf16.msra.mxu0 0
        %1248 = vmatprep.subr.bf16.mxu0 0
        %1249 = vmatpush1.bf16.msra.mxu0 0
        %1250 = vmatprep.subr.bf16.mxu0 0
        %1251 = vmatpush1.bf16.msra.mxu0 0
        %1252 = vmatprep.subr.bf16.mxu0 0
        %1253 = vmatpush1.bf16.msra.mxu0 0
        %1254 = vmatprep.subr.bf16.mxu0 0
        %1255 = vmatpush1.bf16.msra.mxu0 0
        %1256 = vmatprep.mubr.bf16.mxu0 0
        %1257 = vmatmul.mubr.bf16.gmra.mrb[0].mxu0 %v1152
        %v1258 = vpop.f32.mrb[0].mxu0
        %v1259 = vadd.f32 0.0, %v1258
        %v1260 = vpop.f32.mrb[0].mxu0
        %v1261 = vpop.f32.mrb[0].mxu0
        %v1262 = vadd.f32 0.0, %v1261
        %v1263 = vpop.f32.mrb[0].mxu0
        %1264 = vmatprep.mubr.bf16.mxu0 0
        %1265 = vmatmul.mubr.bf16.gmra.mrb[0].mxu0 %v1153
        %v1266 = vpop.f32.mrb[0].mxu0
        %v1267 = vadd.f32 0.0, %v1266
        %v1268 = vpop.f32.mrb[0].mxu0
        %v1269 = vpop.f32.mrb[0].mxu0
        %v1270 = vadd.f32 0.0, %v1269
        %v1271 = vpop.f32.mrb[0].mxu0
        %1272 = vmatprep.mubr.bf16.mxu0 0
        %1273 = vmatmul.mubr.bf16.gmra.mrb[0].mxu0 %v1154
        %v1274 = vpop.f32.mrb[0].mxu0
        %v1275 = vadd.f32 0.0, %v1274
        %v1276 = vpop.f32.mrb[0].mxu0
        %v1277 = vpop.f32.mrb[0].mxu0
        %v1278 = vadd.f32 0.0, %v1277
        %v1279 = vpop.f32.mrb[0].mxu0
        %1280 = vmatprep.mubr.bf16.mxu0 0
        %1281 = vmatmul.mubr.bf16.gmra.mrb[0].mxu0 %v1155
        %v1282 = vpop.f32.mrb[0].mxu0
        %v1283 = vadd.f32 0.0, %v1282
        %v1284 = vpop.f32.mrb[0].mxu0
        %v1285 = vpop.f32.mrb[0].mxu0
        %v1286 = vadd.f32 0.0, %v1285
        %v1287 = vpop.f32.mrb[0].mxu0
        %1288 = vmatprep.mubr.bf16.mxu0 0
        %1289 = vmatmul.mubr.bf16.gmra.mrb[0].mxu0 %v1156
        %v1290 = vpop.f32.mrb[0].mxu0
        %v1291 = vadd.f32 0.0, %v1290
        %v1292 = vpop.f32.mrb[0].mxu0
        %v1293 = vpop.f32.mrb[0].mxu0
        %v1294 = vadd.f32 0.0, %v1293
        %v1295 = vpop.f32.mrb[0].mxu0
        %1296 = vmatprep.mubr.bf16.mxu0 0
        %1297 = vmatmul.mubr.bf16.gmra.mrb[0].mxu0 %v1157
        %v1298 = vpop.f32.mrb[0].mxu0
        %v1299 = vadd.f32 0.0, %v1298
        %v1300 = vpop.f32.mrb[0].mxu0
        %v1301 = vpop.f32.mrb[0].mxu0
        %v1302 = vadd.f32 0.0, %v1301
        %v1303 = vpop.f32.mrb[0].mxu0
        %1304 = vmatprep.mubr.bf16.mxu0 0
        %1305 = vmatmul.mubr.bf16.gmra.mrb[0].mxu0 %v1158
        %v1306 = vpop.f32.mrb[0].mxu0
        %v1307 = vadd.f32 0.0, %v1306
        %v1308 = vpop.f32.mrb[0].mxu0
        %v1309 = vpop.f32.mrb[0].mxu0
        %v1310 = vadd.f32 0.0, %v1309
        %v1311 = vpop.f32.mrb[0].mxu0
        %1312 = vmatprep.mubr.bf16.mxu0 0
        %1313 = vmatmul.mubr.bf16.gmra.mrb[0].mxu0 %v1159
        %v1314 = vpop.f32.mrb[0].mxu0
        %v1315 = vadd.f32 0.0, %v1314
        %v1316 = vpop.f32.mrb[0].mxu0
        %v1317 = vpop.f32.mrb[0].mxu0
        %v1318 = vadd.f32 0.0, %v1317
        %v1319 = vpop.f32.mrb[0].mxu0
        %1320 = vdwg.mxu0
        %v1337 = vunpack.c.l.b16 %v735
        %v1338 = vunpack.c.l.b16 %v736
        %v1339 = vunpack.c.l.b16 %v737
        %v1340 = vunpack.c.l.b16 %v738
        %v1341 = vunpack.c.l.b16 %v739
        %v1342 = vunpack.c.l.b16 %v740
        %v1343 = vunpack.c.l.b16 %v741
        %v1344 = vunpack.c.l.b16 %v742
        %v1345 = vunpack.c.l.b16 %v743
        %v1346 = vunpack.c.l.b16 %v744
        %v1347 = vunpack.c.l.b16 %v745
        %v1348 = vunpack.c.l.b16 %v746
        %v1349 = vunpack.c.l.b16 %v747
        %v1350 = vunpack.c.l.b16 %v748
        %v1351 = vunpack.c.l.b16 %v749
        %v1352 = vunpack.c.l.b16 %v750
        %v1353 = vpack.c.b16 %v1338, %v1337
        %v1354 = vpack.c.b16 %v1340, %v1339
        %v1355 = vpack.c.b16 %v1342, %v1341
        %v1356 = vpack.c.b16 %v1344, %v1343
        %v1357 = vpack.c.b16 %v1346, %v1345
        %v1358 = vpack.c.b16 %v1348, %v1347
        %v1359 = vpack.c.b16 %v1350, %v1349
        %v1360 = vpack.c.b16 %v1352, %v1351
        %1369 = vmatprep.subr.bf16.mxu0 0
        %1370 = vmatpush1.bf16.msra.mxu0 %v1353
        %1371 = vmatprep.subr.bf16.mxu0 0
        %1372 = vmatpush1.bf16.msra.mxu0 %v1354
        %1373 = vmatprep.subr.bf16.mxu0 0
        %1374 = vmatpush1.bf16.msra.mxu0 %v1355
        %1375 = vmatprep.subr.bf16.mxu0 0
        %1376 = vmatpush1.bf16.msra.mxu0 %v1356
        %1377 = vmatprep.subr.bf16.mxu0 0
        %1378 = vmatpush1.bf16.msra.mxu0 %v1357
        %1379 = vmatprep.subr.bf16.mxu0 0
        %1380 = vmatpush1.bf16.msra.mxu0 %v1358
        %1381 = vmatprep.subr.bf16.mxu0 0
        %1382 = vmatpush1.bf16.msra.mxu0 %v1359
        %1383 = vmatprep.subr.bf16.mxu0 0
        %1384 = vmatpush1.bf16.msra.mxu0 %v1360
        %1385 = vmatprep.subr.bf16.mxu0 0
        %1386 = vmatpush1.bf16.msra.mxu0 0
        %1387 = vmatprep.subr.bf16.mxu0 0
        %1388 = vmatpush1.bf16.msra.mxu0 0
        %1389 = vmatprep.subr.bf16.mxu0 0
        %1390 = vmatpush1.bf16.msra.mxu0 0
        %1391 = vmatprep.subr.bf16.mxu0 0
        %1392 = vmatpush1.bf16.msra.mxu0 0
        %1393 = vmatprep.subr.bf16.mxu0 0
        %1394 = vmatpush1.bf16.msra.mxu0 0
        %1395 = vmatprep.subr.bf16.mxu0 0
        %1396 = vmatpush1.bf16.msra.mxu0 0
        %1397 = vmatprep.subr.bf16.mxu0 0
        %1398 = vmatpush1.bf16.msra.mxu0 0
        %1399 = vmatprep.subr.bf16.mxu0 0
        %1400 = vmatpush1.bf16.msra.mxu0 0
        %1401 = vmatprep.mubr.bf16.mxu0 0
        %1402 = vmatmul.mubr.bf16.gmra.mrb[0].mxu0 %v727
        %v1403 = vpop.f32.mrb[0].mxu0
        %v1404 = vadd.f32 %v1259, %v1403
        %v1405 = vpop.f32.mrb[0].mxu0
        %v1406 = vpop.f32.mrb[0].mxu0
        %v1407 = vadd.f32 %v1262, %v1406
        %v1408 = vpop.f32.mrb[0].mxu0
        %1409 = vmatprep.mubr.bf16.mxu0 0
        %1410 = vmatmul.mubr.bf16.gmra.mrb[0].mxu0 %v728
        %v1411 = vpop.f32.mrb[0].mxu0
        %v1412 = vadd.f32 %v1267, %v1411
        %v1413 = vpop.f32.mrb[0].mxu0
        %v1414 = vpop.f32.mrb[0].mxu0
        %v1415 = vadd.f32 %v1270, %v1414
        %v1416 = vpop.f32.mrb[0].mxu0
        %1417 = vmatprep.mubr.bf16.mxu0 0
        %1418 = vmatmul.mubr.bf16.gmra.mrb[0].mxu0 %v729
        %v1419 = vpop.f32.mrb[0].mxu0
        %v1420 = vadd.f32 %v1275, %v1419
        %v1421 = vpop.f32.mrb[0].mxu0
        %v1422 = vpop.f32.mrb[0].mxu0
        %v1423 = vadd.f32 %v1278, %v1422
        %v1424 = vpop.f32.mrb[0].mxu0
        %1425 = vmatprep.mubr.bf16.mxu0 0
        %1426 = vmatmul.mubr.bf16.gmra.mrb[0].mxu0 %v730
        %v1427 = vpop.f32.mrb[0].mxu0
        %v1428 = vadd.f32 %v1283, %v1427
        %v1429 = vpop.f32.mrb[0].mxu0
        %v1430 = vpop.f32.mrb[0].mxu0
        %v1431 = vadd.f32 %v1286, %v1430
        %v1432 = vpop.f32.mrb[0].mxu0
        %1433 = vmatprep.mubr.bf16.mxu0 0
        %1434 = vmatmul.mubr.bf16.gmra.mrb[0].mxu0 %v731
        %v1435 = vpop.f32.mrb[0].mxu0
        %v1436 = vadd.f32 %v1291, %v1435
        %v1437 = vpop.f32.mrb[0].mxu0
        %v1438 = vpop.f32.mrb[0].mxu0
        %v1439 = vadd.f32 %v1294, %v1438
        %v1440 = vpop.f32.mrb[0].mxu0
        %1441 = vmatprep.mubr.bf16.mxu0 0
        %1442 = vmatmul.mubr.bf16.gmra.mrb[0].mxu0 %v732
        %v1443 = vpop.f32.mrb[0].mxu0
        %v1444 = vadd.f32 %v1299, %v1443
        %v1445 = vpop.f32.mrb[0].mxu0
        %v1446 = vpop.f32.mrb[0].mxu0
        %v1447 = vadd.f32 %v1302, %v1446
        %v1448 = vpop.f32.mrb[0].mxu0
        %1449 = vmatprep.mubr.bf16.mxu0 0
        %1450 = vmatmul.mubr.bf16.gmra.mrb[0].mxu0 %v733
        %v1451 = vpop.f32.mrb[0].mxu0
        %v1452 = vadd.f32 %v1307, %v1451
        %v1453 = vpop.f32.mrb[0].mxu0
        %v1454 = vpop.f32.mrb[0].mxu0
        %v1455 = vadd.f32 %v1310, %v1454
        %v1456 = vpop.f32.mrb[0].mxu0
        %1457 = vmatprep.mubr.bf16.mxu0 0
        %1458 = vmatmul.mubr.bf16.gmra.mrb[0].mxu0 %v734
        %v1459 = vpop.f32.mrb[0].mxu0
        %v1460 = vadd.f32 %v1315, %v1459
        %v1461 = vpop.f32.mrb[0].mxu0
        %v1462 = vpop.f32.mrb[0].mxu0
        %v1463 = vadd.f32 %v1318, %v1462
        %v1464 = vpop.f32.mrb[0].mxu0
        %1465 = vdwg.mxu0
        %1466 = vset.pattern.permute.xlu0 2
        %1467 = vperm.xlu0 %1466, %v277
        %v1468 = vpop.permute.xlu0 %1467
        %1470 = vset.pattern.permute.xlu0 2
        %1471 = vperm.xlu0 %1470, %v278
        %v1472 = vpop.permute.xlu0 %1471
        %1474 = vset.pattern.permute.xlu0 2
        %1475 = vperm.xlu0 %1474, %v279
        %v1476 = vpop.permute.xlu0 %1475
        %1478 = vset.pattern.permute.xlu0 2
        %1479 = vperm.xlu0 %1478, %v280
        %v1480 = vpop.permute.xlu0 %1479
        %1482 = vset.pattern.permute.xlu0 2
        %1483 = vperm.xlu0 %1482, %v281
        %v1484 = vpop.permute.xlu0 %1483
        %1486 = vset.pattern.permute.xlu0 2
        %1487 = vperm.xlu0 %1486, %v282
        %v1488 = vpop.permute.xlu0 %1487
        %1490 = vset.pattern.permute.xlu0 2
        %1491 = vperm.xlu0 %1490, %v283
        %v1492 = vpop.permute.xlu0 %1491
        %1494 = vset.pattern.permute.xlu0 2
        %1495 = vperm.xlu0 %1494, %v284
        %v1496 = vpop.permute.xlu0 %1495
        %1498 = vset.pattern.permute.xlu0 2
        %1499 = vperm.xlu0 %1498, %v285
        %v1500 = vpop.permute.xlu0 %1499
        %1502 = vset.pattern.permute.xlu0 2
        %1503 = vperm.xlu0 %1502, %v286
        %v1504 = vpop.permute.xlu0 %1503
        %1506 = vset.pattern.permute.xlu0 2
        %1507 = vperm.xlu0 %1506, %v287
        %v1508 = vpop.permute.xlu0 %1507
        %1510 = vset.pattern.permute.xlu0 2
        %1511 = vperm.xlu0 %1510, %v288
        %v1512 = vpop.permute.xlu0 %1511
        %1514 = vset.pattern.permute.xlu0 2
        %1515 = vperm.xlu0 %1514, %v289
        %v1516 = vpop.permute.xlu0 %1515
        %1518 = vset.pattern.permute.xlu0 2
        %1519 = vperm.xlu0 %1518, %v290
        %v1520 = vpop.permute.xlu0 %1519
        %1522 = vset.pattern.permute.xlu0 2
        %1523 = vperm.xlu0 %1522, %v291
        %v1524 = vpop.permute.xlu0 %1523
        %1526 = vset.pattern.permute.xlu0 2
        %1527 = vperm.xlu0 %1526, %v292
        %v1528 = vpop.permute.xlu0 %1527
        %v1530 = vsub.f32 %v295, %v1468
        %v1531 = vsub.f32 %v295, %v1472
        %v1532 = vsub.f32 %v295, %v1476
        %v1533 = vsub.f32 %v295, %v1480
        %v1534 = vsub.f32 %v295, %v1484
        %v1535 = vsub.f32 %v295, %v1488
        %v1536 = vsub.f32 %v295, %v1492
        %v1537 = vsub.f32 %v295, %v1496
        %v1538 = vsub.f32 %v295, %v1500
        %v1539 = vsub.f32 %v295, %v1504
        %v1540 = vsub.f32 %v295, %v1508
        %v1541 = vsub.f32 %v295, %v1512
        %v1542 = vsub.f32 %v295, %v1516
        %v1543 = vsub.f32 %v295, %v1520
        %v1544 = vsub.f32 %v295, %v1524
        %v1545 = vsub.f32 %v295, %v1528
        %v1546 = vand.u32 2147483647, %v1530
        %v1547 = vand.u32 2147483647, %v1531
        %v1548 = vand.u32 2147483647, %v1532
        %v1549 = vand.u32 2147483647, %v1533
        %v1550 = vand.u32 2147483647, %v1534
        %v1551 = vand.u32 2147483647, %v1535
        %v1552 = vand.u32 2147483647, %v1536
        %v1553 = vand.u32 2147483647, %v1537
        %v1554 = vand.u32 2147483647, %v1538
        %v1555 = vand.u32 2147483647, %v1539
        %v1556 = vand.u32 2147483647, %v1540
        %v1557 = vand.u32 2147483647, %v1541
        %v1558 = vand.u32 2147483647, %v1542
        %v1559 = vand.u32 2147483647, %v1543
        %v1560 = vand.u32 2147483647, %v1544
        %v1561 = vand.u32 2147483647, %v1545
        %v1562 = vsub.f32 1.0, %v1546
        %v1563 = vsub.f32 1.0, %v1547
        %v1564 = vsub.f32 1.0, %v1548
        %v1565 = vsub.f32 1.0, %v1549
        %v1566 = vsub.f32 1.0, %v1550
        %v1567 = vsub.f32 1.0, %v1551
        %v1568 = vsub.f32 1.0, %v1552
        %v1569 = vsub.f32 1.0, %v1553
        %v1570 = vsub.f32 1.0, %v1554
        %v1571 = vsub.f32 1.0, %v1555
        %v1572 = vsub.f32 1.0, %v1556
        %v1573 = vsub.f32 1.0, %v1557
        %v1574 = vsub.f32 1.0, %v1558
        %v1575 = vsub.f32 1.0, %v1559
        %v1576 = vsub.f32 1.0, %v1560
        %v1577 = vsub.f32 1.0, %v1561
        %v1578 = vmax.f32 %v1562, 0.0
        %v1579 = vmax.f32 %v1563, 0.0
        %v1580 = vmax.f32 %v1564, 0.0
        %v1581 = vmax.f32 %v1565, 0.0
        %v1582 = vmax.f32 %v1566, 0.0
        %v1583 = vmax.f32 %v1567, 0.0
        %v1584 = vmax.f32 %v1568, 0.0
        %v1585 = vmax.f32 %v1569, 0.0
        %v1586 = vmax.f32 %v1570, 0.0
        %v1587 = vmax.f32 %v1571, 0.0
        %v1588 = vmax.f32 %v1572, 0.0
        %v1589 = vmax.f32 %v1573, 0.0
        %v1590 = vmax.f32 %v1574, 0.0
        %v1591 = vmax.f32 %v1575, 0.0
        %v1592 = vmax.f32 %v1576, 0.0
        %v1593 = vmax.f32 %v1577, 0.0
        %1594 = vset.pattern.permute.xlu0 11
        %1595 = vperm.xlu0 %1594, %v277
        %v1596 = vpop.permute.xlu0 %1595
        %1598 = vset.pattern.permute.xlu0 11
        %1599 = vperm.xlu0 %1598, %v278
        %v1600 = vpop.permute.xlu0 %1599
        %1602 = vset.pattern.permute.xlu0 11
        %1603 = vperm.xlu0 %1602, %v279
        %v1604 = vpop.permute.xlu0 %1603
        %1606 = vset.pattern.permute.xlu0 11
        %1607 = vperm.xlu0 %1606, %v280
        %v1608 = vpop.permute.xlu0 %1607
        %1610 = vset.pattern.permute.xlu0 11
        %1611 = vperm.xlu0 %1610, %v281
        %v1612 = vpop.permute.xlu0 %1611
        %1614 = vset.pattern.permute.xlu0 11
        %1615 = vperm.xlu0 %1614, %v282
        %v1616 = vpop.permute.xlu0 %1615
        %1618 = vset.pattern.permute.xlu0 11
        %1619 = vperm.xlu0 %1618, %v283
        %v1620 = vpop.permute.xlu0 %1619
        %1622 = vset.pattern.permute.xlu0 11
        %1623 = vperm.xlu0 %1622, %v284
        %v1624 = vpop.permute.xlu0 %1623
        %1626 = vset.pattern.permute.xlu0 11
        %1627 = vperm.xlu0 %1626, %v285
        %v1628 = vpop.permute.xlu0 %1627
        %1630 = vset.pattern.permute.xlu0 11
        %1631 = vperm.xlu0 %1630, %v286
        %v1632 = vpop.permute.xlu0 %1631
        %1634 = vset.pattern.permute.xlu0 11
        %1635 = vperm.xlu0 %1634, %v287
        %v1636 = vpop.permute.xlu0 %1635
        %1638 = vset.pattern.permute.xlu0 11
        %1639 = vperm.xlu0 %1638, %v288
        %v1640 = vpop.permute.xlu0 %1639
        %1642 = vset.pattern.permute.xlu0 11
        %1643 = vperm.xlu0 %1642, %v289
        %v1644 = vpop.permute.xlu0 %1643
        %1646 = vset.pattern.permute.xlu0 11
        %1647 = vperm.xlu0 %1646, %v290
        %v1648 = vpop.permute.xlu0 %1647
        %1650 = vset.pattern.permute.xlu0 11
        %1651 = vperm.xlu0 %1650, %v291
        %v1652 = vpop.permute.xlu0 %1651
        %1654 = vset.pattern.permute.xlu0 11
        %1655 = vperm.xlu0 %1654, %v292
        %v1656 = vpop.permute.xlu0 %1655
        %v1658 = vsub.f32 %v301, %v1596
        %v1659 = vsub.f32 %v301, %v1600
        %v1660 = vsub.f32 %v301, %v1604
        %v1661 = vsub.f32 %v301, %v1608
        %v1662 = vsub.f32 %v301, %v1612
        %v1663 = vsub.f32 %v301, %v1616
        %v1664 = vsub.f32 %v301, %v1620
        %v1665 = vsub.f32 %v301, %v1624
        %v1666 = vsub.f32 %v301, %v1628
        %v1667 = vsub.f32 %v301, %v1632
        %v1668 = vsub.f32 %v301, %v1636
        %v1669 = vsub.f32 %v301, %v1640
        %v1670 = vsub.f32 %v301, %v1644
        %v1671 = vsub.f32 %v301, %v1648
        %v1672 = vsub.f32 %v301, %v1652
        %v1673 = vsub.f32 %v301, %v1656
        %v1674 = vand.u32 2147483647, %v1658
        %v1675 = vand.u32 2147483647, %v1659
        %v1676 = vand.u32 2147483647, %v1660
        %v1677 = vand.u32 2147483647, %v1661
        %v1678 = vand.u32 2147483647, %v1662
        %v1679 = vand.u32 2147483647, %v1663
        %v1680 = vand.u32 2147483647, %v1664
        %v1681 = vand.u32 2147483647, %v1665
        %v1682 = vand.u32 2147483647, %v1666
        %v1683 = vand.u32 2147483647, %v1667
        %v1684 = vand.u32 2147483647, %v1668
        %v1685 = vand.u32 2147483647, %v1669
        %v1686 = vand.u32 2147483647, %v1670
        %v1687 = vand.u32 2147483647, %v1671
        %v1688 = vand.u32 2147483647, %v1672
        %v1689 = vand.u32 2147483647, %v1673
        %v1690 = vsub.f32 1.0, %v1674
        %v1691 = vsub.f32 1.0, %v1675
        %v1692 = vsub.f32 1.0, %v1676
        %v1693 = vsub.f32 1.0, %v1677
        %v1694 = vsub.f32 1.0, %v1678
        %v1695 = vsub.f32 1.0, %v1679
        %v1696 = vsub.f32 1.0, %v1680
        %v1697 = vsub.f32 1.0, %v1681
        %v1698 = vsub.f32 1.0, %v1682
        %v1699 = vsub.f32 1.0, %v1683
        %v1700 = vsub.f32 1.0, %v1684
        %v1701 = vsub.f32 1.0, %v1685
        %v1702 = vsub.f32 1.0, %v1686
        %v1703 = vsub.f32 1.0, %v1687
        %v1704 = vsub.f32 1.0, %v1688
        %v1705 = vsub.f32 1.0, %v1689
        %v1706 = vmax.f32 %v1690, 0.0
        %v1707 = vmax.f32 %v1691, 0.0
        %v1708 = vmax.f32 %v1692, 0.0
        %v1709 = vmax.f32 %v1693, 0.0
        %v1710 = vmax.f32 %v1694, 0.0
        %v1711 = vmax.f32 %v1695, 0.0
        %v1712 = vmax.f32 %v1696, 0.0
        %v1713 = vmax.f32 %v1697, 0.0
        %v1714 = vmax.f32 %v1698, 0.0
        %v1715 = vmax.f32 %v1699, 0.0
        %v1716 = vmax.f32 %v1700, 0.0
        %v1717 = vmax.f32 %v1701, 0.0
        %v1718 = vmax.f32 %v1702, 0.0
        %v1719 = vmax.f32 %v1703, 0.0
        %v1720 = vmax.f32 %v1704, 0.0
        %v1721 = vmax.f32 %v1705, 0.0
        %v1722 = vpack.c.bf16 %v1579, %v1578
        %v1723 = vpack.c.bf16 %v1581, %v1580
        %v1724 = vpack.c.bf16 %v1583, %v1582
        %v1725 = vpack.c.bf16 %v1585, %v1584
        %v1726 = vpack.c.bf16 %v1587, %v1586
        %v1727 = vpack.c.bf16 %v1589, %v1588
        %v1728 = vpack.c.bf16 %v1591, %v1590
        %v1729 = vpack.c.bf16 %v1593, %v1592
        %v1731 = vsel %vm589, %v1722, 0
        %v1734 = vsel %vm589, %v1723, 0
        %v1737 = vsel %vm589, %v1724, 0
        %v1740 = vsel %vm589, %v1725, 0
        %v1743 = vsel %vm589, %v1726, 0
        %v1746 = vsel %vm589, %v1727, 0
        %v1749 = vsel %vm589, %v1728, 0
        %v1752 = vsel %vm589, %v1729, 0
        %1754 = vmatprep.subr.bf16.mxu0 0
        %1755 = vmatpush1.bf16.msra.mxu0 %v587
        %1756 = vmatprep.subr.bf16.mxu0 0
        %1757 = vmatpush1.bf16.msra.mxu0 0
        %1758 = vmatprep.subr.bf16.mxu0 0
        %1759 = vmatpush1.bf16.msra.mxu0 0
        %1760 = vmatprep.subr.bf16.mxu0 0
        %1761 = vmatpush1.bf16.msra.mxu0 0
        %1762 = vmatprep.subr.bf16.mxu0 0
        %1763 = vmatpush1.bf16.msra.mxu0 0
        %1764 = vmatprep.subr.bf16.mxu0 0
        %1765 = vmatpush1.bf16.msra.mxu0 0
        %1766 = vmatprep.subr.bf16.mxu0 0
        %1767 = vmatpush1.bf16.msra.mxu0 0
        %1768 = vmatprep.subr.bf16.mxu0 0
        %1769 = vmatpush1.bf16.msra.mxu0 0
        %1770 = vmatprep.subr.bf16.mxu0 0
        %1771 = vmatpush1.bf16.msra.mxu0 0
        %1772 = vmatprep.subr.bf16.mxu0 0
        %1773 = vmatpush1.bf16.msra.mxu0 0
        %1774 = vmatprep.subr.bf16.mxu0 0
        %1775 = vmatpush1.bf16.msra.mxu0 0
        %1776 = vmatprep.subr.bf16.mxu0 0
        %1777 = vmatpush1.bf16.msra.mxu0 0
        %1778 = vmatprep.subr.bf16.mxu0 0
        %1779 = vmatpush1.bf16.msra.mxu0 0
        %1780 = vmatprep.subr.bf16.mxu0 0
        %1781 = vmatpush1.bf16.msra.mxu0 0
        %1782 = vmatprep.subr.bf16.mxu0 0
        %1783 = vmatpush1.bf16.msra.mxu0 0
        %1784 = vmatprep.subr.bf16.mxu0 0
        %1785 = vmatpush1.bf16.msra.mxu0 0
        %1786 = vmatprep.mubr.bf16.mxu0 0
        %1787 = vmatmul.mubr.bf16.gmra.mrb[0].mxu0 %v1731
        %v1788 = vpop.f32.mrb[0].mxu0
        %v1789 = vadd.f32 0.0, %v1788
        %v1790 = vpop.f32.mrb[0].mxu0
        %v1791 = vpop.f32.mrb[0].mxu0
        %v1792 = vadd.f32 0.0, %v1791
        %v1793 = vpop.f32.mrb[0].mxu0
        %1794 = vmatprep.mubr.bf16.mxu0 0
        %1795 = vmatmul.mubr.bf16.gmra.mrb[0].mxu0 %v1734
        %v1796 = vpop.f32.mrb[0].mxu0
        %v1797 = vadd.f32 0.0, %v1796
        %v1798 = vpop.f32.mrb[0].mxu0
        %v1799 = vpop.f32.mrb[0].mxu0
        %v1800 = vadd.f32 0.0, %v1799
        %v1801 = vpop.f32.mrb[0].mxu0
        %1802 = vmatprep.mubr.bf16.mxu0 0
        %1803 = vmatmul.mubr.bf16.gmra.mrb[0].mxu0 %v1737
        %v1804 = vpop.f32.mrb[0].mxu0
        %v1805 = vadd.f32 0.0, %v1804
        %v1806 = vpop.f32.mrb[0].mxu0
        %v1807 = vpop.f32.mrb[0].mxu0
        %v1808 = vadd.f32 0.0, %v1807
        %v1809 = vpop.f32.mrb[0].mxu0
        %1810 = vmatprep.mubr.bf16.mxu0 0
        %1811 = vmatmul.mubr.bf16.gmra.mrb[0].mxu0 %v1740
        %v1812 = vpop.f32.mrb[0].mxu0
        %v1813 = vadd.f32 0.0, %v1812
        %v1814 = vpop.f32.mrb[0].mxu0
        %v1815 = vpop.f32.mrb[0].mxu0
        %v1816 = vadd.f32 0.0, %v1815
        %v1817 = vpop.f32.mrb[0].mxu0
        %1818 = vmatprep.mubr.bf16.mxu0 0
        %1819 = vmatmul.mubr.bf16.gmra.mrb[0].mxu0 %v1743
        %v1820 = vpop.f32.mrb[0].mxu0
        %v1821 = vadd.f32 0.0, %v1820
        %v1822 = vpop.f32.mrb[0].mxu0
        %v1823 = vpop.f32.mrb[0].mxu0
        %v1824 = vadd.f32 0.0, %v1823
        %v1825 = vpop.f32.mrb[0].mxu0
        %1826 = vmatprep.mubr.bf16.mxu0 0
        %1827 = vmatmul.mubr.bf16.gmra.mrb[0].mxu0 %v1746
        %v1828 = vpop.f32.mrb[0].mxu0
        %v1829 = vadd.f32 0.0, %v1828
        %v1830 = vpop.f32.mrb[0].mxu0
        %v1831 = vpop.f32.mrb[0].mxu0
        %v1832 = vadd.f32 0.0, %v1831
        %v1833 = vpop.f32.mrb[0].mxu0
        %1834 = vmatprep.mubr.bf16.mxu0 0
        %1835 = vmatmul.mubr.bf16.gmra.mrb[0].mxu0 %v1749
        %v1836 = vpop.f32.mrb[0].mxu0
        %v1837 = vadd.f32 0.0, %v1836
        %v1838 = vpop.f32.mrb[0].mxu0
        %v1839 = vpop.f32.mrb[0].mxu0
        %v1840 = vadd.f32 0.0, %v1839
        %v1841 = vpop.f32.mrb[0].mxu0
        %1842 = vmatprep.mubr.bf16.mxu0 0
        %1843 = vmatmul.mubr.bf16.gmra.mrb[0].mxu0 %v1752
        %v1844 = vpop.f32.mrb[0].mxu0
        %v1845 = vadd.f32 0.0, %v1844
        %v1846 = vpop.f32.mrb[0].mxu0
        %v1847 = vpop.f32.mrb[0].mxu0
        %v1848 = vadd.f32 0.0, %v1847
        %v1849 = vpop.f32.mrb[0].mxu0
        %1850 = vdwg.mxu0
        %v1851 = vmul.f32 %v1706, %v1789
        %v1852 = vmul.f32 %v1707, %v1792
        %v1853 = vmul.f32 %v1708, %v1797
        %v1854 = vmul.f32 %v1709, %v1800
        %v1855 = vmul.f32 %v1710, %v1805
        %v1856 = vmul.f32 %v1711, %v1808
        %v1857 = vmul.f32 %v1712, %v1813
        %v1858 = vmul.f32 %v1713, %v1816
        %v1859 = vmul.f32 %v1714, %v1821
        %v1860 = vmul.f32 %v1715, %v1824
        %v1861 = vmul.f32 %v1716, %v1829
        %v1862 = vmul.f32 %v1717, %v1832
        %v1863 = vmul.f32 %v1718, %v1837
        %v1864 = vmul.f32 %v1719, %v1840
        %v1865 = vmul.f32 %v1720, %v1845
        %v1866 = vmul.f32 %v1721, %v1848
        %v1867 = vpack.c.bf16 %v1852, %v1851
        %v1868 = vpack.c.bf16 %v1854, %v1853
        %v1869 = vpack.c.bf16 %v1856, %v1855
        %v1870 = vpack.c.bf16 %v1858, %v1857
        %v1871 = vpack.c.bf16 %v1860, %v1859
        %v1872 = vpack.c.bf16 %v1862, %v1861
        %v1873 = vpack.c.bf16 %v1864, %v1863
        %v1874 = vpack.c.bf16 %v1866, %v1865
        %v1875 = vld [vmem:[%s3 + $0x80] sm:$0xf]
        %v1876 = vld [vmem:[%s3 + $0x84] sm:$0xf]
        %v1877 = vld [vmem:[%s3 + $0x88] sm:$0xf]
        %v1878 = vld [vmem:[%s3 + $0x8c] sm:$0xf]
        %v1879 = vld [vmem:[%s3 + $0x90] sm:$0xf]
        %v1880 = vld [vmem:[%s3 + $0x94] sm:$0xf]
        %v1881 = vld [vmem:[%s3 + $0x98] sm:$0xf]
        %v1882 = vld [vmem:[%s3 + $0x9c] sm:$0xf]
        %v1883 = vld [vmem:[%s3 + $0xa0] sm:$0xf]
        %v1884 = vld [vmem:[%s3 + $0xa4] sm:$0xf]
        %v1885 = vld [vmem:[%s3 + $0xa8] sm:$0xf]
        %v1886 = vld [vmem:[%s3 + $0xac] sm:$0xf]
        %v1887 = vld [vmem:[%s3 + $0xb0] sm:$0xf]
        %v1888 = vld [vmem:[%s3 + $0xb4] sm:$0xf]
        %v1889 = vld [vmem:[%s3 + $0xb8] sm:$0xf]
        %v1890 = vld [vmem:[%s3 + $0xbc] sm:$0xf]
        %v1907 = vunpack.c.l.b16 %v1875
        %v1908 = vunpack.c.l.b16 %v1876
        %v1909 = vunpack.c.l.b16 %v1877
        %v1910 = vunpack.c.l.b16 %v1878
        %v1911 = vunpack.c.l.b16 %v1879
        %v1912 = vunpack.c.l.b16 %v1880
        %v1913 = vunpack.c.l.b16 %v1881
        %v1914 = vunpack.c.l.b16 %v1882
        %v1915 = vunpack.c.l.b16 %v1883
        %v1916 = vunpack.c.l.b16 %v1884
        %v1917 = vunpack.c.l.b16 %v1885
        %v1918 = vunpack.c.l.b16 %v1886
        %v1919 = vunpack.c.l.b16 %v1887
        %v1920 = vunpack.c.l.b16 %v1888
        %v1921 = vunpack.c.l.b16 %v1889
        %v1922 = vunpack.c.l.b16 %v1890
        %v1923 = vpack.c.b16 %v1908, %v1907
        %v1924 = vpack.c.b16 %v1910, %v1909
        %v1925 = vpack.c.b16 %v1912, %v1911
        %v1926 = vpack.c.b16 %v1914, %v1913
        %v1927 = vpack.c.b16 %v1916, %v1915
        %v1928 = vpack.c.b16 %v1918, %v1917
        %v1929 = vpack.c.b16 %v1920, %v1919
        %v1930 = vpack.c.b16 %v1922, %v1921
        %1939 = vmatprep.subr.bf16.mxu0 0
        %1940 = vmatpush1.bf16.msra.mxu0 %v1923
        %1941 = vmatprep.subr.bf16.mxu0 0
        %1942 = vmatpush1.bf16.msra.mxu0 %v1924
        %1943 = vmatprep.subr.bf16.mxu0 0
        %1944 = vmatpush1.bf16.msra.mxu0 %v1925
        %1945 = vmatprep.subr.bf16.mxu0 0
        %1946 = vmatpush1.bf16.msra.mxu0 %v1926
        %1947 = vmatprep.subr.bf16.mxu0 0
        %1948 = vmatpush1.bf16.msra.mxu0 %v1927
        %1949 = vmatprep.subr.bf16.mxu0 0
        %1950 = vmatpush1.bf16.msra.mxu0 %v1928
        %1951 = vmatprep.subr.bf16.mxu0 0
        %1952 = vmatpush1.bf16.msra.mxu0 %v1929
        %1953 = vmatprep.subr.bf16.mxu0 0
        %1954 = vmatpush1.bf16.msra.mxu0 %v1930
        %1955 = vmatprep.subr.bf16.mxu0 0
        %1956 = vmatpush1.bf16.msra.mxu0 0
        %1957 = vmatprep.subr.bf16.mxu0 0
        %1958 = vmatpush1.bf16.msra.mxu0 0
        %1959 = vmatprep.subr.bf16.mxu0 0
        %1960 = vmatpush1.bf16.msra.mxu0 0
        %1961 = vmatprep.subr.bf16.mxu0 0
        %1962 = vmatpush1.bf16.msra.mxu0 0
        %1963 = vmatprep.subr.bf16.mxu0 0
        %1964 = vmatpush1.bf16.msra.mxu0 0
        %1965 = vmatprep.subr.bf16.mxu0 0
        %1966 = vmatpush1.bf16.msra.mxu0 0
        %1967 = vmatprep.subr.bf16.mxu0 0
        %1968 = vmatpush1.bf16.msra.mxu0 0
        %1969 = vmatprep.subr.bf16.mxu0 0
        %1970 = vmatpush1.bf16.msra.mxu0 0
        %1971 = vmatprep.mubr.bf16.mxu0 0
        %1972 = vmatmul.mubr.bf16.gmra.mrb[0].mxu0 %v1867
        %v1973 = vpop.f32.mrb[0].mxu0
        %v1974 = vadd.f32 0.0, %v1973
        %v1975 = vpop.f32.mrb[0].mxu0
        %v1976 = vpop.f32.mrb[0].mxu0
        %v1977 = vadd.f32 0.0, %v1976
        %v1978 = vpop.f32.mrb[0].mxu0
        %1979 = vmatprep.mubr.bf16.mxu0 0
        %1980 = vmatmul.mubr.bf16.gmra.mrb[0].mxu0 %v1868
        %v1981 = vpop.f32.mrb[0].mxu0
        %v1982 = vadd.f32 0.0, %v1981
        %v1983 = vpop.f32.mrb[0].mxu0
        %v1984 = vpop.f32.mrb[0].mxu0
        %v1985 = vadd.f32 0.0, %v1984
        %v1986 = vpop.f32.mrb[0].mxu0
        %1987 = vmatprep.mubr.bf16.mxu0 0
        %1988 = vmatmul.mubr.bf16.gmra.mrb[0].mxu0 %v1869
        %v1989 = vpop.f32.mrb[0].mxu0
        %v1990 = vadd.f32 0.0, %v1989
        %v1991 = vpop.f32.mrb[0].mxu0
        %v1992 = vpop.f32.mrb[0].mxu0
        %v1993 = vadd.f32 0.0, %v1992
        %v1994 = vpop.f32.mrb[0].mxu0
        %1995 = vmatprep.mubr.bf16.mxu0 0
        %1996 = vmatmul.mubr.bf16.gmra.mrb[0].mxu0 %v1870
        %v1997 = vpop.f32.mrb[0].mxu0
        %v1998 = vadd.f32 0.0, %v1997
        %v1999 = vpop.f32.mrb[0].mxu0
        %v2000 = vpop.f32.mrb[0].mxu0
        %v2001 = vadd.f32 0.0, %v2000
        %v2002 = vpop.f32.mrb[0].mxu0
        %2003 = vmatprep.mubr.bf16.mxu0 0
        %2004 = vmatmul.mubr.bf16.gmra.mrb[0].mxu0 %v1871
        %v2005 = vpop.f32.mrb[0].mxu0
        %v2006 = vadd.f32 0.0, %v2005
        %v2007 = vpop.f32.mrb[0].mxu0
        %v2008 = vpop.f32.mrb[0].mxu0
        %v2009 = vadd.f32 0.0, %v2008
        %v2010 = vpop.f32.mrb[0].mxu0
        %2011 = vmatprep.mubr.bf16.mxu0 0
        %2012 = vmatmul.mubr.bf16.gmra.mrb[0].mxu0 %v1872
        %v2013 = vpop.f32.mrb[0].mxu0
        %v2014 = vadd.f32 0.0, %v2013
        %v2015 = vpop.f32.mrb[0].mxu0
        %v2016 = vpop.f32.mrb[0].mxu0
        %v2017 = vadd.f32 0.0, %v2016
        %v2018 = vpop.f32.mrb[0].mxu0
        %2019 = vmatprep.mubr.bf16.mxu0 0
        %2020 = vmatmul.mubr.bf16.gmra.mrb[0].mxu0 %v1873
        %v2021 = vpop.f32.mrb[0].mxu0
        %v2022 = vadd.f32 0.0, %v2021
        %v2023 = vpop.f32.mrb[0].mxu0
        %v2024 = vpop.f32.mrb[0].mxu0
        %v2025 = vadd.f32 0.0, %v2024
        %v2026 = vpop.f32.mrb[0].mxu0
        %2027 = vmatprep.mubr.bf16.mxu0 0
        %2028 = vmatmul.mubr.bf16.gmra.mrb[0].mxu0 %v1874
        %v2029 = vpop.f32.mrb[0].mxu0
        %v2030 = vadd.f32 0.0, %v2029
        %v2031 = vpop.f32.mrb[0].mxu0
        %v2032 = vpop.f32.mrb[0].mxu0
        %v2033 = vadd.f32 0.0, %v2032
        %v2034 = vpop.f32.mrb[0].mxu0
        %2035 = vdwg.mxu0
        %v2036 = vadd.f32 %v1404, %v1974
        %v2037 = vadd.f32 %v1407, %v1977
        %v2038 = vadd.f32 %v1412, %v1982
        %v2039 = vadd.f32 %v1415, %v1985
        %v2040 = vadd.f32 %v1420, %v1990
        %v2041 = vadd.f32 %v1423, %v1993
        %v2042 = vadd.f32 %v1428, %v1998
        %v2043 = vadd.f32 %v1431, %v2001
        %v2044 = vadd.f32 %v1436, %v2006
        %v2045 = vadd.f32 %v1439, %v2009
        %v2046 = vadd.f32 %v1444, %v2014
        %v2047 = vadd.f32 %v1447, %v2017
        %v2048 = vadd.f32 %v1452, %v2022
        %v2049 = vadd.f32 %v1455, %v2025
        %v2050 = vadd.f32 %v1460, %v2030
        %v2051 = vadd.f32 %v1463, %v2033
        %2052 = vset.pattern.permute.xlu0 3
        %2053 = vperm.xlu0 %2052, %v277
        %v2054 = vpop.permute.xlu0 %2053
        %2056 = vset.pattern.permute.xlu0 3
        %2057 = vperm.xlu0 %2056, %v278
        %v2058 = vpop.permute.xlu0 %2057
        %2060 = vset.pattern.permute.xlu0 3
        %2061 = vperm.xlu0 %2060, %v279
        %v2062 = vpop.permute.xlu0 %2061
        %2064 = vset.pattern.permute.xlu0 3
        %2065 = vperm.xlu0 %2064, %v280
        %v2066 = vpop.permute.xlu0 %2065
        %2068 = vset.pattern.permute.xlu0 3
        %2069 = vperm.xlu0 %2068, %v281
        %v2070 = vpop.permute.xlu0 %2069
        %2072 = vset.pattern.permute.xlu0 3
        %2073 = vperm.xlu0 %2072, %v282
        %v2074 = vpop.permute.xlu0 %2073
        %2076 = vset.pattern.permute.xlu0 3
        %2077 = vperm.xlu0 %2076, %v283
        %v2078 = vpop.permute.xlu0 %2077
        %2080 = vset.pattern.permute.xlu0 3
        %2081 = vperm.xlu0 %2080, %v284
        %v2082 = vpop.permute.xlu0 %2081
        %2084 = vset.pattern.permute.xlu0 3
        %2085 = vperm.xlu0 %2084, %v285
        %v2086 = vpop.permute.xlu0 %2085
        %2088 = vset.pattern.permute.xlu0 3
        %2089 = vperm.xlu0 %2088, %v286
        %v2090 = vpop.permute.xlu0 %2089
        %2092 = vset.pattern.permute.xlu0 3
        %2093 = vperm.xlu0 %2092, %v287
        %v2094 = vpop.permute.xlu0 %2093
        %2096 = vset.pattern.permute.xlu0 3
        %2097 = vperm.xlu0 %2096, %v288
        %v2098 = vpop.permute.xlu0 %2097
        %2100 = vset.pattern.permute.xlu0 3
        %2101 = vperm.xlu0 %2100, %v289
        %v2102 = vpop.permute.xlu0 %2101
        %2104 = vset.pattern.permute.xlu0 3
        %2105 = vperm.xlu0 %2104, %v290
        %v2106 = vpop.permute.xlu0 %2105
        %2108 = vset.pattern.permute.xlu0 3
        %2109 = vperm.xlu0 %2108, %v291
        %v2110 = vpop.permute.xlu0 %2109
        %2112 = vset.pattern.permute.xlu0 3
        %2113 = vperm.xlu0 %2112, %v292
        %v2114 = vpop.permute.xlu0 %2113
        %v2116 = vsub.f32 %v295, %v2054
        %v2117 = vsub.f32 %v295, %v2058
        %v2118 = vsub.f32 %v295, %v2062
        %v2119 = vsub.f32 %v295, %v2066
        %v2120 = vsub.f32 %v295, %v2070
        %v2121 = vsub.f32 %v295, %v2074
        %v2122 = vsub.f32 %v295, %v2078
        %v2123 = vsub.f32 %v295, %v2082
        %v2124 = vsub.f32 %v295, %v2086
        %v2125 = vsub.f32 %v295, %v2090
        %v2126 = vsub.f32 %v295, %v2094
        %v2127 = vsub.f32 %v295, %v2098
        %v2128 = vsub.f32 %v295, %v2102
        %v2129 = vsub.f32 %v295, %v2106
        %v2130 = vsub.f32 %v295, %v2110
        %v2131 = vsub.f32 %v295, %v2114
        %v2132 = vand.u32 2147483647, %v2116
        %v2133 = vand.u32 2147483647, %v2117
        %v2134 = vand.u32 2147483647, %v2118
        %v2135 = vand.u32 2147483647, %v2119
        %v2136 = vand.u32 2147483647, %v2120
        %v2137 = vand.u32 2147483647, %v2121
        %v2138 = vand.u32 2147483647, %v2122
        %v2139 = vand.u32 2147483647, %v2123
        %v2140 = vand.u32 2147483647, %v2124
        %v2141 = vand.u32 2147483647, %v2125
        %v2142 = vand.u32 2147483647, %v2126
        %v2143 = vand.u32 2147483647, %v2127
        %v2144 = vand.u32 2147483647, %v2128
        %v2145 = vand.u32 2147483647, %v2129
        %v2146 = vand.u32 2147483647, %v2130
        %v2147 = vand.u32 2147483647, %v2131
        %v2148 = vsub.f32 1.0, %v2132
        %v2149 = vsub.f32 1.0, %v2133
        %v2150 = vsub.f32 1.0, %v2134
        %v2151 = vsub.f32 1.0, %v2135
        %v2152 = vsub.f32 1.0, %v2136
        %v2153 = vsub.f32 1.0, %v2137
        %v2154 = vsub.f32 1.0, %v2138
        %v2155 = vsub.f32 1.0, %v2139
        %v2156 = vsub.f32 1.0, %v2140
        %v2157 = vsub.f32 1.0, %v2141
        %v2158 = vsub.f32 1.0, %v2142
        %v2159 = vsub.f32 1.0, %v2143
        %v2160 = vsub.f32 1.0, %v2144
        %v2161 = vsub.f32 1.0, %v2145
        %v2162 = vsub.f32 1.0, %v2146
        %v2163 = vsub.f32 1.0, %v2147
        %v2164 = vmax.f32 %v2148, 0.0
        %v2165 = vmax.f32 %v2149, 0.0
        %v2166 = vmax.f32 %v2150, 0.0
        %v2167 = vmax.f32 %v2151, 0.0
        %v2168 = vmax.f32 %v2152, 0.0
        %v2169 = vmax.f32 %v2153, 0.0
        %v2170 = vmax.f32 %v2154, 0.0
        %v2171 = vmax.f32 %v2155, 0.0
        %v2172 = vmax.f32 %v2156, 0.0
        %v2173 = vmax.f32 %v2157, 0.0
        %v2174 = vmax.f32 %v2158, 0.0
        %v2175 = vmax.f32 %v2159, 0.0
        %v2176 = vmax.f32 %v2160, 0.0
        %v2177 = vmax.f32 %v2161, 0.0
        %v2178 = vmax.f32 %v2162, 0.0
        %v2179 = vmax.f32 %v2163, 0.0
        %2180 = vset.pattern.permute.xlu0 12
        %2181 = vperm.xlu0 %2180, %v277
        %v2182 = vpop.permute.xlu0 %2181
        %2184 = vset.pattern.permute.xlu0 12
        %2185 = vperm.xlu0 %2184, %v278
        %v2186 = vpop.permute.xlu0 %2185
        %2188 = vset.pattern.permute.xlu0 12
        %2189 = vperm.xlu0 %2188, %v279
        %v2190 = vpop.permute.xlu0 %2189
        %2192 = vset.pattern.permute.xlu0 12
        %2193 = vperm.xlu0 %2192, %v280
        %v2194 = vpop.permute.xlu0 %2193
        %2196 = vset.pattern.permute.xlu0 12
        %2197 = vperm.xlu0 %2196, %v281
        %v2198 = vpop.permute.xlu0 %2197
        %2200 = vset.pattern.permute.xlu0 12
        %2201 = vperm.xlu0 %2200, %v282
        %v2202 = vpop.permute.xlu0 %2201
        %2204 = vset.pattern.permute.xlu0 12
        %2205 = vperm.xlu0 %2204, %v283
        %v2206 = vpop.permute.xlu0 %2205
        %2208 = vset.pattern.permute.xlu0 12
        %2209 = vperm.xlu0 %2208, %v284
        %v2210 = vpop.permute.xlu0 %2209
        %2212 = vset.pattern.permute.xlu0 12
        %2213 = vperm.xlu0 %2212, %v285
        %v2214 = vpop.permute.xlu0 %2213
        %2216 = vset.pattern.permute.xlu0 12
        %2217 = vperm.xlu0 %2216, %v286
        %v2218 = vpop.permute.xlu0 %2217
        %2220 = vset.pattern.permute.xlu0 12
        %2221 = vperm.xlu0 %2220, %v287
        %v2222 = vpop.permute.xlu0 %2221
        %2224 = vset.pattern.permute.xlu0 12
        %2225 = vperm.xlu0 %2224, %v288
        %v2226 = vpop.permute.xlu0 %2225
        %2228 = vset.pattern.permute.xlu0 12
        %2229 = vperm.xlu0 %2228, %v289
        %v2230 = vpop.permute.xlu0 %2229
        %2232 = vset.pattern.permute.xlu0 12
        %2233 = vperm.xlu0 %2232, %v290
        %v2234 = vpop.permute.xlu0 %2233
        %2236 = vset.pattern.permute.xlu0 12
        %2237 = vperm.xlu0 %2236, %v291
        %v2238 = vpop.permute.xlu0 %2237
        %2240 = vset.pattern.permute.xlu0 12
        %2241 = vperm.xlu0 %2240, %v292
        %v2242 = vpop.permute.xlu0 %2241
        %v2244 = vsub.f32 %v301, %v2182
        %v2245 = vsub.f32 %v301, %v2186
        %v2246 = vsub.f32 %v301, %v2190
        %v2247 = vsub.f32 %v301, %v2194
        %v2248 = vsub.f32 %v301, %v2198
        %v2249 = vsub.f32 %v301, %v2202
        %v2250 = vsub.f32 %v301, %v2206
        %v2251 = vsub.f32 %v301, %v2210
        %v2252 = vsub.f32 %v301, %v2214
        %v2253 = vsub.f32 %v301, %v2218
        %v2254 = vsub.f32 %v301, %v2222
        %v2255 = vsub.f32 %v301, %v2226
        %v2256 = vsub.f32 %v301, %v2230
        %v2257 = vsub.f32 %v301, %v2234
        %v2258 = vsub.f32 %v301, %v2238
        %v2259 = vsub.f32 %v301, %v2242
        %v2260 = vand.u32 2147483647, %v2244
        %v2261 = vand.u32 2147483647, %v2245
        %v2262 = vand.u32 2147483647, %v2246
        %v2263 = vand.u32 2147483647, %v2247
        %v2264 = vand.u32 2147483647, %v2248
        %v2265 = vand.u32 2147483647, %v2249
        %v2266 = vand.u32 2147483647, %v2250
        %v2267 = vand.u32 2147483647, %v2251
        %v2268 = vand.u32 2147483647, %v2252
        %v2269 = vand.u32 2147483647, %v2253
        %v2270 = vand.u32 2147483647, %v2254
        %v2271 = vand.u32 2147483647, %v2255
        %v2272 = vand.u32 2147483647, %v2256
        %v2273 = vand.u32 2147483647, %v2257
        %v2274 = vand.u32 2147483647, %v2258
        %v2275 = vand.u32 2147483647, %v2259
        %v2276 = vsub.f32 1.0, %v2260
        %v2277 = vsub.f32 1.0, %v2261
        %v2278 = vsub.f32 1.0, %v2262
        %v2279 = vsub.f32 1.0, %v2263
        %v2280 = vsub.f32 1.0, %v2264
        %v2281 = vsub.f32 1.0, %v2265
        %v2282 = vsub.f32 1.0, %v2266
        %v2283 = vsub.f32 1.0, %v2267
        %v2284 = vsub.f32 1.0, %v2268
        %v2285 = vsub.f32 1.0, %v2269
        %v2286 = vsub.f32 1.0, %v2270
        %v2287 = vsub.f32 1.0, %v2271
        %v2288 = vsub.f32 1.0, %v2272
        %v2289 = vsub.f32 1.0, %v2273
        %v2290 = vsub.f32 1.0, %v2274
        %v2291 = vsub.f32 1.0, %v2275
        %v2292 = vmax.f32 %v2276, 0.0
        %v2293 = vmax.f32 %v2277, 0.0
        %v2294 = vmax.f32 %v2278, 0.0
        %v2295 = vmax.f32 %v2279, 0.0
        %v2296 = vmax.f32 %v2280, 0.0
        %v2297 = vmax.f32 %v2281, 0.0
        %v2298 = vmax.f32 %v2282, 0.0
        %v2299 = vmax.f32 %v2283, 0.0
        %v2300 = vmax.f32 %v2284, 0.0
        %v2301 = vmax.f32 %v2285, 0.0
        %v2302 = vmax.f32 %v2286, 0.0
        %v2303 = vmax.f32 %v2287, 0.0
        %v2304 = vmax.f32 %v2288, 0.0
        %v2305 = vmax.f32 %v2289, 0.0
        %v2306 = vmax.f32 %v2290, 0.0
        %v2307 = vmax.f32 %v2291, 0.0
        %v2308 = vpack.c.bf16 %v2165, %v2164
        %v2309 = vpack.c.bf16 %v2167, %v2166
        %v2310 = vpack.c.bf16 %v2169, %v2168
        %v2311 = vpack.c.bf16 %v2171, %v2170
        %v2312 = vpack.c.bf16 %v2173, %v2172
        %v2313 = vpack.c.bf16 %v2175, %v2174
        %v2314 = vpack.c.bf16 %v2177, %v2176
        %v2315 = vpack.c.bf16 %v2179, %v2178
        %v2317 = vsel %vm589, %v2308, 0
        %v2320 = vsel %vm589, %v2309, 0
        %v2323 = vsel %vm589, %v2310, 0
        %v2326 = vsel %vm589, %v2311, 0
        %v2329 = vsel %vm589, %v2312, 0
        %v2332 = vsel %vm589, %v2313, 0
        %v2335 = vsel %vm589, %v2314, 0
        %v2338 = vsel %vm589, %v2315, 0
        %2340 = vmatprep.subr.bf16.mxu0 0
        %2341 = vmatpush1.bf16.msra.mxu0 %v587
        %2342 = vmatprep.subr.bf16.mxu0 0
        %2343 = vmatpush1.bf16.msra.mxu0 0
        %2344 = vmatprep.subr.bf16.mxu0 0
        %2345 = vmatpush1.bf16.msra.mxu0 0
        %2346 = vmatprep.subr.bf16.mxu0 0
        %2347 = vmatpush1.bf16.msra.mxu0 0
        %2348 = vmatprep.subr.bf16.mxu0 0
        %2349 = vmatpush1.bf16.msra.mxu0 0
        %2350 = vmatprep.subr.bf16.mxu0 0
        %2351 = vmatpush1.bf16.msra.mxu0 0
        %2352 = vmatprep.subr.bf16.mxu0 0
        %2353 = vmatpush1.bf16.msra.mxu0 0
        %2354 = vmatprep.subr.bf16.mxu0 0
        %2355 = vmatpush1.bf16.msra.mxu0 0
        %2356 = vmatprep.subr.bf16.mxu0 0
        %2357 = vmatpush1.bf16.msra.mxu0 0
        %2358 = vmatprep.subr.bf16.mxu0 0
        %2359 = vmatpush1.bf16.msra.mxu0 0
        %2360 = vmatprep.subr.bf16.mxu0 0
        %2361 = vmatpush1.bf16.msra.mxu0 0
        %2362 = vmatprep.subr.bf16.mxu0 0
        %2363 = vmatpush1.bf16.msra.mxu0 0
        %2364 = vmatprep.subr.bf16.mxu0 0
        %2365 = vmatpush1.bf16.msra.mxu0 0
        %2366 = vmatprep.subr.bf16.mxu0 0
        %2367 = vmatpush1.bf16.msra.mxu0 0
        %2368 = vmatprep.subr.bf16.mxu0 0
        %2369 = vmatpush1.bf16.msra.mxu0 0
        %2370 = vmatprep.subr.bf16.mxu0 0
        %2371 = vmatpush1.bf16.msra.mxu0 0
        %2372 = vmatprep.mubr.bf16.mxu0 0
        %2373 = vmatmul.mubr.bf16.gmra.mrb[0].mxu0 %v2317
        %v2374 = vpop.f32.mrb[0].mxu0
        %v2375 = vadd.f32 0.0, %v2374
        %v2376 = vpop.f32.mrb[0].mxu0
        %v2377 = vpop.f32.mrb[0].mxu0
        %v2378 = vadd.f32 0.0, %v2377
        %v2379 = vpop.f32.mrb[0].mxu0
        %2380 = vmatprep.mubr.bf16.mxu0 0
        %2381 = vmatmul.mubr.bf16.gmra.mrb[0].mxu0 %v2320
        %v2382 = vpop.f32.mrb[0].mxu0
        %v2383 = vadd.f32 0.0, %v2382
        %v2384 = vpop.f32.mrb[0].mxu0
        %v2385 = vpop.f32.mrb[0].mxu0
        %v2386 = vadd.f32 0.0, %v2385
        %v2387 = vpop.f32.mrb[0].mxu0
        %2388 = vmatprep.mubr.bf16.mxu0 0
        %2389 = vmatmul.mubr.bf16.gmra.mrb[0].mxu0 %v2323
        %v2390 = vpop.f32.mrb[0].mxu0
        %v2391 = vadd.f32 0.0, %v2390
        %v2392 = vpop.f32.mrb[0].mxu0
        %v2393 = vpop.f32.mrb[0].mxu0
        %v2394 = vadd.f32 0.0, %v2393
        %v2395 = vpop.f32.mrb[0].mxu0
        %2396 = vmatprep.mubr.bf16.mxu0 0
        %2397 = vmatmul.mubr.bf16.gmra.mrb[0].mxu0 %v2326
        %v2398 = vpop.f32.mrb[0].mxu0
        %v2399 = vadd.f32 0.0, %v2398
        %v2400 = vpop.f32.mrb[0].mxu0
        %v2401 = vpop.f32.mrb[0].mxu0
        %v2402 = vadd.f32 0.0, %v2401
        %v2403 = vpop.f32.mrb[0].mxu0
        %2404 = vmatprep.mubr.bf16.mxu0 0
        %2405 = vmatmul.mubr.bf16.gmra.mrb[0].mxu0 %v2329
        %v2406 = vpop.f32.mrb[0].mxu0
        %v2407 = vadd.f32 0.0, %v2406
        %v2408 = vpop.f32.mrb[0].mxu0
        %v2409 = vpop.f32.mrb[0].mxu0
        %v2410 = vadd.f32 0.0, %v2409
        %v2411 = vpop.f32.mrb[0].mxu0
        %2412 = vmatprep.mubr.bf16.mxu0 0
        %2413 = vmatmul.mubr.bf16.gmra.mrb[0].mxu0 %v2332
        %v2414 = vpop.f32.mrb[0].mxu0
        %v2415 = vadd.f32 0.0, %v2414
        %v2416 = vpop.f32.mrb[0].mxu0
        %v2417 = vpop.f32.mrb[0].mxu0
        %v2418 = vadd.f32 0.0, %v2417
        %v2419 = vpop.f32.mrb[0].mxu0
        %2420 = vmatprep.mubr.bf16.mxu0 0
        %2421 = vmatmul.mubr.bf16.gmra.mrb[0].mxu0 %v2335
        %v2422 = vpop.f32.mrb[0].mxu0
        %v2423 = vadd.f32 0.0, %v2422
        %v2424 = vpop.f32.mrb[0].mxu0
        %v2425 = vpop.f32.mrb[0].mxu0
        %v2426 = vadd.f32 0.0, %v2425
        %v2427 = vpop.f32.mrb[0].mxu0
        %2428 = vmatprep.mubr.bf16.mxu0 0
        %2429 = vmatmul.mubr.bf16.gmra.mrb[0].mxu0 %v2338
        %v2430 = vpop.f32.mrb[0].mxu0
        %v2431 = vadd.f32 0.0, %v2430
        %v2432 = vpop.f32.mrb[0].mxu0
        %v2433 = vpop.f32.mrb[0].mxu0
        %v2434 = vadd.f32 0.0, %v2433
        %v2435 = vpop.f32.mrb[0].mxu0
        %2436 = vdwg.mxu0
        %v2437 = vmul.f32 %v2292, %v2375
        %v2438 = vmul.f32 %v2293, %v2378
        %v2439 = vmul.f32 %v2294, %v2383
        %v2440 = vmul.f32 %v2295, %v2386
        %v2441 = vmul.f32 %v2296, %v2391
        %v2442 = vmul.f32 %v2297, %v2394
        %v2443 = vmul.f32 %v2298, %v2399
        %v2444 = vmul.f32 %v2299, %v2402
        %v2445 = vmul.f32 %v2300, %v2407
        %v2446 = vmul.f32 %v2301, %v2410
        %v2447 = vmul.f32 %v2302, %v2415
        %v2448 = vmul.f32 %v2303, %v2418
        %v2449 = vmul.f32 %v2304, %v2423
        %v2450 = vmul.f32 %v2305, %v2426
        %v2451 = vmul.f32 %v2306, %v2431
        %v2452 = vmul.f32 %v2307, %v2434
        %v2453 = vpack.c.bf16 %v2438, %v2437
        %v2454 = vpack.c.bf16 %v2440, %v2439
        %v2455 = vpack.c.bf16 %v2442, %v2441
        %v2456 = vpack.c.bf16 %v2444, %v2443
        %v2457 = vpack.c.bf16 %v2446, %v2445
        %v2458 = vpack.c.bf16 %v2448, %v2447
        %v2459 = vpack.c.bf16 %v2450, %v2449
        %v2460 = vpack.c.bf16 %v2452, %v2451
        %v2461 = vld [vmem:[%s3 + $0xc0] sm:$0xf]
        %v2462 = vld [vmem:[%s3 + $0xc4] sm:$0xf]
        %v2463 = vld [vmem:[%s3 + $0xc8] sm:$0xf]
        %v2464 = vld [vmem:[%s3 + $0xcc] sm:$0xf]
        %v2465 = vld [vmem:[%s3 + $0xd0] sm:$0xf]
        %v2466 = vld [vmem:[%s3 + $0xd4] sm:$0xf]
        %v2467 = vld [vmem:[%s3 + $0xd8] sm:$0xf]
        %v2468 = vld [vmem:[%s3 + $0xdc] sm:$0xf]
        %v2469 = vld [vmem:[%s3 + $0xe0] sm:$0xf]
        %v2470 = vld [vmem:[%s3 + $0xe4] sm:$0xf]
        %v2471 = vld [vmem:[%s3 + $0xe8] sm:$0xf]
        %v2472 = vld [vmem:[%s3 + $0xec] sm:$0xf]
        %v2473 = vld [vmem:[%s3 + $0xf0] sm:$0xf]
        %v2474 = vld [vmem:[%s3 + $0xf4] sm:$0xf]
        %v2475 = vld [vmem:[%s3 + $0xf8] sm:$0xf]
        %v2476 = vld [vmem:[%s3 + $0xfc] sm:$0xf]
        %v2493 = vunpack.c.l.b16 %v2461
        %v2494 = vunpack.c.l.b16 %v2462
        %v2495 = vunpack.c.l.b16 %v2463
        %v2496 = vunpack.c.l.b16 %v2464
        %v2497 = vunpack.c.l.b16 %v2465
        %v2498 = vunpack.c.l.b16 %v2466
        %v2499 = vunpack.c.l.b16 %v2467
        %v2500 = vunpack.c.l.b16 %v2468
        %v2501 = vunpack.c.l.b16 %v2469
        %v2502 = vunpack.c.l.b16 %v2470
        %v2503 = vunpack.c.l.b16 %v2471
        %v2504 = vunpack.c.l.b16 %v2472
        %v2505 = vunpack.c.l.b16 %v2473
        %v2506 = vunpack.c.l.b16 %v2474
        %v2507 = vunpack.c.l.b16 %v2475
        %v2508 = vunpack.c.l.b16 %v2476
        %v2509 = vpack.c.b16 %v2494, %v2493
        %v2510 = vpack.c.b16 %v2496, %v2495
        %v2511 = vpack.c.b16 %v2498, %v2497
        %v2512 = vpack.c.b16 %v2500, %v2499
        %v2513 = vpack.c.b16 %v2502, %v2501
        %v2514 = vpack.c.b16 %v2504, %v2503
        %v2515 = vpack.c.b16 %v2506, %v2505
        %v2516 = vpack.c.b16 %v2508, %v2507
        %2525 = vmatprep.subr.bf16.mxu0 0
        %2526 = vmatpush1.bf16.msra.mxu0 %v2509
        %2527 = vmatprep.subr.bf16.mxu0 0
        %2528 = vmatpush1.bf16.msra.mxu0 %v2510
        %2529 = vmatprep.subr.bf16.mxu0 0
        %2530 = vmatpush1.bf16.msra.mxu0 %v2511
        %2531 = vmatprep.subr.bf16.mxu0 0
        %2532 = vmatpush1.bf16.msra.mxu0 %v2512
        %2533 = vmatprep.subr.bf16.mxu0 0
        %2534 = vmatpush1.bf16.msra.mxu0 %v2513
        %2535 = vmatprep.subr.bf16.mxu0 0
        %2536 = vmatpush1.bf16.msra.mxu0 %v2514
        %2537 = vmatprep.subr.bf16.mxu0 0
        %2538 = vmatpush1.bf16.msra.mxu0 %v2515
        %2539 = vmatprep.subr.bf16.mxu0 0
        %2540 = vmatpush1.bf16.msra.mxu0 %v2516
        %2541 = vmatprep.subr.bf16.mxu0 0
        %2542 = vmatpush1.bf16.msra.mxu0 0
        %2543 = vmatprep.subr.bf16.mxu0 0
        %2544 = vmatpush1.bf16.msra.mxu0 0
        %2545 = vmatprep.subr.bf16.mxu0 0
        %2546 = vmatpush1.bf16.msra.mxu0 0
        %2547 = vmatprep.subr.bf16.mxu0 0
        %2548 = vmatpush1.bf16.msra.mxu0 0
        %2549 = vmatprep.subr.bf16.mxu0 0
        %2550 = vmatpush1.bf16.msra.mxu0 0
        %2551 = vmatprep.subr.bf16.mxu0 0
        %2552 = vmatpush1.bf16.msra.mxu0 0
        %2553 = vmatprep.subr.bf16.mxu0 0
        %2554 = vmatpush1.bf16.msra.mxu0 0
        %2555 = vmatprep.subr.bf16.mxu0 0
        %2556 = vmatpush1.bf16.msra.mxu0 0
        %2557 = vmatprep.mubr.bf16.mxu0 0
        %2558 = vmatmul.mubr.bf16.gmra.mrb[0].mxu0 %v2453
        %v2559 = vpop.f32.mrb[0].mxu0
        %v2560 = vadd.f32 0.0, %v2559
        %v2561 = vpop.f32.mrb[0].mxu0
        %v2562 = vpop.f32.mrb[0].mxu0
        %v2563 = vadd.f32 0.0, %v2562
        %v2564 = vpop.f32.mrb[0].mxu0
        %2565 = vmatprep.mubr.bf16.mxu0 0
        %2566 = vmatmul.mubr.bf16.gmra.mrb[0].mxu0 %v2454
        %v2567 = vpop.f32.mrb[0].mxu0
        %v2568 = vadd.f32 0.0, %v2567
        %v2569 = vpop.f32.mrb[0].mxu0
        %v2570 = vpop.f32.mrb[0].mxu0
        %v2571 = vadd.f32 0.0, %v2570
        %v2572 = vpop.f32.mrb[0].mxu0
        %2573 = vmatprep.mubr.bf16.mxu0 0
        %2574 = vmatmul.mubr.bf16.gmra.mrb[0].mxu0 %v2455
        %v2575 = vpop.f32.mrb[0].mxu0
        %v2576 = vadd.f32 0.0, %v2575
        %v2577 = vpop.f32.mrb[0].mxu0
        %v2578 = vpop.f32.mrb[0].mxu0
        %v2579 = vadd.f32 0.0, %v2578
        %v2580 = vpop.f32.mrb[0].mxu0
        %2581 = vmatprep.mubr.bf16.mxu0 0
        %2582 = vmatmul.mubr.bf16.gmra.mrb[0].mxu0 %v2456
        %v2583 = vpop.f32.mrb[0].mxu0
        %v2584 = vadd.f32 0.0, %v2583
        %v2585 = vpop.f32.mrb[0].mxu0
        %v2586 = vpop.f32.mrb[0].mxu0
        %v2587 = vadd.f32 0.0, %v2586
        %v2588 = vpop.f32.mrb[0].mxu0
        %2589 = vmatprep.mubr.bf16.mxu0 0
        %2590 = vmatmul.mubr.bf16.gmra.mrb[0].mxu0 %v2457
        %v2591 = vpop.f32.mrb[0].mxu0
        %v2592 = vadd.f32 0.0, %v2591
        %v2593 = vpop.f32.mrb[0].mxu0
        %v2594 = vpop.f32.mrb[0].mxu0
        %v2595 = vadd.f32 0.0, %v2594
        %v2596 = vpop.f32.mrb[0].mxu0
        %2597 = vmatprep.mubr.bf16.mxu0 0
        %2598 = vmatmul.mubr.bf16.gmra.mrb[0].mxu0 %v2458
        %v2599 = vpop.f32.mrb[0].mxu0
        %v2600 = vadd.f32 0.0, %v2599
        %v2601 = vpop.f32.mrb[0].mxu0
        %v2602 = vpop.f32.mrb[0].mxu0
        %v2603 = vadd.f32 0.0, %v2602
        %v2604 = vpop.f32.mrb[0].mxu0
        %2605 = vmatprep.mubr.bf16.mxu0 0
        %2606 = vmatmul.mubr.bf16.gmra.mrb[0].mxu0 %v2459
        %v2607 = vpop.f32.mrb[0].mxu0
        %v2608 = vadd.f32 0.0, %v2607
        %v2609 = vpop.f32.mrb[0].mxu0
        %v2610 = vpop.f32.mrb[0].mxu0
        %v2611 = vadd.f32 0.0, %v2610
        %v2612 = vpop.f32.mrb[0].mxu0
        %2613 = vmatprep.mubr.bf16.mxu0 0
        %2614 = vmatmul.mubr.bf16.gmra.mrb[0].mxu0 %v2460
        %v2615 = vpop.f32.mrb[0].mxu0
        %v2616 = vadd.f32 0.0, %v2615
        %v2617 = vpop.f32.mrb[0].mxu0
        %v2618 = vpop.f32.mrb[0].mxu0
        %v2619 = vadd.f32 0.0, %v2618
        %v2620 = vpop.f32.mrb[0].mxu0
        %2621 = vdwg.mxu0
        %v2622 = vadd.f32 %v2036, %v2560
        %v2623 = vadd.f32 %v2037, %v2563
        %v2624 = vadd.f32 %v2038, %v2568
        %v2625 = vadd.f32 %v2039, %v2571
        %v2626 = vadd.f32 %v2040, %v2576
        %v2627 = vadd.f32 %v2041, %v2579
        %v2628 = vadd.f32 %v2042, %v2584
        %v2629 = vadd.f32 %v2043, %v2587
        %v2630 = vadd.f32 %v2044, %v2592
        %v2631 = vadd.f32 %v2045, %v2595
        %v2632 = vadd.f32 %v2046, %v2600
        %v2633 = vadd.f32 %v2047, %v2603
        %v2634 = vadd.f32 %v2048, %v2608
        %v2635 = vadd.f32 %v2049, %v2611
        %v2636 = vadd.f32 %v2050, %v2616
        %v2637 = vadd.f32 %v2051, %v2619
        %2638 = vset.pattern.permute.xlu0 4
        %2639 = vperm.xlu0 %2638, %v277
        %v2640 = vpop.permute.xlu0 %2639
        %2642 = vset.pattern.permute.xlu0 4
        %2643 = vperm.xlu0 %2642, %v278
        %v2644 = vpop.permute.xlu0 %2643
        %2646 = vset.pattern.permute.xlu0 4
        %2647 = vperm.xlu0 %2646, %v279
        %v2648 = vpop.permute.xlu0 %2647
        %2650 = vset.pattern.permute.xlu0 4
        %2651 = vperm.xlu0 %2650, %v280
        %v2652 = vpop.permute.xlu0 %2651
        %2654 = vset.pattern.permute.xlu0 4
        %2655 = vperm.xlu0 %2654, %v281
        %v2656 = vpop.permute.xlu0 %2655
        %2658 = vset.pattern.permute.xlu0 4
        %2659 = vperm.xlu0 %2658, %v282
        %v2660 = vpop.permute.xlu0 %2659
        %2662 = vset.pattern.permute.xlu0 4
        %2663 = vperm.xlu0 %2662, %v283
        %v2664 = vpop.permute.xlu0 %2663
        %2666 = vset.pattern.permute.xlu0 4
        %2667 = vperm.xlu0 %2666, %v284
        %v2668 = vpop.permute.xlu0 %2667
        %2670 = vset.pattern.permute.xlu0 4
        %2671 = vperm.xlu0 %2670, %v285
        %v2672 = vpop.permute.xlu0 %2671
        %2674 = vset.pattern.permute.xlu0 4
        %2675 = vperm.xlu0 %2674, %v286
        %v2676 = vpop.permute.xlu0 %2675
        %2678 = vset.pattern.permute.xlu0 4
        %2679 = vperm.xlu0 %2678, %v287
        %v2680 = vpop.permute.xlu0 %2679
        %2682 = vset.pattern.permute.xlu0 4
        %2683 = vperm.xlu0 %2682, %v288
        %v2684 = vpop.permute.xlu0 %2683
        %2686 = vset.pattern.permute.xlu0 4
        %2687 = vperm.xlu0 %2686, %v289
        %v2688 = vpop.permute.xlu0 %2687
        %2690 = vset.pattern.permute.xlu0 4
        %2691 = vperm.xlu0 %2690, %v290
        %v2692 = vpop.permute.xlu0 %2691
        %2694 = vset.pattern.permute.xlu0 4
        %2695 = vperm.xlu0 %2694, %v291
        %v2696 = vpop.permute.xlu0 %2695
        %2698 = vset.pattern.permute.xlu0 4
        %2699 = vperm.xlu0 %2698, %v292
        %v2700 = vpop.permute.xlu0 %2699
        %v2702 = vsub.f32 %v295, %v2640
        %v2703 = vsub.f32 %v295, %v2644
        %v2704 = vsub.f32 %v295, %v2648
        %v2705 = vsub.f32 %v295, %v2652
        %v2706 = vsub.f32 %v295, %v2656
        %v2707 = vsub.f32 %v295, %v2660
        %v2708 = vsub.f32 %v295, %v2664
        %v2709 = vsub.f32 %v295, %v2668
        %v2710 = vsub.f32 %v295, %v2672
        %v2711 = vsub.f32 %v295, %v2676
        %v2712 = vsub.f32 %v295, %v2680
        %v2713 = vsub.f32 %v295, %v2684
        %v2714 = vsub.f32 %v295, %v2688
        %v2715 = vsub.f32 %v295, %v2692
        %v2716 = vsub.f32 %v295, %v2696
        %v2717 = vsub.f32 %v295, %v2700
        %v2718 = vand.u32 2147483647, %v2702
        %v2719 = vand.u32 2147483647, %v2703
        %v2720 = vand.u32 2147483647, %v2704
        %v2721 = vand.u32 2147483647, %v2705
        %v2722 = vand.u32 2147483647, %v2706
        %v2723 = vand.u32 2147483647, %v2707
        %v2724 = vand.u32 2147483647, %v2708
        %v2725 = vand.u32 2147483647, %v2709
        %v2726 = vand.u32 2147483647, %v2710
        %v2727 = vand.u32 2147483647, %v2711
        %v2728 = vand.u32 2147483647, %v2712
        %v2729 = vand.u32 2147483647, %v2713
        %v2730 = vand.u32 2147483647, %v2714
        %v2731 = vand.u32 2147483647, %v2715
        %v2732 = vand.u32 2147483647, %v2716
        %v2733 = vand.u32 2147483647, %v2717
        %v2734 = vsub.f32 1.0, %v2718
        %v2735 = vsub.f32 1.0, %v2719
        %v2736 = vsub.f32 1.0, %v2720
        %v2737 = vsub.f32 1.0, %v2721
        %v2738 = vsub.f32 1.0, %v2722
        %v2739 = vsub.f32 1.0, %v2723
        %v2740 = vsub.f32 1.0, %v2724
        %v2741 = vsub.f32 1.0, %v2725
        %v2742 = vsub.f32 1.0, %v2726
        %v2743 = vsub.f32 1.0, %v2727
        %v2744 = vsub.f32 1.0, %v2728
        %v2745 = vsub.f32 1.0, %v2729
        %v2746 = vsub.f32 1.0, %v2730
        %v2747 = vsub.f32 1.0, %v2731
        %v2748 = vsub.f32 1.0, %v2732
        %v2749 = vsub.f32 1.0, %v2733
        %v2750 = vmax.f32 %v2734, 0.0
        %v2751 = vmax.f32 %v2735, 0.0
        %v2752 = vmax.f32 %v2736, 0.0
        %v2753 = vmax.f32 %v2737, 0.0
        %v2754 = vmax.f32 %v2738, 0.0
        %v2755 = vmax.f32 %v2739, 0.0
        %v2756 = vmax.f32 %v2740, 0.0
        %v2757 = vmax.f32 %v2741, 0.0
        %v2758 = vmax.f32 %v2742, 0.0
        %v2759 = vmax.f32 %v2743, 0.0
        %v2760 = vmax.f32 %v2744, 0.0
        %v2761 = vmax.f32 %v2745, 0.0
        %v2762 = vmax.f32 %v2746, 0.0
        %v2763 = vmax.f32 %v2747, 0.0
        %v2764 = vmax.f32 %v2748, 0.0
        %v2765 = vmax.f32 %v2749, 0.0
        %2766 = vset.pattern.permute.xlu0 13
        %2767 = vperm.xlu0 %2766, %v277
        %v2768 = vpop.permute.xlu0 %2767
        %2770 = vset.pattern.permute.xlu0 13
        %2771 = vperm.xlu0 %2770, %v278
        %v2772 = vpop.permute.xlu0 %2771
        %2774 = vset.pattern.permute.xlu0 13
        %2775 = vperm.xlu0 %2774, %v279
        %v2776 = vpop.permute.xlu0 %2775
        %2778 = vset.pattern.permute.xlu0 13
        %2779 = vperm.xlu0 %2778, %v280
        %v2780 = vpop.permute.xlu0 %2779
        %2782 = vset.pattern.permute.xlu0 13
        %2783 = vperm.xlu0 %2782, %v281
        %v2784 = vpop.permute.xlu0 %2783
        %2786 = vset.pattern.permute.xlu0 13
        %2787 = vperm.xlu0 %2786, %v282
        %v2788 = vpop.permute.xlu0 %2787
        %2790 = vset.pattern.permute.xlu0 13
        %2791 = vperm.xlu0 %2790, %v283
        %v2792 = vpop.permute.xlu0 %2791
        %2794 = vset.pattern.permute.xlu0 13
        %2795 = vperm.xlu0 %2794, %v284
        %v2796 = vpop.permute.xlu0 %2795
        %2798 = vset.pattern.permute.xlu0 13
        %2799 = vperm.xlu0 %2798, %v285
        %v2800 = vpop.permute.xlu0 %2799
        %2802 = vset.pattern.permute.xlu0 13
        %2803 = vperm.xlu0 %2802, %v286
        %v2804 = vpop.permute.xlu0 %2803
        %2806 = vset.pattern.permute.xlu0 13
        %2807 = vperm.xlu0 %2806, %v287
        %v2808 = vpop.permute.xlu0 %2807
        %2810 = vset.pattern.permute.xlu0 13
        %2811 = vperm.xlu0 %2810, %v288
        %v2812 = vpop.permute.xlu0 %2811
        %2814 = vset.pattern.permute.xlu0 13
        %2815 = vperm.xlu0 %2814, %v289
        %v2816 = vpop.permute.xlu0 %2815
        %2818 = vset.pattern.permute.xlu0 13
        %2819 = vperm.xlu0 %2818, %v290
        %v2820 = vpop.permute.xlu0 %2819
        %2822 = vset.pattern.permute.xlu0 13
        %2823 = vperm.xlu0 %2822, %v291
        %v2824 = vpop.permute.xlu0 %2823
        %2826 = vset.pattern.permute.xlu0 13
        %2827 = vperm.xlu0 %2826, %v292
        %v2828 = vpop.permute.xlu0 %2827
        %v2830 = vsub.f32 %v301, %v2768
        %v2831 = vsub.f32 %v301, %v2772
        %v2832 = vsub.f32 %v301, %v2776
        %v2833 = vsub.f32 %v301, %v2780
        %v2834 = vsub.f32 %v301, %v2784
        %v2835 = vsub.f32 %v301, %v2788
        %v2836 = vsub.f32 %v301, %v2792
        %v2837 = vsub.f32 %v301, %v2796
        %v2838 = vsub.f32 %v301, %v2800
        %v2839 = vsub.f32 %v301, %v2804
        %v2840 = vsub.f32 %v301, %v2808
        %v2841 = vsub.f32 %v301, %v2812
        %v2842 = vsub.f32 %v301, %v2816
        %v2843 = vsub.f32 %v301, %v2820
        %v2844 = vsub.f32 %v301, %v2824
        %v2845 = vsub.f32 %v301, %v2828
        %v2846 = vand.u32 2147483647, %v2830
        %v2847 = vand.u32 2147483647, %v2831
        %v2848 = vand.u32 2147483647, %v2832
        %v2849 = vand.u32 2147483647, %v2833
        %v2850 = vand.u32 2147483647, %v2834
        %v2851 = vand.u32 2147483647, %v2835
        %v2852 = vand.u32 2147483647, %v2836
        %v2853 = vand.u32 2147483647, %v2837
        %v2854 = vand.u32 2147483647, %v2838
        %v2855 = vand.u32 2147483647, %v2839
        %v2856 = vand.u32 2147483647, %v2840
        %v2857 = vand.u32 2147483647, %v2841
        %v2858 = vand.u32 2147483647, %v2842
        %v2859 = vand.u32 2147483647, %v2843
        %v2860 = vand.u32 2147483647, %v2844
        %v2861 = vand.u32 2147483647, %v2845
        %v2862 = vsub.f32 1.0, %v2846
        %v2863 = vsub.f32 1.0, %v2847
        %v2864 = vsub.f32 1.0, %v2848
        %v2865 = vsub.f32 1.0, %v2849
        %v2866 = vsub.f32 1.0, %v2850
        %v2867 = vsub.f32 1.0, %v2851
        %v2868 = vsub.f32 1.0, %v2852
        %v2869 = vsub.f32 1.0, %v2853
        %v2870 = vsub.f32 1.0, %v2854
        %v2871 = vsub.f32 1.0, %v2855
        %v2872 = vsub.f32 1.0, %v2856
        %v2873 = vsub.f32 1.0, %v2857
        %v2874 = vsub.f32 1.0, %v2858
        %v2875 = vsub.f32 1.0, %v2859
        %v2876 = vsub.f32 1.0, %v2860
        %v2877 = vsub.f32 1.0, %v2861
        %v2878 = vmax.f32 %v2862, 0.0
        %v2879 = vmax.f32 %v2863, 0.0
        %v2880 = vmax.f32 %v2864, 0.0
        %v2881 = vmax.f32 %v2865, 0.0
        %v2882 = vmax.f32 %v2866, 0.0
        %v2883 = vmax.f32 %v2867, 0.0
        %v2884 = vmax.f32 %v2868, 0.0
        %v2885 = vmax.f32 %v2869, 0.0
        %v2886 = vmax.f32 %v2870, 0.0
        %v2887 = vmax.f32 %v2871, 0.0
        %v2888 = vmax.f32 %v2872, 0.0
        %v2889 = vmax.f32 %v2873, 0.0
        %v2890 = vmax.f32 %v2874, 0.0
        %v2891 = vmax.f32 %v2875, 0.0
        %v2892 = vmax.f32 %v2876, 0.0
        %v2893 = vmax.f32 %v2877, 0.0
        %v2894 = vpack.c.bf16 %v2751, %v2750
        %v2895 = vpack.c.bf16 %v2753, %v2752
        %v2896 = vpack.c.bf16 %v2755, %v2754
        %v2897 = vpack.c.bf16 %v2757, %v2756
        %v2898 = vpack.c.bf16 %v2759, %v2758
        %v2899 = vpack.c.bf16 %v2761, %v2760
        %v2900 = vpack.c.bf16 %v2763, %v2762
        %v2901 = vpack.c.bf16 %v2765, %v2764
        %v2903 = vsel %vm589, %v2894, 0
        %v2906 = vsel %vm589, %v2895, 0
        %v2909 = vsel %vm589, %v2896, 0
        %v2912 = vsel %vm589, %v2897, 0
        %v2915 = vsel %vm589, %v2898, 0
        %v2918 = vsel %vm589, %v2899, 0
        %v2921 = vsel %vm589, %v2900, 0
        %v2924 = vsel %vm589, %v2901, 0
        %2926 = vmatprep.subr.bf16.mxu0 0
        %2927 = vmatpush1.bf16.msra.mxu0 %v587
        %2928 = vmatprep.subr.bf16.mxu0 0
        %2929 = vmatpush1.bf16.msra.mxu0 0
        %2930 = vmatprep.subr.bf16.mxu0 0
        %2931 = vmatpush1.bf16.msra.mxu0 0
        %2932 = vmatprep.subr.bf16.mxu0 0
        %2933 = vmatpush1.bf16.msra.mxu0 0
        %2934 = vmatprep.subr.bf16.mxu0 0
        %2935 = vmatpush1.bf16.msra.mxu0 0
        %2936 = vmatprep.subr.bf16.mxu0 0
        %2937 = vmatpush1.bf16.msra.mxu0 0
        %2938 = vmatprep.subr.bf16.mxu0 0
        %2939 = vmatpush1.bf16.msra.mxu0 0
        %2940 = vmatprep.subr.bf16.mxu0 0
        %2941 = vmatpush1.bf16.msra.mxu0 0
        %2942 = vmatprep.subr.bf16.mxu0 0
        %2943 = vmatpush1.bf16.msra.mxu0 0
        %2944 = vmatprep.subr.bf16.mxu0 0
        %2945 = vmatpush1.bf16.msra.mxu0 0
        %2946 = vmatprep.subr.bf16.mxu0 0
        %2947 = vmatpush1.bf16.msra.mxu0 0
        %2948 = vmatprep.subr.bf16.mxu0 0
        %2949 = vmatpush1.bf16.msra.mxu0 0
        %2950 = vmatprep.subr.bf16.mxu0 0
        %2951 = vmatpush1.bf16.msra.mxu0 0
        %2952 = vmatprep.subr.bf16.mxu0 0
        %2953 = vmatpush1.bf16.msra.mxu0 0
        %2954 = vmatprep.subr.bf16.mxu0 0
        %2955 = vmatpush1.bf16.msra.mxu0 0
        %2956 = vmatprep.subr.bf16.mxu0 0
        %2957 = vmatpush1.bf16.msra.mxu0 0
        %2958 = vmatprep.mubr.bf16.mxu0 0
        %2959 = vmatmul.mubr.bf16.gmra.mrb[0].mxu0 %v2903
        %v2960 = vpop.f32.mrb[0].mxu0
        %v2961 = vadd.f32 0.0, %v2960
        %v2962 = vpop.f32.mrb[0].mxu0
        %v2963 = vpop.f32.mrb[0].mxu0
        %v2964 = vadd.f32 0.0, %v2963
        %v2965 = vpop.f32.mrb[0].mxu0
        %2966 = vmatprep.mubr.bf16.mxu0 0
        %2967 = vmatmul.mubr.bf16.gmra.mrb[0].mxu0 %v2906
        %v2968 = vpop.f32.mrb[0].mxu0
        %v2969 = vadd.f32 0.0, %v2968
        %v2970 = vpop.f32.mrb[0].mxu0
        %v2971 = vpop.f32.mrb[0].mxu0
        %v2972 = vadd.f32 0.0, %v2971
        %v2973 = vpop.f32.mrb[0].mxu0
        %2974 = vmatprep.mubr.bf16.mxu0 0
        %2975 = vmatmul.mubr.bf16.gmra.mrb[0].mxu0 %v2909
        %v2976 = vpop.f32.mrb[0].mxu0
        %v2977 = vadd.f32 0.0, %v2976
        %v2978 = vpop.f32.mrb[0].mxu0
        %v2979 = vpop.f32.mrb[0].mxu0
        %v2980 = vadd.f32 0.0, %v2979
        %v2981 = vpop.f32.mrb[0].mxu0
        %2982 = vmatprep.mubr.bf16.mxu0 0
        %2983 = vmatmul.mubr.bf16.gmra.mrb[0].mxu0 %v2912
        %v2984 = vpop.f32.mrb[0].mxu0
        %v2985 = vadd.f32 0.0, %v2984
        %v2986 = vpop.f32.mrb[0].mxu0
        %v2987 = vpop.f32.mrb[0].mxu0
        %v2988 = vadd.f32 0.0, %v2987
        %v2989 = vpop.f32.mrb[0].mxu0
        %2990 = vmatprep.mubr.bf16.mxu0 0
        %2991 = vmatmul.mubr.bf16.gmra.mrb[0].mxu0 %v2915
        %v2992 = vpop.f32.mrb[0].mxu0
        %v2993 = vadd.f32 0.0, %v2992
        %v2994 = vpop.f32.mrb[0].mxu0
        %v2995 = vpop.f32.mrb[0].mxu0
        %v2996 = vadd.f32 0.0, %v2995
        %v2997 = vpop.f32.mrb[0].mxu0
        %2998 = vmatprep.mubr.bf16.mxu0 0
        %2999 = vmatmul.mubr.bf16.gmra.mrb[0].mxu0 %v2918
        %v3000 = vpop.f32.mrb[0].mxu0
        %v3001 = vadd.f32 0.0, %v3000
        %v3002 = vpop.f32.mrb[0].mxu0
        %v3003 = vpop.f32.mrb[0].mxu0
        %v3004 = vadd.f32 0.0, %v3003
        %v3005 = vpop.f32.mrb[0].mxu0
        %3006 = vmatprep.mubr.bf16.mxu0 0
        %3007 = vmatmul.mubr.bf16.gmra.mrb[0].mxu0 %v2921
        %v3008 = vpop.f32.mrb[0].mxu0
        %v3009 = vadd.f32 0.0, %v3008
        %v3010 = vpop.f32.mrb[0].mxu0
        %v3011 = vpop.f32.mrb[0].mxu0
        %v3012 = vadd.f32 0.0, %v3011
        %v3013 = vpop.f32.mrb[0].mxu0
        %3014 = vmatprep.mubr.bf16.mxu0 0
        %3015 = vmatmul.mubr.bf16.gmra.mrb[0].mxu0 %v2924
        %v3016 = vpop.f32.mrb[0].mxu0
        %v3017 = vadd.f32 0.0, %v3016
        %v3018 = vpop.f32.mrb[0].mxu0
        %v3019 = vpop.f32.mrb[0].mxu0
        %v3020 = vadd.f32 0.0, %v3019
        %v3021 = vpop.f32.mrb[0].mxu0
        %3022 = vdwg.mxu0
        %v3023 = vmul.f32 %v2878, %v2961
        %v3024 = vmul.f32 %v2879, %v2964
        %v3025 = vmul.f32 %v2880, %v2969
        %v3026 = vmul.f32 %v2881, %v2972
        %v3027 = vmul.f32 %v2882, %v2977
        %v3028 = vmul.f32 %v2883, %v2980
        %v3029 = vmul.f32 %v2884, %v2985
        %v3030 = vmul.f32 %v2885, %v2988
        %v3031 = vmul.f32 %v2886, %v2993
        %v3032 = vmul.f32 %v2887, %v2996
        %v3033 = vmul.f32 %v2888, %v3001
        %v3034 = vmul.f32 %v2889, %v3004
        %v3035 = vmul.f32 %v2890, %v3009
        %v3036 = vmul.f32 %v2891, %v3012
        %v3037 = vmul.f32 %v2892, %v3017
        %v3038 = vmul.f32 %v2893, %v3020
        %v3039 = vpack.c.bf16 %v3024, %v3023
        %v3040 = vpack.c.bf16 %v3026, %v3025
        %v3041 = vpack.c.bf16 %v3028, %v3027
        %v3042 = vpack.c.bf16 %v3030, %v3029
        %v3043 = vpack.c.bf16 %v3032, %v3031
        %v3044 = vpack.c.bf16 %v3034, %v3033
        %v3045 = vpack.c.bf16 %v3036, %v3035
        %v3046 = vpack.c.bf16 %v3038, %v3037
        %v3047 = vld [vmem:[%s3 + $0x100] sm:$0xf]
        %v3048 = vld [vmem:[%s3 + $0x104] sm:$0xf]
        %v3049 = vld [vmem:[%s3 + $0x108] sm:$0xf]
        %v3050 = vld [vmem:[%s3 + $0x10c] sm:$0xf]
        %v3051 = vld [vmem:[%s3 + $0x110] sm:$0xf]
        %v3052 = vld [vmem:[%s3 + $0x114] sm:$0xf]
        %v3053 = vld [vmem:[%s3 + $0x118] sm:$0xf]
        %v3054 = vld [vmem:[%s3 + $0x11c] sm:$0xf]
        %v3055 = vld [vmem:[%s3 + $0x120] sm:$0xf]
        %v3056 = vld [vmem:[%s3 + $0x124] sm:$0xf]
        %v3057 = vld [vmem:[%s3 + $0x128] sm:$0xf]
        %v3058 = vld [vmem:[%s3 + $0x12c] sm:$0xf]
        %v3059 = vld [vmem:[%s3 + $0x130] sm:$0xf]
        %v3060 = vld [vmem:[%s3 + $0x134] sm:$0xf]
        %v3061 = vld [vmem:[%s3 + $0x138] sm:$0xf]
        %v3062 = vld [vmem:[%s3 + $0x13c] sm:$0xf]
        %v3079 = vunpack.c.l.b16 %v3047
        %v3080 = vunpack.c.l.b16 %v3048
        %v3081 = vunpack.c.l.b16 %v3049
        %v3082 = vunpack.c.l.b16 %v3050
        %v3083 = vunpack.c.l.b16 %v3051
        %v3084 = vunpack.c.l.b16 %v3052
        %v3085 = vunpack.c.l.b16 %v3053
        %v3086 = vunpack.c.l.b16 %v3054
        %v3087 = vunpack.c.l.b16 %v3055
        %v3088 = vunpack.c.l.b16 %v3056
        %v3089 = vunpack.c.l.b16 %v3057
        %v3090 = vunpack.c.l.b16 %v3058
        %v3091 = vunpack.c.l.b16 %v3059
        %v3092 = vunpack.c.l.b16 %v3060
        %v3093 = vunpack.c.l.b16 %v3061
        %v3094 = vunpack.c.l.b16 %v3062
        %v3095 = vpack.c.b16 %v3080, %v3079
        %v3096 = vpack.c.b16 %v3082, %v3081
        %v3097 = vpack.c.b16 %v3084, %v3083
        %v3098 = vpack.c.b16 %v3086, %v3085
        %v3099 = vpack.c.b16 %v3088, %v3087
        %v3100 = vpack.c.b16 %v3090, %v3089
        %v3101 = vpack.c.b16 %v3092, %v3091
        %v3102 = vpack.c.b16 %v3094, %v3093
        %3111 = vmatprep.subr.bf16.mxu0 0
        %3112 = vmatpush1.bf16.msra.mxu0 %v3095
        %3113 = vmatprep.subr.bf16.mxu0 0
        %3114 = vmatpush1.bf16.msra.mxu0 %v3096
        %3115 = vmatprep.subr.bf16.mxu0 0
        %3116 = vmatpush1.bf16.msra.mxu0 %v3097
        %3117 = vmatprep.subr.bf16.mxu0 0
        %3118 = vmatpush1.bf16.msra.mxu0 %v3098
        %3119 = vmatprep.subr.bf16.mxu0 0
        %3120 = vmatpush1.bf16.msra.mxu0 %v3099
        %3121 = vmatprep.subr.bf16.mxu0 0
        %3122 = vmatpush1.bf16.msra.mxu0 %v3100
        %3123 = vmatprep.subr.bf16.mxu0 0
        %3124 = vmatpush1.bf16.msra.mxu0 %v3101
        %3125 = vmatprep.subr.bf16.mxu0 0
        %3126 = vmatpush1.bf16.msra.mxu0 %v3102
        %3127 = vmatprep.subr.bf16.mxu0 0
        %3128 = vmatpush1.bf16.msra.mxu0 0
        %3129 = vmatprep.subr.bf16.mxu0 0
        %3130 = vmatpush1.bf16.msra.mxu0 0
        %3131 = vmatprep.subr.bf16.mxu0 0
        %3132 = vmatpush1.bf16.msra.mxu0 0
        %3133 = vmatprep.subr.bf16.mxu0 0
        %3134 = vmatpush1.bf16.msra.mxu0 0
        %3135 = vmatprep.subr.bf16.mxu0 0
        %3136 = vmatpush1.bf16.msra.mxu0 0
        %3137 = vmatprep.subr.bf16.mxu0 0
        %3138 = vmatpush1.bf16.msra.mxu0 0
        %3139 = vmatprep.subr.bf16.mxu0 0
        %3140 = vmatpush1.bf16.msra.mxu0 0
        %3141 = vmatprep.subr.bf16.mxu0 0
        %3142 = vmatpush1.bf16.msra.mxu0 0
        %3143 = vmatprep.mubr.bf16.mxu0 0
        %3144 = vmatmul.mubr.bf16.gmra.mrb[0].mxu0 %v3039
        %v3145 = vpop.f32.mrb[0].mxu0
        %v3146 = vadd.f32 0.0, %v3145
        %v3147 = vpop.f32.mrb[0].mxu0
        %v3148 = vpop.f32.mrb[0].mxu0
        %v3149 = vadd.f32 0.0, %v3148
        %v3150 = vpop.f32.mrb[0].mxu0
        %3151 = vmatprep.mubr.bf16.mxu0 0
        %3152 = vmatmul.mubr.bf16.gmra.mrb[0].mxu0 %v3040
        %v3153 = vpop.f32.mrb[0].mxu0
        %v3154 = vadd.f32 0.0, %v3153
        %v3155 = vpop.f32.mrb[0].mxu0
        %v3156 = vpop.f32.mrb[0].mxu0
        %v3157 = vadd.f32 0.0, %v3156
        %v3158 = vpop.f32.mrb[0].mxu0
        %3159 = vmatprep.mubr.bf16.mxu0 0
        %3160 = vmatmul.mubr.bf16.gmra.mrb[0].mxu0 %v3041
        %v3161 = vpop.f32.mrb[0].mxu0
        %v3162 = vadd.f32 0.0, %v3161
        %v3163 = vpop.f32.mrb[0].mxu0
        %v3164 = vpop.f32.mrb[0].mxu0
        %v3165 = vadd.f32 0.0, %v3164
        %v3166 = vpop.f32.mrb[0].mxu0
        %3167 = vmatprep.mubr.bf16.mxu0 0
        %3168 = vmatmul.mubr.bf16.gmra.mrb[0].mxu0 %v3042
        %v3169 = vpop.f32.mrb[0].mxu0
        %v3170 = vadd.f32 0.0, %v3169
        %v3171 = vpop.f32.mrb[0].mxu0
        %v3172 = vpop.f32.mrb[0].mxu0
        %v3173 = vadd.f32 0.0, %v3172
        %v3174 = vpop.f32.mrb[0].mxu0
        %3175 = vmatprep.mubr.bf16.mxu0 0
        %3176 = vmatmul.mubr.bf16.gmra.mrb[0].mxu0 %v3043
        %v3177 = vpop.f32.mrb[0].mxu0
        %v3178 = vadd.f32 0.0, %v3177
        %v3179 = vpop.f32.mrb[0].mxu0
        %v3180 = vpop.f32.mrb[0].mxu0
        %v3181 = vadd.f32 0.0, %v3180
        %v3182 = vpop.f32.mrb[0].mxu0
        %3183 = vmatprep.mubr.bf16.mxu0 0
        %3184 = vmatmul.mubr.bf16.gmra.mrb[0].mxu0 %v3044
        %v3185 = vpop.f32.mrb[0].mxu0
        %v3186 = vadd.f32 0.0, %v3185
        %v3187 = vpop.f32.mrb[0].mxu0
        %v3188 = vpop.f32.mrb[0].mxu0
        %v3189 = vadd.f32 0.0, %v3188
        %v3190 = vpop.f32.mrb[0].mxu0
        %3191 = vmatprep.mubr.bf16.mxu0 0
        %3192 = vmatmul.mubr.bf16.gmra.mrb[0].mxu0 %v3045
        %v3193 = vpop.f32.mrb[0].mxu0
        %v3194 = vadd.f32 0.0, %v3193
        %v3195 = vpop.f32.mrb[0].mxu0
        %v3196 = vpop.f32.mrb[0].mxu0
        %v3197 = vadd.f32 0.0, %v3196
        %v3198 = vpop.f32.mrb[0].mxu0
        %3199 = vmatprep.mubr.bf16.mxu0 0
        %3200 = vmatmul.mubr.bf16.gmra.mrb[0].mxu0 %v3046
        %v3201 = vpop.f32.mrb[0].mxu0
        %v3202 = vadd.f32 0.0, %v3201
        %v3203 = vpop.f32.mrb[0].mxu0
        %v3204 = vpop.f32.mrb[0].mxu0
        %v3205 = vadd.f32 0.0, %v3204
        %v3206 = vpop.f32.mrb[0].mxu0
        %3207 = vdwg.mxu0
        %v3208 = vadd.f32 %v2622, %v3146
        %v3209 = vadd.f32 %v2623, %v3149
        %v3210 = vadd.f32 %v2624, %v3154
        %v3211 = vadd.f32 %v2625, %v3157
        %v3212 = vadd.f32 %v2626, %v3162
        %v3213 = vadd.f32 %v2627, %v3165
        %v3214 = vadd.f32 %v2628, %v3170
        %v3215 = vadd.f32 %v2629, %v3173
        %v3216 = vadd.f32 %v2630, %v3178
        %v3217 = vadd.f32 %v2631, %v3181
        %v3218 = vadd.f32 %v2632, %v3186
        %v3219 = vadd.f32 %v2633, %v3189
        %v3220 = vadd.f32 %v2634, %v3194
        %v3221 = vadd.f32 %v2635, %v3197
        %v3222 = vadd.f32 %v2636, %v3202
        %v3223 = vadd.f32 %v2637, %v3205
        %3224 = vset.pattern.permute.xlu0 5
        %3225 = vperm.xlu0 %3224, %v277
        %v3226 = vpop.permute.xlu0 %3225
        %3228 = vset.pattern.permute.xlu0 5
        %3229 = vperm.xlu0 %3228, %v278
        %v3230 = vpop.permute.xlu0 %3229
        %3232 = vset.pattern.permute.xlu0 5
        %3233 = vperm.xlu0 %3232, %v279
        %v3234 = vpop.permute.xlu0 %3233
        %3236 = vset.pattern.permute.xlu0 5
        %3237 = vperm.xlu0 %3236, %v280
        %v3238 = vpop.permute.xlu0 %3237
        %3240 = vset.pattern.permute.xlu0 5
        %3241 = vperm.xlu0 %3240, %v281
        %v3242 = vpop.permute.xlu0 %3241
        %3244 = vset.pattern.permute.xlu0 5
        %3245 = vperm.xlu0 %3244, %v282
        %v3246 = vpop.permute.xlu0 %3245
        %3248 = vset.pattern.permute.xlu0 5
        %3249 = vperm.xlu0 %3248, %v283
        %v3250 = vpop.permute.xlu0 %3249
        %3252 = vset.pattern.permute.xlu0 5
        %3253 = vperm.xlu0 %3252, %v284
        %v3254 = vpop.permute.xlu0 %3253
        %3256 = vset.pattern.permute.xlu0 5
        %3257 = vperm.xlu0 %3256, %v285
        %v3258 = vpop.permute.xlu0 %3257
        %3260 = vset.pattern.permute.xlu0 5
        %3261 = vperm.xlu0 %3260, %v286
        %v3262 = vpop.permute.xlu0 %3261
        %3264 = vset.pattern.permute.xlu0 5
        %3265 = vperm.xlu0 %3264, %v287
        %v3266 = vpop.permute.xlu0 %3265
        %3268 = vset.pattern.permute.xlu0 5
        %3269 = vperm.xlu0 %3268, %v288
        %v3270 = vpop.permute.xlu0 %3269
        %3272 = vset.pattern.permute.xlu0 5
        %3273 = vperm.xlu0 %3272, %v289
        %v3274 = vpop.permute.xlu0 %3273
        %3276 = vset.pattern.permute.xlu0 5
        %3277 = vperm.xlu0 %3276, %v290
        %v3278 = vpop.permute.xlu0 %3277
        %3280 = vset.pattern.permute.xlu0 5
        %3281 = vperm.xlu0 %3280, %v291
        %v3282 = vpop.permute.xlu0 %3281
        %3284 = vset.pattern.permute.xlu0 5
        %3285 = vperm.xlu0 %3284, %v292
        %v3286 = vpop.permute.xlu0 %3285
        %v3288 = vsub.f32 %v295, %v3226
        %v3289 = vsub.f32 %v295, %v3230
        %v3290 = vsub.f32 %v295, %v3234
        %v3291 = vsub.f32 %v295, %v3238
        %v3292 = vsub.f32 %v295, %v3242
        %v3293 = vsub.f32 %v295, %v3246
        %v3294 = vsub.f32 %v295, %v3250
        %v3295 = vsub.f32 %v295, %v3254
        %v3296 = vsub.f32 %v295, %v3258
        %v3297 = vsub.f32 %v295, %v3262
        %v3298 = vsub.f32 %v295, %v3266
        %v3299 = vsub.f32 %v295, %v3270
        %v3300 = vsub.f32 %v295, %v3274
        %v3301 = vsub.f32 %v295, %v3278
        %v3302 = vsub.f32 %v295, %v3282
        %v3303 = vsub.f32 %v295, %v3286
        %v3304 = vand.u32 2147483647, %v3288
        %v3305 = vand.u32 2147483647, %v3289
        %v3306 = vand.u32 2147483647, %v3290
        %v3307 = vand.u32 2147483647, %v3291
        %v3308 = vand.u32 2147483647, %v3292
        %v3309 = vand.u32 2147483647, %v3293
        %v3310 = vand.u32 2147483647, %v3294
        %v3311 = vand.u32 2147483647, %v3295
        %v3312 = vand.u32 2147483647, %v3296
        %v3313 = vand.u32 2147483647, %v3297
        %v3314 = vand.u32 2147483647, %v3298
        %v3315 = vand.u32 2147483647, %v3299
        %v3316 = vand.u32 2147483647, %v3300
        %v3317 = vand.u32 2147483647, %v3301
        %v3318 = vand.u32 2147483647, %v3302
        %v3319 = vand.u32 2147483647, %v3303
        %v3320 = vsub.f32 1.0, %v3304
        %v3321 = vsub.f32 1.0, %v3305
        %v3322 = vsub.f32 1.0, %v3306
        %v3323 = vsub.f32 1.0, %v3307
        %v3324 = vsub.f32 1.0, %v3308
        %v3325 = vsub.f32 1.0, %v3309
        %v3326 = vsub.f32 1.0, %v3310
        %v3327 = vsub.f32 1.0, %v3311
        %v3328 = vsub.f32 1.0, %v3312
        %v3329 = vsub.f32 1.0, %v3313
        %v3330 = vsub.f32 1.0, %v3314
        %v3331 = vsub.f32 1.0, %v3315
        %v3332 = vsub.f32 1.0, %v3316
        %v3333 = vsub.f32 1.0, %v3317
        %v3334 = vsub.f32 1.0, %v3318
        %v3335 = vsub.f32 1.0, %v3319
        %v3336 = vmax.f32 %v3320, 0.0
        %v3337 = vmax.f32 %v3321, 0.0
        %v3338 = vmax.f32 %v3322, 0.0
        %v3339 = vmax.f32 %v3323, 0.0
        %v3340 = vmax.f32 %v3324, 0.0
        %v3341 = vmax.f32 %v3325, 0.0
        %v3342 = vmax.f32 %v3326, 0.0
        %v3343 = vmax.f32 %v3327, 0.0
        %v3344 = vmax.f32 %v3328, 0.0
        %v3345 = vmax.f32 %v3329, 0.0
        %v3346 = vmax.f32 %v3330, 0.0
        %v3347 = vmax.f32 %v3331, 0.0
        %v3348 = vmax.f32 %v3332, 0.0
        %v3349 = vmax.f32 %v3333, 0.0
        %v3350 = vmax.f32 %v3334, 0.0
        %v3351 = vmax.f32 %v3335, 0.0
        %3352 = vset.pattern.permute.xlu0 14
        %3353 = vperm.xlu0 %3352, %v277
        %v3354 = vpop.permute.xlu0 %3353
        %3356 = vset.pattern.permute.xlu0 14
        %3357 = vperm.xlu0 %3356, %v278
        %v3358 = vpop.permute.xlu0 %3357
        %3360 = vset.pattern.permute.xlu0 14
        %3361 = vperm.xlu0 %3360, %v279
        %v3362 = vpop.permute.xlu0 %3361
        %3364 = vset.pattern.permute.xlu0 14
        %3365 = vperm.xlu0 %3364, %v280
        %v3366 = vpop.permute.xlu0 %3365
        %3368 = vset.pattern.permute.xlu0 14
        %3369 = vperm.xlu0 %3368, %v281
        %v3370 = vpop.permute.xlu0 %3369
        %3372 = vset.pattern.permute.xlu0 14
        %3373 = vperm.xlu0 %3372, %v282
        %v3374 = vpop.permute.xlu0 %3373
        %3376 = vset.pattern.permute.xlu0 14
        %3377 = vperm.xlu0 %3376, %v283
        %v3378 = vpop.permute.xlu0 %3377
        %3380 = vset.pattern.permute.xlu0 14
        %3381 = vperm.xlu0 %3380, %v284
        %v3382 = vpop.permute.xlu0 %3381
        %3384 = vset.pattern.permute.xlu0 14
        %3385 = vperm.xlu0 %3384, %v285
        %v3386 = vpop.permute.xlu0 %3385
        %3388 = vset.pattern.permute.xlu0 14
        %3389 = vperm.xlu0 %3388, %v286
        %v3390 = vpop.permute.xlu0 %3389
        %3392 = vset.pattern.permute.xlu0 14
        %3393 = vperm.xlu0 %3392, %v287
        %v3394 = vpop.permute.xlu0 %3393
        %3396 = vset.pattern.permute.xlu0 14
        %3397 = vperm.xlu0 %3396, %v288
        %v3398 = vpop.permute.xlu0 %3397
        %3400 = vset.pattern.permute.xlu0 14
        %3401 = vperm.xlu0 %3400, %v289
        %v3402 = vpop.permute.xlu0 %3401
        %3404 = vset.pattern.permute.xlu0 14
        %3405 = vperm.xlu0 %3404, %v290
        %v3406 = vpop.permute.xlu0 %3405
        %3408 = vset.pattern.permute.xlu0 14
        %3409 = vperm.xlu0 %3408, %v291
        %v3410 = vpop.permute.xlu0 %3409
        %3412 = vset.pattern.permute.xlu0 14
        %3413 = vperm.xlu0 %3412, %v292
        %v3414 = vpop.permute.xlu0 %3413
        %v3416 = vsub.f32 %v301, %v3354
        %v3417 = vsub.f32 %v301, %v3358
        %v3418 = vsub.f32 %v301, %v3362
        %v3419 = vsub.f32 %v301, %v3366
        %v3420 = vsub.f32 %v301, %v3370
        %v3421 = vsub.f32 %v301, %v3374
        %v3422 = vsub.f32 %v301, %v3378
        %v3423 = vsub.f32 %v301, %v3382
        %v3424 = vsub.f32 %v301, %v3386
        %v3425 = vsub.f32 %v301, %v3390
        %v3426 = vsub.f32 %v301, %v3394
        %v3427 = vsub.f32 %v301, %v3398
        %v3428 = vsub.f32 %v301, %v3402
        %v3429 = vsub.f32 %v301, %v3406
        %v3430 = vsub.f32 %v301, %v3410
        %v3431 = vsub.f32 %v301, %v3414
        %v3432 = vand.u32 2147483647, %v3416
        %v3433 = vand.u32 2147483647, %v3417
        %v3434 = vand.u32 2147483647, %v3418
        %v3435 = vand.u32 2147483647, %v3419
        %v3436 = vand.u32 2147483647, %v3420
        %v3437 = vand.u32 2147483647, %v3421
        %v3438 = vand.u32 2147483647, %v3422
        %v3439 = vand.u32 2147483647, %v3423
        %v3440 = vand.u32 2147483647, %v3424
        %v3441 = vand.u32 2147483647, %v3425
        %v3442 = vand.u32 2147483647, %v3426
        %v3443 = vand.u32 2147483647, %v3427
        %v3444 = vand.u32 2147483647, %v3428
        %v3445 = vand.u32 2147483647, %v3429
        %v3446 = vand.u32 2147483647, %v3430
        %v3447 = vand.u32 2147483647, %v3431
        %v3448 = vsub.f32 1.0, %v3432
        %v3449 = vsub.f32 1.0, %v3433
        %v3450 = vsub.f32 1.0, %v3434
        %v3451 = vsub.f32 1.0, %v3435
        %v3452 = vsub.f32 1.0, %v3436
        %v3453 = vsub.f32 1.0, %v3437
        %v3454 = vsub.f32 1.0, %v3438
        %v3455 = vsub.f32 1.0, %v3439
        %v3456 = vsub.f32 1.0, %v3440
        %v3457 = vsub.f32 1.0, %v3441
        %v3458 = vsub.f32 1.0, %v3442
        %v3459 = vsub.f32 1.0, %v3443
        %v3460 = vsub.f32 1.0, %v3444
        %v3461 = vsub.f32 1.0, %v3445
        %v3462 = vsub.f32 1.0, %v3446
        %v3463 = vsub.f32 1.0, %v3447
        %v3464 = vmax.f32 %v3448, 0.0
        %v3465 = vmax.f32 %v3449, 0.0
        %v3466 = vmax.f32 %v3450, 0.0
        %v3467 = vmax.f32 %v3451, 0.0
        %v3468 = vmax.f32 %v3452, 0.0
        %v3469 = vmax.f32 %v3453, 0.0
        %v3470 = vmax.f32 %v3454, 0.0
        %v3471 = vmax.f32 %v3455, 0.0
        %v3472 = vmax.f32 %v3456, 0.0
        %v3473 = vmax.f32 %v3457, 0.0
        %v3474 = vmax.f32 %v3458, 0.0
        %v3475 = vmax.f32 %v3459, 0.0
        %v3476 = vmax.f32 %v3460, 0.0
        %v3477 = vmax.f32 %v3461, 0.0
        %v3478 = vmax.f32 %v3462, 0.0
        %v3479 = vmax.f32 %v3463, 0.0
        %v3480 = vpack.c.bf16 %v3337, %v3336
        %v3481 = vpack.c.bf16 %v3339, %v3338
        %v3482 = vpack.c.bf16 %v3341, %v3340
        %v3483 = vpack.c.bf16 %v3343, %v3342
        %v3484 = vpack.c.bf16 %v3345, %v3344
        %v3485 = vpack.c.bf16 %v3347, %v3346
        %v3486 = vpack.c.bf16 %v3349, %v3348
        %v3487 = vpack.c.bf16 %v3351, %v3350
        %v3489 = vsel %vm589, %v3480, 0
        %v3492 = vsel %vm589, %v3481, 0
        %v3495 = vsel %vm589, %v3482, 0
        %v3498 = vsel %vm589, %v3483, 0
        %v3501 = vsel %vm589, %v3484, 0
        %v3504 = vsel %vm589, %v3485, 0
        %v3507 = vsel %vm589, %v3486, 0
        %v3510 = vsel %vm589, %v3487, 0
        %3512 = vmatprep.subr.bf16.mxu0 0
        %3513 = vmatpush1.bf16.msra.mxu0 %v587
        %3514 = vmatprep.subr.bf16.mxu0 0
        %3515 = vmatpush1.bf16.msra.mxu0 0
        %3516 = vmatprep.subr.bf16.mxu0 0
        %3517 = vmatpush1.bf16.msra.mxu0 0
        %3518 = vmatprep.subr.bf16.mxu0 0
        %3519 = vmatpush1.bf16.msra.mxu0 0
        %3520 = vmatprep.subr.bf16.mxu0 0
        %3521 = vmatpush1.bf16.msra.mxu0 0
        %3522 = vmatprep.subr.bf16.mxu0 0
        %3523 = vmatpush1.bf16.msra.mxu0 0
        %3524 = vmatprep.subr.bf16.mxu0 0
        %3525 = vmatpush1.bf16.msra.mxu0 0
        %3526 = vmatprep.subr.bf16.mxu0 0
        %3527 = vmatpush1.bf16.msra.mxu0 0
        %3528 = vmatprep.subr.bf16.mxu0 0
        %3529 = vmatpush1.bf16.msra.mxu0 0
        %3530 = vmatprep.subr.bf16.mxu0 0
        %3531 = vmatpush1.bf16.msra.mxu0 0
        %3532 = vmatprep.subr.bf16.mxu0 0
        %3533 = vmatpush1.bf16.msra.mxu0 0
        %3534 = vmatprep.subr.bf16.mxu0 0
        %3535 = vmatpush1.bf16.msra.mxu0 0
        %3536 = vmatprep.subr.bf16.mxu0 0
        %3537 = vmatpush1.bf16.msra.mxu0 0
        %3538 = vmatprep.subr.bf16.mxu0 0
        %3539 = vmatpush1.bf16.msra.mxu0 0
        %3540 = vmatprep.subr.bf16.mxu0 0
        %3541 = vmatpush1.bf16.msra.mxu0 0
        %3542 = vmatprep.subr.bf16.mxu0 0
        %3543 = vmatpush1.bf16.msra.mxu0 0
        %3544 = vmatprep.mubr.bf16.mxu0 0
        %3545 = vmatmul.mubr.bf16.gmra.mrb[0].mxu0 %v3489
        %v3546 = vpop.f32.mrb[0].mxu0
        %v3547 = vadd.f32 0.0, %v3546
        %v3548 = vpop.f32.mrb[0].mxu0
        %v3549 = vpop.f32.mrb[0].mxu0
        %v3550 = vadd.f32 0.0, %v3549
        %v3551 = vpop.f32.mrb[0].mxu0
        %3552 = vmatprep.mubr.bf16.mxu0 0
        %3553 = vmatmul.mubr.bf16.gmra.mrb[0].mxu0 %v3492
        %v3554 = vpop.f32.mrb[0].mxu0
        %v3555 = vadd.f32 0.0, %v3554
        %v3556 = vpop.f32.mrb[0].mxu0
        %v3557 = vpop.f32.mrb[0].mxu0
        %v3558 = vadd.f32 0.0, %v3557
        %v3559 = vpop.f32.mrb[0].mxu0
        %3560 = vmatprep.mubr.bf16.mxu0 0
        %3561 = vmatmul.mubr.bf16.gmra.mrb[0].mxu0 %v3495
        %v3562 = vpop.f32.mrb[0].mxu0
        %v3563 = vadd.f32 0.0, %v3562
        %v3564 = vpop.f32.mrb[0].mxu0
        %v3565 = vpop.f32.mrb[0].mxu0
        %v3566 = vadd.f32 0.0, %v3565
        %v3567 = vpop.f32.mrb[0].mxu0
        %3568 = vmatprep.mubr.bf16.mxu0 0
        %3569 = vmatmul.mubr.bf16.gmra.mrb[0].mxu0 %v3498
        %v3570 = vpop.f32.mrb[0].mxu0
        %v3571 = vadd.f32 0.0, %v3570
        %v3572 = vpop.f32.mrb[0].mxu0
        %v3573 = vpop.f32.mrb[0].mxu0
        %v3574 = vadd.f32 0.0, %v3573
        %v3575 = vpop.f32.mrb[0].mxu0
        %3576 = vmatprep.mubr.bf16.mxu0 0
        %3577 = vmatmul.mubr.bf16.gmra.mrb[0].mxu0 %v3501
        %v3578 = vpop.f32.mrb[0].mxu0
        %v3579 = vadd.f32 0.0, %v3578
        %v3580 = vpop.f32.mrb[0].mxu0
        %v3581 = vpop.f32.mrb[0].mxu0
        %v3582 = vadd.f32 0.0, %v3581
        %v3583 = vpop.f32.mrb[0].mxu0
        %3584 = vmatprep.mubr.bf16.mxu0 0
        %3585 = vmatmul.mubr.bf16.gmra.mrb[0].mxu0 %v3504
        %v3586 = vpop.f32.mrb[0].mxu0
        %v3587 = vadd.f32 0.0, %v3586
        %v3588 = vpop.f32.mrb[0].mxu0
        %v3589 = vpop.f32.mrb[0].mxu0
        %v3590 = vadd.f32 0.0, %v3589
        %v3591 = vpop.f32.mrb[0].mxu0
        %3592 = vmatprep.mubr.bf16.mxu0 0
        %3593 = vmatmul.mubr.bf16.gmra.mrb[0].mxu0 %v3507
        %v3594 = vpop.f32.mrb[0].mxu0
        %v3595 = vadd.f32 0.0, %v3594
        %v3596 = vpop.f32.mrb[0].mxu0
        %v3597 = vpop.f32.mrb[0].mxu0
        %v3598 = vadd.f32 0.0, %v3597
        %v3599 = vpop.f32.mrb[0].mxu0
        %3600 = vmatprep.mubr.bf16.mxu0 0
        %3601 = vmatmul.mubr.bf16.gmra.mrb[0].mxu0 %v3510
        %v3602 = vpop.f32.mrb[0].mxu0
        %v3603 = vadd.f32 0.0, %v3602
        %v3604 = vpop.f32.mrb[0].mxu0
        %v3605 = vpop.f32.mrb[0].mxu0
        %v3606 = vadd.f32 0.0, %v3605
        %v3607 = vpop.f32.mrb[0].mxu0
        %3608 = vdwg.mxu0
        %v3609 = vmul.f32 %v3464, %v3547
        %v3610 = vmul.f32 %v3465, %v3550
        %v3611 = vmul.f32 %v3466, %v3555
        %v3612 = vmul.f32 %v3467, %v3558
        %v3613 = vmul.f32 %v3468, %v3563
        %v3614 = vmul.f32 %v3469, %v3566
        %v3615 = vmul.f32 %v3470, %v3571
        %v3616 = vmul.f32 %v3471, %v3574
        %v3617 = vmul.f32 %v3472, %v3579
        %v3618 = vmul.f32 %v3473, %v3582
        %v3619 = vmul.f32 %v3474, %v3587
        %v3620 = vmul.f32 %v3475, %v3590
        %v3621 = vmul.f32 %v3476, %v3595
        %v3622 = vmul.f32 %v3477, %v3598
        %v3623 = vmul.f32 %v3478, %v3603
        %v3624 = vmul.f32 %v3479, %v3606
        %v3625 = vpack.c.bf16 %v3610, %v3609
        %v3626 = vpack.c.bf16 %v3612, %v3611
        %v3627 = vpack.c.bf16 %v3614, %v3613
        %v3628 = vpack.c.bf16 %v3616, %v3615
        %v3629 = vpack.c.bf16 %v3618, %v3617
        %v3630 = vpack.c.bf16 %v3620, %v3619
        %v3631 = vpack.c.bf16 %v3622, %v3621
        %v3632 = vpack.c.bf16 %v3624, %v3623
        %v3633 = vld [vmem:[%s3 + $0x140] sm:$0xf]
        %v3634 = vld [vmem:[%s3 + $0x144] sm:$0xf]
        %v3635 = vld [vmem:[%s3 + $0x148] sm:$0xf]
        %v3636 = vld [vmem:[%s3 + $0x14c] sm:$0xf]
        %v3637 = vld [vmem:[%s3 + $0x150] sm:$0xf]
        %v3638 = vld [vmem:[%s3 + $0x154] sm:$0xf]
        %v3639 = vld [vmem:[%s3 + $0x158] sm:$0xf]
        %v3640 = vld [vmem:[%s3 + $0x15c] sm:$0xf]
        %v3641 = vld [vmem:[%s3 + $0x160] sm:$0xf]
        %v3642 = vld [vmem:[%s3 + $0x164] sm:$0xf]
        %v3643 = vld [vmem:[%s3 + $0x168] sm:$0xf]
        %v3644 = vld [vmem:[%s3 + $0x16c] sm:$0xf]
        %v3645 = vld [vmem:[%s3 + $0x170] sm:$0xf]
        %v3646 = vld [vmem:[%s3 + $0x174] sm:$0xf]
        %v3647 = vld [vmem:[%s3 + $0x178] sm:$0xf]
        %v3648 = vld [vmem:[%s3 + $0x17c] sm:$0xf]
        %v3665 = vunpack.c.l.b16 %v3633
        %v3666 = vunpack.c.l.b16 %v3634
        %v3667 = vunpack.c.l.b16 %v3635
        %v3668 = vunpack.c.l.b16 %v3636
        %v3669 = vunpack.c.l.b16 %v3637
        %v3670 = vunpack.c.l.b16 %v3638
        %v3671 = vunpack.c.l.b16 %v3639
        %v3672 = vunpack.c.l.b16 %v3640
        %v3673 = vunpack.c.l.b16 %v3641
        %v3674 = vunpack.c.l.b16 %v3642
        %v3675 = vunpack.c.l.b16 %v3643
        %v3676 = vunpack.c.l.b16 %v3644
        %v3677 = vunpack.c.l.b16 %v3645
        %v3678 = vunpack.c.l.b16 %v3646
        %v3679 = vunpack.c.l.b16 %v3647
        %v3680 = vunpack.c.l.b16 %v3648
        %v3681 = vpack.c.b16 %v3666, %v3665
        %v3682 = vpack.c.b16 %v3668, %v3667
        %v3683 = vpack.c.b16 %v3670, %v3669
        %v3684 = vpack.c.b16 %v3672, %v3671
        %v3685 = vpack.c.b16 %v3674, %v3673
        %v3686 = vpack.c.b16 %v3676, %v3675
        %v3687 = vpack.c.b16 %v3678, %v3677
        %v3688 = vpack.c.b16 %v3680, %v3679
        %3697 = vmatprep.subr.bf16.mxu0 0
        %3698 = vmatpush1.bf16.msra.mxu0 %v3681
        %3699 = vmatprep.subr.bf16.mxu0 0
        %3700 = vmatpush1.bf16.msra.mxu0 %v3682
        %3701 = vmatprep.subr.bf16.mxu0 0
        %3702 = vmatpush1.bf16.msra.mxu0 %v3683
        %3703 = vmatprep.subr.bf16.mxu0 0
        %3704 = vmatpush1.bf16.msra.mxu0 %v3684
        %3705 = vmatprep.subr.bf16.mxu0 0
        %3706 = vmatpush1.bf16.msra.mxu0 %v3685
        %3707 = vmatprep.subr.bf16.mxu0 0
        %3708 = vmatpush1.bf16.msra.mxu0 %v3686
        %3709 = vmatprep.subr.bf16.mxu0 0
        %3710 = vmatpush1.bf16.msra.mxu0 %v3687
        %3711 = vmatprep.subr.bf16.mxu0 0
        %3712 = vmatpush1.bf16.msra.mxu0 %v3688
        %3713 = vmatprep.subr.bf16.mxu0 0
        %3714 = vmatpush1.bf16.msra.mxu0 0
        %3715 = vmatprep.subr.bf16.mxu0 0
        %3716 = vmatpush1.bf16.msra.mxu0 0
        %3717 = vmatprep.subr.bf16.mxu0 0
        %3718 = vmatpush1.bf16.msra.mxu0 0
        %3719 = vmatprep.subr.bf16.mxu0 0
        %3720 = vmatpush1.bf16.msra.mxu0 0
        %3721 = vmatprep.subr.bf16.mxu0 0
        %3722 = vmatpush1.bf16.msra.mxu0 0
        %3723 = vmatprep.subr.bf16.mxu0 0
        %3724 = vmatpush1.bf16.msra.mxu0 0
        %3725 = vmatprep.subr.bf16.mxu0 0
        %3726 = vmatpush1.bf16.msra.mxu0 0
        %3727 = vmatprep.subr.bf16.mxu0 0
        %3728 = vmatpush1.bf16.msra.mxu0 0
        %3729 = vmatprep.mubr.bf16.mxu0 0
        %3730 = vmatmul.mubr.bf16.gmra.mrb[0].mxu0 %v3625
        %v3731 = vpop.f32.mrb[0].mxu0
        %v3732 = vadd.f32 0.0, %v3731
        %v3733 = vpop.f32.mrb[0].mxu0
        %v3734 = vpop.f32.mrb[0].mxu0
        %v3735 = vadd.f32 0.0, %v3734
        %v3736 = vpop.f32.mrb[0].mxu0
        %3737 = vmatprep.mubr.bf16.mxu0 0
        %3738 = vmatmul.mubr.bf16.gmra.mrb[0].mxu0 %v3626
        %v3739 = vpop.f32.mrb[0].mxu0
        %v3740 = vadd.f32 0.0, %v3739
        %v3741 = vpop.f32.mrb[0].mxu0
        %v3742 = vpop.f32.mrb[0].mxu0
        %v3743 = vadd.f32 0.0, %v3742
        %v3744 = vpop.f32.mrb[0].mxu0
        %3745 = vmatprep.mubr.bf16.mxu0 0
        %3746 = vmatmul.mubr.bf16.gmra.mrb[0].mxu0 %v3627
        %v3747 = vpop.f32.mrb[0].mxu0
        %v3748 = vadd.f32 0.0, %v3747
        %v3749 = vpop.f32.mrb[0].mxu0
        %v3750 = vpop.f32.mrb[0].mxu0
        %v3751 = vadd.f32 0.0, %v3750
        %v3752 = vpop.f32.mrb[0].mxu0
        %3753 = vmatprep.mubr.bf16.mxu0 0
        %3754 = vmatmul.mubr.bf16.gmra.mrb[0].mxu0 %v3628
        %v3755 = vpop.f32.mrb[0].mxu0
        %v3756 = vadd.f32 0.0, %v3755
        %v3757 = vpop.f32.mrb[0].mxu0
        %v3758 = vpop.f32.mrb[0].mxu0
        %v3759 = vadd.f32 0.0, %v3758
        %v3760 = vpop.f32.mrb[0].mxu0
        %3761 = vmatprep.mubr.bf16.mxu0 0
        %3762 = vmatmul.mubr.bf16.gmra.mrb[0].mxu0 %v3629
        %v3763 = vpop.f32.mrb[0].mxu0
        %v3764 = vadd.f32 0.0, %v3763
        %v3765 = vpop.f32.mrb[0].mxu0
        %v3766 = vpop.f32.mrb[0].mxu0
        %v3767 = vadd.f32 0.0, %v3766
        %v3768 = vpop.f32.mrb[0].mxu0
        %3769 = vmatprep.mubr.bf16.mxu0 0
        %3770 = vmatmul.mubr.bf16.gmra.mrb[0].mxu0 %v3630
        %v3771 = vpop.f32.mrb[0].mxu0
        %v3772 = vadd.f32 0.0, %v3771
        %v3773 = vpop.f32.mrb[0].mxu0
        %v3774 = vpop.f32.mrb[0].mxu0
        %v3775 = vadd.f32 0.0, %v3774
        %v3776 = vpop.f32.mrb[0].mxu0
        %3777 = vmatprep.mubr.bf16.mxu0 0
        %3778 = vmatmul.mubr.bf16.gmra.mrb[0].mxu0 %v3631
        %v3779 = vpop.f32.mrb[0].mxu0
        %v3780 = vadd.f32 0.0, %v3779
        %v3781 = vpop.f32.mrb[0].mxu0
        %v3782 = vpop.f32.mrb[0].mxu0
        %v3783 = vadd.f32 0.0, %v3782
        %v3784 = vpop.f32.mrb[0].mxu0
        %3785 = vmatprep.mubr.bf16.mxu0 0
        %3786 = vmatmul.mubr.bf16.gmra.mrb[0].mxu0 %v3632
        %v3787 = vpop.f32.mrb[0].mxu0
        %v3788 = vadd.f32 0.0, %v3787
        %v3789 = vpop.f32.mrb[0].mxu0
        %v3790 = vpop.f32.mrb[0].mxu0
        %v3791 = vadd.f32 0.0, %v3790
        %v3792 = vpop.f32.mrb[0].mxu0
        %3793 = vdwg.mxu0
        %v3794 = vadd.f32 %v3208, %v3732
        %v3795 = vadd.f32 %v3209, %v3735
        %v3796 = vadd.f32 %v3210, %v3740
        %v3797 = vadd.f32 %v3211, %v3743
        %v3798 = vadd.f32 %v3212, %v3748
        %v3799 = vadd.f32 %v3213, %v3751
        %v3800 = vadd.f32 %v3214, %v3756
        %v3801 = vadd.f32 %v3215, %v3759
        %v3802 = vadd.f32 %v3216, %v3764
        %v3803 = vadd.f32 %v3217, %v3767
        %v3804 = vadd.f32 %v3218, %v3772
        %v3805 = vadd.f32 %v3219, %v3775
        %v3806 = vadd.f32 %v3220, %v3780
        %v3807 = vadd.f32 %v3221, %v3783
        %v3808 = vadd.f32 %v3222, %v3788
        %v3809 = vadd.f32 %v3223, %v3791
        %3810 = vset.pattern.permute.xlu0 6
        %3811 = vperm.xlu0 %3810, %v277
        %v3812 = vpop.permute.xlu0 %3811
        %3814 = vset.pattern.permute.xlu0 6
        %3815 = vperm.xlu0 %3814, %v278
        %v3816 = vpop.permute.xlu0 %3815
        %3818 = vset.pattern.permute.xlu0 6
        %3819 = vperm.xlu0 %3818, %v279
        %v3820 = vpop.permute.xlu0 %3819
        %3822 = vset.pattern.permute.xlu0 6
        %3823 = vperm.xlu0 %3822, %v280
        %v3824 = vpop.permute.xlu0 %3823
        %3826 = vset.pattern.permute.xlu0 6
        %3827 = vperm.xlu0 %3826, %v281
        %v3828 = vpop.permute.xlu0 %3827
        %3830 = vset.pattern.permute.xlu0 6
        %3831 = vperm.xlu0 %3830, %v282
        %v3832 = vpop.permute.xlu0 %3831
        %3834 = vset.pattern.permute.xlu0 6
        %3835 = vperm.xlu0 %3834, %v283
        %v3836 = vpop.permute.xlu0 %3835
        %3838 = vset.pattern.permute.xlu0 6
        %3839 = vperm.xlu0 %3838, %v284
        %v3840 = vpop.permute.xlu0 %3839
        %3842 = vset.pattern.permute.xlu0 6
        %3843 = vperm.xlu0 %3842, %v285
        %v3844 = vpop.permute.xlu0 %3843
        %3846 = vset.pattern.permute.xlu0 6
        %3847 = vperm.xlu0 %3846, %v286
        %v3848 = vpop.permute.xlu0 %3847
        %3850 = vset.pattern.permute.xlu0 6
        %3851 = vperm.xlu0 %3850, %v287
        %v3852 = vpop.permute.xlu0 %3851
        %3854 = vset.pattern.permute.xlu0 6
        %3855 = vperm.xlu0 %3854, %v288
        %v3856 = vpop.permute.xlu0 %3855
        %3858 = vset.pattern.permute.xlu0 6
        %3859 = vperm.xlu0 %3858, %v289
        %v3860 = vpop.permute.xlu0 %3859
        %3862 = vset.pattern.permute.xlu0 6
        %3863 = vperm.xlu0 %3862, %v290
        %v3864 = vpop.permute.xlu0 %3863
        %3866 = vset.pattern.permute.xlu0 6
        %3867 = vperm.xlu0 %3866, %v291
        %v3868 = vpop.permute.xlu0 %3867
        %3870 = vset.pattern.permute.xlu0 6
        %3871 = vperm.xlu0 %3870, %v292
        %v3872 = vpop.permute.xlu0 %3871
        %v3874 = vsub.f32 %v295, %v3812
        %v3875 = vsub.f32 %v295, %v3816
        %v3876 = vsub.f32 %v295, %v3820
        %v3877 = vsub.f32 %v295, %v3824
        %v3878 = vsub.f32 %v295, %v3828
        %v3879 = vsub.f32 %v295, %v3832
        %v3880 = vsub.f32 %v295, %v3836
        %v3881 = vsub.f32 %v295, %v3840
        %v3882 = vsub.f32 %v295, %v3844
        %v3883 = vsub.f32 %v295, %v3848
        %v3884 = vsub.f32 %v295, %v3852
        %v3885 = vsub.f32 %v295, %v3856
        %v3886 = vsub.f32 %v295, %v3860
        %v3887 = vsub.f32 %v295, %v3864
        %v3888 = vsub.f32 %v295, %v3868
        %v3889 = vsub.f32 %v295, %v3872
        %v3890 = vand.u32 2147483647, %v3874
        %v3891 = vand.u32 2147483647, %v3875
        %v3892 = vand.u32 2147483647, %v3876
        %v3893 = vand.u32 2147483647, %v3877
        %v3894 = vand.u32 2147483647, %v3878
        %v3895 = vand.u32 2147483647, %v3879
        %v3896 = vand.u32 2147483647, %v3880
        %v3897 = vand.u32 2147483647, %v3881
        %v3898 = vand.u32 2147483647, %v3882
        %v3899 = vand.u32 2147483647, %v3883
        %v3900 = vand.u32 2147483647, %v3884
        %v3901 = vand.u32 2147483647, %v3885
        %v3902 = vand.u32 2147483647, %v3886
        %v3903 = vand.u32 2147483647, %v3887
        %v3904 = vand.u32 2147483647, %v3888
        %v3905 = vand.u32 2147483647, %v3889
        %v3906 = vsub.f32 1.0, %v3890
        %v3907 = vsub.f32 1.0, %v3891
        %v3908 = vsub.f32 1.0, %v3892
        %v3909 = vsub.f32 1.0, %v3893
        %v3910 = vsub.f32 1.0, %v3894
        %v3911 = vsub.f32 1.0, %v3895
        %v3912 = vsub.f32 1.0, %v3896
        %v3913 = vsub.f32 1.0, %v3897
        %v3914 = vsub.f32 1.0, %v3898
        %v3915 = vsub.f32 1.0, %v3899
        %v3916 = vsub.f32 1.0, %v3900
        %v3917 = vsub.f32 1.0, %v3901
        %v3918 = vsub.f32 1.0, %v3902
        %v3919 = vsub.f32 1.0, %v3903
        %v3920 = vsub.f32 1.0, %v3904
        %v3921 = vsub.f32 1.0, %v3905
        %v3922 = vmax.f32 %v3906, 0.0
        %v3923 = vmax.f32 %v3907, 0.0
        %v3924 = vmax.f32 %v3908, 0.0
        %v3925 = vmax.f32 %v3909, 0.0
        %v3926 = vmax.f32 %v3910, 0.0
        %v3927 = vmax.f32 %v3911, 0.0
        %v3928 = vmax.f32 %v3912, 0.0
        %v3929 = vmax.f32 %v3913, 0.0
        %v3930 = vmax.f32 %v3914, 0.0
        %v3931 = vmax.f32 %v3915, 0.0
        %v3932 = vmax.f32 %v3916, 0.0
        %v3933 = vmax.f32 %v3917, 0.0
        %v3934 = vmax.f32 %v3918, 0.0
        %v3935 = vmax.f32 %v3919, 0.0
        %v3936 = vmax.f32 %v3920, 0.0
        %v3937 = vmax.f32 %v3921, 0.0
        %3938 = vset.pattern.permute.xlu0 15
        %3939 = vperm.xlu0 %3938, %v277
        %v3940 = vpop.permute.xlu0 %3939
        %3942 = vset.pattern.permute.xlu0 15
        %3943 = vperm.xlu0 %3942, %v278
        %v3944 = vpop.permute.xlu0 %3943
        %3946 = vset.pattern.permute.xlu0 15
        %3947 = vperm.xlu0 %3946, %v279
        %v3948 = vpop.permute.xlu0 %3947
        %3950 = vset.pattern.permute.xlu0 15
        %3951 = vperm.xlu0 %3950, %v280
        %v3952 = vpop.permute.xlu0 %3951
        %3954 = vset.pattern.permute.xlu0 15
        %3955 = vperm.xlu0 %3954, %v281
        %v3956 = vpop.permute.xlu0 %3955
        %3958 = vset.pattern.permute.xlu0 15
        %3959 = vperm.xlu0 %3958, %v282
        %v3960 = vpop.permute.xlu0 %3959
        %3962 = vset.pattern.permute.xlu0 15
        %3963 = vperm.xlu0 %3962, %v283
        %v3964 = vpop.permute.xlu0 %3963
        %3966 = vset.pattern.permute.xlu0 15
        %3967 = vperm.xlu0 %3966, %v284
        %v3968 = vpop.permute.xlu0 %3967
        %3970 = vset.pattern.permute.xlu0 15
        %3971 = vperm.xlu0 %3970, %v285
        %v3972 = vpop.permute.xlu0 %3971
        %3974 = vset.pattern.permute.xlu0 15
        %3975 = vperm.xlu0 %3974, %v286
        %v3976 = vpop.permute.xlu0 %3975
        %3978 = vset.pattern.permute.xlu0 15
        %3979 = vperm.xlu0 %3978, %v287
        %v3980 = vpop.permute.xlu0 %3979
        %3982 = vset.pattern.permute.xlu0 15
        %3983 = vperm.xlu0 %3982, %v288
        %v3984 = vpop.permute.xlu0 %3983
        %3986 = vset.pattern.permute.xlu0 15
        %3987 = vperm.xlu0 %3986, %v289
        %v3988 = vpop.permute.xlu0 %3987
        %3990 = vset.pattern.permute.xlu0 15
        %3991 = vperm.xlu0 %3990, %v290
        %v3992 = vpop.permute.xlu0 %3991
        %3994 = vset.pattern.permute.xlu0 15
        %3995 = vperm.xlu0 %3994, %v291
        %v3996 = vpop.permute.xlu0 %3995
        %3998 = vset.pattern.permute.xlu0 15
        %3999 = vperm.xlu0 %3998, %v292
        %v4000 = vpop.permute.xlu0 %3999
        %v4002 = vsub.f32 %v301, %v3940
        %v4003 = vsub.f32 %v301, %v3944
        %v4004 = vsub.f32 %v301, %v3948
        %v4005 = vsub.f32 %v301, %v3952
        %v4006 = vsub.f32 %v301, %v3956
        %v4007 = vsub.f32 %v301, %v3960
        %v4008 = vsub.f32 %v301, %v3964
        %v4009 = vsub.f32 %v301, %v3968
        %v4010 = vsub.f32 %v301, %v3972
        %v4011 = vsub.f32 %v301, %v3976
        %v4012 = vsub.f32 %v301, %v3980
        %v4013 = vsub.f32 %v301, %v3984
        %v4014 = vsub.f32 %v301, %v3988
        %v4015 = vsub.f32 %v301, %v3992
        %v4016 = vsub.f32 %v301, %v3996
        %v4017 = vsub.f32 %v301, %v4000
        %v4018 = vand.u32 2147483647, %v4002
        %v4019 = vand.u32 2147483647, %v4003
        %v4020 = vand.u32 2147483647, %v4004
        %v4021 = vand.u32 2147483647, %v4005
        %v4022 = vand.u32 2147483647, %v4006
        %v4023 = vand.u32 2147483647, %v4007
        %v4024 = vand.u32 2147483647, %v4008
        %v4025 = vand.u32 2147483647, %v4009
        %v4026 = vand.u32 2147483647, %v4010
        %v4027 = vand.u32 2147483647, %v4011
        %v4028 = vand.u32 2147483647, %v4012
        %v4029 = vand.u32 2147483647, %v4013
        %v4030 = vand.u32 2147483647, %v4014
        %v4031 = vand.u32 2147483647, %v4015
        %v4032 = vand.u32 2147483647, %v4016
        %v4033 = vand.u32 2147483647, %v4017
        %v4034 = vsub.f32 1.0, %v4018
        %v4035 = vsub.f32 1.0, %v4019
        %v4036 = vsub.f32 1.0, %v4020
        %v4037 = vsub.f32 1.0, %v4021
        %v4038 = vsub.f32 1.0, %v4022
        %v4039 = vsub.f32 1.0, %v4023
        %v4040 = vsub.f32 1.0, %v4024
        %v4041 = vsub.f32 1.0, %v4025
        %v4042 = vsub.f32 1.0, %v4026
        %v4043 = vsub.f32 1.0, %v4027
        %v4044 = vsub.f32 1.0, %v4028
        %v4045 = vsub.f32 1.0, %v4029
        %v4046 = vsub.f32 1.0, %v4030
        %v4047 = vsub.f32 1.0, %v4031
        %v4048 = vsub.f32 1.0, %v4032
        %v4049 = vsub.f32 1.0, %v4033
        %v4050 = vmax.f32 %v4034, 0.0
        %v4051 = vmax.f32 %v4035, 0.0
        %v4052 = vmax.f32 %v4036, 0.0
        %v4053 = vmax.f32 %v4037, 0.0
        %v4054 = vmax.f32 %v4038, 0.0
        %v4055 = vmax.f32 %v4039, 0.0
        %v4056 = vmax.f32 %v4040, 0.0
        %v4057 = vmax.f32 %v4041, 0.0
        %v4058 = vmax.f32 %v4042, 0.0
        %v4059 = vmax.f32 %v4043, 0.0
        %v4060 = vmax.f32 %v4044, 0.0
        %v4061 = vmax.f32 %v4045, 0.0
        %v4062 = vmax.f32 %v4046, 0.0
        %v4063 = vmax.f32 %v4047, 0.0
        %v4064 = vmax.f32 %v4048, 0.0
        %v4065 = vmax.f32 %v4049, 0.0
        %v4066 = vpack.c.bf16 %v3923, %v3922
        %v4067 = vpack.c.bf16 %v3925, %v3924
        %v4068 = vpack.c.bf16 %v3927, %v3926
        %v4069 = vpack.c.bf16 %v3929, %v3928
        %v4070 = vpack.c.bf16 %v3931, %v3930
        %v4071 = vpack.c.bf16 %v3933, %v3932
        %v4072 = vpack.c.bf16 %v3935, %v3934
        %v4073 = vpack.c.bf16 %v3937, %v3936
        %v4075 = vsel %vm589, %v4066, 0
        %v4078 = vsel %vm589, %v4067, 0
        %v4081 = vsel %vm589, %v4068, 0
        %v4084 = vsel %vm589, %v4069, 0
        %v4087 = vsel %vm589, %v4070, 0
        %v4090 = vsel %vm589, %v4071, 0
        %v4093 = vsel %vm589, %v4072, 0
        %v4096 = vsel %vm589, %v4073, 0
        %4098 = vmatprep.subr.bf16.mxu0 0
        %4099 = vmatpush1.bf16.msra.mxu0 %v587
        %4100 = vmatprep.subr.bf16.mxu0 0
        %4101 = vmatpush1.bf16.msra.mxu0 0
        %4102 = vmatprep.subr.bf16.mxu0 0
        %4103 = vmatpush1.bf16.msra.mxu0 0
        %4104 = vmatprep.subr.bf16.mxu0 0
        %4105 = vmatpush1.bf16.msra.mxu0 0
        %4106 = vmatprep.subr.bf16.mxu0 0
        %4107 = vmatpush1.bf16.msra.mxu0 0
        %4108 = vmatprep.subr.bf16.mxu0 0
        %4109 = vmatpush1.bf16.msra.mxu0 0
        %4110 = vmatprep.subr.bf16.mxu0 0
        %4111 = vmatpush1.bf16.msra.mxu0 0
        %4112 = vmatprep.subr.bf16.mxu0 0
        %4113 = vmatpush1.bf16.msra.mxu0 0
        %4114 = vmatprep.subr.bf16.mxu0 0
        %4115 = vmatpush1.bf16.msra.mxu0 0
        %4116 = vmatprep.subr.bf16.mxu0 0
        %4117 = vmatpush1.bf16.msra.mxu0 0
        %4118 = vmatprep.subr.bf16.mxu0 0
        %4119 = vmatpush1.bf16.msra.mxu0 0
        %4120 = vmatprep.subr.bf16.mxu0 0
        %4121 = vmatpush1.bf16.msra.mxu0 0
        %4122 = vmatprep.subr.bf16.mxu0 0
        %4123 = vmatpush1.bf16.msra.mxu0 0
        %4124 = vmatprep.subr.bf16.mxu0 0
        %4125 = vmatpush1.bf16.msra.mxu0 0
        %4126 = vmatprep.subr.bf16.mxu0 0
        %4127 = vmatpush1.bf16.msra.mxu0 0
        %4128 = vmatprep.subr.bf16.mxu0 0
        %4129 = vmatpush1.bf16.msra.mxu0 0
        %4130 = vmatprep.mubr.bf16.mxu0 0
        %4131 = vmatmul.mubr.bf16.gmra.mrb[0].mxu0 %v4075
        %v4132 = vpop.f32.mrb[0].mxu0
        %v4133 = vadd.f32 0.0, %v4132
        %v4134 = vpop.f32.mrb[0].mxu0
        %v4135 = vpop.f32.mrb[0].mxu0
        %v4136 = vadd.f32 0.0, %v4135
        %v4137 = vpop.f32.mrb[0].mxu0
        %4138 = vmatprep.mubr.bf16.mxu0 0
        %4139 = vmatmul.mubr.bf16.gmra.mrb[0].mxu0 %v4078
        %v4140 = vpop.f32.mrb[0].mxu0
        %v4141 = vadd.f32 0.0, %v4140
        %v4142 = vpop.f32.mrb[0].mxu0
        %v4143 = vpop.f32.mrb[0].mxu0
        %v4144 = vadd.f32 0.0, %v4143
        %v4145 = vpop.f32.mrb[0].mxu0
        %4146 = vmatprep.mubr.bf16.mxu0 0
        %4147 = vmatmul.mubr.bf16.gmra.mrb[0].mxu0 %v4081
        %v4148 = vpop.f32.mrb[0].mxu0
        %v4149 = vadd.f32 0.0, %v4148
        %v4150 = vpop.f32.mrb[0].mxu0
        %v4151 = vpop.f32.mrb[0].mxu0
        %v4152 = vadd.f32 0.0, %v4151
        %v4153 = vpop.f32.mrb[0].mxu0
        %4154 = vmatprep.mubr.bf16.mxu0 0
        %4155 = vmatmul.mubr.bf16.gmra.mrb[0].mxu0 %v4084
        %v4156 = vpop.f32.mrb[0].mxu0
        %v4157 = vadd.f32 0.0, %v4156
        %v4158 = vpop.f32.mrb[0].mxu0
        %v4159 = vpop.f32.mrb[0].mxu0
        %v4160 = vadd.f32 0.0, %v4159
        %v4161 = vpop.f32.mrb[0].mxu0
        %4162 = vmatprep.mubr.bf16.mxu0 0
        %4163 = vmatmul.mubr.bf16.gmra.mrb[0].mxu0 %v4087
        %v4164 = vpop.f32.mrb[0].mxu0
        %v4165 = vadd.f32 0.0, %v4164
        %v4166 = vpop.f32.mrb[0].mxu0
        %v4167 = vpop.f32.mrb[0].mxu0
        %v4168 = vadd.f32 0.0, %v4167
        %v4169 = vpop.f32.mrb[0].mxu0
        %4170 = vmatprep.mubr.bf16.mxu0 0
        %4171 = vmatmul.mubr.bf16.gmra.mrb[0].mxu0 %v4090
        %v4172 = vpop.f32.mrb[0].mxu0
        %v4173 = vadd.f32 0.0, %v4172
        %v4174 = vpop.f32.mrb[0].mxu0
        %v4175 = vpop.f32.mrb[0].mxu0
        %v4176 = vadd.f32 0.0, %v4175
        %v4177 = vpop.f32.mrb[0].mxu0
        %4178 = vmatprep.mubr.bf16.mxu0 0
        %4179 = vmatmul.mubr.bf16.gmra.mrb[0].mxu0 %v4093
        %v4180 = vpop.f32.mrb[0].mxu0
        %v4181 = vadd.f32 0.0, %v4180
        %v4182 = vpop.f32.mrb[0].mxu0
        %v4183 = vpop.f32.mrb[0].mxu0
        %v4184 = vadd.f32 0.0, %v4183
        %v4185 = vpop.f32.mrb[0].mxu0
        %4186 = vmatprep.mubr.bf16.mxu0 0
        %4187 = vmatmul.mubr.bf16.gmra.mrb[0].mxu0 %v4096
        %v4188 = vpop.f32.mrb[0].mxu0
        %v4189 = vadd.f32 0.0, %v4188
        %v4190 = vpop.f32.mrb[0].mxu0
        %v4191 = vpop.f32.mrb[0].mxu0
        %v4192 = vadd.f32 0.0, %v4191
        %v4193 = vpop.f32.mrb[0].mxu0
        %4194 = vdwg.mxu0
        %v4195 = vmul.f32 %v4050, %v4133
        %v4196 = vmul.f32 %v4051, %v4136
        %v4197 = vmul.f32 %v4052, %v4141
        %v4198 = vmul.f32 %v4053, %v4144
        %v4199 = vmul.f32 %v4054, %v4149
        %v4200 = vmul.f32 %v4055, %v4152
        %v4201 = vmul.f32 %v4056, %v4157
        %v4202 = vmul.f32 %v4057, %v4160
        %v4203 = vmul.f32 %v4058, %v4165
        %v4204 = vmul.f32 %v4059, %v4168
        %v4205 = vmul.f32 %v4060, %v4173
        %v4206 = vmul.f32 %v4061, %v4176
        %v4207 = vmul.f32 %v4062, %v4181
        %v4208 = vmul.f32 %v4063, %v4184
        %v4209 = vmul.f32 %v4064, %v4189
        %v4210 = vmul.f32 %v4065, %v4192
        %v4211 = vpack.c.bf16 %v4196, %v4195
        %v4212 = vpack.c.bf16 %v4198, %v4197
        %v4213 = vpack.c.bf16 %v4200, %v4199
        %v4214 = vpack.c.bf16 %v4202, %v4201
        %v4215 = vpack.c.bf16 %v4204, %v4203
        %v4216 = vpack.c.bf16 %v4206, %v4205
        %v4217 = vpack.c.bf16 %v4208, %v4207
        %v4218 = vpack.c.bf16 %v4210, %v4209
        %v4219 = vld [vmem:[%s3 + $0x180] sm:$0xf]
        %v4220 = vld [vmem:[%s3 + $0x184] sm:$0xf]
        %v4221 = vld [vmem:[%s3 + $0x188] sm:$0xf]
        %v4222 = vld [vmem:[%s3 + $0x18c] sm:$0xf]
        %v4223 = vld [vmem:[%s3 + $0x190] sm:$0xf]
        %v4224 = vld [vmem:[%s3 + $0x194] sm:$0xf]
        %v4225 = vld [vmem:[%s3 + $0x198] sm:$0xf]
        %v4226 = vld [vmem:[%s3 + $0x19c] sm:$0xf]
        %v4227 = vld [vmem:[%s3 + $0x1a0] sm:$0xf]
        %v4228 = vld [vmem:[%s3 + $0x1a4] sm:$0xf]
        %v4229 = vld [vmem:[%s3 + $0x1a8] sm:$0xf]
        %v4230 = vld [vmem:[%s3 + $0x1ac] sm:$0xf]
        %v4231 = vld [vmem:[%s3 + $0x1b0] sm:$0xf]
        %v4232 = vld [vmem:[%s3 + $0x1b4] sm:$0xf]
        %v4233 = vld [vmem:[%s3 + $0x1b8] sm:$0xf]
        %v4234 = vld [vmem:[%s3 + $0x1bc] sm:$0xf]
        %v4251 = vunpack.c.l.b16 %v4219
        %v4252 = vunpack.c.l.b16 %v4220
        %v4253 = vunpack.c.l.b16 %v4221
        %v4254 = vunpack.c.l.b16 %v4222
        %v4255 = vunpack.c.l.b16 %v4223
        %v4256 = vunpack.c.l.b16 %v4224
        %v4257 = vunpack.c.l.b16 %v4225
        %v4258 = vunpack.c.l.b16 %v4226
        %v4259 = vunpack.c.l.b16 %v4227
        %v4260 = vunpack.c.l.b16 %v4228
        %v4261 = vunpack.c.l.b16 %v4229
        %v4262 = vunpack.c.l.b16 %v4230
        %v4263 = vunpack.c.l.b16 %v4231
        %v4264 = vunpack.c.l.b16 %v4232
        %v4265 = vunpack.c.l.b16 %v4233
        %v4266 = vunpack.c.l.b16 %v4234
        %v4267 = vpack.c.b16 %v4252, %v4251
        %v4268 = vpack.c.b16 %v4254, %v4253
        %v4269 = vpack.c.b16 %v4256, %v4255
        %v4270 = vpack.c.b16 %v4258, %v4257
        %v4271 = vpack.c.b16 %v4260, %v4259
        %v4272 = vpack.c.b16 %v4262, %v4261
        %v4273 = vpack.c.b16 %v4264, %v4263
        %v4274 = vpack.c.b16 %v4266, %v4265
        %4283 = vmatprep.subr.bf16.mxu0 0
        %4284 = vmatpush1.bf16.msra.mxu0 %v4267
        %4285 = vmatprep.subr.bf16.mxu0 0
        %4286 = vmatpush1.bf16.msra.mxu0 %v4268
        %4287 = vmatprep.subr.bf16.mxu0 0
        %4288 = vmatpush1.bf16.msra.mxu0 %v4269
        %4289 = vmatprep.subr.bf16.mxu0 0
        %4290 = vmatpush1.bf16.msra.mxu0 %v4270
        %4291 = vmatprep.subr.bf16.mxu0 0
        %4292 = vmatpush1.bf16.msra.mxu0 %v4271
        %4293 = vmatprep.subr.bf16.mxu0 0
        %4294 = vmatpush1.bf16.msra.mxu0 %v4272
        %4295 = vmatprep.subr.bf16.mxu0 0
        %4296 = vmatpush1.bf16.msra.mxu0 %v4273
        %4297 = vmatprep.subr.bf16.mxu0 0
        %4298 = vmatpush1.bf16.msra.mxu0 %v4274
        %4299 = vmatprep.subr.bf16.mxu0 0
        %4300 = vmatpush1.bf16.msra.mxu0 0
        %4301 = vmatprep.subr.bf16.mxu0 0
        %4302 = vmatpush1.bf16.msra.mxu0 0
        %4303 = vmatprep.subr.bf16.mxu0 0
        %4304 = vmatpush1.bf16.msra.mxu0 0
        %4305 = vmatprep.subr.bf16.mxu0 0
        %4306 = vmatpush1.bf16.msra.mxu0 0
        %4307 = vmatprep.subr.bf16.mxu0 0
        %4308 = vmatpush1.bf16.msra.mxu0 0
        %4309 = vmatprep.subr.bf16.mxu0 0
        %4310 = vmatpush1.bf16.msra.mxu0 0
        %4311 = vmatprep.subr.bf16.mxu0 0
        %4312 = vmatpush1.bf16.msra.mxu0 0
        %4313 = vmatprep.subr.bf16.mxu0 0
        %4314 = vmatpush1.bf16.msra.mxu0 0
        %4315 = vmatprep.mubr.bf16.mxu0 0
        %4316 = vmatmul.mubr.bf16.gmra.mrb[0].mxu0 %v4211
        %v4317 = vpop.f32.mrb[0].mxu0
        %v4318 = vadd.f32 0.0, %v4317
        %v4319 = vpop.f32.mrb[0].mxu0
        %v4320 = vpop.f32.mrb[0].mxu0
        %v4321 = vadd.f32 0.0, %v4320
        %v4322 = vpop.f32.mrb[0].mxu0
        %4323 = vmatprep.mubr.bf16.mxu0 0
        %4324 = vmatmul.mubr.bf16.gmra.mrb[0].mxu0 %v4212
        %v4325 = vpop.f32.mrb[0].mxu0
        %v4326 = vadd.f32 0.0, %v4325
        %v4327 = vpop.f32.mrb[0].mxu0
        %v4328 = vpop.f32.mrb[0].mxu0
        %v4329 = vadd.f32 0.0, %v4328
        %v4330 = vpop.f32.mrb[0].mxu0
        %4331 = vmatprep.mubr.bf16.mxu0 0
        %4332 = vmatmul.mubr.bf16.gmra.mrb[0].mxu0 %v4213
        %v4333 = vpop.f32.mrb[0].mxu0
        %v4334 = vadd.f32 0.0, %v4333
        %v4335 = vpop.f32.mrb[0].mxu0
        %v4336 = vpop.f32.mrb[0].mxu0
        %v4337 = vadd.f32 0.0, %v4336
        %v4338 = vpop.f32.mrb[0].mxu0
        %4339 = vmatprep.mubr.bf16.mxu0 0
        %4340 = vmatmul.mubr.bf16.gmra.mrb[0].mxu0 %v4214
        %v4341 = vpop.f32.mrb[0].mxu0
        %v4342 = vadd.f32 0.0, %v4341
        %v4343 = vpop.f32.mrb[0].mxu0
        %v4344 = vpop.f32.mrb[0].mxu0
        %v4345 = vadd.f32 0.0, %v4344
        %v4346 = vpop.f32.mrb[0].mxu0
        %4347 = vmatprep.mubr.bf16.mxu0 0
        %4348 = vmatmul.mubr.bf16.gmra.mrb[0].mxu0 %v4215
        %v4349 = vpop.f32.mrb[0].mxu0
        %v4350 = vadd.f32 0.0, %v4349
        %v4351 = vpop.f32.mrb[0].mxu0
        %v4352 = vpop.f32.mrb[0].mxu0
        %v4353 = vadd.f32 0.0, %v4352
        %v4354 = vpop.f32.mrb[0].mxu0
        %4355 = vmatprep.mubr.bf16.mxu0 0
        %4356 = vmatmul.mubr.bf16.gmra.mrb[0].mxu0 %v4216
        %v4357 = vpop.f32.mrb[0].mxu0
        %v4358 = vadd.f32 0.0, %v4357
        %v4359 = vpop.f32.mrb[0].mxu0
        %v4360 = vpop.f32.mrb[0].mxu0
        %v4361 = vadd.f32 0.0, %v4360
        %v4362 = vpop.f32.mrb[0].mxu0
        %4363 = vmatprep.mubr.bf16.mxu0 0
        %4364 = vmatmul.mubr.bf16.gmra.mrb[0].mxu0 %v4217
        %v4365 = vpop.f32.mrb[0].mxu0
        %v4366 = vadd.f32 0.0, %v4365
        %v4367 = vpop.f32.mrb[0].mxu0
        %v4368 = vpop.f32.mrb[0].mxu0
        %v4369 = vadd.f32 0.0, %v4368
        %v4370 = vpop.f32.mrb[0].mxu0
        %4371 = vmatprep.mubr.bf16.mxu0 0
        %4372 = vmatmul.mubr.bf16.gmra.mrb[0].mxu0 %v4218
        %v4373 = vpop.f32.mrb[0].mxu0
        %v4374 = vadd.f32 0.0, %v4373
        %v4375 = vpop.f32.mrb[0].mxu0
        %v4376 = vpop.f32.mrb[0].mxu0
        %v4377 = vadd.f32 0.0, %v4376
        %v4378 = vpop.f32.mrb[0].mxu0
        %4379 = vdwg.mxu0
        %v4380 = vadd.f32 %v3794, %v4318
        %v4381 = vadd.f32 %v3795, %v4321
        %v4382 = vadd.f32 %v3796, %v4326
        %v4383 = vadd.f32 %v3797, %v4329
        %v4384 = vadd.f32 %v3798, %v4334
        %v4385 = vadd.f32 %v3799, %v4337
        %v4386 = vadd.f32 %v3800, %v4342
        %v4387 = vadd.f32 %v3801, %v4345
        %v4388 = vadd.f32 %v3802, %v4350
        %v4389 = vadd.f32 %v3803, %v4353
        %v4390 = vadd.f32 %v3804, %v4358
        %v4391 = vadd.f32 %v3805, %v4361
        %v4392 = vadd.f32 %v3806, %v4366
        %v4393 = vadd.f32 %v3807, %v4369
        %v4394 = vadd.f32 %v3808, %v4374
        %v4395 = vadd.f32 %v3809, %v4377
        %4396 = vset.pattern.permute.xlu0 7
        %4397 = vperm.xlu0 %4396, %v277
        %v4398 = vpop.permute.xlu0 %4397
        %4400 = vset.pattern.permute.xlu0 7
        %4401 = vperm.xlu0 %4400, %v278
        %v4402 = vpop.permute.xlu0 %4401
        %4404 = vset.pattern.permute.xlu0 7
        %4405 = vperm.xlu0 %4404, %v279
        %v4406 = vpop.permute.xlu0 %4405
        %4408 = vset.pattern.permute.xlu0 7
        %4409 = vperm.xlu0 %4408, %v280
        %v4410 = vpop.permute.xlu0 %4409
        %4412 = vset.pattern.permute.xlu0 7
        %4413 = vperm.xlu0 %4412, %v281
        %v4414 = vpop.permute.xlu0 %4413
        %4416 = vset.pattern.permute.xlu0 7
        %4417 = vperm.xlu0 %4416, %v282
        %v4418 = vpop.permute.xlu0 %4417
        %4420 = vset.pattern.permute.xlu0 7
        %4421 = vperm.xlu0 %4420, %v283
        %v4422 = vpop.permute.xlu0 %4421
        %4424 = vset.pattern.permute.xlu0 7
        %4425 = vperm.xlu0 %4424, %v284
        %v4426 = vpop.permute.xlu0 %4425
        %4428 = vset.pattern.permute.xlu0 7
        %4429 = vperm.xlu0 %4428, %v285
        %v4430 = vpop.permute.xlu0 %4429
        %4432 = vset.pattern.permute.xlu0 7
        %4433 = vperm.xlu0 %4432, %v286
        %v4434 = vpop.permute.xlu0 %4433
        %4436 = vset.pattern.permute.xlu0 7
        %4437 = vperm.xlu0 %4436, %v287
        %v4438 = vpop.permute.xlu0 %4437
        %4440 = vset.pattern.permute.xlu0 7
        %4441 = vperm.xlu0 %4440, %v288
        %v4442 = vpop.permute.xlu0 %4441
        %4444 = vset.pattern.permute.xlu0 7
        %4445 = vperm.xlu0 %4444, %v289
        %v4446 = vpop.permute.xlu0 %4445
        %4448 = vset.pattern.permute.xlu0 7
        %4449 = vperm.xlu0 %4448, %v290
        %v4450 = vpop.permute.xlu0 %4449
        %4452 = vset.pattern.permute.xlu0 7
        %4453 = vperm.xlu0 %4452, %v291
        %v4454 = vpop.permute.xlu0 %4453
        %4456 = vset.pattern.permute.xlu0 7
        %4457 = vperm.xlu0 %4456, %v292
        %v4458 = vpop.permute.xlu0 %4457
        %v4460 = vsub.f32 %v295, %v4398
        %v4461 = vsub.f32 %v295, %v4402
        %v4462 = vsub.f32 %v295, %v4406
        %v4463 = vsub.f32 %v295, %v4410
        %v4464 = vsub.f32 %v295, %v4414
        %v4465 = vsub.f32 %v295, %v4418
        %v4466 = vsub.f32 %v295, %v4422
        %v4467 = vsub.f32 %v295, %v4426
        %v4468 = vsub.f32 %v295, %v4430
        %v4469 = vsub.f32 %v295, %v4434
        %v4470 = vsub.f32 %v295, %v4438
        %v4471 = vsub.f32 %v295, %v4442
        %v4472 = vsub.f32 %v295, %v4446
        %v4473 = vsub.f32 %v295, %v4450
        %v4474 = vsub.f32 %v295, %v4454
        %v4475 = vsub.f32 %v295, %v4458
        %v4476 = vand.u32 2147483647, %v4460
        %v4477 = vand.u32 2147483647, %v4461
        %v4478 = vand.u32 2147483647, %v4462
        %v4479 = vand.u32 2147483647, %v4463
        %v4480 = vand.u32 2147483647, %v4464
        %v4481 = vand.u32 2147483647, %v4465
        %v4482 = vand.u32 2147483647, %v4466
        %v4483 = vand.u32 2147483647, %v4467
        %v4484 = vand.u32 2147483647, %v4468
        %v4485 = vand.u32 2147483647, %v4469
        %v4486 = vand.u32 2147483647, %v4470
        %v4487 = vand.u32 2147483647, %v4471
        %v4488 = vand.u32 2147483647, %v4472
        %v4489 = vand.u32 2147483647, %v4473
        %v4490 = vand.u32 2147483647, %v4474
        %v4491 = vand.u32 2147483647, %v4475
        %v4492 = vsub.f32 1.0, %v4476
        %v4493 = vsub.f32 1.0, %v4477
        %v4494 = vsub.f32 1.0, %v4478
        %v4495 = vsub.f32 1.0, %v4479
        %v4496 = vsub.f32 1.0, %v4480
        %v4497 = vsub.f32 1.0, %v4481
        %v4498 = vsub.f32 1.0, %v4482
        %v4499 = vsub.f32 1.0, %v4483
        %v4500 = vsub.f32 1.0, %v4484
        %v4501 = vsub.f32 1.0, %v4485
        %v4502 = vsub.f32 1.0, %v4486
        %v4503 = vsub.f32 1.0, %v4487
        %v4504 = vsub.f32 1.0, %v4488
        %v4505 = vsub.f32 1.0, %v4489
        %v4506 = vsub.f32 1.0, %v4490
        %v4507 = vsub.f32 1.0, %v4491
        %v4508 = vmax.f32 %v4492, 0.0
        %v4509 = vmax.f32 %v4493, 0.0
        %v4510 = vmax.f32 %v4494, 0.0
        %v4511 = vmax.f32 %v4495, 0.0
        %v4512 = vmax.f32 %v4496, 0.0
        %v4513 = vmax.f32 %v4497, 0.0
        %v4514 = vmax.f32 %v4498, 0.0
        %v4515 = vmax.f32 %v4499, 0.0
        %v4516 = vmax.f32 %v4500, 0.0
        %v4517 = vmax.f32 %v4501, 0.0
        %v4518 = vmax.f32 %v4502, 0.0
        %v4519 = vmax.f32 %v4503, 0.0
        %v4520 = vmax.f32 %v4504, 0.0
        %v4521 = vmax.f32 %v4505, 0.0
        %v4522 = vmax.f32 %v4506, 0.0
        %v4523 = vmax.f32 %v4507, 0.0
        %4524 = vset.pattern.permute.xlu0 16
        %4525 = vperm.xlu0 %4524, %v277
        %v4526 = vpop.permute.xlu0 %4525
        %4528 = vset.pattern.permute.xlu0 16
        %4529 = vperm.xlu0 %4528, %v278
        %v4530 = vpop.permute.xlu0 %4529
        %4532 = vset.pattern.permute.xlu0 16
        %4533 = vperm.xlu0 %4532, %v279
        %v4534 = vpop.permute.xlu0 %4533
        %4536 = vset.pattern.permute.xlu0 16
        %4537 = vperm.xlu0 %4536, %v280
        %v4538 = vpop.permute.xlu0 %4537
        %4540 = vset.pattern.permute.xlu0 16
        %4541 = vperm.xlu0 %4540, %v281
        %v4542 = vpop.permute.xlu0 %4541
        %4544 = vset.pattern.permute.xlu0 16
        %4545 = vperm.xlu0 %4544, %v282
        %v4546 = vpop.permute.xlu0 %4545
        %4548 = vset.pattern.permute.xlu0 16
        %4549 = vperm.xlu0 %4548, %v283
        %v4550 = vpop.permute.xlu0 %4549
        %4552 = vset.pattern.permute.xlu0 16
        %4553 = vperm.xlu0 %4552, %v284
        %v4554 = vpop.permute.xlu0 %4553
        %4556 = vset.pattern.permute.xlu0 16
        %4557 = vperm.xlu0 %4556, %v285
        %v4558 = vpop.permute.xlu0 %4557
        %4560 = vset.pattern.permute.xlu0 16
        %4561 = vperm.xlu0 %4560, %v286
        %v4562 = vpop.permute.xlu0 %4561
        %4564 = vset.pattern.permute.xlu0 16
        %4565 = vperm.xlu0 %4564, %v287
        %v4566 = vpop.permute.xlu0 %4565
        %4568 = vset.pattern.permute.xlu0 16
        %4569 = vperm.xlu0 %4568, %v288
        %v4570 = vpop.permute.xlu0 %4569
        %4572 = vset.pattern.permute.xlu0 16
        %4573 = vperm.xlu0 %4572, %v289
        %v4574 = vpop.permute.xlu0 %4573
        %4576 = vset.pattern.permute.xlu0 16
        %4577 = vperm.xlu0 %4576, %v290
        %v4578 = vpop.permute.xlu0 %4577
        %4580 = vset.pattern.permute.xlu0 16
        %4581 = vperm.xlu0 %4580, %v291
        %v4582 = vpop.permute.xlu0 %4581
        %4584 = vset.pattern.permute.xlu0 16
        %4585 = vperm.xlu0 %4584, %v292
        %v4586 = vpop.permute.xlu0 %4585
        %v4588 = vsub.f32 %v301, %v4526
        %v4589 = vsub.f32 %v301, %v4530
        %v4590 = vsub.f32 %v301, %v4534
        %v4591 = vsub.f32 %v301, %v4538
        %v4592 = vsub.f32 %v301, %v4542
        %v4593 = vsub.f32 %v301, %v4546
        %v4594 = vsub.f32 %v301, %v4550
        %v4595 = vsub.f32 %v301, %v4554
        %v4596 = vsub.f32 %v301, %v4558
        %v4597 = vsub.f32 %v301, %v4562
        %v4598 = vsub.f32 %v301, %v4566
        %v4599 = vsub.f32 %v301, %v4570
        %v4600 = vsub.f32 %v301, %v4574
        %v4601 = vsub.f32 %v301, %v4578
        %v4602 = vsub.f32 %v301, %v4582
        %v4603 = vsub.f32 %v301, %v4586
        %v4604 = vand.u32 2147483647, %v4588
        %v4605 = vand.u32 2147483647, %v4589
        %v4606 = vand.u32 2147483647, %v4590
        %v4607 = vand.u32 2147483647, %v4591
        %v4608 = vand.u32 2147483647, %v4592
        %v4609 = vand.u32 2147483647, %v4593
        %v4610 = vand.u32 2147483647, %v4594
        %v4611 = vand.u32 2147483647, %v4595
        %v4612 = vand.u32 2147483647, %v4596
        %v4613 = vand.u32 2147483647, %v4597
        %v4614 = vand.u32 2147483647, %v4598
        %v4615 = vand.u32 2147483647, %v4599
        %v4616 = vand.u32 2147483647, %v4600
        %v4617 = vand.u32 2147483647, %v4601
        %v4618 = vand.u32 2147483647, %v4602
        %v4619 = vand.u32 2147483647, %v4603
        %v4620 = vsub.f32 1.0, %v4604
        %v4621 = vsub.f32 1.0, %v4605
        %v4622 = vsub.f32 1.0, %v4606
        %v4623 = vsub.f32 1.0, %v4607
        %v4624 = vsub.f32 1.0, %v4608
        %v4625 = vsub.f32 1.0, %v4609
        %v4626 = vsub.f32 1.0, %v4610
        %v4627 = vsub.f32 1.0, %v4611
        %v4628 = vsub.f32 1.0, %v4612
        %v4629 = vsub.f32 1.0, %v4613
        %v4630 = vsub.f32 1.0, %v4614
        %v4631 = vsub.f32 1.0, %v4615
        %v4632 = vsub.f32 1.0, %v4616
        %v4633 = vsub.f32 1.0, %v4617
        %v4634 = vsub.f32 1.0, %v4618
        %v4635 = vsub.f32 1.0, %v4619
        %v4636 = vmax.f32 %v4620, 0.0
        %v4637 = vmax.f32 %v4621, 0.0
        %v4638 = vmax.f32 %v4622, 0.0
        %v4639 = vmax.f32 %v4623, 0.0
        %v4640 = vmax.f32 %v4624, 0.0
        %v4641 = vmax.f32 %v4625, 0.0
        %v4642 = vmax.f32 %v4626, 0.0
        %v4643 = vmax.f32 %v4627, 0.0
        %v4644 = vmax.f32 %v4628, 0.0
        %v4645 = vmax.f32 %v4629, 0.0
        %v4646 = vmax.f32 %v4630, 0.0
        %v4647 = vmax.f32 %v4631, 0.0
        %v4648 = vmax.f32 %v4632, 0.0
        %v4649 = vmax.f32 %v4633, 0.0
        %v4650 = vmax.f32 %v4634, 0.0
        %v4651 = vmax.f32 %v4635, 0.0
        %v4652 = vpack.c.bf16 %v4509, %v4508
        %v4653 = vpack.c.bf16 %v4511, %v4510
        %v4654 = vpack.c.bf16 %v4513, %v4512
        %v4655 = vpack.c.bf16 %v4515, %v4514
        %v4656 = vpack.c.bf16 %v4517, %v4516
        %v4657 = vpack.c.bf16 %v4519, %v4518
        %v4658 = vpack.c.bf16 %v4521, %v4520
        %v4659 = vpack.c.bf16 %v4523, %v4522
        %v4661 = vsel %vm589, %v4652, 0
        %v4664 = vsel %vm589, %v4653, 0
        %v4667 = vsel %vm589, %v4654, 0
        %v4670 = vsel %vm589, %v4655, 0
        %v4673 = vsel %vm589, %v4656, 0
        %v4676 = vsel %vm589, %v4657, 0
        %v4679 = vsel %vm589, %v4658, 0
        %v4682 = vsel %vm589, %v4659, 0
        %4684 = vmatprep.subr.bf16.mxu0 0
        %4685 = vmatpush1.bf16.msra.mxu0 %v587
        %4686 = vmatprep.subr.bf16.mxu0 0
        %4687 = vmatpush1.bf16.msra.mxu0 0
        %4688 = vmatprep.subr.bf16.mxu0 0
        %4689 = vmatpush1.bf16.msra.mxu0 0
        %4690 = vmatprep.subr.bf16.mxu0 0
        %4691 = vmatpush1.bf16.msra.mxu0 0
        %4692 = vmatprep.subr.bf16.mxu0 0
        %4693 = vmatpush1.bf16.msra.mxu0 0
        %4694 = vmatprep.subr.bf16.mxu0 0
        %4695 = vmatpush1.bf16.msra.mxu0 0
        %4696 = vmatprep.subr.bf16.mxu0 0
        %4697 = vmatpush1.bf16.msra.mxu0 0
        %4698 = vmatprep.subr.bf16.mxu0 0
        %4699 = vmatpush1.bf16.msra.mxu0 0
        %4700 = vmatprep.subr.bf16.mxu0 0
        %4701 = vmatpush1.bf16.msra.mxu0 0
        %4702 = vmatprep.subr.bf16.mxu0 0
        %4703 = vmatpush1.bf16.msra.mxu0 0
        %4704 = vmatprep.subr.bf16.mxu0 0
        %4705 = vmatpush1.bf16.msra.mxu0 0
        %4706 = vmatprep.subr.bf16.mxu0 0
        %4707 = vmatpush1.bf16.msra.mxu0 0
        %4708 = vmatprep.subr.bf16.mxu0 0
        %4709 = vmatpush1.bf16.msra.mxu0 0
        %4710 = vmatprep.subr.bf16.mxu0 0
        %4711 = vmatpush1.bf16.msra.mxu0 0
        %4712 = vmatprep.subr.bf16.mxu0 0
        %4713 = vmatpush1.bf16.msra.mxu0 0
        %4714 = vmatprep.subr.bf16.mxu0 0
        %4715 = vmatpush1.bf16.msra.mxu0 0
        %4716 = vmatprep.mubr.bf16.mxu0 0
        %4717 = vmatmul.mubr.bf16.gmra.mrb[0].mxu0 %v4661
        %v4718 = vpop.f32.mrb[0].mxu0
        %v4719 = vadd.f32 0.0, %v4718
        %v4720 = vpop.f32.mrb[0].mxu0
        %v4721 = vpop.f32.mrb[0].mxu0
        %v4722 = vadd.f32 0.0, %v4721
        %v4723 = vpop.f32.mrb[0].mxu0
        %4724 = vmatprep.mubr.bf16.mxu0 0
        %4725 = vmatmul.mubr.bf16.gmra.mrb[0].mxu0 %v4664
        %v4726 = vpop.f32.mrb[0].mxu0
        %v4727 = vadd.f32 0.0, %v4726
        %v4728 = vpop.f32.mrb[0].mxu0
        %v4729 = vpop.f32.mrb[0].mxu0
        %v4730 = vadd.f32 0.0, %v4729
        %v4731 = vpop.f32.mrb[0].mxu0
        %4732 = vmatprep.mubr.bf16.mxu0 0
        %4733 = vmatmul.mubr.bf16.gmra.mrb[0].mxu0 %v4667
        %v4734 = vpop.f32.mrb[0].mxu0
        %v4735 = vadd.f32 0.0, %v4734
        %v4736 = vpop.f32.mrb[0].mxu0
        %v4737 = vpop.f32.mrb[0].mxu0
        %v4738 = vadd.f32 0.0, %v4737
        %v4739 = vpop.f32.mrb[0].mxu0
        %4740 = vmatprep.mubr.bf16.mxu0 0
        %4741 = vmatmul.mubr.bf16.gmra.mrb[0].mxu0 %v4670
        %v4742 = vpop.f32.mrb[0].mxu0
        %v4743 = vadd.f32 0.0, %v4742
        %v4744 = vpop.f32.mrb[0].mxu0
        %v4745 = vpop.f32.mrb[0].mxu0
        %v4746 = vadd.f32 0.0, %v4745
        %v4747 = vpop.f32.mrb[0].mxu0
        %4748 = vmatprep.mubr.bf16.mxu0 0
        %4749 = vmatmul.mubr.bf16.gmra.mrb[0].mxu0 %v4673
        %v4750 = vpop.f32.mrb[0].mxu0
        %v4751 = vadd.f32 0.0, %v4750
        %v4752 = vpop.f32.mrb[0].mxu0
        %v4753 = vpop.f32.mrb[0].mxu0
        %v4754 = vadd.f32 0.0, %v4753
        %v4755 = vpop.f32.mrb[0].mxu0
        %4756 = vmatprep.mubr.bf16.mxu0 0
        %4757 = vmatmul.mubr.bf16.gmra.mrb[0].mxu0 %v4676
        %v4758 = vpop.f32.mrb[0].mxu0
        %v4759 = vadd.f32 0.0, %v4758
        %v4760 = vpop.f32.mrb[0].mxu0
        %v4761 = vpop.f32.mrb[0].mxu0
        %v4762 = vadd.f32 0.0, %v4761
        %v4763 = vpop.f32.mrb[0].mxu0
        %4764 = vmatprep.mubr.bf16.mxu0 0
        %4765 = vmatmul.mubr.bf16.gmra.mrb[0].mxu0 %v4679
        %v4766 = vpop.f32.mrb[0].mxu0
        %v4767 = vadd.f32 0.0, %v4766
        %v4768 = vpop.f32.mrb[0].mxu0
        %v4769 = vpop.f32.mrb[0].mxu0
        %v4770 = vadd.f32 0.0, %v4769
        %v4771 = vpop.f32.mrb[0].mxu0
        %4772 = vmatprep.mubr.bf16.mxu0 0
        %4773 = vmatmul.mubr.bf16.gmra.mrb[0].mxu0 %v4682
        %v4774 = vpop.f32.mrb[0].mxu0
        %v4775 = vadd.f32 0.0, %v4774
        %v4776 = vpop.f32.mrb[0].mxu0
        %v4777 = vpop.f32.mrb[0].mxu0
        %v4778 = vadd.f32 0.0, %v4777
        %v4779 = vpop.f32.mrb[0].mxu0
        %4780 = vdwg.mxu0
        %v4781 = vmul.f32 %v4636, %v4719
        %v4782 = vmul.f32 %v4637, %v4722
        %v4783 = vmul.f32 %v4638, %v4727
        %v4784 = vmul.f32 %v4639, %v4730
        %v4785 = vmul.f32 %v4640, %v4735
        %v4786 = vmul.f32 %v4641, %v4738
        %v4787 = vmul.f32 %v4642, %v4743
        %v4788 = vmul.f32 %v4643, %v4746
        %v4789 = vmul.f32 %v4644, %v4751
        %v4790 = vmul.f32 %v4645, %v4754
        %v4791 = vmul.f32 %v4646, %v4759
        %v4792 = vmul.f32 %v4647, %v4762
        %v4793 = vmul.f32 %v4648, %v4767
        %v4794 = vmul.f32 %v4649, %v4770
        %v4795 = vmul.f32 %v4650, %v4775
        %v4796 = vmul.f32 %v4651, %v4778
        %v4797 = vpack.c.bf16 %v4782, %v4781
        %v4798 = vpack.c.bf16 %v4784, %v4783
        %v4799 = vpack.c.bf16 %v4786, %v4785
        %v4800 = vpack.c.bf16 %v4788, %v4787
        %v4801 = vpack.c.bf16 %v4790, %v4789
        %v4802 = vpack.c.bf16 %v4792, %v4791
        %v4803 = vpack.c.bf16 %v4794, %v4793
        %v4804 = vpack.c.bf16 %v4796, %v4795
        %v4805 = vld [vmem:[%s3 + $0x1c0] sm:$0xf]
        %v4806 = vld [vmem:[%s3 + $0x1c4] sm:$0xf]
        %v4807 = vld [vmem:[%s3 + $0x1c8] sm:$0xf]
        %v4808 = vld [vmem:[%s3 + $0x1cc] sm:$0xf]
        %v4809 = vld [vmem:[%s3 + $0x1d0] sm:$0xf]
        %v4810 = vld [vmem:[%s3 + $0x1d4] sm:$0xf]
        %v4811 = vld [vmem:[%s3 + $0x1d8] sm:$0xf]
        %v4812 = vld [vmem:[%s3 + $0x1dc] sm:$0xf]
        %v4813 = vld [vmem:[%s3 + $0x1e0] sm:$0xf]
        %v4814 = vld [vmem:[%s3 + $0x1e4] sm:$0xf]
        %v4815 = vld [vmem:[%s3 + $0x1e8] sm:$0xf]
        %v4816 = vld [vmem:[%s3 + $0x1ec] sm:$0xf]
        %v4817 = vld [vmem:[%s3 + $0x1f0] sm:$0xf]
        %v4818 = vld [vmem:[%s3 + $0x1f4] sm:$0xf]
        %v4819 = vld [vmem:[%s3 + $0x1f8] sm:$0xf]
        %v4820 = vld [vmem:[%s3 + $0x1fc] sm:$0xf]
        %v4837 = vunpack.c.l.b16 %v4805
        %v4838 = vunpack.c.l.b16 %v4806
        %v4839 = vunpack.c.l.b16 %v4807
        %v4840 = vunpack.c.l.b16 %v4808
        %v4841 = vunpack.c.l.b16 %v4809
        %v4842 = vunpack.c.l.b16 %v4810
        %v4843 = vunpack.c.l.b16 %v4811
        %v4844 = vunpack.c.l.b16 %v4812
        %v4845 = vunpack.c.l.b16 %v4813
        %v4846 = vunpack.c.l.b16 %v4814
        %v4847 = vunpack.c.l.b16 %v4815
        %v4848 = vunpack.c.l.b16 %v4816
        %v4849 = vunpack.c.l.b16 %v4817
        %v4850 = vunpack.c.l.b16 %v4818
        %v4851 = vunpack.c.l.b16 %v4819
        %v4852 = vunpack.c.l.b16 %v4820
        %v4853 = vpack.c.b16 %v4838, %v4837
        %v4854 = vpack.c.b16 %v4840, %v4839
        %v4855 = vpack.c.b16 %v4842, %v4841
        %v4856 = vpack.c.b16 %v4844, %v4843
        %v4857 = vpack.c.b16 %v4846, %v4845
        %v4858 = vpack.c.b16 %v4848, %v4847
        %v4859 = vpack.c.b16 %v4850, %v4849
        %v4860 = vpack.c.b16 %v4852, %v4851
        %4869 = vmatprep.subr.bf16.mxu0 0
        %4870 = vmatpush1.bf16.msra.mxu0 %v4853
        %4871 = vmatprep.subr.bf16.mxu0 0
        %4872 = vmatpush1.bf16.msra.mxu0 %v4854
        %4873 = vmatprep.subr.bf16.mxu0 0
        %4874 = vmatpush1.bf16.msra.mxu0 %v4855
        %4875 = vmatprep.subr.bf16.mxu0 0
        %4876 = vmatpush1.bf16.msra.mxu0 %v4856
        %4877 = vmatprep.subr.bf16.mxu0 0
        %4878 = vmatpush1.bf16.msra.mxu0 %v4857
        %4879 = vmatprep.subr.bf16.mxu0 0
        %4880 = vmatpush1.bf16.msra.mxu0 %v4858
        %4881 = vmatprep.subr.bf16.mxu0 0
        %4882 = vmatpush1.bf16.msra.mxu0 %v4859
        %4883 = vmatprep.subr.bf16.mxu0 0
        %4884 = vmatpush1.bf16.msra.mxu0 %v4860
        %4885 = vmatprep.subr.bf16.mxu0 0
        %4886 = vmatpush1.bf16.msra.mxu0 0
        %4887 = vmatprep.subr.bf16.mxu0 0
        %4888 = vmatpush1.bf16.msra.mxu0 0
        %4889 = vmatprep.subr.bf16.mxu0 0
        %4890 = vmatpush1.bf16.msra.mxu0 0
        %4891 = vmatprep.subr.bf16.mxu0 0
        %4892 = vmatpush1.bf16.msra.mxu0 0
        %4893 = vmatprep.subr.bf16.mxu0 0
        %4894 = vmatpush1.bf16.msra.mxu0 0
        %4895 = vmatprep.subr.bf16.mxu0 0
        %4896 = vmatpush1.bf16.msra.mxu0 0
        %4897 = vmatprep.subr.bf16.mxu0 0
        %4898 = vmatpush1.bf16.msra.mxu0 0
        %4899 = vmatprep.subr.bf16.mxu0 0
        %4900 = vmatpush1.bf16.msra.mxu0 0
        %4901 = vmatprep.mubr.bf16.mxu0 0
        %4902 = vmatmul.mubr.bf16.gmra.mrb[0].mxu0 %v4797
        %v4903 = vpop.f32.mrb[0].mxu0
        %v4904 = vadd.f32 0.0, %v4903
        %v4905 = vpop.f32.mrb[0].mxu0
        %v4906 = vpop.f32.mrb[0].mxu0
        %v4907 = vadd.f32 0.0, %v4906
        %v4908 = vpop.f32.mrb[0].mxu0
        %4909 = vmatprep.mubr.bf16.mxu0 0
        %4910 = vmatmul.mubr.bf16.gmra.mrb[0].mxu0 %v4798
        %v4911 = vpop.f32.mrb[0].mxu0
        %v4912 = vadd.f32 0.0, %v4911
        %v4913 = vpop.f32.mrb[0].mxu0
        %v4914 = vpop.f32.mrb[0].mxu0
        %v4915 = vadd.f32 0.0, %v4914
        %v4916 = vpop.f32.mrb[0].mxu0
        %4917 = vmatprep.mubr.bf16.mxu0 0
        %4918 = vmatmul.mubr.bf16.gmra.mrb[0].mxu0 %v4799
        %v4919 = vpop.f32.mrb[0].mxu0
        %v4920 = vadd.f32 0.0, %v4919
        %v4921 = vpop.f32.mrb[0].mxu0
        %v4922 = vpop.f32.mrb[0].mxu0
        %v4923 = vadd.f32 0.0, %v4922
        %v4924 = vpop.f32.mrb[0].mxu0
        %4925 = vmatprep.mubr.bf16.mxu0 0
        %4926 = vmatmul.mubr.bf16.gmra.mrb[0].mxu0 %v4800
        %v4927 = vpop.f32.mrb[0].mxu0
        %v4928 = vadd.f32 0.0, %v4927
        %v4929 = vpop.f32.mrb[0].mxu0
        %v4930 = vpop.f32.mrb[0].mxu0
        %v4931 = vadd.f32 0.0, %v4930
        %v4932 = vpop.f32.mrb[0].mxu0
        %4933 = vmatprep.mubr.bf16.mxu0 0
        %4934 = vmatmul.mubr.bf16.gmra.mrb[0].mxu0 %v4801
        %v4935 = vpop.f32.mrb[0].mxu0
        %v4936 = vadd.f32 0.0, %v4935
        %v4937 = vpop.f32.mrb[0].mxu0
        %v4938 = vpop.f32.mrb[0].mxu0
        %v4939 = vadd.f32 0.0, %v4938
        %v4940 = vpop.f32.mrb[0].mxu0
        %4941 = vmatprep.mubr.bf16.mxu0 0
        %4942 = vmatmul.mubr.bf16.gmra.mrb[0].mxu0 %v4802
        %v4943 = vpop.f32.mrb[0].mxu0
        %v4944 = vadd.f32 0.0, %v4943
        %v4945 = vpop.f32.mrb[0].mxu0
        %v4946 = vpop.f32.mrb[0].mxu0
        %v4947 = vadd.f32 0.0, %v4946
        %v4948 = vpop.f32.mrb[0].mxu0
        %4949 = vmatprep.mubr.bf16.mxu0 0
        %4950 = vmatmul.mubr.bf16.gmra.mrb[0].mxu0 %v4803
        %v4951 = vpop.f32.mrb[0].mxu0
        %v4952 = vadd.f32 0.0, %v4951
        %v4953 = vpop.f32.mrb[0].mxu0
        %v4954 = vpop.f32.mrb[0].mxu0
        %v4955 = vadd.f32 0.0, %v4954
        %v4956 = vpop.f32.mrb[0].mxu0
        %4957 = vmatprep.mubr.bf16.mxu0 0
        %4958 = vmatmul.mubr.bf16.gmra.mrb[0].mxu0 %v4804
        %v4959 = vpop.f32.mrb[0].mxu0
        %v4960 = vadd.f32 0.0, %v4959
        %v4961 = vpop.f32.mrb[0].mxu0
        %v4962 = vpop.f32.mrb[0].mxu0
        %v4963 = vadd.f32 0.0, %v4962
        %v4964 = vpop.f32.mrb[0].mxu0
        %4965 = vdwg.mxu0
        %v4966 = vadd.f32 %v4380, %v4904
        %v4967 = vadd.f32 %v4381, %v4907
        %v4968 = vadd.f32 %v4382, %v4912
        %v4969 = vadd.f32 %v4383, %v4915
        %v4970 = vadd.f32 %v4384, %v4920
        %v4971 = vadd.f32 %v4385, %v4923
        %v4972 = vadd.f32 %v4386, %v4928
        %v4973 = vadd.f32 %v4387, %v4931
        %v4974 = vadd.f32 %v4388, %v4936
        %v4975 = vadd.f32 %v4389, %v4939
        %v4976 = vadd.f32 %v4390, %v4944
        %v4977 = vadd.f32 %v4391, %v4947
        %v4978 = vadd.f32 %v4392, %v4952
        %v4979 = vadd.f32 %v4393, %v4955
        %v4980 = vadd.f32 %v4394, %v4960
        %v4981 = vadd.f32 %v4395, %v4963
        %4982 = vset.pattern.permute.xlu0 8
        %4983 = vperm.xlu0 %4982, %v277
        %v4984 = vpop.permute.xlu0 %4983
        %4986 = vset.pattern.permute.xlu0 8
        %4987 = vperm.xlu0 %4986, %v278
        %v4988 = vpop.permute.xlu0 %4987
        %4990 = vset.pattern.permute.xlu0 8
        %4991 = vperm.xlu0 %4990, %v279
        %v4992 = vpop.permute.xlu0 %4991
        %4994 = vset.pattern.permute.xlu0 8
        %4995 = vperm.xlu0 %4994, %v280
        %v4996 = vpop.permute.xlu0 %4995
        %4998 = vset.pattern.permute.xlu0 8
        %4999 = vperm.xlu0 %4998, %v281
        %v5000 = vpop.permute.xlu0 %4999
        %5002 = vset.pattern.permute.xlu0 8
        %5003 = vperm.xlu0 %5002, %v282
        %v5004 = vpop.permute.xlu0 %5003
        %5006 = vset.pattern.permute.xlu0 8
        %5007 = vperm.xlu0 %5006, %v283
        %v5008 = vpop.permute.xlu0 %5007
        %5010 = vset.pattern.permute.xlu0 8
        %5011 = vperm.xlu0 %5010, %v284
        %v5012 = vpop.permute.xlu0 %5011
        %5014 = vset.pattern.permute.xlu0 8
        %5015 = vperm.xlu0 %5014, %v285
        %v5016 = vpop.permute.xlu0 %5015
        %5018 = vset.pattern.permute.xlu0 8
        %5019 = vperm.xlu0 %5018, %v286
        %v5020 = vpop.permute.xlu0 %5019
        %5022 = vset.pattern.permute.xlu0 8
        %5023 = vperm.xlu0 %5022, %v287
        %v5024 = vpop.permute.xlu0 %5023
        %5026 = vset.pattern.permute.xlu0 8
        %5027 = vperm.xlu0 %5026, %v288
        %v5028 = vpop.permute.xlu0 %5027
        %5030 = vset.pattern.permute.xlu0 8
        %5031 = vperm.xlu0 %5030, %v289
        %v5032 = vpop.permute.xlu0 %5031
        %5034 = vset.pattern.permute.xlu0 8
        %5035 = vperm.xlu0 %5034, %v290
        %v5036 = vpop.permute.xlu0 %5035
        %5038 = vset.pattern.permute.xlu0 8
        %5039 = vperm.xlu0 %5038, %v291
        %v5040 = vpop.permute.xlu0 %5039
        %5042 = vset.pattern.permute.xlu0 8
        %5043 = vperm.xlu0 %5042, %v292
        %v5044 = vpop.permute.xlu0 %5043
        %v5046 = vsub.f32 %v295, %v4984
        %v5047 = vsub.f32 %v295, %v4988
        %v5048 = vsub.f32 %v295, %v4992
        %v5049 = vsub.f32 %v295, %v4996
        %v5050 = vsub.f32 %v295, %v5000
        %v5051 = vsub.f32 %v295, %v5004
        %v5052 = vsub.f32 %v295, %v5008
        %v5053 = vsub.f32 %v295, %v5012
        %v5054 = vsub.f32 %v295, %v5016
        %v5055 = vsub.f32 %v295, %v5020
        %v5056 = vsub.f32 %v295, %v5024
        %v5057 = vsub.f32 %v295, %v5028
        %v5058 = vsub.f32 %v295, %v5032
        %v5059 = vsub.f32 %v295, %v5036
        %v5060 = vsub.f32 %v295, %v5040
        %v5061 = vsub.f32 %v295, %v5044
        %v5062 = vand.u32 2147483647, %v5046
        %v5063 = vand.u32 2147483647, %v5047
        %v5064 = vand.u32 2147483647, %v5048
        %v5065 = vand.u32 2147483647, %v5049
        %v5066 = vand.u32 2147483647, %v5050
        %v5067 = vand.u32 2147483647, %v5051
        %v5068 = vand.u32 2147483647, %v5052
        %v5069 = vand.u32 2147483647, %v5053
        %v5070 = vand.u32 2147483647, %v5054
        %v5071 = vand.u32 2147483647, %v5055
        %v5072 = vand.u32 2147483647, %v5056
        %v5073 = vand.u32 2147483647, %v5057
        %v5074 = vand.u32 2147483647, %v5058
        %v5075 = vand.u32 2147483647, %v5059
        %v5076 = vand.u32 2147483647, %v5060
        %v5077 = vand.u32 2147483647, %v5061
        %v5078 = vsub.f32 1.0, %v5062
        %v5079 = vsub.f32 1.0, %v5063
        %v5080 = vsub.f32 1.0, %v5064
        %v5081 = vsub.f32 1.0, %v5065
        %v5082 = vsub.f32 1.0, %v5066
        %v5083 = vsub.f32 1.0, %v5067
        %v5084 = vsub.f32 1.0, %v5068
        %v5085 = vsub.f32 1.0, %v5069
        %v5086 = vsub.f32 1.0, %v5070
        %v5087 = vsub.f32 1.0, %v5071
        %v5088 = vsub.f32 1.0, %v5072
        %v5089 = vsub.f32 1.0, %v5073
        %v5090 = vsub.f32 1.0, %v5074
        %v5091 = vsub.f32 1.0, %v5075
        %v5092 = vsub.f32 1.0, %v5076
        %v5093 = vsub.f32 1.0, %v5077
        %v5094 = vmax.f32 %v5078, 0.0
        %v5095 = vmax.f32 %v5079, 0.0
        %v5096 = vmax.f32 %v5080, 0.0
        %v5097 = vmax.f32 %v5081, 0.0
        %v5098 = vmax.f32 %v5082, 0.0
        %v5099 = vmax.f32 %v5083, 0.0
        %v5100 = vmax.f32 %v5084, 0.0
        %v5101 = vmax.f32 %v5085, 0.0
        %v5102 = vmax.f32 %v5086, 0.0
        %v5103 = vmax.f32 %v5087, 0.0
        %v5104 = vmax.f32 %v5088, 0.0
        %v5105 = vmax.f32 %v5089, 0.0
        %v5106 = vmax.f32 %v5090, 0.0
        %v5107 = vmax.f32 %v5091, 0.0
        %v5108 = vmax.f32 %v5092, 0.0
        %v5109 = vmax.f32 %v5093, 0.0
        %5110 = vset.pattern.permute.xlu0 17
        %5111 = vperm.xlu0 %5110, %v277
        %v5112 = vpop.permute.xlu0 %5111
        %5114 = vset.pattern.permute.xlu0 17
        %5115 = vperm.xlu0 %5114, %v278
        %v5116 = vpop.permute.xlu0 %5115
        %5118 = vset.pattern.permute.xlu0 17
        %5119 = vperm.xlu0 %5118, %v279
        %v5120 = vpop.permute.xlu0 %5119
        %5122 = vset.pattern.permute.xlu0 17
        %5123 = vperm.xlu0 %5122, %v280
        %v5124 = vpop.permute.xlu0 %5123
        %5126 = vset.pattern.permute.xlu0 17
        %5127 = vperm.xlu0 %5126, %v281
        %v5128 = vpop.permute.xlu0 %5127
        %5130 = vset.pattern.permute.xlu0 17
        %5131 = vperm.xlu0 %5130, %v282
        %v5132 = vpop.permute.xlu0 %5131
        %5134 = vset.pattern.permute.xlu0 17
        %5135 = vperm.xlu0 %5134, %v283
        %v5136 = vpop.permute.xlu0 %5135
        %5138 = vset.pattern.permute.xlu0 17
        %5139 = vperm.xlu0 %5138, %v284
        %v5140 = vpop.permute.xlu0 %5139
        %5142 = vset.pattern.permute.xlu0 17
        %5143 = vperm.xlu0 %5142, %v285
        %v5144 = vpop.permute.xlu0 %5143
        %5146 = vset.pattern.permute.xlu0 17
        %5147 = vperm.xlu0 %5146, %v286
        %v5148 = vpop.permute.xlu0 %5147
        %5150 = vset.pattern.permute.xlu0 17
        %5151 = vperm.xlu0 %5150, %v287
        %v5152 = vpop.permute.xlu0 %5151
        %5154 = vset.pattern.permute.xlu0 17
        %5155 = vperm.xlu0 %5154, %v288
        %v5156 = vpop.permute.xlu0 %5155
        %5158 = vset.pattern.permute.xlu0 17
        %5159 = vperm.xlu0 %5158, %v289
        %v5160 = vpop.permute.xlu0 %5159
        %5162 = vset.pattern.permute.xlu0 17
        %5163 = vperm.xlu0 %5162, %v290
        %v5164 = vpop.permute.xlu0 %5163
        %5166 = vset.pattern.permute.xlu0 17
        %5167 = vperm.xlu0 %5166, %v291
        %v5168 = vpop.permute.xlu0 %5167
        %5170 = vset.pattern.permute.xlu0 17
        %5171 = vperm.xlu0 %5170, %v292
        %v5172 = vpop.permute.xlu0 %5171
        %v5174 = vsub.f32 %v301, %v5112
        %v5175 = vsub.f32 %v301, %v5116
        %v5176 = vsub.f32 %v301, %v5120
        %v5177 = vsub.f32 %v301, %v5124
        %v5178 = vsub.f32 %v301, %v5128
        %v5179 = vsub.f32 %v301, %v5132
        %v5180 = vsub.f32 %v301, %v5136
        %v5181 = vsub.f32 %v301, %v5140
        %v5182 = vsub.f32 %v301, %v5144
        %v5183 = vsub.f32 %v301, %v5148
        %v5184 = vsub.f32 %v301, %v5152
        %v5185 = vsub.f32 %v301, %v5156
        %v5186 = vsub.f32 %v301, %v5160
        %v5187 = vsub.f32 %v301, %v5164
        %v5188 = vsub.f32 %v301, %v5168
        %v5189 = vsub.f32 %v301, %v5172
        %v5190 = vand.u32 2147483647, %v5174
        %v5191 = vand.u32 2147483647, %v5175
        %v5192 = vand.u32 2147483647, %v5176
        %v5193 = vand.u32 2147483647, %v5177
        %v5194 = vand.u32 2147483647, %v5178
        %v5195 = vand.u32 2147483647, %v5179
        %v5196 = vand.u32 2147483647, %v5180
        %v5197 = vand.u32 2147483647, %v5181
        %v5198 = vand.u32 2147483647, %v5182
        %v5199 = vand.u32 2147483647, %v5183
        %v5200 = vand.u32 2147483647, %v5184
        %v5201 = vand.u32 2147483647, %v5185
        %v5202 = vand.u32 2147483647, %v5186
        %v5203 = vand.u32 2147483647, %v5187
        %v5204 = vand.u32 2147483647, %v5188
        %v5205 = vand.u32 2147483647, %v5189
        %v5206 = vsub.f32 1.0, %v5190
        %v5207 = vsub.f32 1.0, %v5191
        %v5208 = vsub.f32 1.0, %v5192
        %v5209 = vsub.f32 1.0, %v5193
        %v5210 = vsub.f32 1.0, %v5194
        %v5211 = vsub.f32 1.0, %v5195
        %v5212 = vsub.f32 1.0, %v5196
        %v5213 = vsub.f32 1.0, %v5197
        %v5214 = vsub.f32 1.0, %v5198
        %v5215 = vsub.f32 1.0, %v5199
        %v5216 = vsub.f32 1.0, %v5200
        %v5217 = vsub.f32 1.0, %v5201
        %v5218 = vsub.f32 1.0, %v5202
        %v5219 = vsub.f32 1.0, %v5203
        %v5220 = vsub.f32 1.0, %v5204
        %v5221 = vsub.f32 1.0, %v5205
        %v5222 = vmax.f32 %v5206, 0.0
        %v5223 = vmax.f32 %v5207, 0.0
        %v5224 = vmax.f32 %v5208, 0.0
        %v5225 = vmax.f32 %v5209, 0.0
        %v5226 = vmax.f32 %v5210, 0.0
        %v5227 = vmax.f32 %v5211, 0.0
        %v5228 = vmax.f32 %v5212, 0.0
        %v5229 = vmax.f32 %v5213, 0.0
        %v5230 = vmax.f32 %v5214, 0.0
        %v5231 = vmax.f32 %v5215, 0.0
        %v5232 = vmax.f32 %v5216, 0.0
        %v5233 = vmax.f32 %v5217, 0.0
        %v5234 = vmax.f32 %v5218, 0.0
        %v5235 = vmax.f32 %v5219, 0.0
        %v5236 = vmax.f32 %v5220, 0.0
        %v5237 = vmax.f32 %v5221, 0.0
        %v5238 = vpack.c.bf16 %v5095, %v5094
        %v5239 = vpack.c.bf16 %v5097, %v5096
        %v5240 = vpack.c.bf16 %v5099, %v5098
        %v5241 = vpack.c.bf16 %v5101, %v5100
        %v5242 = vpack.c.bf16 %v5103, %v5102
        %v5243 = vpack.c.bf16 %v5105, %v5104
        %v5244 = vpack.c.bf16 %v5107, %v5106
        %v5245 = vpack.c.bf16 %v5109, %v5108
        %v5247 = vsel %vm589, %v5238, 0
        %v5250 = vsel %vm589, %v5239, 0
        %v5253 = vsel %vm589, %v5240, 0
        %v5256 = vsel %vm589, %v5241, 0
        %v5259 = vsel %vm589, %v5242, 0
        %v5262 = vsel %vm589, %v5243, 0
        %v5265 = vsel %vm589, %v5244, 0
        %v5268 = vsel %vm589, %v5245, 0
        %5270 = vmatprep.subr.bf16.mxu0 0
        %5271 = vmatpush1.bf16.msra.mxu0 %v587
        %5272 = vmatprep.subr.bf16.mxu0 0
        %5273 = vmatpush1.bf16.msra.mxu0 0
        %5274 = vmatprep.subr.bf16.mxu0 0
        %5275 = vmatpush1.bf16.msra.mxu0 0
        %5276 = vmatprep.subr.bf16.mxu0 0
        %5277 = vmatpush1.bf16.msra.mxu0 0
        %5278 = vmatprep.subr.bf16.mxu0 0
        %5279 = vmatpush1.bf16.msra.mxu0 0
        %5280 = vmatprep.subr.bf16.mxu0 0
        %5281 = vmatpush1.bf16.msra.mxu0 0
        %5282 = vmatprep.subr.bf16.mxu0 0
        %5283 = vmatpush1.bf16.msra.mxu0 0
        %5284 = vmatprep.subr.bf16.mxu0 0
        %5285 = vmatpush1.bf16.msra.mxu0 0
        %5286 = vmatprep.subr.bf16.mxu0 0
        %5287 = vmatpush1.bf16.msra.mxu0 0
        %5288 = vmatprep.subr.bf16.mxu0 0
        %5289 = vmatpush1.bf16.msra.mxu0 0
        %5290 = vmatprep.subr.bf16.mxu0 0
        %5291 = vmatpush1.bf16.msra.mxu0 0
        %5292 = vmatprep.subr.bf16.mxu0 0
        %5293 = vmatpush1.bf16.msra.mxu0 0
        %5294 = vmatprep.subr.bf16.mxu0 0
        %5295 = vmatpush1.bf16.msra.mxu0 0
        %5296 = vmatprep.subr.bf16.mxu0 0
        %5297 = vmatpush1.bf16.msra.mxu0 0
        %5298 = vmatprep.subr.bf16.mxu0 0
        %5299 = vmatpush1.bf16.msra.mxu0 0
        %5300 = vmatprep.subr.bf16.mxu0 0
        %5301 = vmatpush1.bf16.msra.mxu0 0
        %5302 = vmatprep.mubr.bf16.mxu0 0
        %5303 = vmatmul.mubr.bf16.gmra.mrb[0].mxu0 %v5247
        %v5304 = vpop.f32.mrb[0].mxu0
        %v5305 = vadd.f32 0.0, %v5304
        %v5306 = vpop.f32.mrb[0].mxu0
        %v5307 = vpop.f32.mrb[0].mxu0
        %v5308 = vadd.f32 0.0, %v5307
        %v5309 = vpop.f32.mrb[0].mxu0
        %5310 = vmatprep.mubr.bf16.mxu0 0
        %5311 = vmatmul.mubr.bf16.gmra.mrb[0].mxu0 %v5250
        %v5312 = vpop.f32.mrb[0].mxu0
        %v5313 = vadd.f32 0.0, %v5312
        %v5314 = vpop.f32.mrb[0].mxu0
        %v5315 = vpop.f32.mrb[0].mxu0
        %v5316 = vadd.f32 0.0, %v5315
        %v5317 = vpop.f32.mrb[0].mxu0
        %5318 = vmatprep.mubr.bf16.mxu0 0
        %5319 = vmatmul.mubr.bf16.gmra.mrb[0].mxu0 %v5253
        %v5320 = vpop.f32.mrb[0].mxu0
        %v5321 = vadd.f32 0.0, %v5320
        %v5322 = vpop.f32.mrb[0].mxu0
        %v5323 = vpop.f32.mrb[0].mxu0
        %v5324 = vadd.f32 0.0, %v5323
        %v5325 = vpop.f32.mrb[0].mxu0
        %5326 = vmatprep.mubr.bf16.mxu0 0
        %5327 = vmatmul.mubr.bf16.gmra.mrb[0].mxu0 %v5256
        %v5328 = vpop.f32.mrb[0].mxu0
        %v5329 = vadd.f32 0.0, %v5328
        %v5330 = vpop.f32.mrb[0].mxu0
        %v5331 = vpop.f32.mrb[0].mxu0
        %v5332 = vadd.f32 0.0, %v5331
        %v5333 = vpop.f32.mrb[0].mxu0
        %5334 = vmatprep.mubr.bf16.mxu0 0
        %5335 = vmatmul.mubr.bf16.gmra.mrb[0].mxu0 %v5259
        %v5336 = vpop.f32.mrb[0].mxu0
        %v5337 = vadd.f32 0.0, %v5336
        %v5338 = vpop.f32.mrb[0].mxu0
        %v5339 = vpop.f32.mrb[0].mxu0
        %v5340 = vadd.f32 0.0, %v5339
        %v5341 = vpop.f32.mrb[0].mxu0
        %5342 = vmatprep.mubr.bf16.mxu0 0
        %5343 = vmatmul.mubr.bf16.gmra.mrb[0].mxu0 %v5262
        %v5344 = vpop.f32.mrb[0].mxu0
        %v5345 = vadd.f32 0.0, %v5344
        %v5346 = vpop.f32.mrb[0].mxu0
        %v5347 = vpop.f32.mrb[0].mxu0
        %v5348 = vadd.f32 0.0, %v5347
        %v5349 = vpop.f32.mrb[0].mxu0
        %5350 = vmatprep.mubr.bf16.mxu0 0
        %5351 = vmatmul.mubr.bf16.gmra.mrb[0].mxu0 %v5265
        %v5352 = vpop.f32.mrb[0].mxu0
        %v5353 = vadd.f32 0.0, %v5352
        %v5354 = vpop.f32.mrb[0].mxu0
        %v5355 = vpop.f32.mrb[0].mxu0
        %v5356 = vadd.f32 0.0, %v5355
        %v5357 = vpop.f32.mrb[0].mxu0
        %5358 = vmatprep.mubr.bf16.mxu0 0
        %5359 = vmatmul.mubr.bf16.gmra.mrb[0].mxu0 %v5268
        %v5360 = vpop.f32.mrb[0].mxu0
        %v5361 = vadd.f32 0.0, %v5360
        %v5362 = vpop.f32.mrb[0].mxu0
        %v5363 = vpop.f32.mrb[0].mxu0
        %v5364 = vadd.f32 0.0, %v5363
        %v5365 = vpop.f32.mrb[0].mxu0
        %5366 = vdwg.mxu0
        %v5367 = vmul.f32 %v5222, %v5305
        %v5368 = vmul.f32 %v5223, %v5308
        %v5369 = vmul.f32 %v5224, %v5313
        %v5370 = vmul.f32 %v5225, %v5316
        %v5371 = vmul.f32 %v5226, %v5321
        %v5372 = vmul.f32 %v5227, %v5324
        %v5373 = vmul.f32 %v5228, %v5329
        %v5374 = vmul.f32 %v5229, %v5332
        %v5375 = vmul.f32 %v5230, %v5337
        %v5376 = vmul.f32 %v5231, %v5340
        %v5377 = vmul.f32 %v5232, %v5345
        %v5378 = vmul.f32 %v5233, %v5348
        %v5379 = vmul.f32 %v5234, %v5353
        %v5380 = vmul.f32 %v5235, %v5356
        %v5381 = vmul.f32 %v5236, %v5361
        %v5382 = vmul.f32 %v5237, %v5364
        %v5383 = vpack.c.bf16 %v5368, %v5367
        %v5384 = vpack.c.bf16 %v5370, %v5369
        %v5385 = vpack.c.bf16 %v5372, %v5371
        %v5386 = vpack.c.bf16 %v5374, %v5373
        %v5387 = vpack.c.bf16 %v5376, %v5375
        %v5388 = vpack.c.bf16 %v5378, %v5377
        %v5389 = vpack.c.bf16 %v5380, %v5379
        %v5390 = vpack.c.bf16 %v5382, %v5381
        %v5391 = vld [vmem:[%s3 + $0x200] sm:$0xf]
        %v5392 = vld [vmem:[%s3 + $0x204] sm:$0xf]
        %v5393 = vld [vmem:[%s3 + $0x208] sm:$0xf]
        %v5394 = vld [vmem:[%s3 + $0x20c] sm:$0xf]
        %v5395 = vld [vmem:[%s3 + $0x210] sm:$0xf]
        %v5396 = vld [vmem:[%s3 + $0x214] sm:$0xf]
        %v5397 = vld [vmem:[%s3 + $0x218] sm:$0xf]
        %v5398 = vld [vmem:[%s3 + $0x21c] sm:$0xf]
        %v5399 = vld [vmem:[%s3 + $0x220] sm:$0xf]
        %v5400 = vld [vmem:[%s3 + $0x224] sm:$0xf]
        %v5401 = vld [vmem:[%s3 + $0x228] sm:$0xf]
        %v5402 = vld [vmem:[%s3 + $0x22c] sm:$0xf]
        %v5403 = vld [vmem:[%s3 + $0x230] sm:$0xf]
        %v5404 = vld [vmem:[%s3 + $0x234] sm:$0xf]
        %v5405 = vld [vmem:[%s3 + $0x238] sm:$0xf]
        %v5406 = vld [vmem:[%s3 + $0x23c] sm:$0xf]
        %v5423 = vunpack.c.l.b16 %v5391
        %v5424 = vunpack.c.l.b16 %v5392
        %v5425 = vunpack.c.l.b16 %v5393
        %v5426 = vunpack.c.l.b16 %v5394
        %v5427 = vunpack.c.l.b16 %v5395
        %v5428 = vunpack.c.l.b16 %v5396
        %v5429 = vunpack.c.l.b16 %v5397
        %v5430 = vunpack.c.l.b16 %v5398
        %v5431 = vunpack.c.l.b16 %v5399
        %v5432 = vunpack.c.l.b16 %v5400
        %v5433 = vunpack.c.l.b16 %v5401
        %v5434 = vunpack.c.l.b16 %v5402
        %v5435 = vunpack.c.l.b16 %v5403
        %v5436 = vunpack.c.l.b16 %v5404
        %v5437 = vunpack.c.l.b16 %v5405
        %v5438 = vunpack.c.l.b16 %v5406
        %v5439 = vpack.c.b16 %v5424, %v5423
        %v5440 = vpack.c.b16 %v5426, %v5425
        %v5441 = vpack.c.b16 %v5428, %v5427
        %v5442 = vpack.c.b16 %v5430, %v5429
        %v5443 = vpack.c.b16 %v5432, %v5431
        %v5444 = vpack.c.b16 %v5434, %v5433
        %v5445 = vpack.c.b16 %v5436, %v5435
        %v5446 = vpack.c.b16 %v5438, %v5437
        %5455 = vmatprep.subr.bf16.mxu0 0
        %5456 = vmatpush1.bf16.msra.mxu0 %v5439
        %5457 = vmatprep.subr.bf16.mxu0 0
        %5458 = vmatpush1.bf16.msra.mxu0 %v5440
        %5459 = vmatprep.subr.bf16.mxu0 0
        %5460 = vmatpush1.bf16.msra.mxu0 %v5441
        %5461 = vmatprep.subr.bf16.mxu0 0
        %5462 = vmatpush1.bf16.msra.mxu0 %v5442
        %5463 = vmatprep.subr.bf16.mxu0 0
        %5464 = vmatpush1.bf16.msra.mxu0 %v5443
        %5465 = vmatprep.subr.bf16.mxu0 0
        %5466 = vmatpush1.bf16.msra.mxu0 %v5444
        %5467 = vmatprep.subr.bf16.mxu0 0
        %5468 = vmatpush1.bf16.msra.mxu0 %v5445
        %5469 = vmatprep.subr.bf16.mxu0 0
        %5470 = vmatpush1.bf16.msra.mxu0 %v5446
        %5471 = vmatprep.subr.bf16.mxu0 0
        %5472 = vmatpush1.bf16.msra.mxu0 0
        %5473 = vmatprep.subr.bf16.mxu0 0
        %5474 = vmatpush1.bf16.msra.mxu0 0
        %5475 = vmatprep.subr.bf16.mxu0 0
        %5476 = vmatpush1.bf16.msra.mxu0 0
        %5477 = vmatprep.subr.bf16.mxu0 0
        %5478 = vmatpush1.bf16.msra.mxu0 0
        %5479 = vmatprep.subr.bf16.mxu0 0
        %5480 = vmatpush1.bf16.msra.mxu0 0
        %5481 = vmatprep.subr.bf16.mxu0 0
        %5482 = vmatpush1.bf16.msra.mxu0 0
        %5483 = vmatprep.subr.bf16.mxu0 0
        %5484 = vmatpush1.bf16.msra.mxu0 0
        %5485 = vmatprep.subr.bf16.mxu0 0
        %5486 = vmatpush1.bf16.msra.mxu0 0
        %5487 = vmatprep.mubr.bf16.mxu0 0
        %5488 = vmatmul.mubr.bf16.gmra.mrb[0].mxu0 %v5383
        %v5489 = vpop.f32.mrb[0].mxu0
        %v5490 = vadd.f32 0.0, %v5489
        %v5491 = vpop.f32.mrb[0].mxu0
        %v5492 = vpop.f32.mrb[0].mxu0
        %v5493 = vadd.f32 0.0, %v5492
        %v5494 = vpop.f32.mrb[0].mxu0
        %5495 = vmatprep.mubr.bf16.mxu0 0
        %5496 = vmatmul.mubr.bf16.gmra.mrb[0].mxu0 %v5384
        %v5497 = vpop.f32.mrb[0].mxu0
        %v5498 = vadd.f32 0.0, %v5497
        %v5499 = vpop.f32.mrb[0].mxu0
        %v5500 = vpop.f32.mrb[0].mxu0
        %v5501 = vadd.f32 0.0, %v5500
        %v5502 = vpop.f32.mrb[0].mxu0
        %5503 = vmatprep.mubr.bf16.mxu0 0
        %5504 = vmatmul.mubr.bf16.gmra.mrb[0].mxu0 %v5385
        %v5505 = vpop.f32.mrb[0].mxu0
        %v5506 = vadd.f32 0.0, %v5505
        %v5507 = vpop.f32.mrb[0].mxu0
        %v5508 = vpop.f32.mrb[0].mxu0
        %v5509 = vadd.f32 0.0, %v5508
        %v5510 = vpop.f32.mrb[0].mxu0
        %5511 = vmatprep.mubr.bf16.mxu0 0
        %5512 = vmatmul.mubr.bf16.gmra.mrb[0].mxu0 %v5386
        %v5513 = vpop.f32.mrb[0].mxu0
        %v5514 = vadd.f32 0.0, %v5513
        %v5515 = vpop.f32.mrb[0].mxu0
        %v5516 = vpop.f32.mrb[0].mxu0
        %v5517 = vadd.f32 0.0, %v5516
        %v5518 = vpop.f32.mrb[0].mxu0
        %5519 = vmatprep.mubr.bf16.mxu0 0
        %5520 = vmatmul.mubr.bf16.gmra.mrb[0].mxu0 %v5387
        %v5521 = vpop.f32.mrb[0].mxu0
        %v5522 = vadd.f32 0.0, %v5521
        %v5523 = vpop.f32.mrb[0].mxu0
        %v5524 = vpop.f32.mrb[0].mxu0
        %v5525 = vadd.f32 0.0, %v5524
        %v5526 = vpop.f32.mrb[0].mxu0
        %5527 = vmatprep.mubr.bf16.mxu0 0
        %5528 = vmatmul.mubr.bf16.gmra.mrb[0].mxu0 %v5388
        %v5529 = vpop.f32.mrb[0].mxu0
        %v5530 = vadd.f32 0.0, %v5529
        %v5531 = vpop.f32.mrb[0].mxu0
        %v5532 = vpop.f32.mrb[0].mxu0
        %v5533 = vadd.f32 0.0, %v5532
        %v5534 = vpop.f32.mrb[0].mxu0
        %5535 = vmatprep.mubr.bf16.mxu0 0
        %5536 = vmatmul.mubr.bf16.gmra.mrb[0].mxu0 %v5389
        %v5537 = vpop.f32.mrb[0].mxu0
        %v5538 = vadd.f32 0.0, %v5537
        %v5539 = vpop.f32.mrb[0].mxu0
        %v5540 = vpop.f32.mrb[0].mxu0
        %v5541 = vadd.f32 0.0, %v5540
        %v5542 = vpop.f32.mrb[0].mxu0
        %5543 = vmatprep.mubr.bf16.mxu0 0
        %5544 = vmatmul.mubr.bf16.gmra.mrb[0].mxu0 %v5390
        %v5545 = vpop.f32.mrb[0].mxu0
        %v5546 = vadd.f32 0.0, %v5545
        %v5547 = vpop.f32.mrb[0].mxu0
        %v5548 = vpop.f32.mrb[0].mxu0
        %v5549 = vadd.f32 0.0, %v5548
        %v5550 = vpop.f32.mrb[0].mxu0
        %5551 = vdwg.mxu0
        %v5552 = vadd.f32 %v4966, %v5490
        %v5553 = vadd.f32 %v4967, %v5493
        %v5554 = vadd.f32 %v4968, %v5498
        %v5555 = vadd.f32 %v4969, %v5501
        %v5556 = vadd.f32 %v4970, %v5506
        %v5557 = vadd.f32 %v4971, %v5509
        %v5558 = vadd.f32 %v4972, %v5514
        %v5559 = vadd.f32 %v4973, %v5517
        %v5560 = vadd.f32 %v4974, %v5522
        %v5561 = vadd.f32 %v4975, %v5525
        %v5562 = vadd.f32 %v4976, %v5530
        %v5563 = vadd.f32 %v4977, %v5533
        %v5564 = vadd.f32 %v4978, %v5538
        %v5565 = vadd.f32 %v4979, %v5541
        %v5566 = vadd.f32 %v4980, %v5546
        %v5567 = vadd.f32 %v4981, %v5549
        %v5568 = vld [vmem:[%s4] sm:$0x1]
        %v5570 = vlaneseq
        %v5571 = vshrl.u32 %v5570, 7
        %v5572 = vsub.s32 0, %v5571
        %v5573 = vrot.slane %v5568, %v5572
        %v5575 = vadd.f32 %v5552, %v5573
        %v5576 = vadd.f32 %v5553, %v5573
        %v5577 = vadd.f32 %v5554, %v5573
        %v5578 = vadd.f32 %v5555, %v5573
        %v5579 = vadd.f32 %v5556, %v5573
        %v5580 = vadd.f32 %v5557, %v5573
        %v5581 = vadd.f32 %v5558, %v5573
        %v5582 = vadd.f32 %v5559, %v5573
        %v5583 = vadd.f32 %v5560, %v5573
        %v5584 = vadd.f32 %v5561, %v5573
        %v5585 = vadd.f32 %v5562, %v5573
        %v5586 = vadd.f32 %v5563, %v5573
        %v5587 = vadd.f32 %v5564, %v5573
        %v5588 = vadd.f32 %v5565, %v5573
        %v5589 = vadd.f32 %v5566, %v5573
        %v5590 = vadd.f32 %v5567, %v5573
        %v5591 = vpack.c.bf16 %v5576, %v5575
        %v5592 = vpack.c.bf16 %v5578, %v5577
        %v5593 = vpack.c.bf16 %v5580, %v5579
        %v5594 = vpack.c.bf16 %v5582, %v5581
        %v5595 = vpack.c.bf16 %v5584, %v5583
        %v5596 = vpack.c.bf16 %v5586, %v5585
        %v5597 = vpack.c.bf16 %v5588, %v5587
        %v5598 = vpack.c.bf16 %v5590, %v5589
        %v5607 = vunpack.c.l.b16 %v5591
        %v5608 = vunpack.c.h.b16 %v5591
        %v5609 = vunpack.c.l.b16 %v5592
        %v5610 = vunpack.c.h.b16 %v5592
        %v5611 = vunpack.c.l.b16 %v5593
        %v5612 = vunpack.c.h.b16 %v5593
        %v5613 = vunpack.c.l.b16 %v5594
        %v5614 = vunpack.c.h.b16 %v5594
        %v5615 = vunpack.c.l.b16 %v5595
        %v5616 = vunpack.c.h.b16 %v5595
        %v5617 = vunpack.c.l.b16 %v5596
        %v5618 = vunpack.c.h.b16 %v5596
        %v5619 = vunpack.c.l.b16 %v5597
        %v5620 = vunpack.c.h.b16 %v5597
        %v5621 = vunpack.c.l.b16 %v5598
        %v5622 = vunpack.c.h.b16 %v5598
        %v5623 = vpack.c.b16 %v5607, %v5607
        %v5624 = vpack.c.b16 %v5608, %v5608
        %v5625 = vpack.c.b16 %v5609, %v5609
        %v5626 = vpack.c.b16 %v5610, %v5610
        %v5627 = vpack.c.b16 %v5611, %v5611
        %v5628 = vpack.c.b16 %v5612, %v5612
        %v5629 = vpack.c.b16 %v5613, %v5613
        %v5630 = vpack.c.b16 %v5614, %v5614
        %v5631 = vpack.c.b16 %v5615, %v5615
        %v5632 = vpack.c.b16 %v5616, %v5616
        %v5633 = vpack.c.b16 %v5617, %v5617
        %v5634 = vpack.c.b16 %v5618, %v5618
        %v5635 = vpack.c.b16 %v5619, %v5619
        %v5636 = vpack.c.b16 %v5620, %v5620
        %v5637 = vpack.c.b16 %v5621, %v5621
        %v5638 = vpack.c.b16 %v5622, %v5622
        %5655 = vst [vmem:[%s257] sm:$0xf] %v5623
        %5656 = vst [vmem:[%s257 + $0x4] sm:$0xf] %v5624
        %5657 = vst [vmem:[%s257 + $0x8] sm:$0xf] %v5625
        %5658 = vst [vmem:[%s257 + $0xc] sm:$0xf] %v5626
        %5659 = vst [vmem:[%s257 + $0x10] sm:$0xf] %v5627
        %5660 = vst [vmem:[%s257 + $0x14] sm:$0xf] %v5628
        %5661 = vst [vmem:[%s257 + $0x18] sm:$0xf] %v5629
        %5662 = vst [vmem:[%s257 + $0x1c] sm:$0xf] %v5630
        %5663 = vst [vmem:[%s257 + $0x20] sm:$0xf] %v5631
        %5664 = vst [vmem:[%s257 + $0x24] sm:$0xf] %v5632
        %5665 = vst [vmem:[%s257 + $0x28] sm:$0xf] %v5633
        %5666 = vst [vmem:[%s257 + $0x2c] sm:$0xf] %v5634
        %5667 = vst [vmem:[%s257 + $0x30] sm:$0xf] %v5635
        %5668 = vst [vmem:[%s257 + $0x34] sm:$0xf] %v5636
        %5669 = vst [vmem:[%s257 + $0x38] sm:$0xf] %v5637
        %5670 = vst [vmem:[%s257 + $0x3c] sm:$0xf] %v5638
        %s5671 = sand.u32 %s158, 1
        %s5672 = scalar_lea.sflag [#allocation3], %s5671
        %s5673 = sand.u32 %s158, 1
        %s5674 = smul.addr %s5673, 64
        %s5675 = scalar_lea.vmem [#allocation2], %s5674
        // Predicated region
        $region41: #{tpu_custom_call.1} parent=39 // pred_check
          %p5676 = pneg %p168
        $region42: #{tpu_custom_call.1} parent=39 // pred_check_branch
          %5678 = sbr.rel (%p5676) target = $region44
        $region43: #{tpu_custom_call.1} parent=39 // pred_region
          %s5679 = smul.u32 16, %s24
          %s5681 = ssub.s32 1024, 1024
          %5682 = vsyncadd %s5672, %s5681
          %s5683 = smul.addr %s23, 32
          %s5684 = sadd.s32 %s5679, %s5683
          %s5685 = smul.addr %s5684, 64
          %s5686 = scalar_lea.hbm %s5, %s5685
          %s5687 = sshll.u32 %s5675, 4
          %s5688 = int_to_ptr.vmem [resolvable:$true] %s5687
          %5693 = dma.vmem_to_hbm [thread:$0]  %s5688, 1024, %s5686, %s5672, 64, 64, 4
        $region44: #{tpu_custom_call.1} parent=39 // pred_fallthru
          _
      $region40: #{tpu_custom_call.1} parent=5 // pred_fallthru
        _
      %p5694 = scmp.le.s32.totalorder 2, %s14
      // Predicated region
      $region45: #{tpu_custom_call.1} parent=5 // pred_check
        %p5695 = pneg %p5694
      $region46: #{tpu_custom_call.1} parent=5 // pred_check_branch
        %5697 = sbr.rel (%p5695) target = $region48
      $region47: #{tpu_custom_call.1} parent=5 // pred_region
        %s5698 = ssub.s32 %s14, 2
        // Predicated region
        $region49: #{tpu_custom_call.1} parent=47 // pred_check
          %p5699 = pneg %p174
        $region50: #{tpu_custom_call.1} parent=47 // pred_check_branch
          %5701 = sbr.rel (%p5699) target = $region52
        $region51: #{tpu_custom_call.1} parent=47 // pred_region
          %s5702 = sand.u32 %s159, 1
          %s5703 = scalar_lea.sflag [#allocation3], %s5702
          %s5704 = sand.u32 %s159, 1
          %s5705 = smul.addr %s5704, 64
          %s5706 = scalar_lea.vmem [#allocation2], %s5705
          %5707 = dma.done %s5703, 1024
        $region52: #{tpu_custom_call.1} parent=47 // pred_fallthru
          _
      $region48: #{tpu_custom_call.1} parent=5 // pred_fallthru
        _
    $region6: #{tpu_custom_call.1} parent=1 // loop_footer
      %s18 = sadd.s32 1, %s14
    $region7: #{tpu_custom_call.1} parent=1 // loop_footer_branch
      %13 = sbr.rel target = $region3
    $region8: #{tpu_custom_call.1} parent=1 // loop_exit
      _
    %5708 = vsyncpa [#allocation3], 1
    %s5709 = scalar_lea.sflag [#allocation3], 1
    %5710 = vsyncpa %s5709, 1

</llo_original>
